<compile_context>
chip_gen: v7x
topology: tpu7x:2x2x1
jax: 0.10.0
libtpu: 0.0.40
codegen_flags: <defaults>
</compile_context>

<pallas_src>
import jax
import jax.numpy as jnp
from jax import lax
from jax.experimental import pallas as pl
from jax.experimental.pallas import tpu as pltpu

_BF16 = jnp.bfloat16


# ------------------------------- helpers -----------------------------------

def _round_up(x, m):
    return ((x + m - 1) // m) * m


def _choose_tm(mp):
    # mp is a multiple of 128; prefer >=2 grid steps (both v7x TCs), TM <= 512.
    for tm in (512, 256, 128):
        if mp % tm == 0 and mp // tm >= 2:
            return tm
    return min(mp, 128)


def _const_spec(block_shape, index_map):
    # Constant-index operands (weights/bias/scale/shift): single-buffer them to
    # save VMEM (matters on v7x at large ngf). Fall back gracefully if this
    # Pallas version has no pipeline_mode.
    try:
        return pl.BlockSpec(block_shape, index_map, pipeline_mode=pl.Buffered(1))
    except (AttributeError, TypeError):
        return pl.BlockSpec(block_shape, index_map)


# ------------------------- fused GEMM Pallas kernel -------------------------

def _make_gemm_kernel(act, fuse_bn, tanh_out, emit_stats, m_total, tm):
    """out = epilogue(act(A*scale + shift) @ B + bias), plus optional masked
    per-channel (sum, sum_sq) of the f32 output for a downstream BatchNorm."""

    def kernel(*refs):
        if fuse_bn:
            a_ref, b_ref, bias_ref, scale_ref, shift_ref = refs[:5]
            out_refs = refs[5:]
        else:
            a_ref, b_ref, bias_ref = refs[:3]
            out_refs = refs[3:]

        a = a_ref[...]
        if fuse_bn or act != "none":
            a = a.astype(jnp.float32)
            if fuse_bn:
                a = a * scale_ref[...] + shift_ref[...]
            if act == "lrelu":
                a = jnp.where(a >= 0, a, 0.2 * a)
            elif act == "relu":
                a = jnp.maximum(a, 0.0)
            a = a.astype(_BF16)

        out = jnp.dot(a, b_ref[...], preferred_element_type=jnp.float32)
        out = out + bias_ref[...]
        if tanh_out:
            out = jnp.tanh(out)

        o_ref = out_refs[0]
        o_ref[...] = out.astype(o_ref.dtype)

        if emit_stats:
            # Mask out the zero-padded M rows so batch stats only see real rows.
            i = pl.program_id(0)
            rows = lax.broadcasted_iota(jnp.int32, (tm, 1), 0)
            valid = rows < (m_total - i * tm)
            om = jnp.where(valid, out, 0.0)
            s = jnp.sum(om, axis=0, keepdims=True)
            ss = jnp.sum(om * om, axis=0, keepdims=True)
            pad = jnp.zeros((6, om.shape[1]), jnp.float32)
            out_refs[1][...] = jnp.concatenate([s, ss, pad], axis=0)[None]

    return kernel


def fused_gemm(patches, wmat, bias_vec, *, scale_k=None, shift_k=None,
               act="none", tanh_out=False, emit_stats=False, out_dtype=_BF16):
    """out[:M, :Nc] = epilogue(act(patches*scale + shift) @ wmat + bias).

    M is blocked (parallel grid axis, double-buffered); K and N are whole,
    with N padded to a multiple of 128 for lane-dense MXU output / stores."""
    M, K = patches.shape
    Kb, Nc = wmat.shape
    assert Kb == K
    Kp = _round_up(K, 16)          # bf16 sublane packing alignment
    Npad = _round_up(Nc, 128)      # lane-dense output
    Mp = _round_up(M, 128)
    TM = _choose_tm(Mp)
    grid_m = Mp // TM
    fuse_bn = scale_k is not None

    a = jnp.pad(patches.astype(_BF16), ((0, Mp - M), (0, Kp - K)))
    b = jnp.pad(wmat.astype(_BF16), ((0, Kp - K), (0, Npad - Nc)))
    bias_row = jnp.pad(bias_vec.astype(jnp.float32), (0, Npad - Nc)).reshape(1, Npad)

    in_arrays = [a, b, bias_row]
    in_specs = [
        pl.BlockSpec((TM, Kp), lambda i: (i, 0)),
        _const_spec((Kp, Npad), lambda i: (0, 0)),
        _const_spec((1, Npad), lambda i: (0, 0)),
    ]
    if fuse_bn:
        sc = jnp.pad(scale_k.astype(jnp.float32), (0, Kp - K),
                     constant_values=1.0).reshape(1, Kp)
        sh = jnp.pad(shift_k.astype(jnp.float32), (0, Kp - K)).reshape(1, Kp)
        in_arrays += [sc, sh]
        in_specs += [_const_spec((1, Kp), lambda i: (0, 0)),
                     _const_spec((1, Kp), lambda i: (0, 0))]

    kernel = _make_gemm_kernel(act, fuse_bn, tanh_out, emit_stats, M, TM)

    out_struct = jax.ShapeDtypeStruct((Mp, Npad), out_dtype)
    out_spec = pl.BlockSpec((TM, Npad), lambda i: (i, 0))
    if emit_stats:
        out_shape = (out_struct, jax.ShapeDtypeStruct((grid_m, 8, Npad), jnp.float32))
        out_specs = (out_spec, pl.BlockSpec((1, 8, Npad), lambda i: (i, 0, 0)))
    else:
        out_shape = out_struct
        out_specs = out_spec

    res = pl.pallas_call(
        kernel,
        grid=(grid_m,),
        out_shape=out_shape,
        in_specs=in_specs,
        out_specs=out_specs,
        compiler_params=pltpu.CompilerParams(dimension_semantics=("parallel",)),
    )(*in_arrays)

    if emit_stats:
        out, stats_raw = res
        stats = jnp.sum(stats_raw, axis=0)[:2]        # (2, Npad): [sum, sum_sq]
        return out, stats
    return res, None


# -------------------------- BatchNorm scalar glue ----------------------------

def _bn_scale_shift(stats, count, gamma, beta, eps=1e-5):
    """Training-mode BatchNorm2d (biased variance) -> per-channel scale/shift."""
    mean = stats[0] / count
    var = jnp.maximum(stats[1] / count - mean * mean, 0.0)
    scale = gamma * lax.rsqrt(var + eps)
    shift = beta - mean * scale
    return scale, shift


def _bn_pad_value(scale, shift):
    # Per-channel v such that v*scale + shift == 0: reproduces the consumer
    # conv's zero-padding of the (deferred) BN'd activation inside the kernel.
    return jnp.where(jnp.abs(scale) > 1e-12, -shift / scale, 0.0)


# --------------------------- convolution lowering ---------------------------

def _im2col(x, k, stride, pad, pad_vec=None):
    """k x k patch extraction. Returns [N*Ho*Wo, k*k*C] in (kh, kw, C) order.
    `pad_vec` (per-channel) is used as the padding value (see _bn_pad_value)."""
    N, H, W, C = x.shape
    Hp, Wp = H + 2 * pad, W + 2 * pad
    if pad > 0:
        if pad_vec is None:
            xp = jnp.pad(x, ((0, 0), (pad, pad), (pad, pad), (0, 0)))
        else:
            xp = jnp.broadcast_to(pad_vec.astype(x.dtype), (N, Hp, Wp, C))
            xp = lax.dynamic_update_slice(xp, x, (0, pad, pad, 0))
    else:
        xp = x
    Ho = (Hp - k) // stride + 1
    Wo = (Wp - k) // stride + 1
    cols = []
    for kh in range(k):
        for kw in range(k):
            cols.append(xp[:, kh:kh + stride * (Ho - 1) + 1:stride,
                              kw:kw + stride * (Wo - 1) + 1:stride, :])
    p = jnp.stack(cols, axis=3)                      # [N, Ho, Wo, k*k, C]
    return p.reshape(N * Ho * Wo, k * k * C), (N, Ho, Wo)


def conv2d_s2(x, w, *, bias=None, act="none", scale=None, shift=None,
              with_stats=False, out_dtype=_BF16):
    """nn.Conv2d(Cin, Cout, k=4, s=2, p=1); w: [Cout, Cin, 4, 4].  The previous
    layer's BatchNorm (scale/shift) and the LeakyReLU/ReLU are fused into the
    GEMM's A-path; optionally emits BN batch stats for the layer's own BN."""
    Cout = w.shape[0]
    pad_vec = None if scale is None else _bn_pad_value(scale, shift)
    patches, (N, Ho, Wo) = _im2col(x, 4, 2, 1, pad_vec)
    wmat = jnp.transpose(w, (2, 3, 1, 0)).reshape(-1, Cout)   # (kh,kw,Cin) x Cout
    bvec = jnp.zeros((Cout,), jnp.float32) if bias is None else bias.astype(jnp.float32)
    sk = None if scale is None else jnp.tile(scale, 16)
    hk = None if shift is None else jnp.tile(shift, 16)

    out, stats = fused_gemm(patches, wmat, bvec, scale_k=sk, shift_k=hk,
                            act=act, emit_stats=with_stats, out_dtype=out_dtype)
    M = N * Ho * Wo
    y = out[:M, :Cout].reshape(N, Ho, Wo, Cout)
    if with_stats:
        return y, stats[:, :Cout], M
    return y


# sub-pixel tap map: (output parity, 3x3 window offset) -> transpose-conv tap index
_TAP = {(0, 0): 3, (0, 1): 1, (1, 1): 2, (1, 2): 0}


def _subpixel_weight(wt):
    """[9*Cin, 4*Cout] sub-pixel weight for ConvTranspose2d(k=4, s=2, p=1);
    columns ordered (parity p = 2*py + px, Cout)."""
    Cin, Cout = wt.shape[0], wt.shape[1]
    wbig = jnp.zeros((3, 3, Cin, 4, Cout), wt.dtype)
    for py in range(2):
        for wr in range(3):
            ky = _TAP.get((py, wr))
            if ky is None:
                continue
            for px in range(2):
                for wc in range(3):
                    kx = _TAP.get((px, wc))
                    if kx is None:
                        continue
                    wbig = wbig.at[wr, wc, :, py * 2 + px, :].set(wt[:, :, ky, kx])
    return wbig.reshape(9 * Cin, 4 * Cout)


def conv_transpose2d_s2(x, wt, *, bias=None, act="relu", scale=None, shift=None,
                        tanh_out=False, with_stats=False, out_dtype=_BF16):
    """nn.ConvTranspose2d(Cin, Cout, k=4, s=2, p=1); wt: [Cin, Cout, 4, 4].
    One GEMM over a 3x3/stride-1 im2col with the 4 output parities packed in
    the lane dim; previous BN + ReLU fused in the A-path; bias/tanh epilogue."""
    N, H, W, Cin = x.shape
    Cout = wt.shape[1]
    pad_vec = None if scale is None else _bn_pad_value(scale, shift)
    patches, _ = _im2col(x, 3, 1, 1, pad_vec)                 # [N*H*W, 9*Cin]
    wbig = _subpixel_weight(wt)                               # [9*Cin, 4*Cout]
    if bias is None:
        bvec = jnp.zeros((4 * Cout,), jnp.float32)
    else:
        bvec = jnp.tile(bias.astype(jnp.float32), 4)          # (parity, co) layout
    sk = None if scale is None else jnp.tile(scale, 9)
    hk = None if shift is None else jnp.tile(shift, 9)

    out, stats = fused_gemm(patches, wbig, bvec, scale_k=sk, shift_k=hk,
                            act=act, tanh_out=tanh_out, emit_stats=with_stats,
                            out_dtype=out_dtype)
    M = N * H * W
    o = out[:M, :4 * Cout].reshape(N, H, W, 2, 2, Cout)       # (..., py, px, C)
    # TODO(synk): fuse this parity de-interleave into the consumer's im2col.
    o = jnp.transpose(o, (0, 1, 3, 2, 4, 5)).reshape(N, 2 * H, 2 * W, Cout)
    if with_stats:
        s = stats[:, :4 * Cout].reshape(2, 4, Cout).sum(axis=1)   # (2, Cout)
        return o, s, N * (2 * H) * (2 * W)
    return o


# ------------------------------ UnetGenerator -------------------------------
# UnetGenerator(input_nc, output_nc, num_downs=5, ngf, norm_layer=BatchNorm2d):
# with BatchNorm2d every inner conv has bias=False; only the outermost
# ConvTranspose2d has bias=True.

def init_params(key, input_nc=3, output_nc=3, ngf=8):
    def nrm(k, shape):
        return 0.1 * jax.random.normal(k, shape, jnp.float32)

    ks = jax.random.split(key, 11)
    p = {
        # down convs: Conv2d weight [Cout, Cin, 4, 4]
        "d1_w": nrm(ks[0], (ngf, input_nc, 4, 4)),
        "d2_w": nrm(ks[1], (ngf * 2, ngf, 4, 4)),
        "d3_w": nrm(ks[2], (ngf * 4, ngf * 2, 4, 4)),
        "d4_w": nrm(ks[3], (ngf * 8, ngf * 4, 4, 4)),
        "d5_w": nrm(ks[4], (ngf * 8, ngf * 8, 4, 4)),
        # up convs: ConvTranspose2d weight [Cin, Cout, 4, 4]
        "u5_w": nrm(ks[5], (ngf * 8, ngf * 8, 4, 4)),
        "u4_w": nrm(ks[6], (ngf * 16, ngf * 4, 4, 4)),
        "u3_w": nrm(ks[7], (ngf * 8, ngf * 2, 4, 4)),
        "u2_w": nrm(ks[8], (ngf * 4, ngf, 4, 4)),
        "u1_w": nrm(ks[9], (ngf * 2, output_nc, 4, 4)),
        "u1_b": nrm(ks[10], (output_nc,)),
    }
    # BatchNorm affine params (PyTorch default init: weight=1, bias=0)
    for name, c in [("bn_d2", ngf * 2), ("bn_d3", ngf * 4), ("bn_d4", ngf * 8),
                    ("bn_u5", ngf * 8), ("bn_u4", ngf * 4),
                    ("bn_u3", ngf * 2), ("bn_u2", ngf)]:
        p[name + "_g"] = jnp.ones((c,), jnp.float32)
        p[name + "_b"] = jnp.zeros((c,), jnp.float32)
    return p


def unet_generator_forward(params, x_nchw):
    p = params
    x = jnp.transpose(x_nchw, (0, 2, 3, 1)).astype(_BF16)     # NCHW -> NHWC, bf16

    # ----- down path: previous BN + LeakyReLU fused into each conv's GEMM -----
    x1 = conv2d_s2(x, p["d1_w"])                                   # outermost down
    r2, st2, c2 = conv2d_s2(x1, p["d2_w"], act="lrelu", with_stats=True)
    sc2, sh2 = _bn_scale_shift(st2, c2, p["bn_d2_g"], p["bn_d2_b"])
    r3, st3, c3 = conv2d_s2(r2, p["d3_w"], act="lrelu",
                            scale=sc2, shift=sh2, with_stats=True)
    sc3, sh3 = _bn_scale_shift(st3, c3, p["bn_d3_g"], p["bn_d3_b"])
    r4, st4, c4 = conv2d_s2(r3, p["d4_w"], act="lrelu",
                            scale=sc3, shift=sh3, with_stats=True)
    sc4, sh4 = _bn_scale_shift(st4, c4, p["bn_d4_g"], p["bn_d4_b"])

    # ----- innermost block -----
    h5 = conv2d_s2(r4, p["d5_w"], act="lrelu", scale=sc4, shift=sh4)   # no BN after
    ru5, stu5, cu5 = conv_transpose2d_s2(h5, p["u5_w"], act="relu", with_stats=True)
    scu5, shu5 = _bn_scale_shift(stu5, cu5, p["bn_u5_g"], p["bn_u5_b"])

    # ----- up path: skips concat *raw* activations; BN applied in the consumer -----
    s5 = jnp.concatenate([r4, ru5], axis=-1)
    sc_s5 = jnp.concatenate([sc4, scu5]); sh_s5 = jnp.concatenate([sh4, shu5])
    ru4, stu4, cu4 = conv_transpose2d_s2(s5, p["u4_w"], act="relu",
                                         scale=sc_s5, shift=sh_s5, with_stats=True)
    scu4, shu4 = _bn_scale_shift(stu4, cu4, p["bn_u4_g"], p["bn_u4_b"])

    s4 = jnp.concatenate([r3, ru4], axis=-1)
    sc_s4 = jnp.concatenate([sc3, scu4]); sh_s4 = jnp.concatenate([sh3, shu4])
    ru3, stu3, cu3 = conv_transpose2d_s2(s4, p["u3_w"], act="relu",
                                         scale=sc_s4, shift=sh_s4, with_stats=True)
    scu3, shu3 = _bn_scale_shift(stu3, cu3, p["bn_u3_g"], p["bn_u3_b"])

    s3 = jnp.concatenate([r2, ru3], axis=-1)
    sc_s3 = jnp.concatenate([sc2, scu3]); sh_s3 = jnp.concatenate([sh2, shu3])
    ru2, stu2, cu2 = conv_transpose2d_s2(s3, p["u2_w"], act="relu",
                                         scale=sc_s3, shift=sh_s3, with_stats=True)
    scu2, shu2 = _bn_scale_shift(stu2, cu2, p["bn_u2_g"], p["bn_u2_b"])

    # ----- outermost up: ReLU -> ConvTranspose2d(bias=True) -> Tanh (all fused) -----
    s2 = jnp.concatenate([x1, ru2], axis=-1)
    ngf = x1.shape[-1]
    sc_s2 = jnp.concatenate([jnp.ones((ngf,), jnp.float32), scu2])   # x1 has no BN
    sh_s2 = jnp.concatenate([jnp.zeros((ngf,), jnp.float32), shu2])
    out = conv_transpose2d_s2(s2, p["u1_w"], bias=p["u1_b"], act="relu",
                              scale=sc_s2, shift=sh_s2, tanh_out=True,
                              out_dtype=jnp.float32)
    return jnp.transpose(out, (0, 3, 1, 2))                           # NHWC -> NCHW


if __name__ == "__main__":
    key = jax.random.PRNGKey(0)
    k_param, k_in = jax.random.split(key)

    # UnetGenerator(input_nc=3, output_nc=3, num_downs=5, ngf=8)
    # input spatial must be divisible by 2**num_downs -> 32x32
    params = init_params(k_param, input_nc=3, output_nc=3, ngf=8)
    x = jax.random.normal(k_in, (2, 3, 32, 32), jnp.float32)          # NCHW like PyTorch

    fwd = jax.jit(unet_generator_forward)
    y = jax.block_until_ready(fwd(params, x))

    assert y.shape == (2, 3, 32, 32), y.shape
    assert bool(jnp.all(jnp.isfinite(y)))
    assert bool(jnp.all(jnp.abs(y) <= 1.0))                           # Tanh output range
    print("KERNEL_OK")
</pallas_src>

<mosaic_0001>
module attributes {stable_mosaic.version = 11 : i64} {
  func.func @kernel(%arg0: i32, %arg1: memref<256x48xbf16, #tpu.memory_space<vmem>>, %arg2: memref<48x128xbf16, #tpu.memory_space<vmem>>, %arg3: memref<1x128xf32, #tpu.memory_space<vmem>>, %arg4: memref<256x128xbf16, #tpu.memory_space<vmem>>) attributes {dimension_semantics = [#tpu.dimension_semantics<parallel>], iteration_bounds = array<i64: 2>, scalar_prefetch = 0 : i64, scratch_operands = 0 : i64, tpu.core_type = #tpu.core_type<tc>, window_params = [{transform_indices = @transform_0, window_bounds = array<i64: 256, 48>}, {pipeline_mode = #tpu.pipeline_mode<synchronous>, transform_indices = @transform_1, window_bounds = array<i64: 48, 128>}, {pipeline_mode = #tpu.pipeline_mode<synchronous>, transform_indices = @transform_2, window_bounds = array<i64: 1, 128>}, {transform_indices = @transform_3, window_bounds = array<i64: 256, 128>}]} {
    %c0 = arith.constant 0 : index
    %c0_0 = arith.constant 0 : index
    %0 = vector.load %arg1[%c0, %c0_0] : memref<256x48xbf16, #tpu.memory_space<vmem>>, vector<256x48xbf16>
    %c0_1 = arith.constant 0 : index
    %c0_2 = arith.constant 0 : index
    %1 = vector.load %arg2[%c0_1, %c0_2] : memref<48x128xbf16, #tpu.memory_space<vmem>>, vector<48x128xbf16>
    %cst = arith.constant dense<0.000000e+00> : vector<256x128xf32>
    %2 = tpu.matmul %0, %1, %cst {dimension_numbers = #tpu.dot_dimension_numbers<[1], [0], [0], [1], [0, 0, 1, 1], [], []>} : vector<256x48xbf16>, vector<48x128xbf16>, vector<256x128xf32> -> vector<256x128xf32>
    %c0_3 = arith.constant 0 : index
    %c0_4 = arith.constant 0 : index
    %3 = vector.load %arg3[%c0_3, %c0_4] : memref<1x128xf32, #tpu.memory_space<vmem>>, vector<1x128xf32>
    %4 = vector.broadcast %3 : vector<1x128xf32> to vector<256x128xf32>
    %5 = arith.addf %2, %4 : vector<256x128xf32>
    %6 = arith.truncf %5 : vector<256x128xf32> to vector<256x128xbf16>
    %c0_5 = arith.constant 0 : index
    %c0_6 = arith.constant 0 : index
    %7 = vector.load %arg4[%c0_5, %c0_6] : memref<256x128xbf16, #tpu.memory_space<vmem>>, vector<256x128xbf16>
    tpu.vector_store %arg4[%c0_5, %c0_6], %6 {strides = array<i32>} : memref<256x128xbf16, #tpu.memory_space<vmem>>, vector<256x128xbf16>,
    return
  }
  func.func @transform_0(%arg0: i32) -> (i32, i32) {
    %c0_i32 = arith.constant 0 : i32
    %c0_i32_0 = arith.constant 0 : i32
    return %arg0, %c0_i32 : i32, i32
  }
  func.func @transform_1(%arg0: i32) -> (i32, i32) {
    %c0_i32 = arith.constant 0 : i32
    %c0_i32_0 = arith.constant 0 : i32
    %c0_i32_1 = arith.constant 0 : i32
    return %c0_i32, %c0_i32_0 : i32, i32
  }
  func.func @transform_2(%arg0: i32) -> (i32, i32) {
    %c0_i32 = arith.constant 0 : i32
    %c0_i32_0 = arith.constant 0 : i32
    %c0_i32_1 = arith.constant 0 : i32
    return %c0_i32, %c0_i32_0 : i32, i32
  }
  func.func @transform_3(%arg0: i32) -> (i32, i32) {
    %c0_i32 = arith.constant 0 : i32
    %c0_i32_0 = arith.constant 0 : i32
    return %arg0, %c0_i32 : i32, i32
  }
}

module attributes {stable_mosaic.version = 11 : i64} {
  func.func @kernel(%arg0: i32, %arg1: memref<128x128xbf16, #tpu.memory_space<vmem>>, %arg2: memref<128x128xbf16, #tpu.memory_space<vmem>>, %arg3: memref<1x128xf32, #tpu.memory_space<vmem>>, %arg4: memref<128x128xbf16, #tpu.memory_space<vmem>>, %arg5: memref<1x8x128xf32, #tpu.memory_space<vmem>>) attributes {dimension_semantics = [#tpu.dimension_semantics<parallel>], iteration_bounds = array<i64: 1>, scalar_prefetch = 0 : i64, scratch_operands = 0 : i64, tpu.core_type = #tpu.core_type<tc>, window_params = [{transform_indices = @transform_0, window_bounds = array<i64: 128, 128>}, {pipeline_mode = #tpu.pipeline_mode<synchronous>, transform_indices = @transform_1, window_bounds = array<i64: 128, 128>}, {pipeline_mode = #tpu.pipeline_mode<synchronous>, transform_indices = @transform_2, window_bounds = array<i64: 1, 128>}, {transform_indices = @transform_3, window_bounds = array<i64: 128, 128>}, {transform_indices = @transform_4, window_bounds = array<i64: 1, 8, 128>}]} {
    %c0 = arith.constant 0 : index
    %c0_0 = arith.constant 0 : index
    %0 = vector.load %arg1[%c0, %c0_0] : memref<128x128xbf16, #tpu.memory_space<vmem>>, vector<128x128xbf16>
    %1 = arith.extf %0 : vector<128x128xbf16> to vector<128x128xf32>
    %cst = arith.constant 0.000000e+00 : f32
    %2 = vector.broadcast %cst : f32 to vector<128x128xf32>
    %3 = arith.cmpf oge, %1, %2 : vector<128x128xf32>
    %cst_1 = arith.constant 2.000000e-01 : f32
    %4 = vector.broadcast %cst_1 : f32 to vector<128x128xf32>
    %5 = arith.mulf %4, %1 : vector<128x128xf32>
    %6 = arith.select %3, %1, %5 : vector<128x128xi1>, vector<128x128xf32>
    %7 = arith.truncf %6 : vector<128x128xf32> to vector<128x128xbf16>
    %c0_2 = arith.constant 0 : index
    %c0_3 = arith.constant 0 : index
    %8 = vector.load %arg2[%c0_2, %c0_3] : memref<128x128xbf16, #tpu.memory_space<vmem>>, vector<128x128xbf16>
    %cst_4 = arith.constant dense<0.000000e+00> : vector<128x128xf32>
    %9 = tpu.matmul %7, %8, %cst_4 {dimension_numbers = #tpu.dot_dimension_numbers<[1], [0], [0], [1], [0, 0, 1, 1], [], []>} : vector<128x128xbf16>, vector<128x128xbf16>, vector<128x128xf32> -> vector<128x128xf32>
    %c0_5 = arith.constant 0 : index
    %c0_6 = arith.constant 0 : index
    %10 = vector.load %arg3[%c0_5, %c0_6] : memref<1x128xf32, #tpu.memory_space<vmem>>, vector<1x128xf32>
    %11 = vector.broadcast %10 : vector<1x128xf32> to vector<128x128xf32>
    %12 = arith.addf %9, %11 : vector<128x128xf32>
    %13 = arith.truncf %12 : vector<128x128xf32> to vector<128x128xbf16>
    %c0_7 = arith.constant 0 : index
    %c0_8 = arith.constant 0 : index
    %14 = vector.load %arg4[%c0_7, %c0_8] : memref<128x128xbf16, #tpu.memory_space<vmem>>, vector<128x128xbf16>
    tpu.vector_store %arg4[%c0_7, %c0_8], %13 {strides = array<i32>} : memref<128x128xbf16, #tpu.memory_space<vmem>>, vector<128x128xbf16>,
    %15 = tpu.iota {dimensions = array<i32: 0>} : vector<128x1xi32>
    %c128_i32 = arith.constant 128 : i32
    %16 = arith.muli %arg0, %c128_i32 : i32
    %c128_i32_9 = arith.constant 128 : i32
    %17 = arith.subi %c128_i32_9, %16 : i32
    %18 = vector.broadcast %17 : i32 to vector<128x1xi32>
    %19 = arith.cmpi slt, %15, %18 : vector<128x1xi32>
    %cst_10 = arith.constant 0.000000e+00 : f32
    %20 = vector.shape_cast %19 : vector<128x1xi1> to vector<128x1xi1>
    %21 = vector.broadcast %20 : vector<128x1xi1> to vector<128x128xi1>
    %22 = vector.broadcast %cst_10 : f32 to vector<128x128xf32>
    %23 = arith.select %21, %12, %22 : vector<128x128xi1>, vector<128x128xf32>
    %cst_11 = arith.constant dense<0.000000e+00> : vector<128xf32>
    %24 = vector.multi_reduction <add>, %23, %cst_11 [0] : vector<128x128xf32> to vector<128xf32>
    %25 = vector.shape_cast %24 : vector<128xf32> to vector<1x128xf32>
    %26 = arith.mulf %23, %23 : vector<128x128xf32>
    %cst_12 = arith.constant dense<0.000000e+00> : vector<128xf32>
    %27 = vector.multi_reduction <add>, %26, %cst_12 [0] : vector<128x128xf32> to vector<128xf32>
    %28 = vector.shape_cast %27 : vector<128xf32> to vector<1x128xf32>
    %cst_13 = arith.constant 0.000000e+00 : f32
    %29 = vector.broadcast %cst_13 : f32 to vector<6x128xf32>
    %30 = tpu.concatenate %25, %28, %29 in 0 : vector<1x128xf32>, vector<1x128xf32>, vector<6x128xf32> -> vector<8x128xf32>
    %31 = vector.shape_cast %30 : vector<8x128xf32> to vector<1x8x128xf32>
    %c0_14 = arith.constant 0 : index
    %c0_15 = arith.constant 0 : index
    %c0_16 = arith.constant 0 : index
    %32 = vector.load %arg5[%c0_14, %c0_15, %c0_16] : memref<1x8x128xf32, #tpu.memory_space<vmem>>, vector<1x8x128xf32>
    tpu.vector_store %arg5[%c0_14, %c0_15, %c0_16], %31 {strides = array<i32>} : memref<1x8x128xf32, #tpu.memory_space<vmem>>, vector<1x8x128xf32>,
    return
  }
  func.func @transform_0(%arg0: i32) -> (i32, i32) {
    %c0_i32 = arith.constant 0 : i32
    %c0_i32_0 = arith.constant 0 : i32
    return %arg0, %c0_i32 : i32, i32
  }
  func.func @transform_1(%arg0: i32) -> (i32, i32) {
    %c0_i32 = arith.constant 0 : i32
    %c0_i32_0 = arith.constant 0 : i32
    %c0_i32_1 = arith.constant 0 : i32
    return %c0_i32, %c0_i32_0 : i32, i32
  }
  func.func @transform_2(%arg0: i32) -> (i32, i32) {
    %c0_i32 = arith.constant 0 : i32
    %c0_i32_0 = arith.constant 0 : i32
    %c0_i32_1 = arith.constant 0 : i32
    return %c0_i32, %c0_i32_0 : i32, i32
  }
  func.func @transform_3(%arg0: i32) -> (i32, i32) {
    %c0_i32 = arith.constant 0 : i32
    %c0_i32_0 = arith.constant 0 : i32
    return %arg0, %c0_i32 : i32, i32
  }
  func.func @transform_4(%arg0: i32) -> (i32, i32, i32) {
    %c0_i32 = arith.constant 0 : i32
    %c0_i32_0 = arith.constant 0 : i32
    %c0_i32_1 = arith.constant 0 : i32
    return %arg0, %c0_i32, %c0_i32_0 : i32, i32, i32
  }
}

module attributes {stable_mosaic.version = 11 : i64} {
  func.func @kernel(%arg0: i32, %arg1: memref<128x256xbf16, #tpu.memory_space<vmem>>, %arg2: memref<256x128xbf16, #tpu.memory_space<vmem>>, %arg3: memref<1x128xf32, #tpu.memory_space<vmem>>, %arg4: memref<1x256xf32, #tpu.memory_space<vmem>>, %arg5: memref<1x256xf32, #tpu.memory_space<vmem>>, %arg6: memref<128x128xbf16, #tpu.memory_space<vmem>>, %arg7: memref<1x8x128xf32, #tpu.memory_space<vmem>>) attributes {dimension_semantics = [#tpu.dimension_semantics<parallel>], iteration_bounds = array<i64: 1>, scalar_prefetch = 0 : i64, scratch_operands = 0 : i64, tpu.core_type = #tpu.core_type<tc>, window_params = [{transform_indices = @transform_0, window_bounds = array<i64: 128, 256>}, {pipeline_mode = #tpu.pipeline_mode<synchronous>, transform_indices = @transform_1, window_bounds = array<i64: 256, 128>}, {pipeline_mode = #tpu.pipeline_mode<synchronous>, transform_indices = @transform_2, window_bounds = array<i64: 1, 128>}, {pipeline_mode = #tpu.pipeline_mode<synchronous>, transform_indices = @transform_3, window_bounds = array<i64: 1, 256>}, {pipeline_mode = #tpu.pipeline_mode<synchronous>, transform_indices = @transform_4, window_bounds = array<i64: 1, 256>}, {transform_indices = @transform_5, window_bounds = array<i64: 128, 128>}, {transform_indices = @transform_6, window_bounds = array<i64: 1, 8, 128>}]} {
    %c0 = arith.constant 0 : index
    %c0_0 = arith.constant 0 : index
    %0 = vector.load %arg1[%c0, %c0_0] : memref<128x256xbf16, #tpu.memory_space<vmem>>, vector<128x256xbf16>
    %1 = arith.extf %0 : vector<128x256xbf16> to vector<128x256xf32>
    %c0_1 = arith.constant 0 : index
    %c0_2 = arith.constant 0 : index
    %2 = vector.load %arg4[%c0_1, %c0_2] : memref<1x256xf32, #tpu.memory_space<vmem>>, vector<1x256xf32>
    %3 = vector.broadcast %2 : vector<1x256xf32> to vector<128x256xf32>
    %4 = arith.mulf %1, %3 : vector<128x256xf32>
    %c0_3 = arith.constant 0 : index
    %c0_4 = arith.constant 0 : index
    %5 = vector.load %arg5[%c0_3, %c0_4] : memref<1x256xf32, #tpu.memory_space<vmem>>, vector<1x256xf32>
    %6 = vector.broadcast %5 : vector<1x256xf32> to vector<128x256xf32>
    %7 = arith.addf %4, %6 : vector<128x256xf32>
    %cst = arith.constant 0.000000e+00 : f32
    %8 = vector.broadcast %cst : f32 to vector<128x256xf32>
    %9 = arith.cmpf oge, %7, %8 : vector<128x256xf32>
    %cst_5 = arith.constant 2.000000e-01 : f32
    %10 = vector.broadcast %cst_5 : f32 to vector<128x256xf32>
    %11 = arith.mulf %10, %7 : vector<128x256xf32>
    %12 = arith.select %9, %7, %11 : vector<128x256xi1>, vector<128x256xf32>
    %13 = arith.truncf %12 : vector<128x256xf32> to vector<128x256xbf16>
    %c0_6 = arith.constant 0 : index
    %c0_7 = arith.constant 0 : index
    %14 = vector.load %arg2[%c0_6, %c0_7] : memref<256x128xbf16, #tpu.memory_space<vmem>>, vector<256x128xbf16>
    %cst_8 = arith.constant dense<0.000000e+00> : vector<128x128xf32>
    %15 = tpu.matmul %13, %14, %cst_8 {dimension_numbers = #tpu.dot_dimension_numbers<[1], [0], [0], [1], [0, 0, 1, 1], [], []>} : vector<128x256xbf16>, vector<256x128xbf16>, vector<128x128xf32> -> vector<128x128xf32>
    %c0_9 = arith.constant 0 : index
    %c0_10 = arith.constant 0 : index
    %16 = vector.load %arg3[%c0_9, %c0_10] : memref<1x128xf32, #tpu.memory_space<vmem>>, vector<1x128xf32>
    %17 = vector.broadcast %16 : vector<1x128xf32> to vector<128x128xf32>
    %18 = arith.addf %15, %17 : vector<128x128xf32>
    %19 = arith.truncf %18 : vector<128x128xf32> to vector<128x128xbf16>
    %c0_11 = arith.constant 0 : index
    %c0_12 = arith.constant 0 : index
    %20 = vector.load %arg6[%c0_11, %c0_12] : memref<128x128xbf16, #tpu.memory_space<vmem>>, vector<128x128xbf16>
    tpu.vector_store %arg6[%c0_11, %c0_12], %19 {strides = array<i32>} : memref<128x128xbf16, #tpu.memory_space<vmem>>, vector<128x128xbf16>,
    %21 = tpu.iota {dimensions = array<i32: 0>} : vector<128x1xi32>
    %c128_i32 = arith.constant 128 : i32
    %22 = arith.muli %arg0, %c128_i32 : i32
    %c32_i32 = arith.constant 32 : i32
    %23 = arith.subi %c32_i32, %22 : i32
    %24 = vector.broadcast %23 : i32 to vector<128x1xi32>
    %25 = arith.cmpi slt, %21, %24 : vector<128x1xi32>
    %cst_13 = arith.constant 0.000000e+00 : f32
    %26 = vector.shape_cast %25 : vector<128x1xi1> to vector<128x1xi1>
    %27 = vector.broadcast %26 : vector<128x1xi1> to vector<128x128xi1>
    %28 = vector.broadcast %cst_13 : f32 to vector<128x128xf32>
    %29 = arith.select %27, %18, %28 : vector<128x128xi1>, vector<128x128xf32>
    %cst_14 = arith.constant dense<0.000000e+00> : vector<128xf32>
    %30 = vector.multi_reduction <add>, %29, %cst_14 [0] : vector<128x128xf32> to vector<128xf32>
    %31 = vector.shape_cast %30 : vector<128xf32> to vector<1x128xf32>
    %32 = arith.mulf %29, %29 : vector<128x128xf32>
    %cst_15 = arith.constant dense<0.000000e+00> : vector<128xf32>
    %33 = vector.multi_reduction <add>, %32, %cst_15 [0] : vector<128x128xf32> to vector<128xf32>
    %34 = vector.shape_cast %33 : vector<128xf32> to vector<1x128xf32>
    %cst_16 = arith.constant 0.000000e+00 : f32
    %35 = vector.broadcast %cst_16 : f32 to vector<6x128xf32>
    %36 = tpu.concatenate %31, %34, %35 in 0 : vector<1x128xf32>, vector<1x128xf32>, vector<6x128xf32> -> vector<8x128xf32>
    %37 = vector.shape_cast %36 : vector<8x128xf32> to vector<1x8x128xf32>
    %c0_17 = arith.constant 0 : index
    %c0_18 = arith.constant 0 : index
    %c0_19 = arith.constant 0 : index
    %38 = vector.load %arg7[%c0_17, %c0_18, %c0_19] : memref<1x8x128xf32, #tpu.memory_space<vmem>>, vector<1x8x128xf32>
    tpu.vector_store %arg7[%c0_17, %c0_18, %c0_19], %37 {strides = array<i32>} : memref<1x8x128xf32, #tpu.memory_space<vmem>>, vector<1x8x128xf32>,
    return
  }
  func.func @transform_0(%arg0: i32) -> (i32, i32) {
    %c0_i32 = arith.constant 0 : i32
    %c0_i32_0 = arith.constant 0 : i32
    return %arg0, %c0_i32 : i32, i32
  }
  func.func @transform_1(%arg0: i32) -> (i32, i32) {
    %c0_i32 = arith.constant 0 : i32
    %c0_i32_0 = arith.constant 0 : i32
    %c0_i32_1 = arith.constant 0 : i32
    return %c0_i32, %c0_i32_0 : i32, i32
  }
  func.func @transform_2(%arg0: i32) -> (i32, i32) {
    %c0_i32 = arith.constant 0 : i32
    %c0_i32_0 = arith.constant 0 : i32
    %c0_i32_1 = arith.constant 0 : i32
    return %c0_i32, %c0_i32_0 : i32, i32
  }
  func.func @transform_3(%arg0: i32) -> (i32, i32) {
    %c0_i32 = arith.constant 0 : i32
    %c0_i32_0 = arith.constant 0 : i32
    %c0_i32_1 = arith.constant 0 : i32
    return %c0_i32, %c0_i32_0 : i32, i32
  }
  func.func @transform_4(%arg0: i32) -> (i32, i32) {
    %c0_i32 = arith.constant 0 : i32
    %c0_i32_0 = arith.constant 0 : i32
    %c0_i32_1 = arith.constant 0 : i32
    return %c0_i32, %c0_i32_0 : i32, i32
  }
  func.func @transform_5(%arg0: i32) -> (i32, i32) {
    %c0_i32 = arith.constant 0 : i32
    %c0_i32_0 = arith.constant 0 : i32
    return %arg0, %c0_i32 : i32, i32
  }
  func.func @transform_6(%arg0: i32) -> (i32, i32, i32) {
    %c0_i32 = arith.constant 0 : i32
    %c0_i32_0 = arith.constant 0 : i32
    %c0_i32_1 = arith.constant 0 : i32
    return %arg0, %c0_i32, %c0_i32_0 : i32, i32, i32
  }
}

module attributes {stable_mosaic.version = 11 : i64} {
  func.func @kernel(%arg0: i32, %arg1: memref<128x512xbf16, #tpu.memory_space<vmem>>, %arg2: memref<512x128xbf16, #tpu.memory_space<vmem>>, %arg3: memref<1x128xf32, #tpu.memory_space<vmem>>, %arg4: memref<1x512xf32, #tpu.memory_space<vmem>>, %arg5: memref<1x512xf32, #tpu.memory_space<vmem>>, %arg6: memref<128x128xbf16, #tpu.memory_space<vmem>>, %arg7: memref<1x8x128xf32, #tpu.memory_space<vmem>>) attributes {dimension_semantics = [#tpu.dimension_semantics<parallel>], iteration_bounds = array<i64: 1>, scalar_prefetch = 0 : i64, scratch_operands = 0 : i64, tpu.core_type = #tpu.core_type<tc>, window_params = [{transform_indices = @transform_0, window_bounds = array<i64: 128, 512>}, {pipeline_mode = #tpu.pipeline_mode<synchronous>, transform_indices = @transform_1, window_bounds = array<i64: 512, 128>}, {pipeline_mode = #tpu.pipeline_mode<synchronous>, transform_indices = @transform_2, window_bounds = array<i64: 1, 128>}, {pipeline_mode = #tpu.pipeline_mode<synchronous>, transform_indices = @transform_3, window_bounds = array<i64: 1, 512>}, {pipeline_mode = #tpu.pipeline_mode<synchronous>, transform_indices = @transform_4, window_bounds = array<i64: 1, 512>}, {transform_indices = @transform_5, window_bounds = array<i64: 128, 128>}, {transform_indices = @transform_6, window_bounds = array<i64: 1, 8, 128>}]} {
    %c0 = arith.constant 0 : index
    %c0_0 = arith.constant 0 : index
    %0 = vector.load %arg1[%c0, %c0_0] : memref<128x512xbf16, #tpu.memory_space<vmem>>, vector<128x512xbf16>
    %1 = arith.extf %0 : vector<128x512xbf16> to vector<128x512xf32>
    %c0_1 = arith.constant 0 : index
    %c0_2 = arith.constant 0 : index
    %2 = vector.load %arg4[%c0_1, %c0_2] : memref<1x512xf32, #tpu.memory_space<vmem>>, vector<1x512xf32>
    %3 = vector.broadcast %2 : vector<1x512xf32> to vector<128x512xf32>
    %4 = arith.mulf %1, %3 : vector<128x512xf32>
    %c0_3 = arith.constant 0 : index
    %c0_4 = arith.constant 0 : index
    %5 = vector.load %arg5[%c0_3, %c0_4] : memref<1x512xf32, #tpu.memory_space<vmem>>, vector<1x512xf32>
    %6 = vector.broadcast %5 : vector<1x512xf32> to vector<128x512xf32>
    %7 = arith.addf %4, %6 : vector<128x512xf32>
    %cst = arith.constant 0.000000e+00 : f32
    %8 = vector.broadcast %cst : f32 to vector<128x512xf32>
    %9 = arith.cmpf oge, %7, %8 : vector<128x512xf32>
    %cst_5 = arith.constant 2.000000e-01 : f32
    %10 = vector.broadcast %cst_5 : f32 to vector<128x512xf32>
    %11 = arith.mulf %10, %7 : vector<128x512xf32>
    %12 = arith.select %9, %7, %11 : vector<128x512xi1>, vector<128x512xf32>
    %13 = arith.truncf %12 : vector<128x512xf32> to vector<128x512xbf16>
    %c0_6 = arith.constant 0 : index
    %c0_7 = arith.constant 0 : index
    %14 = vector.load %arg2[%c0_6, %c0_7] : memref<512x128xbf16, #tpu.memory_space<vmem>>, vector<512x128xbf16>
    %cst_8 = arith.constant dense<0.000000e+00> : vector<128x128xf32>
    %15 = tpu.matmul %13, %14, %cst_8 {dimension_numbers = #tpu.dot_dimension_numbers<[1], [0], [0], [1], [0, 0, 1, 1], [], []>} : vector<128x512xbf16>, vector<512x128xbf16>, vector<128x128xf32> -> vector<128x128xf32>
    %c0_9 = arith.constant 0 : index
    %c0_10 = arith.constant 0 : index
    %16 = vector.load %arg3[%c0_9, %c0_10] : memref<1x128xf32, #tpu.memory_space<vmem>>, vector<1x128xf32>
    %17 = vector.broadcast %16 : vector<1x128xf32> to vector<128x128xf32>
    %18 = arith.addf %15, %17 : vector<128x128xf32>
    %19 = arith.truncf %18 : vector<128x128xf32> to vector<128x128xbf16>
    %c0_11 = arith.constant 0 : index
    %c0_12 = arith.constant 0 : index
    %20 = vector.load %arg6[%c0_11, %c0_12] : memref<128x128xbf16, #tpu.memory_space<vmem>>, vector<128x128xbf16>
    tpu.vector_store %arg6[%c0_11, %c0_12], %19 {strides = array<i32>} : memref<128x128xbf16, #tpu.memory_space<vmem>>, vector<128x128xbf16>,
    %21 = tpu.iota {dimensions = array<i32: 0>} : vector<128x1xi32>
    %c128_i32 = arith.constant 128 : i32
    %22 = arith.muli %arg0, %c128_i32 : i32
    %c8_i32 = arith.constant 8 : i32
    %23 = arith.subi %c8_i32, %22 : i32
    %24 = vector.broadcast %23 : i32 to vector<128x1xi32>
    %25 = arith.cmpi slt, %21, %24 : vector<128x1xi32>
    %cst_13 = arith.constant 0.000000e+00 : f32
    %26 = vector.shape_cast %25 : vector<128x1xi1> to vector<128x1xi1>
    %27 = vector.broadcast %26 : vector<128x1xi1> to vector<128x128xi1>
    %28 = vector.broadcast %cst_13 : f32 to vector<128x128xf32>
    %29 = arith.select %27, %18, %28 : vector<128x128xi1>, vector<128x128xf32>
    %cst_14 = arith.constant dense<0.000000e+00> : vector<128xf32>
    %30 = vector.multi_reduction <add>, %29, %cst_14 [0] : vector<128x128xf32> to vector<128xf32>
    %31 = vector.shape_cast %30 : vector<128xf32> to vector<1x128xf32>
    %32 = arith.mulf %29, %29 : vector<128x128xf32>
    %cst_15 = arith.constant dense<0.000000e+00> : vector<128xf32>
    %33 = vector.multi_reduction <add>, %32, %cst_15 [0] : vector<128x128xf32> to vector<128xf32>
    %34 = vector.shape_cast %33 : vector<128xf32> to vector<1x128xf32>
    %cst_16 = arith.constant 0.000000e+00 : f32
    %35 = vector.broadcast %cst_16 : f32 to vector<6x128xf32>
    %36 = tpu.concatenate %31, %34, %35 in 0 : vector<1x128xf32>, vector<1x128xf32>, vector<6x128xf32> -> vector<8x128xf32>
    %37 = vector.shape_cast %36 : vector<8x128xf32> to vector<1x8x128xf32>
    %c0_17 = arith.constant 0 : index
    %c0_18 = arith.constant 0 : index
    %c0_19 = arith.constant 0 : index
    %38 = vector.load %arg7[%c0_17, %c0_18, %c0_19] : memref<1x8x128xf32, #tpu.memory_space<vmem>>, vector<1x8x128xf32>
    tpu.vector_store %arg7[%c0_17, %c0_18, %c0_19], %37 {strides = array<i32>} : memref<1x8x128xf32, #tpu.memory_space<vmem>>, vector<1x8x128xf32>,
    return
  }
  func.func @transform_0(%arg0: i32) -> (i32, i32) {
    %c0_i32 = arith.constant 0 : i32
    %c0_i32_0 = arith.constant 0 : i32
    return %arg0, %c0_i32 : i32, i32
  }
  func.func @transform_1(%arg0: i32) -> (i32, i32) {
    %c0_i32 = arith.constant 0 : i32
    %c0_i32_0 = arith.constant 0 : i32
    %c0_i32_1 = arith.constant 0 : i32
    return %c0_i32, %c0_i32_0 : i32, i32
  }
  func.func @transform_2(%arg0: i32) -> (i32, i32) {
    %c0_i32 = arith.constant 0 : i32
    %c0_i32_0 = arith.constant 0 : i32
    %c0_i32_1 = arith.constant 0 : i32
    return %c0_i32, %c0_i32_0 : i32, i32
  }
  func.func @transform_3(%arg0: i32) -> (i32, i32) {
    %c0_i32 = arith.constant 0 : i32
    %c0_i32_0 = arith.constant 0 : i32
    %c0_i32_1 = arith.constant 0 : i32
    return %c0_i32, %c0_i32_0 : i32, i32
  }
  func.func @transform_4(%arg0: i32) -> (i32, i32) {
    %c0_i32 = arith.constant 0 : i32
    %c0_i32_0 = arith.constant 0 : i32
    %c0_i32_1 = arith.constant 0 : i32
    return %c0_i32, %c0_i32_0 : i32, i32
  }
  func.func @transform_5(%arg0: i32) -> (i32, i32) {
    %c0_i32 = arith.constant 0 : i32
    %c0_i32_0 = arith.constant 0 : i32
    return %arg0, %c0_i32 : i32, i32
  }
  func.func @transform_6(%arg0: i32) -> (i32, i32, i32) {
    %c0_i32 = arith.constant 0 : i32
    %c0_i32_0 = arith.constant 0 : i32
    %c0_i32_1 = arith.constant 0 : i32
    return %arg0, %c0_i32, %c0_i32_0 : i32, i32, i32
  }
}

module attributes {stable_mosaic.version = 11 : i64} {
  func.func @kernel(%arg0: i32, %arg1: memref<128x1024xbf16, #tpu.memory_space<vmem>>, %arg2: memref<1024x128xbf16, #tpu.memory_space<vmem>>, %arg3: memref<1x128xf32, #tpu.memory_space<vmem>>, %arg4: memref<1x1024xf32, #tpu.memory_space<vmem>>, %arg5: memref<1x1024xf32, #tpu.memory_space<vmem>>, %arg6: memref<128x128xbf16, #tpu.memory_space<vmem>>) attributes {dimension_semantics = [#tpu.dimension_semantics<parallel>], iteration_bounds = array<i64: 1>, scalar_prefetch = 0 : i64, scratch_operands = 0 : i64, tpu.core_type = #tpu.core_type<tc>, window_params = [{transform_indices = @transform_0, window_bounds = array<i64: 128, 1024>}, {pipeline_mode = #tpu.pipeline_mode<synchronous>, transform_indices = @transform_1, window_bounds = array<i64: 1024, 128>}, {pipeline_mode = #tpu.pipeline_mode<synchronous>, transform_indices = @transform_2, window_bounds = array<i64: 1, 128>}, {pipeline_mode = #tpu.pipeline_mode<synchronous>, transform_indices = @transform_3, window_bounds = array<i64: 1, 1024>}, {pipeline_mode = #tpu.pipeline_mode<synchronous>, transform_indices = @transform_4, window_bounds = array<i64: 1, 1024>}, {transform_indices = @transform_5, window_bounds = array<i64: 128, 128>}]} {
    %c0 = arith.constant 0 : index
    %c0_0 = arith.constant 0 : index
    %0 = vector.load %arg1[%c0, %c0_0] : memref<128x1024xbf16, #tpu.memory_space<vmem>>, vector<128x1024xbf16>
    %1 = arith.extf %0 : vector<128x1024xbf16> to vector<128x1024xf32>
    %c0_1 = arith.constant 0 : index
    %c0_2 = arith.constant 0 : index
    %2 = vector.load %arg4[%c0_1, %c0_2] : memref<1x1024xf32, #tpu.memory_space<vmem>>, vector<1x1024xf32>
    %3 = vector.broadcast %2 : vector<1x1024xf32> to vector<128x1024xf32>
    %4 = arith.mulf %1, %3 : vector<128x1024xf32>
    %c0_3 = arith.constant 0 : index
    %c0_4 = arith.constant 0 : index
    %5 = vector.load %arg5[%c0_3, %c0_4] : memref<1x1024xf32, #tpu.memory_space<vmem>>, vector<1x1024xf32>
    %6 = vector.broadcast %5 : vector<1x1024xf32> to vector<128x1024xf32>
    %7 = arith.addf %4, %6 : vector<128x1024xf32>
    %cst = arith.constant 0.000000e+00 : f32
    %8 = vector.broadcast %cst : f32 to vector<128x1024xf32>
    %9 = arith.cmpf oge, %7, %8 : vector<128x1024xf32>
    %cst_5 = arith.constant 2.000000e-01 : f32
    %10 = vector.broadcast %cst_5 : f32 to vector<128x1024xf32>
    %11 = arith.mulf %10, %7 : vector<128x1024xf32>
    %12 = arith.select %9, %7, %11 : vector<128x1024xi1>, vector<128x1024xf32>
    %13 = arith.truncf %12 : vector<128x1024xf32> to vector<128x1024xbf16>
    %c0_6 = arith.constant 0 : index
    %c0_7 = arith.constant 0 : index
    %14 = vector.load %arg2[%c0_6, %c0_7] : memref<1024x128xbf16, #tpu.memory_space<vmem>>, vector<1024x128xbf16>
    %cst_8 = arith.constant dense<0.000000e+00> : vector<128x128xf32>
    %15 = tpu.matmul %13, %14, %cst_8 {dimension_numbers = #tpu.dot_dimension_numbers<[1], [0], [0], [1], [0, 0, 1, 1], [], []>} : vector<128x1024xbf16>, vector<1024x128xbf16>, vector<128x128xf32> -> vector<128x128xf32>
    %c0_9 = arith.constant 0 : index
    %c0_10 = arith.constant 0 : index
    %16 = vector.load %arg3[%c0_9, %c0_10] : memref<1x128xf32, #tpu.memory_space<vmem>>, vector<1x128xf32>
    %17 = vector.broadcast %16 : vector<1x128xf32> to vector<128x128xf32>
    %18 = arith.addf %15, %17 : vector<128x128xf32>
    %19 = arith.truncf %18 : vector<128x128xf32> to vector<128x128xbf16>
    %c0_11 = arith.constant 0 : index
    %c0_12 = arith.constant 0 : index
    %20 = vector.load %arg6[%c0_11, %c0_12] : memref<128x128xbf16, #tpu.memory_space<vmem>>, vector<128x128xbf16>
    tpu.vector_store %arg6[%c0_11, %c0_12], %19 {strides = array<i32>} : memref<128x128xbf16, #tpu.memory_space<vmem>>, vector<128x128xbf16>,
    return
  }
  func.func @transform_0(%arg0: i32) -> (i32, i32) {
    %c0_i32 = arith.constant 0 : i32
    %c0_i32_0 = arith.constant 0 : i32
    return %arg0, %c0_i32 : i32, i32
  }
  func.func @transform_1(%arg0: i32) -> (i32, i32) {
    %c0_i32 = arith.constant 0 : i32
    %c0_i32_0 = arith.constant 0 : i32
    %c0_i32_1 = arith.constant 0 : i32
    return %c0_i32, %c0_i32_0 : i32, i32
  }
  func.func @transform_2(%arg0: i32) -> (i32, i32) {
    %c0_i32 = arith.constant 0 : i32
    %c0_i32_0 = arith.constant 0 : i32
    %c0_i32_1 = arith.constant 0 : i32
    return %c0_i32, %c0_i32_0 : i32, i32
  }
  func.func @transform_3(%arg0: i32) -> (i32, i32) {
    %c0_i32 = arith.constant 0 : i32
    %c0_i32_0 = arith.constant 0 : i32
    %c0_i32_1 = arith.constant 0 : i32
    return %c0_i32, %c0_i32_0 : i32, i32
  }
  func.func @transform_4(%arg0: i32) -> (i32, i32) {
    %c0_i32 = arith.constant 0 : i32
    %c0_i32_0 = arith.constant 0 : i32
    %c0_i32_1 = arith.constant 0 : i32
    return %c0_i32, %c0_i32_0 : i32, i32
  }
  func.func @transform_5(%arg0: i32) -> (i32, i32) {
    %c0_i32 = arith.constant 0 : i32
    %c0_i32_0 = arith.constant 0 : i32
    return %arg0, %c0_i32 : i32, i32
  }
}

module attributes {stable_mosaic.version = 11 : i64} {
  func.func @kernel(%arg0: i32, %arg1: memref<128x576xbf16, #tpu.memory_space<vmem>>, %arg2: memref<576x256xbf16, #tpu.memory_space<vmem>>, %arg3: memref<1x256xf32, #tpu.memory_space<vmem>>, %arg4: memref<128x256xbf16, #tpu.memory_space<vmem>>, %arg5: memref<1x8x256xf32, #tpu.memory_space<vmem>>) attributes {dimension_semantics = [#tpu.dimension_semantics<parallel>], iteration_bounds = array<i64: 1>, scalar_prefetch = 0 : i64, scratch_operands = 0 : i64, tpu.core_type = #tpu.core_type<tc>, window_params = [{transform_indices = @transform_0, window_bounds = array<i64: 128, 576>}, {pipeline_mode = #tpu.pipeline_mode<synchronous>, transform_indices = @transform_1, window_bounds = array<i64: 576, 256>}, {pipeline_mode = #tpu.pipeline_mode<synchronous>, transform_indices = @transform_2, window_bounds = array<i64: 1, 256>}, {transform_indices = @transform_3, window_bounds = array<i64: 128, 256>}, {transform_indices = @transform_4, window_bounds = array<i64: 1, 8, 256>}]} {
    %c0 = arith.constant 0 : index
    %c0_0 = arith.constant 0 : index
    %0 = vector.load %arg1[%c0, %c0_0] : memref<128x576xbf16, #tpu.memory_space<vmem>>, vector<128x576xbf16>
    %1 = arith.extf %0 : vector<128x576xbf16> to vector<128x576xf32>
    %cst = arith.constant 0.000000e+00 : f32
    %2 = vector.broadcast %cst : f32 to vector<128x576xf32>
    %3 = arith.maximumf %1, %2 : vector<128x576xf32>
    %4 = arith.truncf %3 : vector<128x576xf32> to vector<128x576xbf16>
    %c0_1 = arith.constant 0 : index
    %c0_2 = arith.constant 0 : index
    %5 = vector.load %arg2[%c0_1, %c0_2] : memref<576x256xbf16, #tpu.memory_space<vmem>>, vector<576x256xbf16>
    %cst_3 = arith.constant dense<0.000000e+00> : vector<128x256xf32>
    %6 = tpu.matmul %4, %5, %cst_3 {dimension_numbers = #tpu.dot_dimension_numbers<[1], [0], [0], [1], [0, 0, 1, 1], [], []>} : vector<128x576xbf16>, vector<576x256xbf16>, vector<128x256xf32> -> vector<128x256xf32>
    %c0_4 = arith.constant 0 : index
    %c0_5 = arith.constant 0 : index
    %7 = vector.load %arg3[%c0_4, %c0_5] : memref<1x256xf32, #tpu.memory_space<vmem>>, vector<1x256xf32>
    %8 = vector.broadcast %7 : vector<1x256xf32> to vector<128x256xf32>
    %9 = arith.addf %6, %8 : vector<128x256xf32>
    %10 = arith.truncf %9 : vector<128x256xf32> to vector<128x256xbf16>
    %c0_6 = arith.constant 0 : index
    %c0_7 = arith.constant 0 : index
    %11 = vector.load %arg4[%c0_6, %c0_7] : memref<128x256xbf16, #tpu.memory_space<vmem>>, vector<128x256xbf16>
    tpu.vector_store %arg4[%c0_6, %c0_7], %10 {strides = array<i32>} : memref<128x256xbf16, #tpu.memory_space<vmem>>, vector<128x256xbf16>,
    %12 = tpu.iota {dimensions = array<i32: 0>} : vector<128x1xi32>
    %c128_i32 = arith.constant 128 : i32
    %13 = arith.muli %arg0, %c128_i32 : i32
    %c2_i32 = arith.constant 2 : i32
    %14 = arith.subi %c2_i32, %13 : i32
    %15 = vector.broadcast %14 : i32 to vector<128x1xi32>
    %16 = arith.cmpi slt, %12, %15 : vector<128x1xi32>
    %cst_8 = arith.constant 0.000000e+00 : f32
    %17 = vector.shape_cast %16 : vector<128x1xi1> to vector<128x1xi1>
    %18 = vector.broadcast %17 : vector<128x1xi1> to vector<128x256xi1>
    %19 = vector.broadcast %cst_8 : f32 to vector<128x256xf32>
    %20 = arith.select %18, %9, %19 : vector<128x256xi1>, vector<128x256xf32>
    %cst_9 = arith.constant dense<0.000000e+00> : vector<256xf32>
    %21 = vector.multi_reduction <add>, %20, %cst_9 [0] : vector<128x256xf32> to vector<256xf32>
    %22 = vector.shape_cast %21 : vector<256xf32> to vector<1x256xf32>
    %23 = arith.mulf %20, %20 : vector<128x256xf32>
    %cst_10 = arith.constant dense<0.000000e+00> : vector<256xf32>
    %24 = vector.multi_reduction <add>, %23, %cst_10 [0] : vector<128x256xf32> to vector<256xf32>
    %25 = vector.shape_cast %24 : vector<256xf32> to vector<1x256xf32>
    %cst_11 = arith.constant 0.000000e+00 : f32
    %26 = vector.broadcast %cst_11 : f32 to vector<6x256xf32>
    %27 = tpu.concatenate %22, %25, %26 in 0 : vector<1x256xf32>, vector<1x256xf32>, vector<6x256xf32> -> vector<8x256xf32>
    %28 = vector.shape_cast %27 : vector<8x256xf32> to vector<1x8x256xf32>
    %c0_12 = arith.constant 0 : index
    %c0_13 = arith.constant 0 : index
    %c0_14 = arith.constant 0 : index
    %29 = vector.load %arg5[%c0_12, %c0_13, %c0_14] : memref<1x8x256xf32, #tpu.memory_space<vmem>>, vector<1x8x256xf32>
    tpu.vector_store %arg5[%c0_12, %c0_13, %c0_14], %28 {strides = array<i32>} : memref<1x8x256xf32, #tpu.memory_space<vmem>>, vector<1x8x256xf32>,
    return
  }
  func.func @transform_0(%arg0: i32) -> (i32, i32) {
    %c0_i32 = arith.constant 0 : i32
    %c0_i32_0 = arith.constant 0 : i32
    return %arg0, %c0_i32 : i32, i32
  }
  func.func @transform_1(%arg0: i32) -> (i32, i32) {
    %c0_i32 = arith.constant 0 : i32
    %c0_i32_0 = arith.constant 0 : i32
    %c0_i32_1 = arith.constant 0 : i32
    return %c0_i32, %c0_i32_0 : i32, i32
  }
  func.func @transform_2(%arg0: i32) -> (i32, i32) {
    %c0_i32 = arith.constant 0 : i32
    %c0_i32_0 = arith.constant 0 : i32
    %c0_i32_1 = arith.constant 0 : i32
    return %c0_i32, %c0_i32_0 : i32, i32
  }
  func.func @transform_3(%arg0: i32) -> (i32, i32) {
    %c0_i32 = arith.constant 0 : i32
    %c0_i32_0 = arith.constant 0 : i32
    return %arg0, %c0_i32 : i32, i32
  }
  func.func @transform_4(%arg0: i32) -> (i32, i32, i32) {
    %c0_i32 = arith.constant 0 : i32
    %c0_i32_0 = arith.constant 0 : i32
    %c0_i32_1 = arith.constant 0 : i32
    return %arg0, %c0_i32, %c0_i32_0 : i32, i32, i32
  }
}

module attributes {stable_mosaic.version = 11 : i64} {
  func.func @kernel(%arg0: i32, %arg1: memref<128x1152xbf16, #tpu.memory_space<vmem>>, %arg2: memref<1152x128xbf16, #tpu.memory_space<vmem>>, %arg3: memref<1x128xf32, #tpu.memory_space<vmem>>, %arg4: memref<1x1152xf32, #tpu.memory_space<vmem>>, %arg5: memref<1x1152xf32, #tpu.memory_space<vmem>>, %arg6: memref<128x128xbf16, #tpu.memory_space<vmem>>, %arg7: memref<1x8x128xf32, #tpu.memory_space<vmem>>) attributes {dimension_semantics = [#tpu.dimension_semantics<parallel>], iteration_bounds = array<i64: 1>, scalar_prefetch = 0 : i64, scratch_operands = 0 : i64, tpu.core_type = #tpu.core_type<tc>, window_params = [{transform_indices = @transform_0, window_bounds = array<i64: 128, 1152>}, {pipeline_mode = #tpu.pipeline_mode<synchronous>, transform_indices = @transform_1, window_bounds = array<i64: 1152, 128>}, {pipeline_mode = #tpu.pipeline_mode<synchronous>, transform_indices = @transform_2, window_bounds = array<i64: 1, 128>}, {pipeline_mode = #tpu.pipeline_mode<synchronous>, transform_indices = @transform_3, window_bounds = array<i64: 1, 1152>}, {pipeline_mode = #tpu.pipeline_mode<synchronous>, transform_indices = @transform_4, window_bounds = array<i64: 1, 1152>}, {transform_indices = @transform_5, window_bounds = array<i64: 128, 128>}, {transform_indices = @transform_6, window_bounds = array<i64: 1, 8, 128>}]} {
    %c0 = arith.constant 0 : index
    %c0_0 = arith.constant 0 : index
    %0 = vector.load %arg1[%c0, %c0_0] : memref<128x1152xbf16, #tpu.memory_space<vmem>>, vector<128x1152xbf16>
    %1 = arith.extf %0 : vector<128x1152xbf16> to vector<128x1152xf32>
    %c0_1 = arith.constant 0 : index
    %c0_2 = arith.constant 0 : index
    %2 = vector.load %arg4[%c0_1, %c0_2] : memref<1x1152xf32, #tpu.memory_space<vmem>>, vector<1x1152xf32>
    %3 = vector.broadcast %2 : vector<1x1152xf32> to vector<128x1152xf32>
    %4 = arith.mulf %1, %3 : vector<128x1152xf32>
    %c0_3 = arith.constant 0 : index
    %c0_4 = arith.constant 0 : index
    %5 = vector.load %arg5[%c0_3, %c0_4] : memref<1x1152xf32, #tpu.memory_space<vmem>>, vector<1x1152xf32>
    %6 = vector.broadcast %5 : vector<1x1152xf32> to vector<128x1152xf32>
    %7 = arith.addf %4, %6 : vector<128x1152xf32>
    %cst = arith.constant 0.000000e+00 : f32
    %8 = vector.broadcast %cst : f32 to vector<128x1152xf32>
    %9 = arith.maximumf %7, %8 : vector<128x1152xf32>
    %10 = arith.truncf %9 : vector<128x1152xf32> to vector<128x1152xbf16>
    %c0_5 = arith.constant 0 : index
    %c0_6 = arith.constant 0 : index
    %11 = vector.load %arg2[%c0_5, %c0_6] : memref<1152x128xbf16, #tpu.memory_space<vmem>>, vector<1152x128xbf16>
    %cst_7 = arith.constant dense<0.000000e+00> : vector<128x128xf32>
    %12 = tpu.matmul %10, %11, %cst_7 {dimension_numbers = #tpu.dot_dimension_numbers<[1], [0], [0], [1], [0, 0, 1, 1], [], []>} : vector<128x1152xbf16>, vector<1152x128xbf16>, vector<128x128xf32> -> vector<128x128xf32>
    %c0_8 = arith.constant 0 : index
    %c0_9 = arith.constant 0 : index
    %13 = vector.load %arg3[%c0_8, %c0_9] : memref<1x128xf32, #tpu.memory_space<vmem>>, vector<1x128xf32>
    %14 = vector.broadcast %13 : vector<1x128xf32> to vector<128x128xf32>
    %15 = arith.addf %12, %14 : vector<128x128xf32>
    %16 = arith.truncf %15 : vector<128x128xf32> to vector<128x128xbf16>
    %c0_10 = arith.constant 0 : index
    %c0_11 = arith.constant 0 : index
    %17 = vector.load %arg6[%c0_10, %c0_11] : memref<128x128xbf16, #tpu.memory_space<vmem>>, vector<128x128xbf16>
    tpu.vector_store %arg6[%c0_10, %c0_11], %16 {strides = array<i32>} : memref<128x128xbf16, #tpu.memory_space<vmem>>, vector<128x128xbf16>,
    %18 = tpu.iota {dimensions = array<i32: 0>} : vector<128x1xi32>
    %c128_i32 = arith.constant 128 : i32
    %19 = arith.muli %arg0, %c128_i32 : i32
    %c8_i32 = arith.constant 8 : i32
    %20 = arith.subi %c8_i32, %19 : i32
    %21 = vector.broadcast %20 : i32 to vector<128x1xi32>
    %22 = arith.cmpi slt, %18, %21 : vector<128x1xi32>
    %cst_12 = arith.constant 0.000000e+00 : f32
    %23 = vector.shape_cast %22 : vector<128x1xi1> to vector<128x1xi1>
    %24 = vector.broadcast %23 : vector<128x1xi1> to vector<128x128xi1>
    %25 = vector.broadcast %cst_12 : f32 to vector<128x128xf32>
    %26 = arith.select %24, %15, %25 : vector<128x128xi1>, vector<128x128xf32>
    %cst_13 = arith.constant dense<0.000000e+00> : vector<128xf32>
    %27 = vector.multi_reduction <add>, %26, %cst_13 [0] : vector<128x128xf32> to vector<128xf32>
    %28 = vector.shape_cast %27 : vector<128xf32> to vector<1x128xf32>
    %29 = arith.mulf %26, %26 : vector<128x128xf32>
    %cst_14 = arith.constant dense<0.000000e+00> : vector<128xf32>
    %30 = vector.multi_reduction <add>, %29, %cst_14 [0] : vector<128x128xf32> to vector<128xf32>
    %31 = vector.shape_cast %30 : vector<128xf32> to vector<1x128xf32>
    %cst_15 = arith.constant 0.000000e+00 : f32
    %32 = vector.broadcast %cst_15 : f32 to vector<6x128xf32>
    %33 = tpu.concatenate %28, %31, %32 in 0 : vector<1x128xf32>, vector<1x128xf32>, vector<6x128xf32> -> vector<8x128xf32>
    %34 = vector.shape_cast %33 : vector<8x128xf32> to vector<1x8x128xf32>
    %c0_16 = arith.constant 0 : index
    %c0_17 = arith.constant 0 : index
    %c0_18 = arith.constant 0 : index
    %35 = vector.load %arg7[%c0_16, %c0_17, %c0_18] : memref<1x8x128xf32, #tpu.memory_space<vmem>>, vector<1x8x128xf32>
    tpu.vector_store %arg7[%c0_16, %c0_17, %c0_18], %34 {strides = array<i32>} : memref<1x8x128xf32, #tpu.memory_space<vmem>>, vector<1x8x128xf32>,
    return
  }
  func.func @transform_0(%arg0: i32) -> (i32, i32) {
    %c0_i32 = arith.constant 0 : i32
    %c0_i32_0 = arith.constant 0 : i32
    return %arg0, %c0_i32 : i32, i32
  }
  func.func @transform_1(%arg0: i32) -> (i32, i32) {
    %c0_i32 = arith.constant 0 : i32
    %c0_i32_0 = arith.constant 0 : i32
    %c0_i32_1 = arith.constant 0 : i32
    return %c0_i32, %c0_i32_0 : i32, i32
  }
  func.func @transform_2(%arg0: i32) -> (i32, i32) {
    %c0_i32 = arith.constant 0 : i32
    %c0_i32_0 = arith.constant 0 : i32
    %c0_i32_1 = arith.constant 0 : i32
    return %c0_i32, %c0_i32_0 : i32, i32
  }
  func.func @transform_3(%arg0: i32) -> (i32, i32) {
    %c0_i32 = arith.constant 0 : i32
    %c0_i32_0 = arith.constant 0 : i32
    %c0_i32_1 = arith.constant 0 : i32
    return %c0_i32, %c0_i32_0 : i32, i32
  }
  func.func @transform_4(%arg0: i32) -> (i32, i32) {
    %c0_i32 = arith.constant 0 : i32
    %c0_i32_0 = arith.constant 0 : i32
    %c0_i32_1 = arith.constant 0 : i32
    return %c0_i32, %c0_i32_0 : i32, i32
  }
  func.func @transform_5(%arg0: i32) -> (i32, i32) {
    %c0_i32 = arith.constant 0 : i32
    %c0_i32_0 = arith.constant 0 : i32
    return %arg0, %c0_i32 : i32, i32
  }
  func.func @transform_6(%arg0: i32) -> (i32, i32, i32) {
    %c0_i32 = arith.constant 0 : i32
    %c0_i32_0 = arith.constant 0 : i32
    %c0_i32_1 = arith.constant 0 : i32
    return %arg0, %c0_i32, %c0_i32_0 : i32, i32, i32
  }
}

module attributes {stable_mosaic.version = 11 : i64} {
  func.func @kernel(%arg0: i32, %arg1: memref<128x576xbf16, #tpu.memory_space<vmem>>, %arg2: memref<576x128xbf16, #tpu.memory_space<vmem>>, %arg3: memref<1x128xf32, #tpu.memory_space<vmem>>, %arg4: memref<1x576xf32, #tpu.memory_space<vmem>>, %arg5: memref<1x576xf32, #tpu.memory_space<vmem>>, %arg6: memref<128x128xbf16, #tpu.memory_space<vmem>>, %arg7: memref<1x8x128xf32, #tpu.memory_space<vmem>>) attributes {dimension_semantics = [#tpu.dimension_semantics<parallel>], iteration_bounds = array<i64: 1>, scalar_prefetch = 0 : i64, scratch_operands = 0 : i64, tpu.core_type = #tpu.core_type<tc>, window_params = [{transform_indices = @transform_0, window_bounds = array<i64: 128, 576>}, {pipeline_mode = #tpu.pipeline_mode<synchronous>, transform_indices = @transform_1, window_bounds = array<i64: 576, 128>}, {pipeline_mode = #tpu.pipeline_mode<synchronous>, transform_indices = @transform_2, window_bounds = array<i64: 1, 128>}, {pipeline_mode = #tpu.pipeline_mode<synchronous>, transform_indices = @transform_3, window_bounds = array<i64: 1, 576>}, {pipeline_mode = #tpu.pipeline_mode<synchronous>, transform_indices = @transform_4, window_bounds = array<i64: 1, 576>}, {transform_indices = @transform_5, window_bounds = array<i64: 128, 128>}, {transform_indices = @transform_6, window_bounds = array<i64: 1, 8, 128>}]} {
    %c0 = arith.constant 0 : index
    %c0_0 = arith.constant 0 : index
    %0 = vector.load %arg1[%c0, %c0_0] : memref<128x576xbf16, #tpu.memory_space<vmem>>, vector<128x576xbf16>
    %1 = arith.extf %0 : vector<128x576xbf16> to vector<128x576xf32>
    %c0_1 = arith.constant 0 : index
    %c0_2 = arith.constant 0 : index
    %2 = vector.load %arg4[%c0_1, %c0_2] : memref<1x576xf32, #tpu.memory_space<vmem>>, vector<1x576xf32>
    %3 = vector.broadcast %2 : vector<1x576xf32> to vector<128x576xf32>
    %4 = arith.mulf %1, %3 : vector<128x576xf32>
    %c0_3 = arith.constant 0 : index
    %c0_4 = arith.constant 0 : index
    %5 = vector.load %arg5[%c0_3, %c0_4] : memref<1x576xf32, #tpu.memory_space<vmem>>, vector<1x576xf32>
    %6 = vector.broadcast %5 : vector<1x576xf32> to vector<128x576xf32>
    %7 = arith.addf %4, %6 : vector<128x576xf32>
    %cst = arith.constant 0.000000e+00 : f32
    %8 = vector.broadcast %cst : f32 to vector<128x576xf32>
    %9 = arith.maximumf %7, %8 : vector<128x576xf32>
    %10 = arith.truncf %9 : vector<128x576xf32> to vector<128x576xbf16>
    %c0_5 = arith.constant 0 : index
    %c0_6 = arith.constant 0 : index
    %11 = vector.load %arg2[%c0_5, %c0_6] : memref<576x128xbf16, #tpu.memory_space<vmem>>, vector<576x128xbf16>
    %cst_7 = arith.constant dense<0.000000e+00> : vector<128x128xf32>
    %12 = tpu.matmul %10, %11, %cst_7 {dimension_numbers = #tpu.dot_dimension_numbers<[1], [0], [0], [1], [0, 0, 1, 1], [], []>} : vector<128x576xbf16>, vector<576x128xbf16>, vector<128x128xf32> -> vector<128x128xf32>
    %c0_8 = arith.constant 0 : index
    %c0_9 = arith.constant 0 : index
    %13 = vector.load %arg3[%c0_8, %c0_9] : memref<1x128xf32, #tpu.memory_space<vmem>>, vector<1x128xf32>
    %14 = vector.broadcast %13 : vector<1x128xf32> to vector<128x128xf32>
    %15 = arith.addf %12, %14 : vector<128x128xf32>
    %16 = arith.truncf %15 : vector<128x128xf32> to vector<128x128xbf16>
    %c0_10 = arith.constant 0 : index
    %c0_11 = arith.constant 0 : index
    %17 = vector.load %arg6[%c0_10, %c0_11] : memref<128x128xbf16, #tpu.memory_space<vmem>>, vector<128x128xbf16>
    tpu.vector_store %arg6[%c0_10, %c0_11], %16 {strides = array<i32>} : memref<128x128xbf16, #tpu.memory_space<vmem>>, vector<128x128xbf16>,
    %18 = tpu.iota {dimensions = array<i32: 0>} : vector<128x1xi32>
    %c128_i32 = arith.constant 128 : i32
    %19 = arith.muli %arg0, %c128_i32 : i32
    %c32_i32 = arith.constant 32 : i32
    %20 = arith.subi %c32_i32, %19 : i32
    %21 = vector.broadcast %20 : i32 to vector<128x1xi32>
    %22 = arith.cmpi slt, %18, %21 : vector<128x1xi32>
    %cst_12 = arith.constant 0.000000e+00 : f32
    %23 = vector.shape_cast %22 : vector<128x1xi1> to vector<128x1xi1>
    %24 = vector.broadcast %23 : vector<128x1xi1> to vector<128x128xi1>
    %25 = vector.broadcast %cst_12 : f32 to vector<128x128xf32>
    %26 = arith.select %24, %15, %25 : vector<128x128xi1>, vector<128x128xf32>
    %cst_13 = arith.constant dense<0.000000e+00> : vector<128xf32>
    %27 = vector.multi_reduction <add>, %26, %cst_13 [0] : vector<128x128xf32> to vector<128xf32>
    %28 = vector.shape_cast %27 : vector<128xf32> to vector<1x128xf32>
    %29 = arith.mulf %26, %26 : vector<128x128xf32>
    %cst_14 = arith.constant dense<0.000000e+00> : vector<128xf32>
    %30 = vector.multi_reduction <add>, %29, %cst_14 [0] : vector<128x128xf32> to vector<128xf32>
    %31 = vector.shape_cast %30 : vector<128xf32> to vector<1x128xf32>
    %cst_15 = arith.constant 0.000000e+00 : f32
    %32 = vector.broadcast %cst_15 : f32 to vector<6x128xf32>
    %33 = tpu.concatenate %28, %31, %32 in 0 : vector<1x128xf32>, vector<1x128xf32>, vector<6x128xf32> -> vector<8x128xf32>
    %34 = vector.shape_cast %33 : vector<8x128xf32> to vector<1x8x128xf32>
    %c0_16 = arith.constant 0 : index
    %c0_17 = arith.constant 0 : index
    %c0_18 = arith.constant 0 : index
    %35 = vector.load %arg7[%c0_16, %c0_17, %c0_18] : memref<1x8x128xf32, #tpu.memory_space<vmem>>, vector<1x8x128xf32>
    tpu.vector_store %arg7[%c0_16, %c0_17, %c0_18], %34 {strides = array<i32>} : memref<1x8x128xf32, #tpu.memory_space<vmem>>, vector<1x8x128xf32>,
    return
  }
  func.func @transform_0(%arg0: i32) -> (i32, i32) {
    %c0_i32 = arith.constant 0 : i32
    %c0_i32_0 = arith.constant 0 : i32
    return %arg0, %c0_i32 : i32, i32
  }
  func.func @transform_1(%arg0: i32) -> (i32, i32) {
    %c0_i32 = arith.constant 0 : i32
    %c0_i32_0 = arith.constant 0 : i32
    %c0_i32_1 = arith.constant 0 : i32
    return %c0_i32, %c0_i32_0 : i32, i32
  }
  func.func @transform_2(%arg0: i32) -> (i32, i32) {
    %c0_i32 = arith.constant 0 : i32
    %c0_i32_0 = arith.constant 0 : i32
    %c0_i32_1 = arith.constant 0 : i32
    return %c0_i32, %c0_i32_0 : i32, i32
  }
  func.func @transform_3(%arg0: i32) -> (i32, i32) {
    %c0_i32 = arith.constant 0 : i32
    %c0_i32_0 = arith.constant 0 : i32
    %c0_i32_1 = arith.constant 0 : i32
    return %c0_i32, %c0_i32_0 : i32, i32
  }
  func.func @transform_4(%arg0: i32) -> (i32, i32) {
    %c0_i32 = arith.constant 0 : i32
    %c0_i32_0 = arith.constant 0 : i32
    %c0_i32_1 = arith.constant 0 : i32
    return %c0_i32, %c0_i32_0 : i32, i32
  }
  func.func @transform_5(%arg0: i32) -> (i32, i32) {
    %c0_i32 = arith.constant 0 : i32
    %c0_i32_0 = arith.constant 0 : i32
    return %arg0, %c0_i32 : i32, i32
  }
  func.func @transform_6(%arg0: i32) -> (i32, i32, i32) {
    %c0_i32 = arith.constant 0 : i32
    %c0_i32_0 = arith.constant 0 : i32
    %c0_i32_1 = arith.constant 0 : i32
    return %arg0, %c0_i32, %c0_i32_0 : i32, i32, i32
  }
}

module attributes {stable_mosaic.version = 11 : i64} {
  func.func @kernel(%arg0: i32, %arg1: memref<128x288xbf16, #tpu.memory_space<vmem>>, %arg2: memref<288x128xbf16, #tpu.memory_space<vmem>>, %arg3: memref<1x128xf32, #tpu.memory_space<vmem>>, %arg4: memref<1x288xf32, #tpu.memory_space<vmem>>, %arg5: memref<1x288xf32, #tpu.memory_space<vmem>>, %arg6: memref<128x128xbf16, #tpu.memory_space<vmem>>, %arg7: memref<1x8x128xf32, #tpu.memory_space<vmem>>) attributes {dimension_semantics = [#tpu.dimension_semantics<parallel>], iteration_bounds = array<i64: 1>, scalar_prefetch = 0 : i64, scratch_operands = 0 : i64, tpu.core_type = #tpu.core_type<tc>, window_params = [{transform_indices = @transform_0, window_bounds = array<i64: 128, 288>}, {pipeline_mode = #tpu.pipeline_mode<synchronous>, transform_indices = @transform_1, window_bounds = array<i64: 288, 128>}, {pipeline_mode = #tpu.pipeline_mode<synchronous>, transform_indices = @transform_2, window_bounds = array<i64: 1, 128>}, {pipeline_mode = #tpu.pipeline_mode<synchronous>, transform_indices = @transform_3, window_bounds = array<i64: 1, 288>}, {pipeline_mode = #tpu.pipeline_mode<synchronous>, transform_indices = @transform_4, window_bounds = array<i64: 1, 288>}, {transform_indices = @transform_5, window_bounds = array<i64: 128, 128>}, {transform_indices = @transform_6, window_bounds = array<i64: 1, 8, 128>}]} {
    %c0 = arith.constant 0 : index
    %c0_0 = arith.constant 0 : index
    %0 = vector.load %arg1[%c0, %c0_0] : memref<128x288xbf16, #tpu.memory_space<vmem>>, vector<128x288xbf16>
    %1 = arith.extf %0 : vector<128x288xbf16> to vector<128x288xf32>
    %c0_1 = arith.constant 0 : index
    %c0_2 = arith.constant 0 : index
    %2 = vector.load %arg4[%c0_1, %c0_2] : memref<1x288xf32, #tpu.memory_space<vmem>>, vector<1x288xf32>
    %3 = vector.broadcast %2 : vector<1x288xf32> to vector<128x288xf32>
    %4 = arith.mulf %1, %3 : vector<128x288xf32>
    %c0_3 = arith.constant 0 : index
    %c0_4 = arith.constant 0 : index
    %5 = vector.load %arg5[%c0_3, %c0_4] : memref<1x288xf32, #tpu.memory_space<vmem>>, vector<1x288xf32>
    %6 = vector.broadcast %5 : vector<1x288xf32> to vector<128x288xf32>
    %7 = arith.addf %4, %6 : vector<128x288xf32>
    %cst = arith.constant 0.000000e+00 : f32
    %8 = vector.broadcast %cst : f32 to vector<128x288xf32>
    %9 = arith.maximumf %7, %8 : vector<128x288xf32>
    %10 = arith.truncf %9 : vector<128x288xf32> to vector<128x288xbf16>
    %c0_5 = arith.constant 0 : index
    %c0_6 = arith.constant 0 : index
    %11 = vector.load %arg2[%c0_5, %c0_6] : memref<288x128xbf16, #tpu.memory_space<vmem>>, vector<288x128xbf16>
    %cst_7 = arith.constant dense<0.000000e+00> : vector<128x128xf32>
    %12 = tpu.matmul %10, %11, %cst_7 {dimension_numbers = #tpu.dot_dimension_numbers<[1], [0], [0], [1], [0, 0, 1, 1], [], []>} : vector<128x288xbf16>, vector<288x128xbf16>, vector<128x128xf32> -> vector<128x128xf32>
    %c0_8 = arith.constant 0 : index
    %c0_9 = arith.constant 0 : index
    %13 = vector.load %arg3[%c0_8, %c0_9] : memref<1x128xf32, #tpu.memory_space<vmem>>, vector<1x128xf32>
    %14 = vector.broadcast %13 : vector<1x128xf32> to vector<128x128xf32>
    %15 = arith.addf %12, %14 : vector<128x128xf32>
    %16 = arith.truncf %15 : vector<128x128xf32> to vector<128x128xbf16>
    %c0_10 = arith.constant 0 : index
    %c0_11 = arith.constant 0 : index
    %17 = vector.load %arg6[%c0_10, %c0_11] : memref<128x128xbf16, #tpu.memory_space<vmem>>, vector<128x128xbf16>
    tpu.vector_store %arg6[%c0_10, %c0_11], %16 {strides = array<i32>} : memref<128x128xbf16, #tpu.memory_space<vmem>>, vector<128x128xbf16>,
    %18 = tpu.iota {dimensions = array<i32: 0>} : vector<128x1xi32>
    %c128_i32 = arith.constant 128 : i32
    %19 = arith.muli %arg0, %c128_i32 : i32
    %c128_i32_12 = arith.constant 128 : i32
    %20 = arith.subi %c128_i32_12, %19 : i32
    %21 = vector.broadcast %20 : i32 to vector<128x1xi32>
    %22 = arith.cmpi slt, %18, %21 : vector<128x1xi32>
    %cst_13 = arith.constant 0.000000e+00 : f32
    %23 = vector.shape_cast %22 : vector<128x1xi1> to vector<128x1xi1>
    %24 = vector.broadcast %23 : vector<128x1xi1> to vector<128x128xi1>
    %25 = vector.broadcast %cst_13 : f32 to vector<128x128xf32>
    %26 = arith.select %24, %15, %25 : vector<128x128xi1>, vector<128x128xf32>
    %cst_14 = arith.constant dense<0.000000e+00> : vector<128xf32>
    %27 = vector.multi_reduction <add>, %26, %cst_14 [0] : vector<128x128xf32> to vector<128xf32>
    %28 = vector.shape_cast %27 : vector<128xf32> to vector<1x128xf32>
    %29 = arith.mulf %26, %26 : vector<128x128xf32>
    %cst_15 = arith.constant dense<0.000000e+00> : vector<128xf32>
    %30 = vector.multi_reduction <add>, %29, %cst_15 [0] : vector<128x128xf32> to vector<128xf32>
    %31 = vector.shape_cast %30 : vector<128xf32> to vector<1x128xf32>
    %cst_16 = arith.constant 0.000000e+00 : f32
    %32 = vector.broadcast %cst_16 : f32 to vector<6x128xf32>
    %33 = tpu.concatenate %28, %31, %32 in 0 : vector<1x128xf32>, vector<1x128xf32>, vector<6x128xf32> -> vector<8x128xf32>
    %34 = vector.shape_cast %33 : vector<8x128xf32> to vector<1x8x128xf32>
    %c0_17 = arith.constant 0 : index
    %c0_18 = arith.constant 0 : index
    %c0_19 = arith.constant 0 : index
    %35 = vector.load %arg7[%c0_17, %c0_18, %c0_19] : memref<1x8x128xf32, #tpu.memory_space<vmem>>, vector<1x8x128xf32>
    tpu.vector_store %arg7[%c0_17, %c0_18, %c0_19], %34 {strides = array<i32>} : memref<1x8x128xf32, #tpu.memory_space<vmem>>, vector<1x8x128xf32>,
    return
  }
  func.func @transform_0(%arg0: i32) -> (i32, i32) {
    %c0_i32 = arith.constant 0 : i32
    %c0_i32_0 = arith.constant 0 : i32
    return %arg0, %c0_i32 : i32, i32
  }
  func.func @transform_1(%arg0: i32) -> (i32, i32) {
    %c0_i32 = arith.constant 0 : i32
    %c0_i32_0 = arith.constant 0 : i32
    %c0_i32_1 = arith.constant 0 : i32
    return %c0_i32, %c0_i32_0 : i32, i32
  }
  func.func @transform_2(%arg0: i32) -> (i32, i32) {
    %c0_i32 = arith.constant 0 : i32
    %c0_i32_0 = arith.constant 0 : i32
    %c0_i32_1 = arith.constant 0 : i32
    return %c0_i32, %c0_i32_0 : i32, i32
  }
  func.func @transform_3(%arg0: i32) -> (i32, i32) {
    %c0_i32 = arith.constant 0 : i32
    %c0_i32_0 = arith.constant 0 : i32
    %c0_i32_1 = arith.constant 0 : i32
    return %c0_i32, %c0_i32_0 : i32, i32
  }
  func.func @transform_4(%arg0: i32) -> (i32, i32) {
    %c0_i32 = arith.constant 0 : i32
    %c0_i32_0 = arith.constant 0 : i32
    %c0_i32_1 = arith.constant 0 : i32
    return %c0_i32, %c0_i32_0 : i32, i32
  }
  func.func @transform_5(%arg0: i32) -> (i32, i32) {
    %c0_i32 = arith.constant 0 : i32
    %c0_i32_0 = arith.constant 0 : i32
    return %arg0, %c0_i32 : i32, i32
  }
  func.func @transform_6(%arg0: i32) -> (i32, i32, i32) {
    %c0_i32 = arith.constant 0 : i32
    %c0_i32_0 = arith.constant 0 : i32
    %c0_i32_1 = arith.constant 0 : i32
    return %arg0, %c0_i32, %c0_i32_0 : i32, i32, i32
  }
}

module attributes {stable_mosaic.version = 11 : i64} {
  func.func @kernel(%arg0: i32, %arg1: memref<256x144xbf16, #tpu.memory_space<vmem>>, %arg2: memref<144x128xbf16, #tpu.memory_space<vmem>>, %arg3: memref<1x128xf32, #tpu.memory_space<vmem>>, %arg4: memref<1x144xf32, #tpu.memory_space<vmem>>, %arg5: memref<1x144xf32, #tpu.memory_space<vmem>>, %arg6: memref<256x128xf32, #tpu.memory_space<vmem>>) attributes {dimension_semantics = [#tpu.dimension_semantics<parallel>], iteration_bounds = array<i64: 2>, scalar_prefetch = 0 : i64, scratch_operands = 0 : i64, tpu.core_type = #tpu.core_type<tc>, window_params = [{transform_indices = @transform_0, window_bounds = array<i64: 256, 144>}, {pipeline_mode = #tpu.pipeline_mode<synchronous>, transform_indices = @transform_1, window_bounds = array<i64: 144, 128>}, {pipeline_mode = #tpu.pipeline_mode<synchronous>, transform_indices = @transform_2, window_bounds = array<i64: 1, 128>}, {pipeline_mode = #tpu.pipeline_mode<synchronous>, transform_indices = @transform_3, window_bounds = array<i64: 1, 144>}, {pipeline_mode = #tpu.pipeline_mode<synchronous>, transform_indices = @transform_4, window_bounds = array<i64: 1, 144>}, {transform_indices = @transform_5, window_bounds = array<i64: 256, 128>}]} {
    %c0 = arith.constant 0 : index
    %c0_0 = arith.constant 0 : index
    %0 = vector.load %arg1[%c0, %c0_0] : memref<256x144xbf16, #tpu.memory_space<vmem>>, vector<256x144xbf16>
    %1 = arith.extf %0 : vector<256x144xbf16> to vector<256x144xf32>
    %c0_1 = arith.constant 0 : index
    %c0_2 = arith.constant 0 : index
    %2 = vector.load %arg4[%c0_1, %c0_2] : memref<1x144xf32, #tpu.memory_space<vmem>>, vector<1x144xf32>
    %3 = vector.broadcast %2 : vector<1x144xf32> to vector<256x144xf32>
    %4 = arith.mulf %1, %3 : vector<256x144xf32>
    %c0_3 = arith.constant 0 : index
    %c0_4 = arith.constant 0 : index
    %5 = vector.load %arg5[%c0_3, %c0_4] : memref<1x144xf32, #tpu.memory_space<vmem>>, vector<1x144xf32>
    %6 = vector.broadcast %5 : vector<1x144xf32> to vector<256x144xf32>
    %7 = arith.addf %4, %6 : vector<256x144xf32>
    %cst = arith.constant 0.000000e+00 : f32
    %8 = vector.broadcast %cst : f32 to vector<256x144xf32>
    %9 = arith.maximumf %7, %8 : vector<256x144xf32>
    %10 = arith.truncf %9 : vector<256x144xf32> to vector<256x144xbf16>
    %c0_5 = arith.constant 0 : index
    %c0_6 = arith.constant 0 : index
    %11 = vector.load %arg2[%c0_5, %c0_6] : memref<144x128xbf16, #tpu.memory_space<vmem>>, vector<144x128xbf16>
    %cst_7 = arith.constant dense<0.000000e+00> : vector<256x128xf32>
    %12 = tpu.matmul %10, %11, %cst_7 {dimension_numbers = #tpu.dot_dimension_numbers<[1], [0], [0], [1], [0, 0, 1, 1], [], []>} : vector<256x144xbf16>, vector<144x128xbf16>, vector<256x128xf32> -> vector<256x128xf32>
    %c0_8 = arith.constant 0 : index
    %c0_9 = arith.constant 0 : index
    %13 = vector.load %arg3[%c0_8, %c0_9] : memref<1x128xf32, #tpu.memory_space<vmem>>, vector<1x128xf32>
    %14 = vector.broadcast %13 : vector<1x128xf32> to vector<256x128xf32>
    %15 = arith.addf %12, %14 : vector<256x128xf32>
    %16 = math.tanh %15 : vector<256x128xf32>
    %c0_10 = arith.constant 0 : index
    %c0_11 = arith.constant 0 : index
    %17 = vector.load %arg6[%c0_10, %c0_11] : memref<256x128xf32, #tpu.memory_space<vmem>>, vector<256x128xf32>
    tpu.vector_store %arg6[%c0_10, %c0_11], %16 {strides = array<i32>} : memref<256x128xf32, #tpu.memory_space<vmem>>, vector<256x128xf32>,
    return
  }
  func.func @transform_0(%arg0: i32) -> (i32, i32) {
    %c0_i32 = arith.constant 0 : i32
    %c0_i32_0 = arith.constant 0 : i32
    return %arg0, %c0_i32 : i32, i32
  }
  func.func @transform_1(%arg0: i32) -> (i32, i32) {
    %c0_i32 = arith.constant 0 : i32
    %c0_i32_0 = arith.constant 0 : i32
    %c0_i32_1 = arith.constant 0 : i32
    return %c0_i32, %c0_i32_0 : i32, i32
  }
  func.func @transform_2(%arg0: i32) -> (i32, i32) {
    %c0_i32 = arith.constant 0 : i32
    %c0_i32_0 = arith.constant 0 : i32
    %c0_i32_1 = arith.constant 0 : i32
    return %c0_i32, %c0_i32_0 : i32, i32
  }
  func.func @transform_3(%arg0: i32) -> (i32, i32) {
    %c0_i32 = arith.constant 0 : i32
    %c0_i32_0 = arith.constant 0 : i32
    %c0_i32_1 = arith.constant 0 : i32
    return %c0_i32, %c0_i32_0 : i32, i32
  }
  func.func @transform_4(%arg0: i32) -> (i32, i32) {
    %c0_i32 = arith.constant 0 : i32
    %c0_i32_0 = arith.constant 0 : i32
    %c0_i32_1 = arith.constant 0 : i32
    return %c0_i32, %c0_i32_0 : i32, i32
  }
  func.func @transform_5(%arg0: i32) -> (i32, i32) {
    %c0_i32 = arith.constant 0 : i32
    %c0_i32_0 = arith.constant 0 : i32
    return %arg0, %c0_i32 : i32, i32
  }
}

</mosaic_0001>

<llo_original>
// kernel: unet_generator_forward.10
$region0: #{unet_generator_forward.10}
  #allocation0 [shape = 'u32[]', space=smem, size = 0x4, offset = 0x4, fixed_abs, tag = 'smem constant byte address 0x4 - core index']
  #allocation1 [shape = 'u32[144,128]{1,0:T(1,128)}', space=vmem, size = 0x12000, scoped, tag = 'internal scratch']
  %s0 = inlined_call_operand.vmem [shape: bf16[512,48], index: 0, kind: input, shape index: {}]
  %s1 = inlined_call_operand.vmem [shape: bf16[48,128], index: 1, kind: input, shape index: {}]
  %s2 = inlined_call_operand.vmem [shape: f32[1,128], index: 2, kind: input, shape index: {}]
  %s3 = inlined_call_operand.vmem [shape: bf16[512,128], index: 3, kind: output, shape index: {}]
  %s4 = sld [smem:[#allocation0]]
  $region45: #{unet_generator_forward.10} parent=0
    _
  %s6 = ssub.s32 1, %s4
  %s7 = scalar_select 0, %s6, %s4
  loop: start=0, step=1, limit=4
  $region2: #{unet_generator_forward.10} parent=0 // loop_pre_header
    _
  $region3: #{unet_generator_forward.10} parent=0 // loop_header
    %s9 = sphi 0, %s13
    %p10 = scmp.ge.s32.totalorder %s9, 4
    %s19 = sphi 0, %s21
    %s22 = sphi 0, %s19
    %s23 = sphi 0, %s22
    %s39 = sphi 0, %s23
    %s43 = sphi 0, %s43
    %s45 = sphi 0, %s43
    %s46 = sphi 0, %s45
    %s60 = sphi 0, %s46
    %s64 = sphi 0, %s64
    %s66 = sphi 0, %s64
    %s67 = sphi 0, %s66
    %s81 = sphi 0, %s67
    %s87 = sphi 0, %s89
    %s90 = sphi 0, %s87
    %s91 = sphi 0, %s90
    %s107 = sphi 0, %s91
  $region4: #{unet_generator_forward.10} parent=0 // loop_header_branch
    %12 = sbr.rel (%p10) target = $region8
  $region5: #{unet_generator_forward.10} parent=0 // loop_body
    %s14 = ssub.s32 %s9, 1
    %s15 = ssub.s32 %s9, 2
    %s16 = sadd.s32 %s9, 1
    %s17 = ssub.s32 %s9, %s16
    %p18 = scmp.eq.s32.totalorder %s17, 0
    %s20 = sadd.s32 %s19, 1
    %s21 = scalar_select %p18, %s19, %s20
    %p24 = pneg %p18
    %p25 = scmp.eq.s32.totalorder %s9, 1
    %p26 = por %p24, %p25
    %p27 = scmp.ne.s32.totalorder %s19, %s22
    %p28 = scmp.eq.s32.totalorder %s9, 0
    %p29 = por %p27, %p28
    %p30 = scmp.ne.s32.totalorder %s19, %s22
    %p31 = scmp.eq.s32.totalorder %s14, 1
    %p32 = por %p30, %p31
    %p33 = scmp.ne.s32.totalorder %s22, %s23
    %p34 = scmp.eq.s32.totalorder %s14, 0
    %p35 = por %p33, %p34
    %p36 = scmp.ne.s32.totalorder %s22, %s23
    %p37 = scmp.eq.s32.totalorder %s15, 1
    %p38 = por %p36, %p37
    %p40 = scmp.ne.s32.totalorder %s23, %s39
    %p41 = scmp.eq.s32.totalorder %s15, 0
    %p42 = por %p40, %p41
    %s44 = sadd.s32 %s43, 1
    %p47 = scmp.eq.s32.totalorder %s9, 1
    %p48 = scmp.ne.s32.totalorder %s43, %s45
    %p49 = scmp.eq.s32.totalorder %s9, 0
    %p50 = por %p48, %p49
    %p51 = scmp.ne.s32.totalorder %s43, %s45
    %p52 = scmp.eq.s32.totalorder %s14, 1
    %p53 = por %p51, %p52
    %p54 = scmp.ne.s32.totalorder %s45, %s46
    %p55 = scmp.eq.s32.totalorder %s14, 0
    %p56 = por %p54, %p55
    %p57 = scmp.ne.s32.totalorder %s45, %s46
    %p58 = scmp.eq.s32.totalorder %s15, 1
    %p59 = por %p57, %p58
    %p61 = scmp.ne.s32.totalorder %s46, %s60
    %p62 = scmp.eq.s32.totalorder %s15, 0
    %p63 = por %p61, %p62
    %s65 = sadd.s32 %s64, 1
    %p68 = scmp.eq.s32.totalorder %s9, 1
    %p69 = scmp.ne.s32.totalorder %s64, %s66
    %p70 = scmp.eq.s32.totalorder %s9, 0
    %p71 = por %p69, %p70
    %p72 = scmp.ne.s32.totalorder %s64, %s66
    %p73 = scmp.eq.s32.totalorder %s14, 1
    %p74 = por %p72, %p73
    %p75 = scmp.ne.s32.totalorder %s66, %s67
    %p76 = scmp.eq.s32.totalorder %s14, 0
    %p77 = por %p75, %p76
    %p78 = scmp.ne.s32.totalorder %s66, %s67
    %p79 = scmp.eq.s32.totalorder %s15, 1
    %p80 = por %p78, %p79
    %p82 = scmp.ne.s32.totalorder %s67, %s81
    %p83 = scmp.eq.s32.totalorder %s15, 0
    %p84 = por %p82, %p83
    %s85 = ssub.s32 %s9, %s16
    %p86 = scmp.eq.s32.totalorder %s85, 0
    %s88 = sadd.s32 %s87, 1
    %s89 = scalar_select %p86, %s87, %s88
    %p92 = pneg %p86
    %p93 = scmp.eq.s32.totalorder %s9, 1
    %p94 = por %p92, %p93
    %p95 = scmp.ne.s32.totalorder %s87, %s90
    %p96 = scmp.eq.s32.totalorder %s9, 0
    %p97 = por %p95, %p96
    %p98 = scmp.ne.s32.totalorder %s87, %s90
    %p99 = scmp.eq.s32.totalorder %s14, 1
    %p100 = por %p98, %p99
    %p101 = scmp.ne.s32.totalorder %s90, %s91
    %p102 = scmp.eq.s32.totalorder %s14, 0
    %p103 = por %p101, %p102
    %p104 = scmp.ne.s32.totalorder %s90, %s91
    %p105 = scmp.eq.s32.totalorder %s15, 1
    %p106 = por %p104, %p105
    %p108 = scmp.ne.s32.totalorder %s91, %s107
    %p109 = scmp.eq.s32.totalorder %s15, 0
    %p110 = por %p108, %p109
    %p111 = scmp.le.s32.totalorder 1, %s9
    %p112 = scmp.lt.s32.totalorder %s9, 3
    %p113 = pnand %p111, %p112
    %p114 = pneg %p113
    // Predicated region
    $region9: #{unet_generator_forward.10} parent=5 // pred_check
      _
    $region10: #{unet_generator_forward.10} parent=5 // pred_check_branch
      %116 = sbr.rel (%p113) target = $region12
    $region11: #{unet_generator_forward.10} parent=5 // pred_region
      %s117 = ssub.s32 %s9, 1
      // Predicated region
      $region13: #{unet_generator_forward.10} parent=11 // pred_check
        %p118 = pneg %p56
      $region14: #{unet_generator_forward.10} parent=11 // pred_check_branch
        %120 = sbr.rel (%p118) target = $region16
      $region15: #{unet_generator_forward.10} parent=11 // pred_region
        _
      $region16: #{unet_generator_forward.10} parent=11 // pred_fallthru
        _
      // Predicated region
      $region17: #{unet_generator_forward.10} parent=11 // pred_check
        %p121 = pneg %p77
      $region18: #{unet_generator_forward.10} parent=11 // pred_check_branch
        %123 = sbr.rel (%p121) target = $region20
      $region19: #{unet_generator_forward.10} parent=11 // pred_region
        _
      $region20: #{unet_generator_forward.10} parent=11 // pred_fallthru
        _
    $region12: #{unet_generator_forward.10} parent=5 // pred_fallthru
      _
    %p124 = scmp.lt.s32.totalorder %s9, 2
    // Predicated region
    $region21: #{unet_generator_forward.10} parent=5 // pred_check
      %p125 = pneg %p124
    $region22: #{unet_generator_forward.10} parent=5 // pred_check_branch
      %127 = sbr.rel (%p125) target = $region24
    $region23: #{unet_generator_forward.10} parent=5 // pred_region
      // Predicated region
      $region25: #{unet_generator_forward.10} parent=23 // pred_check
        %p128 = pneg %p29
      $region26: #{unet_generator_forward.10} parent=23 // pred_check_branch
        %130 = sbr.rel (%p128) target = $region28
      $region27: #{unet_generator_forward.10} parent=23 // pred_region
        %s131 = smul.u32 32, %s9
        %p132 = scmp.lt.s32.totalorder %s131, 63
        %s133 = scalar_select %p132, %s131, 63
        %s134 = smul.addr %s133, 4
        %s135 = scalar_lea.vmem %s0, %s134
        %s136 = smul.u32 32, %s9
      $region28: #{unet_generator_forward.10} parent=23 // pred_fallthru
        _
    $region24: #{unet_generator_forward.10} parent=5 // pred_fallthru
      _
    %p137 = scmp.le.s32.totalorder 1, %s9
    %p138 = scmp.lt.s32.totalorder %s9, 3
    %p139 = pnand %p137, %p138
    %p140 = pneg %p139
    // Predicated region
    $region29: #{unet_generator_forward.10} parent=5 // pred_check
      _
    $region30: #{unet_generator_forward.10} parent=5 // pred_check_branch
      %142 = sbr.rel (%p139) target = $region32
    $region31: #{unet_generator_forward.10} parent=5 // pred_region
      %s143 = ssub.s32 %s9, 1
      %s144 = smul.u32 32, %s14
      %p145 = scmp.lt.s32.totalorder %s144, 63
      %s146 = scalar_select %p145, %s144, 63
      %s147 = smul.addr %s146, 4
      %s148 = scalar_lea.vmem %s0, %s147
      %p149 = pneg %p35
      %p150 = pneg %p32
      %p151 = pneg %p56
      %p152 = pneg %p53
      %p153 = pneg %p77
      %p154 = pneg %p74
      %p155 = pneg %p103
      %p156 = pneg %p100
      %s157 = smul.u32 32, %s14
      %p158 = scmp.lt.s32.totalorder %s157, 63
      %s159 = scalar_select %p158, %s157, 63
      %s160 = smul.addr %s159, 4
      %s161 = scalar_lea.vmem %s3, %s160
      %s162 = smul.u32 32, %s14
      %p163 = scmp.lt.s32.totalorder %s162, 63
      %s164 = scalar_select %p163, %s162, 63
      %s165 = smul.addr %s164, 4
      %s166 = scalar_lea.vmem %s0, %s165
      %s167 = smul.u32 32, %s14
      %s168 = smul.u32 32, %s14
      %p169 = scmp.lt.s32.totalorder %s168, 63
      %s170 = scalar_select %p169, %s168, 63
      %s171 = smul.addr %s170, 4
      %s172 = scalar_lea.vmem %s3, %s171
      %s173 = smul.u32 32, %s14
      %v175 = vld [vmem:[%s166] sm:$0xf]
      %v176 = vld [vmem:[%s166 + $0x4] sm:$0xf]
      %v177 = vld [vmem:[%s166 + $0x8] sm:$0xf]
      %v178 = vld [vmem:[%s166 + $0xc] sm:$0xf]
      %v179 = vld [vmem:[%s166 + $0x10] sm:$0xf]
      %v180 = vld [vmem:[%s166 + $0x14] sm:$0xf]
      %v181 = vld [vmem:[%s166 + $0x18] sm:$0xf]
      %v182 = vld [vmem:[%s166 + $0x1c] sm:$0xf]
      %v183 = vld [vmem:[%s166 + $0x20] sm:$0xf]
      %v184 = vld [vmem:[%s166 + $0x24] sm:$0xf]
      %v185 = vld [vmem:[%s166 + $0x28] sm:$0xf]
      %v186 = vld [vmem:[%s166 + $0x2c] sm:$0xf]
      %v187 = vld [vmem:[%s166 + $0x30] sm:$0xf]
      %v188 = vld [vmem:[%s166 + $0x34] sm:$0xf]
      %v189 = vld [vmem:[%s166 + $0x38] sm:$0xf]
      %v190 = vld [vmem:[%s166 + $0x3c] sm:$0xf]
      %v191 = vld [vmem:[%s166 + $0x40] sm:$0xf]
      %v192 = vld [vmem:[%s166 + $0x44] sm:$0xf]
      %v193 = vld [vmem:[%s166 + $0x48] sm:$0xf]
      %v194 = vld [vmem:[%s166 + $0x4c] sm:$0xf]
      %v195 = vld [vmem:[%s166 + $0x50] sm:$0xf]
      %v196 = vld [vmem:[%s166 + $0x54] sm:$0xf]
      %v197 = vld [vmem:[%s166 + $0x58] sm:$0xf]
      %v198 = vld [vmem:[%s166 + $0x5c] sm:$0xf]
      %v199 = vld [vmem:[%s166 + $0x60] sm:$0xf]
      %v200 = vld [vmem:[%s166 + $0x64] sm:$0xf]
      %v201 = vld [vmem:[%s166 + $0x68] sm:$0xf]
      %v202 = vld [vmem:[%s166 + $0x6c] sm:$0xf]
      %v203 = vld [vmem:[%s166 + $0x70] sm:$0xf]
      %v204 = vld [vmem:[%s166 + $0x74] sm:$0xf]
      %v205 = vld [vmem:[%s166 + $0x78] sm:$0xf]
      %v206 = vld [vmem:[%s166 + $0x7c] sm:$0xf]
      %v207 = vld [vmem:[%s1] sm:$0xf]
      %v208 = vld [vmem:[%s1 + $0x4] sm:$0xf]
      %v209 = vld [vmem:[%s1 + $0x8] sm:$0xf]
      %v210 = vld [vmem:[%s1 + $0xc] sm:$0xf]
      %v211 = vld [vmem:[%s1 + $0x10] sm:$0xf]
      %v212 = vld [vmem:[%s1 + $0x14] sm:$0xf]
      %v213 = vld [vmem:[%s2] sm:$0x1]
      %v215 = vlaneseq
      %v216 = vshrl.u32 %v215, 7
      %v217 = vsub.s32 0, %v216
      %v218 = vrot.slane %v213, %v217
      %v252 = vunpack.c.l.b16 %v175
      %v253 = vunpack.c.l.b16 %v176
      %v254 = vunpack.c.l.b16 %v177
      %v255 = vunpack.c.l.b16 %v178
      %v256 = vunpack.c.l.b16 %v179
      %v257 = vunpack.c.l.b16 %v180
      %v258 = vunpack.c.l.b16 %v181
      %v259 = vunpack.c.l.b16 %v182
      %v260 = vunpack.c.l.b16 %v183
      %v261 = vunpack.c.l.b16 %v184
      %v262 = vunpack.c.l.b16 %v185
      %v263 = vunpack.c.l.b16 %v186
      %v264 = vunpack.c.l.b16 %v187
      %v265 = vunpack.c.l.b16 %v188
      %v266 = vunpack.c.l.b16 %v189
      %v267 = vunpack.c.l.b16 %v190
      %v268 = vunpack.c.l.b16 %v191
      %v269 = vunpack.c.l.b16 %v192
      %v270 = vunpack.c.l.b16 %v193
      %v271 = vunpack.c.l.b16 %v194
      %v272 = vunpack.c.l.b16 %v195
      %v273 = vunpack.c.l.b16 %v196
      %v274 = vunpack.c.l.b16 %v197
      %v275 = vunpack.c.l.b16 %v198
      %v276 = vunpack.c.l.b16 %v199
      %v277 = vunpack.c.l.b16 %v200
      %v278 = vunpack.c.l.b16 %v201
      %v279 = vunpack.c.l.b16 %v202
      %v280 = vunpack.c.l.b16 %v203
      %v281 = vunpack.c.l.b16 %v204
      %v282 = vunpack.c.l.b16 %v205
      %v283 = vunpack.c.l.b16 %v206
      %v284 = vpack.c.b16 %v253, %v252
      %v285 = vpack.c.b16 %v255, %v254
      %v286 = vpack.c.b16 %v257, %v256
      %v287 = vpack.c.b16 %v259, %v258
      %v288 = vpack.c.b16 %v261, %v260
      %v289 = vpack.c.b16 %v263, %v262
      %v290 = vpack.c.b16 %v265, %v264
      %v291 = vpack.c.b16 %v267, %v266
      %v292 = vpack.c.b16 %v269, %v268
      %v293 = vpack.c.b16 %v271, %v270
      %v294 = vpack.c.b16 %v273, %v272
      %v295 = vpack.c.b16 %v275, %v274
      %v296 = vpack.c.b16 %v277, %v276
      %v297 = vpack.c.b16 %v279, %v278
      %v298 = vpack.c.b16 %v281, %v280
      %v299 = vpack.c.b16 %v283, %v282
      %v306 = vunpack.c.l.b16 %v207
      %v307 = vunpack.c.l.b16 %v208
      %v308 = vunpack.c.l.b16 %v209
      %v309 = vunpack.c.l.b16 %v210
      %v310 = vunpack.c.l.b16 %v211
      %v311 = vunpack.c.l.b16 %v212
      %v312 = vpack.c.b16 %v307, %v306
      %v313 = vpack.c.b16 %v309, %v308
      %v314 = vpack.c.b16 %v311, %v310
      %vm318 = vcmask 392192
      %v320 = vsel %vm318, %v284, 0
      %v323 = vsel %vm318, %v285, 0
      %v326 = vsel %vm318, %v286, 0
      %v329 = vsel %vm318, %v287, 0
      %v332 = vsel %vm318, %v288, 0
      %v335 = vsel %vm318, %v289, 0
      %v338 = vsel %vm318, %v290, 0
      %v341 = vsel %vm318, %v291, 0
      %v344 = vsel %vm318, %v292, 0
      %v347 = vsel %vm318, %v293, 0
      %v350 = vsel %vm318, %v294, 0
      %v353 = vsel %vm318, %v295, 0
      %v356 = vsel %vm318, %v296, 0
      %v359 = vsel %vm318, %v297, 0
      %v362 = vsel %vm318, %v298, 0
      %v365 = vsel %vm318, %v299, 0
      %367 = vmatprep.subr.bf16.mxu0 0
      %368 = vmatpush1.bf16.msra.mxu0 %v312
      %369 = vmatprep.subr.bf16.mxu0 0
      %370 = vmatpush1.bf16.msra.mxu0 %v313
      %371 = vmatprep.subr.bf16.mxu0 0
      %372 = vmatpush1.bf16.msra.mxu0 %v314
      %373 = vmatprep.subr.bf16.mxu0 0
      %374 = vmatpush1.bf16.msra.mxu0 0
      %375 = vmatprep.subr.bf16.mxu0 0
      %376 = vmatpush1.bf16.msra.mxu0 0
      %377 = vmatprep.subr.bf16.mxu0 0
      %378 = vmatpush1.bf16.msra.mxu0 0
      %379 = vmatprep.subr.bf16.mxu0 0
      %380 = vmatpush1.bf16.msra.mxu0 0
      %381 = vmatprep.subr.bf16.mxu0 0
      %382 = vmatpush1.bf16.msra.mxu0 0
      %383 = vmatprep.subr.bf16.mxu0 0
      %384 = vmatpush1.bf16.msra.mxu0 0
      %385 = vmatprep.subr.bf16.mxu0 0
      %386 = vmatpush1.bf16.msra.mxu0 0
      %387 = vmatprep.subr.bf16.mxu0 0
      %388 = vmatpush1.bf16.msra.mxu0 0
      %389 = vmatprep.subr.bf16.mxu0 0
      %390 = vmatpush1.bf16.msra.mxu0 0
      %391 = vmatprep.subr.bf16.mxu0 0
      %392 = vmatpush1.bf16.msra.mxu0 0
      %393 = vmatprep.subr.bf16.mxu0 0
      %394 = vmatpush1.bf16.msra.mxu0 0
      %395 = vmatprep.subr.bf16.mxu0 0
      %396 = vmatpush1.bf16.msra.mxu0 0
      %397 = vmatprep.subr.bf16.mxu0 0
      %398 = vmatpush1.bf16.msra.mxu0 0
      %399 = vmatprep.mubr.bf16.mxu0 0
      %400 = vmatmul.mubr.bf16.gmra.mrb[0].mxu0 %v320
      %v401 = vpop.f32.mrb[0].mxu0
      %v402 = vadd.f32 %v218, %v401
      %v403 = vpop.f32.mrb[0].mxu0
      %v404 = vpop.f32.mrb[0].mxu0
      %v405 = vadd.f32 %v218, %v404
      %v406 = vpop.f32.mrb[0].mxu0
      %407 = vmatprep.mubr.bf16.mxu0 0
      %408 = vmatmul.mubr.bf16.gmra.mrb[0].mxu0 %v323
      %v409 = vpop.f32.mrb[0].mxu0
      %v410 = vadd.f32 %v218, %v409
      %v411 = vpop.f32.mrb[0].mxu0
      %v412 = vpop.f32.mrb[0].mxu0
      %v413 = vadd.f32 %v218, %v412
      %v414 = vpop.f32.mrb[0].mxu0
      %415 = vmatprep.mubr.bf16.mxu0 0
      %416 = vmatmul.mubr.bf16.gmra.mrb[0].mxu0 %v326
      %v417 = vpop.f32.mrb[0].mxu0
      %v418 = vadd.f32 %v218, %v417
      %v419 = vpop.f32.mrb[0].mxu0
      %v420 = vpop.f32.mrb[0].mxu0
      %v421 = vadd.f32 %v218, %v420
      %v422 = vpop.f32.mrb[0].mxu0
      %423 = vmatprep.mubr.bf16.mxu0 0
      %424 = vmatmul.mubr.bf16.gmra.mrb[0].mxu0 %v329
      %v425 = vpop.f32.mrb[0].mxu0
      %v426 = vadd.f32 %v218, %v425
      %v427 = vpop.f32.mrb[0].mxu0
      %v428 = vpop.f32.mrb[0].mxu0
      %v429 = vadd.f32 %v218, %v428
      %v430 = vpop.f32.mrb[0].mxu0
      %431 = vmatprep.mubr.bf16.mxu0 0
      %432 = vmatmul.mubr.bf16.gmra.mrb[0].mxu0 %v332
      %v433 = vpop.f32.mrb[0].mxu0
      %v434 = vadd.f32 %v218, %v433
      %v435 = vpop.f32.mrb[0].mxu0
      %v436 = vpop.f32.mrb[0].mxu0
      %v437 = vadd.f32 %v218, %v436
      %v438 = vpop.f32.mrb[0].mxu0
      %439 = vmatprep.mubr.bf16.mxu0 0
      %440 = vmatmul.mubr.bf16.gmra.mrb[0].mxu0 %v335
      %v441 = vpop.f32.mrb[0].mxu0
      %v442 = vadd.f32 %v218, %v441
      %v443 = vpop.f32.mrb[0].mxu0
      %v444 = vpop.f32.mrb[0].mxu0
      %v445 = vadd.f32 %v218, %v444
      %v446 = vpop.f32.mrb[0].mxu0
      %447 = vmatprep.mubr.bf16.mxu0 0
      %448 = vmatmul.mubr.bf16.gmra.mrb[0].mxu0 %v338
      %v449 = vpop.f32.mrb[0].mxu0
      %v450 = vadd.f32 %v218, %v449
      %v451 = vpop.f32.mrb[0].mxu0
      %v452 = vpop.f32.mrb[0].mxu0
      %v453 = vadd.f32 %v218, %v452
      %v454 = vpop.f32.mrb[0].mxu0
      %455 = vmatprep.mubr.bf16.mxu0 0
      %456 = vmatmul.mubr.bf16.gmra.mrb[0].mxu0 %v341
      %v457 = vpop.f32.mrb[0].mxu0
      %v458 = vadd.f32 %v218, %v457
      %v459 = vpop.f32.mrb[0].mxu0
      %v460 = vpop.f32.mrb[0].mxu0
      %v461 = vadd.f32 %v218, %v460
      %v462 = vpop.f32.mrb[0].mxu0
      %463 = vmatprep.mubr.bf16.mxu0 0
      %464 = vmatmul.mubr.bf16.gmra.mrb[0].mxu0 %v344
      %v465 = vpop.f32.mrb[0].mxu0
      %v466 = vadd.f32 %v218, %v465
      %v467 = vpop.f32.mrb[0].mxu0
      %v468 = vpop.f32.mrb[0].mxu0
      %v469 = vadd.f32 %v218, %v468
      %v470 = vpop.f32.mrb[0].mxu0
      %471 = vmatprep.mubr.bf16.mxu0 0
      %472 = vmatmul.mubr.bf16.gmra.mrb[0].mxu0 %v347
      %v473 = vpop.f32.mrb[0].mxu0
      %v474 = vadd.f32 %v218, %v473
      %v475 = vpop.f32.mrb[0].mxu0
      %v476 = vpop.f32.mrb[0].mxu0
      %v477 = vadd.f32 %v218, %v476
      %v478 = vpop.f32.mrb[0].mxu0
      %479 = vmatprep.mubr.bf16.mxu0 0
      %480 = vmatmul.mubr.bf16.gmra.mrb[0].mxu0 %v350
      %v481 = vpop.f32.mrb[0].mxu0
      %v482 = vadd.f32 %v218, %v481
      %v483 = vpop.f32.mrb[0].mxu0
      %v484 = vpop.f32.mrb[0].mxu0
      %v485 = vadd.f32 %v218, %v484
      %v486 = vpop.f32.mrb[0].mxu0
      %487 = vmatprep.mubr.bf16.mxu0 0
      %488 = vmatmul.mubr.bf16.gmra.mrb[0].mxu0 %v353
      %v489 = vpop.f32.mrb[0].mxu0
      %v490 = vadd.f32 %v218, %v489
      %v491 = vpop.f32.mrb[0].mxu0
      %v492 = vpop.f32.mrb[0].mxu0
      %v493 = vadd.f32 %v218, %v492
      %v494 = vpop.f32.mrb[0].mxu0
      %495 = vmatprep.mubr.bf16.mxu0 0
      %496 = vmatmul.mubr.bf16.gmra.mrb[0].mxu0 %v356
      %v497 = vpop.f32.mrb[0].mxu0
      %v498 = vadd.f32 %v218, %v497
      %v499 = vpop.f32.mrb[0].mxu0
      %v500 = vpop.f32.mrb[0].mxu0
      %v501 = vadd.f32 %v218, %v500
      %v502 = vpop.f32.mrb[0].mxu0
      %503 = vmatprep.mubr.bf16.mxu0 0
      %504 = vmatmul.mubr.bf16.gmra.mrb[0].mxu0 %v359
      %v505 = vpop.f32.mrb[0].mxu0
      %v506 = vadd.f32 %v218, %v505
      %v507 = vpop.f32.mrb[0].mxu0
      %v508 = vpop.f32.mrb[0].mxu0
      %v509 = vadd.f32 %v218, %v508
      %v510 = vpop.f32.mrb[0].mxu0
      %511 = vmatprep.mubr.bf16.mxu0 0
      %512 = vmatmul.mubr.bf16.gmra.mrb[0].mxu0 %v362
      %v513 = vpop.f32.mrb[0].mxu0
      %v514 = vadd.f32 %v218, %v513
      %v515 = vpop.f32.mrb[0].mxu0
      %v516 = vpop.f32.mrb[0].mxu0
      %v517 = vadd.f32 %v218, %v516
      %v518 = vpop.f32.mrb[0].mxu0
      %519 = vmatprep.mubr.bf16.mxu0 0
      %520 = vmatmul.mubr.bf16.gmra.mrb[0].mxu0 %v365
      %v521 = vpop.f32.mrb[0].mxu0
      %v522 = vadd.f32 %v218, %v521
      %v523 = vpop.f32.mrb[0].mxu0
      %v524 = vpop.f32.mrb[0].mxu0
      %v525 = vadd.f32 %v218, %v524
      %v526 = vpop.f32.mrb[0].mxu0
      %527 = vdwg.mxu0
      %v528 = vpack.c.bf16 %v405, %v402
      %v529 = vpack.c.bf16 %v413, %v410
      %v530 = vpack.c.bf16 %v421, %v418
      %v531 = vpack.c.bf16 %v429, %v426
      %v532 = vpack.c.bf16 %v437, %v434
      %v533 = vpack.c.bf16 %v445, %v442
      %v534 = vpack.c.bf16 %v453, %v450
      %v535 = vpack.c.bf16 %v461, %v458
      %v536 = vpack.c.bf16 %v469, %v466
      %v537 = vpack.c.bf16 %v477, %v474
      %v538 = vpack.c.bf16 %v485, %v482
      %v539 = vpack.c.bf16 %v493, %v490
      %v540 = vpack.c.bf16 %v501, %v498
      %v541 = vpack.c.bf16 %v509, %v506
      %v542 = vpack.c.bf16 %v517, %v514
      %v543 = vpack.c.bf16 %v525, %v522
      %v560 = vunpack.c.l.b16 %v528
      %v561 = vunpack.c.h.b16 %v528
      %v562 = vunpack.c.l.b16 %v529
      %v563 = vunpack.c.h.b16 %v529
      %v564 = vunpack.c.l.b16 %v530
      %v565 = vunpack.c.h.b16 %v530
      %v566 = vunpack.c.l.b16 %v531
      %v567 = vunpack.c.h.b16 %v531
      %v568 = vunpack.c.l.b16 %v532
      %v569 = vunpack.c.h.b16 %v532
      %v570 = vunpack.c.l.b16 %v533
      %v571 = vunpack.c.h.b16 %v533
      %v572 = vunpack.c.l.b16 %v534
      %v573 = vunpack.c.h.b16 %v534
      %v574 = vunpack.c.l.b16 %v535
      %v575 = vunpack.c.h.b16 %v535
      %v576 = vunpack.c.l.b16 %v536
      %v577 = vunpack.c.h.b16 %v536
      %v578 = vunpack.c.l.b16 %v537
      %v579 = vunpack.c.h.b16 %v537
      %v580 = vunpack.c.l.b16 %v538
      %v581 = vunpack.c.h.b16 %v538
      %v582 = vunpack.c.l.b16 %v539
      %v583 = vunpack.c.h.b16 %v539
      %v584 = vunpack.c.l.b16 %v540
      %v585 = vunpack.c.h.b16 %v540
      %v586 = vunpack.c.l.b16 %v541
      %v587 = vunpack.c.h.b16 %v541
      %v588 = vunpack.c.l.b16 %v542
      %v589 = vunpack.c.h.b16 %v542
      %v590 = vunpack.c.l.b16 %v543
      %v591 = vunpack.c.h.b16 %v543
      %v592 = vpack.c.b16 %v560, %v560
      %v593 = vpack.c.b16 %v561, %v561
      %v594 = vpack.c.b16 %v562, %v562
      %v595 = vpack.c.b16 %v563, %v563
      %v596 = vpack.c.b16 %v564, %v564
      %v597 = vpack.c.b16 %v565, %v565
      %v598 = vpack.c.b16 %v566, %v566
      %v599 = vpack.c.b16 %v567, %v567
      %v600 = vpack.c.b16 %v568, %v568
      %v601 = vpack.c.b16 %v569, %v569
      %v602 = vpack.c.b16 %v570, %v570
      %v603 = vpack.c.b16 %v571, %v571
      %v604 = vpack.c.b16 %v572, %v572
      %v605 = vpack.c.b16 %v573, %v573
      %v606 = vpack.c.b16 %v574, %v574
      %v607 = vpack.c.b16 %v575, %v575
      %v608 = vpack.c.b16 %v576, %v576
      %v609 = vpack.c.b16 %v577, %v577
      %v610 = vpack.c.b16 %v578, %v578
      %v611 = vpack.c.b16 %v579, %v579
      %v612 = vpack.c.b16 %v580, %v580
      %v613 = vpack.c.b16 %v581, %v581
      %v614 = vpack.c.b16 %v582, %v582
      %v615 = vpack.c.b16 %v583, %v583
      %v616 = vpack.c.b16 %v584, %v584
      %v617 = vpack.c.b16 %v585, %v585
      %v618 = vpack.c.b16 %v586, %v586
      %v619 = vpack.c.b16 %v587, %v587
      %v620 = vpack.c.b16 %v588, %v588
      %v621 = vpack.c.b16 %v589, %v589
      %v622 = vpack.c.b16 %v590, %v590
      %v623 = vpack.c.b16 %v591, %v591
      %656 = vst [vmem:[%s172] sm:$0xf] %v592
      %657 = vst [vmem:[%s172 + $0x4] sm:$0xf] %v593
      %658 = vst [vmem:[%s172 + $0x8] sm:$0xf] %v594
      %659 = vst [vmem:[%s172 + $0xc] sm:$0xf] %v595
      %660 = vst [vmem:[%s172 + $0x10] sm:$0xf] %v596
      %661 = vst [vmem:[%s172 + $0x14] sm:$0xf] %v597
      %662 = vst [vmem:[%s172 + $0x18] sm:$0xf] %v598
      %663 = vst [vmem:[%s172 + $0x1c] sm:$0xf] %v599
      %664 = vst [vmem:[%s172 + $0x20] sm:$0xf] %v600
      %665 = vst [vmem:[%s172 + $0x24] sm:$0xf] %v601
      %666 = vst [vmem:[%s172 + $0x28] sm:$0xf] %v602
      %667 = vst [vmem:[%s172 + $0x2c] sm:$0xf] %v603
      %668 = vst [vmem:[%s172 + $0x30] sm:$0xf] %v604
      %669 = vst [vmem:[%s172 + $0x34] sm:$0xf] %v605
      %670 = vst [vmem:[%s172 + $0x38] sm:$0xf] %v606
      %671 = vst [vmem:[%s172 + $0x3c] sm:$0xf] %v607
      %672 = vst [vmem:[%s172 + $0x40] sm:$0xf] %v608
      %673 = vst [vmem:[%s172 + $0x44] sm:$0xf] %v609
      %674 = vst [vmem:[%s172 + $0x48] sm:$0xf] %v610
      %675 = vst [vmem:[%s172 + $0x4c] sm:$0xf] %v611
      %676 = vst [vmem:[%s172 + $0x50] sm:$0xf] %v612
      %677 = vst [vmem:[%s172 + $0x54] sm:$0xf] %v613
      %678 = vst [vmem:[%s172 + $0x58] sm:$0xf] %v614
      %679 = vst [vmem:[%s172 + $0x5c] sm:$0xf] %v615
      %680 = vst [vmem:[%s172 + $0x60] sm:$0xf] %v616
      %681 = vst [vmem:[%s172 + $0x64] sm:$0xf] %v617
      %682 = vst [vmem:[%s172 + $0x68] sm:$0xf] %v618
      %683 = vst [vmem:[%s172 + $0x6c] sm:$0xf] %v619
      %684 = vst [vmem:[%s172 + $0x70] sm:$0xf] %v620
      %685 = vst [vmem:[%s172 + $0x74] sm:$0xf] %v621
      %686 = vst [vmem:[%s172 + $0x78] sm:$0xf] %v622
      %687 = vst [vmem:[%s172 + $0x7c] sm:$0xf] %v623
      %s688 = smul.u32 32, %s14
      %p689 = scmp.lt.s32.totalorder %s688, 63
      %s690 = scalar_select %p689, %s688, 63
      %s691 = smul.addr %s690, 4
      %s692 = scalar_lea.vmem %s3, %s691
      // Predicated region
      $region33: #{unet_generator_forward.10} parent=31 // pred_check
        %p693 = pneg %p100
      $region34: #{unet_generator_forward.10} parent=31 // pred_check_branch
        %695 = sbr.rel (%p693) target = $region36
      $region35: #{unet_generator_forward.10} parent=31 // pred_region
        %s696 = smul.u32 32, %s14
      $region36: #{unet_generator_forward.10} parent=31 // pred_fallthru
        _
    $region32: #{unet_generator_forward.10} parent=5 // pred_fallthru
      _
    %p697 = scmp.le.s32.totalorder 2, %s9
    // Predicated region
    $region37: #{unet_generator_forward.10} parent=5 // pred_check
      %p698 = pneg %p697
    $region38: #{unet_generator_forward.10} parent=5 // pred_check_branch
      %700 = sbr.rel (%p698) target = $region40
    $region39: #{unet_generator_forward.10} parent=5 // pred_region
      %s701 = ssub.s32 %s9, 2
      // Predicated region
      $region41: #{unet_generator_forward.10} parent=39 // pred_check
        %p702 = pneg %p106
      $region42: #{unet_generator_forward.10} parent=39 // pred_check_branch
        %704 = sbr.rel (%p702) target = $region44
      $region43: #{unet_generator_forward.10} parent=39 // pred_region
        %s705 = smul.u32 32, %s15
        %p706 = scmp.lt.s32.totalorder %s705, 63
        %s707 = scalar_select %p706, %s705, 63
        %s708 = smul.addr %s707, 4
        %s709 = scalar_lea.vmem %s3, %s708
      $region44: #{unet_generator_forward.10} parent=39 // pred_fallthru
        _
    $region40: #{unet_generator_forward.10} parent=5 // pred_fallthru
      _
  $region6: #{unet_generator_forward.10} parent=0 // loop_footer
    %s13 = sadd.s32 1, %s9
  $region7: #{unet_generator_forward.10} parent=0 // loop_footer_branch
    %8 = sbr.rel target = $region3
  $region8: #{unet_generator_forward.10} parent=0 // loop_exit
    _

// kernel: unet_generator_forward.11
$region0: #{unet_generator_forward.11}
  #allocation0 [shape = 'u32[]', space=smem, size = 0x4, offset = 0x4, fixed_abs, tag = 'smem constant byte address 0x4 - core index']
  #allocation1 [shape = 'u32[144,128]{1,0:T(1,128)}', space=vmem, size = 0x12000, scoped, tag = 'internal scratch']
  %s0 = inlined_call_operand.vmem [shape: bf16[128,128], index: 0, kind: input, shape index: {}]
  %s1 = inlined_call_operand.vmem [shape: bf16[128,128], index: 1, kind: input, shape index: {}]
  %s2 = inlined_call_operand.vmem [shape: f32[1,128], index: 2, kind: input, shape index: {}]
  %s3 = inlined_call_operand.vmem [shape: bf16[128,128], index: 3, kind: output, shape index: {0}]
  %s4 = inlined_call_operand.vmem [shape: f32[1,8,128], index: 4, kind: output, shape index: {1}]
  %5 = xla_tuple %s3, %s4
  %s6 = sld [smem:[#allocation0]]
  $region30: #{unet_generator_forward.11} parent=0
    _
  %s8 = ssub.s32 1, %s6
  %s9 = scalar_select 0, %s8, %s6
  // Predicated region
  $region2: #{unet_generator_forward.11} parent=0 // pred_check
    _
  $region3: #{unet_generator_forward.11} parent=0 // pred_check_branch
    %11 = sbr.rel (0) target = $region5
  $region4: #{unet_generator_forward.11} parent=0 // pred_region
    _
  $region5: #{unet_generator_forward.11} parent=0 // pred_fallthru
    _
  // Predicated region
  $region6: #{unet_generator_forward.11} parent=0 // pred_check
    _
  $region7: #{unet_generator_forward.11} parent=0 // pred_check_branch
    %13 = sbr.rel (0) target = $region9
  $region8: #{unet_generator_forward.11} parent=0 // pred_region
    _
  $region9: #{unet_generator_forward.11} parent=0 // pred_fallthru
    _
  // Predicated region
  $region10: #{unet_generator_forward.11} parent=0 // pred_check
    _
  $region11: #{unet_generator_forward.11} parent=0 // pred_check_branch
    %15 = sbr.rel (0) target = $region13
  $region12: #{unet_generator_forward.11} parent=0 // pred_region
    _
  $region13: #{unet_generator_forward.11} parent=0 // pred_fallthru
    _
  %v17 = vld [vmem:[%s0] sm:$0xf]
  %v18 = vld [vmem:[%s0 + $0x4] sm:$0xf]
  %v19 = vld [vmem:[%s0 + $0x8] sm:$0xf]
  %v20 = vld [vmem:[%s0 + $0xc] sm:$0xf]
  %v21 = vld [vmem:[%s0 + $0x10] sm:$0xf]
  %v22 = vld [vmem:[%s0 + $0x14] sm:$0xf]
  %v23 = vld [vmem:[%s0 + $0x18] sm:$0xf]
  %v24 = vld [vmem:[%s0 + $0x1c] sm:$0xf]
  %v25 = vld [vmem:[%s0 + $0x20] sm:$0xf]
  %v26 = vld [vmem:[%s0 + $0x24] sm:$0xf]
  %v27 = vld [vmem:[%s0 + $0x28] sm:$0xf]
  %v28 = vld [vmem:[%s0 + $0x2c] sm:$0xf]
  %v29 = vld [vmem:[%s0 + $0x30] sm:$0xf]
  %v30 = vld [vmem:[%s0 + $0x34] sm:$0xf]
  %v31 = vld [vmem:[%s0 + $0x38] sm:$0xf]
  %v32 = vld [vmem:[%s0 + $0x3c] sm:$0xf]
  %v33 = vunpack.c.l.bf16 %v17
  %v34 = vunpack.c.l.bf16 %v18
  %v35 = vunpack.c.l.bf16 %v19
  %v36 = vunpack.c.l.bf16 %v20
  %v37 = vunpack.c.l.bf16 %v21
  %v38 = vunpack.c.l.bf16 %v22
  %v39 = vunpack.c.l.bf16 %v23
  %v40 = vunpack.c.l.bf16 %v24
  %v41 = vunpack.c.l.bf16 %v25
  %v42 = vunpack.c.l.bf16 %v26
  %v43 = vunpack.c.l.bf16 %v27
  %v44 = vunpack.c.l.bf16 %v28
  %v45 = vunpack.c.l.bf16 %v29
  %v46 = vunpack.c.l.bf16 %v30
  %v47 = vunpack.c.l.bf16 %v31
  %v48 = vunpack.c.l.bf16 %v32
  %vm49 = vcmp.ge.f32.partialorder %v33, 0.0
  %vm50 = vcmp.ge.f32.partialorder %v34, 0.0
  %vm51 = vcmp.ge.f32.partialorder %v35, 0.0
  %vm52 = vcmp.ge.f32.partialorder %v36, 0.0
  %vm53 = vcmp.ge.f32.partialorder %v37, 0.0
  %vm54 = vcmp.ge.f32.partialorder %v38, 0.0
  %vm55 = vcmp.ge.f32.partialorder %v39, 0.0
  %vm56 = vcmp.ge.f32.partialorder %v40, 0.0
  %vm57 = vcmp.ge.f32.partialorder %v41, 0.0
  %vm58 = vcmp.ge.f32.partialorder %v42, 0.0
  %vm59 = vcmp.ge.f32.partialorder %v43, 0.0
  %vm60 = vcmp.ge.f32.partialorder %v44, 0.0
  %vm61 = vcmp.ge.f32.partialorder %v45, 0.0
  %vm62 = vcmp.ge.f32.partialorder %v46, 0.0
  %vm63 = vcmp.ge.f32.partialorder %v47, 0.0
  %vm64 = vcmp.ge.f32.partialorder %v48, 0.0
  %v65 = vmul.f32 %v33, 0.2
  %v66 = vmul.f32 %v34, 0.2
  %v67 = vmul.f32 %v35, 0.2
  %v68 = vmul.f32 %v36, 0.2
  %v69 = vmul.f32 %v37, 0.2
  %v70 = vmul.f32 %v38, 0.2
  %v71 = vmul.f32 %v39, 0.2
  %v72 = vmul.f32 %v40, 0.2
  %v73 = vmul.f32 %v41, 0.2
  %v74 = vmul.f32 %v42, 0.2
  %v75 = vmul.f32 %v43, 0.2
  %v76 = vmul.f32 %v44, 0.2
  %v77 = vmul.f32 %v45, 0.2
  %v78 = vmul.f32 %v46, 0.2
  %v79 = vmul.f32 %v47, 0.2
  %v80 = vmul.f32 %v48, 0.2
  %v81 = vsel %vm49, %v33, %v65
  %v82 = vsel %vm50, %v34, %v66
  %v83 = vsel %vm51, %v35, %v67
  %v84 = vsel %vm52, %v36, %v68
  %v85 = vsel %vm53, %v37, %v69
  %v86 = vsel %vm54, %v38, %v70
  %v87 = vsel %vm55, %v39, %v71
  %v88 = vsel %vm56, %v40, %v72
  %v89 = vsel %vm57, %v41, %v73
  %v90 = vsel %vm58, %v42, %v74
  %v91 = vsel %vm59, %v43, %v75
  %v92 = vsel %vm60, %v44, %v76
  %v93 = vsel %vm61, %v45, %v77
  %v94 = vsel %vm62, %v46, %v78
  %v95 = vsel %vm63, %v47, %v79
  %v96 = vsel %vm64, %v48, %v80
  %v97 = vpack.c.bf16 %v82, %v81
  %v98 = vpack.c.bf16 %v84, %v83
  %v99 = vpack.c.bf16 %v86, %v85
  %v100 = vpack.c.bf16 %v88, %v87
  %v101 = vpack.c.bf16 %v90, %v89
  %v102 = vpack.c.bf16 %v92, %v91
  %v103 = vpack.c.bf16 %v94, %v93
  %v104 = vpack.c.bf16 %v96, %v95
  %v105 = vld [vmem:[%s1] sm:$0xf]
  %v106 = vld [vmem:[%s1 + $0x4] sm:$0xf]
  %v107 = vld [vmem:[%s1 + $0x8] sm:$0xf]
  %v108 = vld [vmem:[%s1 + $0xc] sm:$0xf]
  %v109 = vld [vmem:[%s1 + $0x10] sm:$0xf]
  %v110 = vld [vmem:[%s1 + $0x14] sm:$0xf]
  %v111 = vld [vmem:[%s1 + $0x18] sm:$0xf]
  %v112 = vld [vmem:[%s1 + $0x1c] sm:$0xf]
  %v113 = vld [vmem:[%s1 + $0x20] sm:$0xf]
  %v114 = vld [vmem:[%s1 + $0x24] sm:$0xf]
  %v115 = vld [vmem:[%s1 + $0x28] sm:$0xf]
  %v116 = vld [vmem:[%s1 + $0x2c] sm:$0xf]
  %v117 = vld [vmem:[%s1 + $0x30] sm:$0xf]
  %v118 = vld [vmem:[%s1 + $0x34] sm:$0xf]
  %v119 = vld [vmem:[%s1 + $0x38] sm:$0xf]
  %v120 = vld [vmem:[%s1 + $0x3c] sm:$0xf]
  %v121 = vld [vmem:[%s2] sm:$0x1]
  %v123 = vlaneseq
  %v124 = vshrl.u32 %v123, 7
  %v125 = vsub.s32 0, %v124
  %v126 = vrot.slane %v121, %v125
  %v144 = vunpack.c.l.b16 %v105
  %v145 = vunpack.c.l.b16 %v106
  %v146 = vunpack.c.l.b16 %v107
  %v147 = vunpack.c.l.b16 %v108
  %v148 = vunpack.c.l.b16 %v109
  %v149 = vunpack.c.l.b16 %v110
  %v150 = vunpack.c.l.b16 %v111
  %v151 = vunpack.c.l.b16 %v112
  %v152 = vunpack.c.l.b16 %v113
  %v153 = vunpack.c.l.b16 %v114
  %v154 = vunpack.c.l.b16 %v115
  %v155 = vunpack.c.l.b16 %v116
  %v156 = vunpack.c.l.b16 %v117
  %v157 = vunpack.c.l.b16 %v118
  %v158 = vunpack.c.l.b16 %v119
  %v159 = vunpack.c.l.b16 %v120
  %v160 = vpack.c.b16 %v145, %v144
  %v161 = vpack.c.b16 %v147, %v146
  %v162 = vpack.c.b16 %v149, %v148
  %v163 = vpack.c.b16 %v151, %v150
  %v164 = vpack.c.b16 %v153, %v152
  %v165 = vpack.c.b16 %v155, %v154
  %v166 = vpack.c.b16 %v157, %v156
  %v167 = vpack.c.b16 %v159, %v158
  %176 = vmatprep.subr.bf16.mxu0 0
  %177 = vmatpush1.bf16.msra.mxu0 %v160
  %178 = vmatprep.subr.bf16.mxu0 0
  %179 = vmatpush1.bf16.msra.mxu0 %v161
  %180 = vmatprep.subr.bf16.mxu0 0
  %181 = vmatpush1.bf16.msra.mxu0 %v162
  %182 = vmatprep.subr.bf16.mxu0 0
  %183 = vmatpush1.bf16.msra.mxu0 %v163
  %184 = vmatprep.subr.bf16.mxu0 0
  %185 = vmatpush1.bf16.msra.mxu0 %v164
  %186 = vmatprep.subr.bf16.mxu0 0
  %187 = vmatpush1.bf16.msra.mxu0 %v165
  %188 = vmatprep.subr.bf16.mxu0 0
  %189 = vmatpush1.bf16.msra.mxu0 %v166
  %190 = vmatprep.subr.bf16.mxu0 0
  %191 = vmatpush1.bf16.msra.mxu0 %v167
  %192 = vmatprep.subr.bf16.mxu0 0
  %193 = vmatpush1.bf16.msra.mxu0 0
  %194 = vmatprep.subr.bf16.mxu0 0
  %195 = vmatpush1.bf16.msra.mxu0 0
  %196 = vmatprep.subr.bf16.mxu0 0
  %197 = vmatpush1.bf16.msra.mxu0 0
  %198 = vmatprep.subr.bf16.mxu0 0
  %199 = vmatpush1.bf16.msra.mxu0 0
  %200 = vmatprep.subr.bf16.mxu0 0
  %201 = vmatpush1.bf16.msra.mxu0 0
  %202 = vmatprep.subr.bf16.mxu0 0
  %203 = vmatpush1.bf16.msra.mxu0 0
  %204 = vmatprep.subr.bf16.mxu0 0
  %205 = vmatpush1.bf16.msra.mxu0 0
  %206 = vmatprep.subr.bf16.mxu0 0
  %207 = vmatpush1.bf16.msra.mxu0 0
  %208 = vmatprep.mubr.bf16.mxu0 0
  %209 = vmatmul.mubr.bf16.gmra.mrb[0].mxu0 %v97
  %v210 = vpop.f32.mrb[0].mxu0
  %v211 = vadd.f32 %v126, %v210
  %v212 = vpop.f32.mrb[0].mxu0
  %v213 = vpop.f32.mrb[0].mxu0
  %v214 = vadd.f32 %v126, %v213
  %v215 = vpop.f32.mrb[0].mxu0
  %216 = vmatprep.mubr.bf16.mxu0 0
  %217 = vmatmul.mubr.bf16.gmra.mrb[0].mxu0 %v98
  %v218 = vpop.f32.mrb[0].mxu0
  %v219 = vadd.f32 %v126, %v218
  %v220 = vpop.f32.mrb[0].mxu0
  %v221 = vpop.f32.mrb[0].mxu0
  %v222 = vadd.f32 %v126, %v221
  %v223 = vpop.f32.mrb[0].mxu0
  %224 = vmatprep.mubr.bf16.mxu0 0
  %225 = vmatmul.mubr.bf16.gmra.mrb[0].mxu0 %v99
  %v226 = vpop.f32.mrb[0].mxu0
  %v227 = vadd.f32 %v126, %v226
  %v228 = vpop.f32.mrb[0].mxu0
  %v229 = vpop.f32.mrb[0].mxu0
  %v230 = vadd.f32 %v126, %v229
  %v231 = vpop.f32.mrb[0].mxu0
  %232 = vmatprep.mubr.bf16.mxu0 0
  %233 = vmatmul.mubr.bf16.gmra.mrb[0].mxu0 %v100
  %v234 = vpop.f32.mrb[0].mxu0
  %v235 = vadd.f32 %v126, %v234
  %v236 = vpop.f32.mrb[0].mxu0
  %v237 = vpop.f32.mrb[0].mxu0
  %v238 = vadd.f32 %v126, %v237
  %v239 = vpop.f32.mrb[0].mxu0
  %240 = vmatprep.mubr.bf16.mxu0 0
  %241 = vmatmul.mubr.bf16.gmra.mrb[0].mxu0 %v101
  %v242 = vpop.f32.mrb[0].mxu0
  %v243 = vadd.f32 %v126, %v242
  %v244 = vpop.f32.mrb[0].mxu0
  %v245 = vpop.f32.mrb[0].mxu0
  %v246 = vadd.f32 %v126, %v245
  %v247 = vpop.f32.mrb[0].mxu0
  %248 = vmatprep.mubr.bf16.mxu0 0
  %249 = vmatmul.mubr.bf16.gmra.mrb[0].mxu0 %v102
  %v250 = vpop.f32.mrb[0].mxu0
  %v251 = vadd.f32 %v126, %v250
  %v252 = vpop.f32.mrb[0].mxu0
  %v253 = vpop.f32.mrb[0].mxu0
  %v254 = vadd.f32 %v126, %v253
  %v255 = vpop.f32.mrb[0].mxu0
  %256 = vmatprep.mubr.bf16.mxu0 0
  %257 = vmatmul.mubr.bf16.gmra.mrb[0].mxu0 %v103
  %v258 = vpop.f32.mrb[0].mxu0
  %v259 = vadd.f32 %v126, %v258
  %v260 = vpop.f32.mrb[0].mxu0
  %v261 = vpop.f32.mrb[0].mxu0
  %v262 = vadd.f32 %v126, %v261
  %v263 = vpop.f32.mrb[0].mxu0
  %264 = vmatprep.mubr.bf16.mxu0 0
  %265 = vmatmul.mubr.bf16.gmra.mrb[0].mxu0 %v104
  %v266 = vpop.f32.mrb[0].mxu0
  %v267 = vadd.f32 %v126, %v266
  %v268 = vpop.f32.mrb[0].mxu0
  %v269 = vpop.f32.mrb[0].mxu0
  %v270 = vadd.f32 %v126, %v269
  %v271 = vpop.f32.mrb[0].mxu0
  %272 = vdwg.mxu0
  %v273 = vpack.c.bf16 %v214, %v211
  %v274 = vpack.c.bf16 %v222, %v219
  %v275 = vpack.c.bf16 %v230, %v227
  %v276 = vpack.c.bf16 %v238, %v235
  %v277 = vpack.c.bf16 %v246, %v243
  %v278 = vpack.c.bf16 %v254, %v251
  %v279 = vpack.c.bf16 %v262, %v259
  %v280 = vpack.c.bf16 %v270, %v267
  %v289 = vunpack.c.l.b16 %v273
  %v290 = vunpack.c.h.b16 %v273
  %v291 = vunpack.c.l.b16 %v274
  %v292 = vunpack.c.h.b16 %v274
  %v293 = vunpack.c.l.b16 %v275
  %v294 = vunpack.c.h.b16 %v275
  %v295 = vunpack.c.l.b16 %v276
  %v296 = vunpack.c.h.b16 %v276
  %v297 = vunpack.c.l.b16 %v277
  %v298 = vunpack.c.h.b16 %v277
  %v299 = vunpack.c.l.b16 %v278
  %v300 = vunpack.c.h.b16 %v278
  %v301 = vunpack.c.l.b16 %v279
  %v302 = vunpack.c.h.b16 %v279
  %v303 = vunpack.c.l.b16 %v280
  %v304 = vunpack.c.h.b16 %v280
  %v305 = vpack.c.b16 %v289, %v289
  %v306 = vpack.c.b16 %v290, %v290
  %v307 = vpack.c.b16 %v291, %v291
  %v308 = vpack.c.b16 %v292, %v292
  %v309 = vpack.c.b16 %v293, %v293
  %v310 = vpack.c.b16 %v294, %v294
  %v311 = vpack.c.b16 %v295, %v295
  %v312 = vpack.c.b16 %v296, %v296
  %v313 = vpack.c.b16 %v297, %v297
  %v314 = vpack.c.b16 %v298, %v298
  %v315 = vpack.c.b16 %v299, %v299
  %v316 = vpack.c.b16 %v300, %v300
  %v317 = vpack.c.b16 %v301, %v301
  %v318 = vpack.c.b16 %v302, %v302
  %v319 = vpack.c.b16 %v303, %v303
  %v320 = vpack.c.b16 %v304, %v304
  %337 = vst [vmem:[%s3] sm:$0xf] %v305
  %338 = vst [vmem:[%s3 + $0x4] sm:$0xf] %v306
  %339 = vst [vmem:[%s3 + $0x8] sm:$0xf] %v307
  %340 = vst [vmem:[%s3 + $0xc] sm:$0xf] %v308
  %341 = vst [vmem:[%s3 + $0x10] sm:$0xf] %v309
  %342 = vst [vmem:[%s3 + $0x14] sm:$0xf] %v310
  %343 = vst [vmem:[%s3 + $0x18] sm:$0xf] %v311
  %344 = vst [vmem:[%s3 + $0x1c] sm:$0xf] %v312
  %345 = vst [vmem:[%s3 + $0x20] sm:$0xf] %v313
  %346 = vst [vmem:[%s3 + $0x24] sm:$0xf] %v314
  %347 = vst [vmem:[%s3 + $0x28] sm:$0xf] %v315
  %348 = vst [vmem:[%s3 + $0x2c] sm:$0xf] %v316
  %349 = vst [vmem:[%s3 + $0x30] sm:$0xf] %v317
  %350 = vst [vmem:[%s3 + $0x34] sm:$0xf] %v318
  %351 = vst [vmem:[%s3 + $0x38] sm:$0xf] %v319
  %352 = vst [vmem:[%s3 + $0x3c] sm:$0xf] %v320
  %v353 = vlaneseq
  %v354 = vshrl.u32 %v353, 7
  %v355 = vadd.s32 %v354, 8
  %v356 = vadd.s32 %v354, 16
  %v357 = vadd.s32 %v354, 24
  %v358 = vadd.s32 %v354, 32
  %v359 = vadd.s32 %v354, 40
  %v360 = vadd.s32 %v354, 48
  %v361 = vadd.s32 %v354, 56
  %v362 = vadd.s32 %v354, 64
  %v363 = vadd.s32 %v354, 72
  %v364 = vadd.s32 %v354, 80
  %v365 = vadd.s32 %v354, 88
  %v366 = vadd.s32 %v354, 96
  %v367 = vadd.s32 %v354, 104
  %v368 = vadd.s32 %v354, 112
  %v369 = vadd.s32 %v354, 120
  %s370 = smul.u32 0, 128
  %s371 = ssub.s32 128, %s370
  %v372 = vstv %s371
  %vm373 = vcmp.lt.s32.totalorder %v354, %v372
  %vm374 = vcmp.lt.s32.totalorder %v355, %v372
  %vm375 = vcmp.lt.s32.totalorder %v356, %v372
  %vm376 = vcmp.lt.s32.totalorder %v357, %v372
  %vm377 = vcmp.lt.s32.totalorder %v358, %v372
  %vm378 = vcmp.lt.s32.totalorder %v359, %v372
  %vm379 = vcmp.lt.s32.totalorder %v360, %v372
  %vm380 = vcmp.lt.s32.totalorder %v361, %v372
  %vm381 = vcmp.lt.s32.totalorder %v362, %v372
  %vm382 = vcmp.lt.s32.totalorder %v363, %v372
  %vm383 = vcmp.lt.s32.totalorder %v364, %v372
  %vm384 = vcmp.lt.s32.totalorder %v365, %v372
  %vm385 = vcmp.lt.s32.totalorder %v366, %v372
  %vm386 = vcmp.lt.s32.totalorder %v367, %v372
  %vm387 = vcmp.lt.s32.totalorder %v368, %v372
  %vm388 = vcmp.lt.s32.totalorder %v369, %v372
  %v389 = vsel %vm373, 1, 0
  %v390 = vsel %vm374, 1, 0
  %v391 = vsel %vm375, 1, 0
  %v392 = vsel %vm376, 1, 0
  %v393 = vsel %vm377, 1, 0
  %v394 = vsel %vm378, 1, 0
  %v395 = vsel %vm379, 1, 0
  %v396 = vsel %vm380, 1, 0
  %v397 = vsel %vm381, 1, 0
  %v398 = vsel %vm382, 1, 0
  %v399 = vsel %vm383, 1, 0
  %v400 = vsel %vm384, 1, 0
  %v401 = vsel %vm385, 1, 0
  %v402 = vsel %vm386, 1, 0
  %v403 = vsel %vm387, 1, 0
  %v404 = vsel %vm388, 1, 0
  %vm405 = vcmp.eq.s32.totalorder %v389, 1
  %vm406 = vcmp.eq.s32.totalorder %v390, 1
  %vm407 = vcmp.eq.s32.totalorder %v391, 1
  %vm408 = vcmp.eq.s32.totalorder %v392, 1
  %vm409 = vcmp.eq.s32.totalorder %v393, 1
  %vm410 = vcmp.eq.s32.totalorder %v394, 1
  %vm411 = vcmp.eq.s32.totalorder %v395, 1
  %vm412 = vcmp.eq.s32.totalorder %v396, 1
  %vm413 = vcmp.eq.s32.totalorder %v397, 1
  %vm414 = vcmp.eq.s32.totalorder %v398, 1
  %vm415 = vcmp.eq.s32.totalorder %v399, 1
  %vm416 = vcmp.eq.s32.totalorder %v400, 1
  %vm417 = vcmp.eq.s32.totalorder %v401, 1
  %vm418 = vcmp.eq.s32.totalorder %v402, 1
  %vm419 = vcmp.eq.s32.totalorder %v403, 1
  %vm420 = vcmp.eq.s32.totalorder %v404, 1
  %v421 = vsel %vm405, %v211, 0.0
  %v422 = vsel %vm406, %v214, 0.0
  %v423 = vsel %vm407, %v219, 0.0
  %v424 = vsel %vm408, %v222, 0.0
  %v425 = vsel %vm409, %v227, 0.0
  %v426 = vsel %vm410, %v230, 0.0
  %v427 = vsel %vm411, %v235, 0.0
  %v428 = vsel %vm412, %v238, 0.0
  %v429 = vsel %vm413, %v243, 0.0
  %v430 = vsel %vm414, %v246, 0.0
  %v431 = vsel %vm415, %v251, 0.0
  %v432 = vsel %vm416, %v254, 0.0
  %v433 = vsel %vm417, %v259, 0.0
  %v434 = vsel %vm418, %v262, 0.0
  %v435 = vsel %vm419, %v267, 0.0
  %v436 = vsel %vm420, %v270, 0.0
  %v437 = vadd.f32 %v421, %v422
  %v438 = vadd.f32 %v437, %v423
  %v439 = vadd.f32 %v438, %v424
  %v440 = vadd.f32 %v439, %v425
  %v441 = vadd.f32 %v440, %v426
  %v442 = vadd.f32 %v441, %v427
  %v443 = vadd.f32 %v442, %v428
  %v444 = vadd.f32 %v443, %v429
  %v445 = vadd.f32 %v444, %v430
  %v446 = vadd.f32 %v445, %v431
  %v447 = vadd.f32 %v446, %v432
  %v448 = vadd.f32 %v447, %v433
  %v449 = vadd.f32 %v448, %v434
  %v450 = vadd.f32 %v449, %v435
  %v451 = vadd.f32 %v450, %v436
  %v452 = vrot.slane %v451, 4
  %v453 = vadd.f32 %v451, %v452
  %v454 = vrot.slane %v453, 2
  %v455 = vadd.f32 %v453, %v454
  %v456 = vrot.slane %v455, 1
  %v457 = vadd.f32 %v455, %v456
  %v458 = vmul.f32 %v421, %v421
  %v459 = vmul.f32 %v422, %v422
  %v460 = vmul.f32 %v423, %v423
  %v461 = vmul.f32 %v424, %v424
  %v462 = vmul.f32 %v425, %v425
  %v463 = vmul.f32 %v426, %v426
  %v464 = vmul.f32 %v427, %v427
  %v465 = vmul.f32 %v428, %v428
  %v466 = vmul.f32 %v429, %v429
  %v467 = vmul.f32 %v430, %v430
  %v468 = vmul.f32 %v431, %v431
  %v469 = vmul.f32 %v432, %v432
  %v470 = vmul.f32 %v433, %v433
  %v471 = vmul.f32 %v434, %v434
  %v472 = vmul.f32 %v435, %v435
  %v473 = vmul.f32 %v436, %v436
  %v474 = vadd.f32 %v458, %v459
  %v475 = vadd.f32 %v474, %v460
  %v476 = vadd.f32 %v475, %v461
  %v477 = vadd.f32 %v476, %v462
  %v478 = vadd.f32 %v477, %v463
  %v479 = vadd.f32 %v478, %v464
  %v480 = vadd.f32 %v479, %v465
  %v481 = vadd.f32 %v480, %v466
  %v482 = vadd.f32 %v481, %v467
  %v483 = vadd.f32 %v482, %v468
  %v484 = vadd.f32 %v483, %v469
  %v485 = vadd.f32 %v484, %v470
  %v486 = vadd.f32 %v485, %v471
  %v487 = vadd.f32 %v486, %v472
  %v488 = vadd.f32 %v487, %v473
  %v489 = vrot.slane %v488, 4
  %v490 = vadd.f32 %v488, %v489
  %v491 = vrot.slane %v490, 2
  %v492 = vadd.f32 %v490, %v491
  %v493 = vrot.slane %v492, 1
  %v494 = vadd.f32 %v492, %v493
  %vm495 = vcmask 1040384
  %v496 = vsel %vm495, %v457, %v494
  %vm497 = vcmask 1041408
  %v498 = vsel %vm497, %v496, 0.0
  %499 = vst [vmem:[%s4] sm:$0xff] %v498
  // Predicated region
  $region14: #{unet_generator_forward.11} parent=0 // pred_check
    _
  $region15: #{unet_generator_forward.11} parent=0 // pred_check_branch
    %501 = sbr.rel (0) target = $region17
  $region16: #{unet_generator_forward.11} parent=0 // pred_region
    _
  $region17: #{unet_generator_forward.11} parent=0 // pred_fallthru
    _
  // Predicated region
  $region18: #{unet_generator_forward.11} parent=0 // pred_check
    _
  $region19: #{unet_generator_forward.11} parent=0 // pred_check_branch
    %503 = sbr.rel (0) target = $region21
  $region20: #{unet_generator_forward.11} parent=0 // pred_region
    _
  $region21: #{unet_generator_forward.11} parent=0 // pred_fallthru
    _
  // Predicated region
  $region22: #{unet_generator_forward.11} parent=0 // pred_check
    _
  $region23: #{unet_generator_forward.11} parent=0 // pred_check_branch
    %505 = sbr.rel (0) target = $region25
  $region24: #{unet_generator_forward.11} parent=0 // pred_region
    _
  $region25: #{unet_generator_forward.11} parent=0 // pred_fallthru
    _
  // Predicated region
  $region26: #{unet_generator_forward.11} parent=0 // pred_check
    _
  $region27: #{unet_generator_forward.11} parent=0 // pred_check_branch
    %507 = sbr.rel (0) target = $region29
  $region28: #{unet_generator_forward.11} parent=0 // pred_region
    _
  $region29: #{unet_generator_forward.11} parent=0 // pred_fallthru
    _

// kernel: tile.78
$region0: #{tile.78}
  #allocation0 [shape = 's32[1]{0}', space=sflag, size = 0x4, scoped, tag = 'scoped memory for tile.78']
  %s0 = inlined_call_operand.vmem [shape: f32[16], index: 0, kind: input, shape index: {}]
  %s1 = inlined_call_operand.vmem [shape: f32[16,16], index: 1, kind: output, shape index: {}]
  // Predicated region
  $region2: #{tile.78} parent=0 // pred_check
    _
  $region3: #{tile.78} parent=0 // pred_check_branch
    %3 = sbr.rel (0) target = $region5
  $region4: #{tile.78} parent=0 // pred_region
    _
  $region5: #{tile.78} parent=0 // pred_fallthru
    _
  %v4 = vld [vmem:[%s0] ss:$0 sm:$0xff]
  %5 = vst [vmem:[%s1] sm:$0xff] %v4
  %s6 = scalar_lea.vmem %s1, 8
  %7 = vst [vmem:[%s6] sm:$0xff] %v4

// kernel: unet_generator_forward.12
$region0: #{unet_generator_forward.12}
  #allocation0 [shape = 'u32[]', space=smem, size = 0x4, offset = 0x4, fixed_abs, tag = 'smem constant byte address 0x4 - core index']
  #allocation1 [shape = 'u32[144,128]{1,0:T(1,128)}', space=vmem, size = 0x12000, scoped, tag = 'internal scratch']
  %s0 = inlined_call_operand.vmem [shape: bf16[128,256], index: 0, kind: input, shape index: {}]
  %s1 = inlined_call_operand.vmem [shape: bf16[256,128], index: 1, kind: input, shape index: {}]
  %s2 = inlined_call_operand.vmem [shape: f32[1,128], index: 2, kind: input, shape index: {}]
  %s3 = inlined_call_operand.vmem [shape: f32[1,256], index: 3, kind: input, shape index: {}]
  %s4 = inlined_call_operand.vmem [shape: f32[1,256], index: 4, kind: input, shape index: {}]
  %s5 = inlined_call_operand.vmem [shape: bf16[128,128], index: 5, kind: output, shape index: {0}]
  %s6 = inlined_call_operand.vmem [shape: f32[1,8,128], index: 6, kind: output, shape index: {1}]
  %7 = xla_tuple %s5, %s6
  %s8 = sld [smem:[#allocation0]]
  $region38: #{unet_generator_forward.12} parent=0
    _
  %s10 = ssub.s32 1, %s8
  %s11 = scalar_select 0, %s10, %s8
  // Predicated region
  $region2: #{unet_generator_forward.12} parent=0 // pred_check
    _
  $region3: #{unet_generator_forward.12} parent=0 // pred_check_branch
    %13 = sbr.rel (0) target = $region5
  $region4: #{unet_generator_forward.12} parent=0 // pred_region
    _
  $region5: #{unet_generator_forward.12} parent=0 // pred_fallthru
    _
  // Predicated region
  $region6: #{unet_generator_forward.12} parent=0 // pred_check
    _
  $region7: #{unet_generator_forward.12} parent=0 // pred_check_branch
    %15 = sbr.rel (0) target = $region9
  $region8: #{unet_generator_forward.12} parent=0 // pred_region
    _
  $region9: #{unet_generator_forward.12} parent=0 // pred_fallthru
    _
  // Predicated region
  $region10: #{unet_generator_forward.12} parent=0 // pred_check
    _
  $region11: #{unet_generator_forward.12} parent=0 // pred_check_branch
    %17 = sbr.rel (0) target = $region13
  $region12: #{unet_generator_forward.12} parent=0 // pred_region
    _
  $region13: #{unet_generator_forward.12} parent=0 // pred_fallthru
    _
  // Predicated region
  $region14: #{unet_generator_forward.12} parent=0 // pred_check
    _
  $region15: #{unet_generator_forward.12} parent=0 // pred_check_branch
    %19 = sbr.rel (0) target = $region17
  $region16: #{unet_generator_forward.12} parent=0 // pred_region
    _
  $region17: #{unet_generator_forward.12} parent=0 // pred_fallthru
    _
  // Predicated region
  $region18: #{unet_generator_forward.12} parent=0 // pred_check
    _
  $region19: #{unet_generator_forward.12} parent=0 // pred_check_branch
    %21 = sbr.rel (0) target = $region21
  $region20: #{unet_generator_forward.12} parent=0 // pred_region
    _
  $region21: #{unet_generator_forward.12} parent=0 // pred_fallthru
    _
  %v23 = vld [vmem:[%s0] sm:$0xff]
  %v24 = vld [vmem:[%s0 + $0x8] sm:$0xff]
  %v25 = vld [vmem:[%s0 + $0x10] sm:$0xff]
  %v26 = vld [vmem:[%s0 + $0x18] sm:$0xff]
  %v27 = vld [vmem:[%s0 + $0x20] sm:$0xff]
  %v28 = vld [vmem:[%s0 + $0x28] sm:$0xff]
  %v29 = vld [vmem:[%s0 + $0x30] sm:$0xff]
  %v30 = vld [vmem:[%s0 + $0x38] sm:$0xff]
  %v31 = vld [vmem:[%s0 + $0x40] sm:$0xff]
  %v32 = vld [vmem:[%s0 + $0x48] sm:$0xff]
  %v33 = vld [vmem:[%s0 + $0x50] sm:$0xff]
  %v34 = vld [vmem:[%s0 + $0x58] sm:$0xff]
  %v35 = vld [vmem:[%s0 + $0x60] sm:$0xff]
  %v36 = vld [vmem:[%s0 + $0x68] sm:$0xff]
  %v37 = vld [vmem:[%s0 + $0x70] sm:$0xff]
  %v38 = vld [vmem:[%s0 + $0x78] sm:$0xff]
  %v39 = vunpack.c.l.bf16 %v23
  %v40 = vunpack.c.h.bf16 %v23
  %v41 = vunpack.c.l.bf16 %v24
  %v42 = vunpack.c.h.bf16 %v24
  %v43 = vunpack.c.l.bf16 %v25
  %v44 = vunpack.c.h.bf16 %v25
  %v45 = vunpack.c.l.bf16 %v26
  %v46 = vunpack.c.h.bf16 %v26
  %v47 = vunpack.c.l.bf16 %v27
  %v48 = vunpack.c.h.bf16 %v27
  %v49 = vunpack.c.l.bf16 %v28
  %v50 = vunpack.c.h.bf16 %v28
  %v51 = vunpack.c.l.bf16 %v29
  %v52 = vunpack.c.h.bf16 %v29
  %v53 = vunpack.c.l.bf16 %v30
  %v54 = vunpack.c.h.bf16 %v30
  %v55 = vunpack.c.l.bf16 %v31
  %v56 = vunpack.c.h.bf16 %v31
  %v57 = vunpack.c.l.bf16 %v32
  %v58 = vunpack.c.h.bf16 %v32
  %v59 = vunpack.c.l.bf16 %v33
  %v60 = vunpack.c.h.bf16 %v33
  %v61 = vunpack.c.l.bf16 %v34
  %v62 = vunpack.c.h.bf16 %v34
  %v63 = vunpack.c.l.bf16 %v35
  %v64 = vunpack.c.h.bf16 %v35
  %v65 = vunpack.c.l.bf16 %v36
  %v66 = vunpack.c.h.bf16 %v36
  %v67 = vunpack.c.l.bf16 %v37
  %v68 = vunpack.c.h.bf16 %v37
  %v69 = vunpack.c.l.bf16 %v38
  %v70 = vunpack.c.h.bf16 %v38
  %v71 = vld [vmem:[%s3] sm:$0x3]
  %v73 = vlaneseq
  %v74 = vshrl.u32 %v73, 7
  %v75 = vsub.s32 0, %v74
  %v76 = vrot.slane %v71, %v75
  %v77 = vlaneseq
  %v78 = vshrl.u32 %v77, 7
  %v79 = vsub.s32 1, %v78
  %v80 = vrot.slane %v71, %v79
  %v83 = vmul.f32 %v39, %v76
  %v84 = vmul.f32 %v40, %v80
  %v85 = vmul.f32 %v41, %v76
  %v86 = vmul.f32 %v42, %v80
  %v87 = vmul.f32 %v43, %v76
  %v88 = vmul.f32 %v44, %v80
  %v89 = vmul.f32 %v45, %v76
  %v90 = vmul.f32 %v46, %v80
  %v91 = vmul.f32 %v47, %v76
  %v92 = vmul.f32 %v48, %v80
  %v93 = vmul.f32 %v49, %v76
  %v94 = vmul.f32 %v50, %v80
  %v95 = vmul.f32 %v51, %v76
  %v96 = vmul.f32 %v52, %v80
  %v97 = vmul.f32 %v53, %v76
  %v98 = vmul.f32 %v54, %v80
  %v99 = vmul.f32 %v55, %v76
  %v100 = vmul.f32 %v56, %v80
  %v101 = vmul.f32 %v57, %v76
  %v102 = vmul.f32 %v58, %v80
  %v103 = vmul.f32 %v59, %v76
  %v104 = vmul.f32 %v60, %v80
  %v105 = vmul.f32 %v61, %v76
  %v106 = vmul.f32 %v62, %v80
  %v107 = vmul.f32 %v63, %v76
  %v108 = vmul.f32 %v64, %v80
  %v109 = vmul.f32 %v65, %v76
  %v110 = vmul.f32 %v66, %v80
  %v111 = vmul.f32 %v67, %v76
  %v112 = vmul.f32 %v68, %v80
  %v113 = vmul.f32 %v69, %v76
  %v114 = vmul.f32 %v70, %v80
  %v115 = vld [vmem:[%s4] sm:$0x3]
  %v117 = vlaneseq
  %v118 = vshrl.u32 %v117, 7
  %v119 = vsub.s32 0, %v118
  %v120 = vrot.slane %v115, %v119
  %v121 = vlaneseq
  %v122 = vshrl.u32 %v121, 7
  %v123 = vsub.s32 1, %v122
  %v124 = vrot.slane %v115, %v123
  %v127 = vadd.f32 %v83, %v120
  %v128 = vadd.f32 %v84, %v124
  %v129 = vadd.f32 %v85, %v120
  %v130 = vadd.f32 %v86, %v124
  %v131 = vadd.f32 %v87, %v120
  %v132 = vadd.f32 %v88, %v124
  %v133 = vadd.f32 %v89, %v120
  %v134 = vadd.f32 %v90, %v124
  %v135 = vadd.f32 %v91, %v120
  %v136 = vadd.f32 %v92, %v124
  %v137 = vadd.f32 %v93, %v120
  %v138 = vadd.f32 %v94, %v124
  %v139 = vadd.f32 %v95, %v120
  %v140 = vadd.f32 %v96, %v124
  %v141 = vadd.f32 %v97, %v120
  %v142 = vadd.f32 %v98, %v124
  %v143 = vadd.f32 %v99, %v120
  %v144 = vadd.f32 %v100, %v124
  %v145 = vadd.f32 %v101, %v120
  %v146 = vadd.f32 %v102, %v124
  %v147 = vadd.f32 %v103, %v120
  %v148 = vadd.f32 %v104, %v124
  %v149 = vadd.f32 %v105, %v120
  %v150 = vadd.f32 %v106, %v124
  %v151 = vadd.f32 %v107, %v120
  %v152 = vadd.f32 %v108, %v124
  %v153 = vadd.f32 %v109, %v120
  %v154 = vadd.f32 %v110, %v124
  %v155 = vadd.f32 %v111, %v120
  %v156 = vadd.f32 %v112, %v124
  %v157 = vadd.f32 %v113, %v120
  %v158 = vadd.f32 %v114, %v124
  %vm159 = vcmp.ge.f32.partialorder %v127, 0.0
  %vm160 = vcmp.ge.f32.partialorder %v128, 0.0
  %vm161 = vcmp.ge.f32.partialorder %v129, 0.0
  %vm162 = vcmp.ge.f32.partialorder %v130, 0.0
  %vm163 = vcmp.ge.f32.partialorder %v131, 0.0
  %vm164 = vcmp.ge.f32.partialorder %v132, 0.0
  %vm165 = vcmp.ge.f32.partialorder %v133, 0.0
  %vm166 = vcmp.ge.f32.partialorder %v134, 0.0
  %vm167 = vcmp.ge.f32.partialorder %v135, 0.0
  %vm168 = vcmp.ge.f32.partialorder %v136, 0.0
  %vm169 = vcmp.ge.f32.partialorder %v137, 0.0
  %vm170 = vcmp.ge.f32.partialorder %v138, 0.0
  %vm171 = vcmp.ge.f32.partialorder %v139, 0.0
  %vm172 = vcmp.ge.f32.partialorder %v140, 0.0
  %vm173 = vcmp.ge.f32.partialorder %v141, 0.0
  %vm174 = vcmp.ge.f32.partialorder %v142, 0.0
  %vm175 = vcmp.ge.f32.partialorder %v143, 0.0
  %vm176 = vcmp.ge.f32.partialorder %v144, 0.0
  %vm177 = vcmp.ge.f32.partialorder %v145, 0.0
  %vm178 = vcmp.ge.f32.partialorder %v146, 0.0
  %vm179 = vcmp.ge.f32.partialorder %v147, 0.0
  %vm180 = vcmp.ge.f32.partialorder %v148, 0.0
  %vm181 = vcmp.ge.f32.partialorder %v149, 0.0
  %vm182 = vcmp.ge.f32.partialorder %v150, 0.0
  %vm183 = vcmp.ge.f32.partialorder %v151, 0.0
  %vm184 = vcmp.ge.f32.partialorder %v152, 0.0
  %vm185 = vcmp.ge.f32.partialorder %v153, 0.0
  %vm186 = vcmp.ge.f32.partialorder %v154, 0.0
  %vm187 = vcmp.ge.f32.partialorder %v155, 0.0
  %vm188 = vcmp.ge.f32.partialorder %v156, 0.0
  %vm189 = vcmp.ge.f32.partialorder %v157, 0.0
  %vm190 = vcmp.ge.f32.partialorder %v158, 0.0
  %v191 = vmul.f32 %v127, 0.2
  %v192 = vmul.f32 %v128, 0.2
  %v193 = vmul.f32 %v129, 0.2
  %v194 = vmul.f32 %v130, 0.2
  %v195 = vmul.f32 %v131, 0.2
  %v196 = vmul.f32 %v132, 0.2
  %v197 = vmul.f32 %v133, 0.2
  %v198 = vmul.f32 %v134, 0.2
  %v199 = vmul.f32 %v135, 0.2
  %v200 = vmul.f32 %v136, 0.2
  %v201 = vmul.f32 %v137, 0.2
  %v202 = vmul.f32 %v138, 0.2
  %v203 = vmul.f32 %v139, 0.2
  %v204 = vmul.f32 %v140, 0.2
  %v205 = vmul.f32 %v141, 0.2
  %v206 = vmul.f32 %v142, 0.2
  %v207 = vmul.f32 %v143, 0.2
  %v208 = vmul.f32 %v144, 0.2
  %v209 = vmul.f32 %v145, 0.2
  %v210 = vmul.f32 %v146, 0.2
  %v211 = vmul.f32 %v147, 0.2
  %v212 = vmul.f32 %v148, 0.2
  %v213 = vmul.f32 %v149, 0.2
  %v214 = vmul.f32 %v150, 0.2
  %v215 = vmul.f32 %v151, 0.2
  %v216 = vmul.f32 %v152, 0.2
  %v217 = vmul.f32 %v153, 0.2
  %v218 = vmul.f32 %v154, 0.2
  %v219 = vmul.f32 %v155, 0.2
  %v220 = vmul.f32 %v156, 0.2
  %v221 = vmul.f32 %v157, 0.2
  %v222 = vmul.f32 %v158, 0.2
  %v223 = vsel %vm159, %v127, %v191
  %v224 = vsel %vm160, %v128, %v192
  %v225 = vsel %vm161, %v129, %v193
  %v226 = vsel %vm162, %v130, %v194
  %v227 = vsel %vm163, %v131, %v195
  %v228 = vsel %vm164, %v132, %v196
  %v229 = vsel %vm165, %v133, %v197
  %v230 = vsel %vm166, %v134, %v198
  %v231 = vsel %vm167, %v135, %v199
  %v232 = vsel %vm168, %v136, %v200
  %v233 = vsel %vm169, %v137, %v201
  %v234 = vsel %vm170, %v138, %v202
  %v235 = vsel %vm171, %v139, %v203
  %v236 = vsel %vm172, %v140, %v204
  %v237 = vsel %vm173, %v141, %v205
  %v238 = vsel %vm174, %v142, %v206
  %v239 = vsel %vm175, %v143, %v207
  %v240 = vsel %vm176, %v144, %v208
  %v241 = vsel %vm177, %v145, %v209
  %v242 = vsel %vm178, %v146, %v210
  %v243 = vsel %vm179, %v147, %v211
  %v244 = vsel %vm180, %v148, %v212
  %v245 = vsel %vm181, %v149, %v213
  %v246 = vsel %vm182, %v150, %v214
  %v247 = vsel %vm183, %v151, %v215
  %v248 = vsel %vm184, %v152, %v216
  %v249 = vsel %vm185, %v153, %v217
  %v250 = vsel %vm186, %v154, %v218
  %v251 = vsel %vm187, %v155, %v219
  %v252 = vsel %vm188, %v156, %v220
  %v253 = vsel %vm189, %v157, %v221
  %v254 = vsel %vm190, %v158, %v222
  %v255 = vpack.c.bf16 %v225, %v223
  %v256 = vpack.c.bf16 %v226, %v224
  %v257 = vpack.c.bf16 %v229, %v227
  %v258 = vpack.c.bf16 %v230, %v228
  %v259 = vpack.c.bf16 %v233, %v231
  %v260 = vpack.c.bf16 %v234, %v232
  %v261 = vpack.c.bf16 %v237, %v235
  %v262 = vpack.c.bf16 %v238, %v236
  %v263 = vpack.c.bf16 %v241, %v239
  %v264 = vpack.c.bf16 %v242, %v240
  %v265 = vpack.c.bf16 %v245, %v243
  %v266 = vpack.c.bf16 %v246, %v244
  %v267 = vpack.c.bf16 %v249, %v247
  %v268 = vpack.c.bf16 %v250, %v248
  %v269 = vpack.c.bf16 %v253, %v251
  %v270 = vpack.c.bf16 %v254, %v252
  %v271 = vld [vmem:[%s1] sm:$0xf]
  %v272 = vld [vmem:[%s1 + $0x4] sm:$0xf]
  %v273 = vld [vmem:[%s1 + $0x8] sm:$0xf]
  %v274 = vld [vmem:[%s1 + $0xc] sm:$0xf]
  %v275 = vld [vmem:[%s1 + $0x10] sm:$0xf]
  %v276 = vld [vmem:[%s1 + $0x14] sm:$0xf]
  %v277 = vld [vmem:[%s1 + $0x18] sm:$0xf]
  %v278 = vld [vmem:[%s1 + $0x1c] sm:$0xf]
  %v279 = vld [vmem:[%s1 + $0x20] sm:$0xf]
  %v280 = vld [vmem:[%s1 + $0x24] sm:$0xf]
  %v281 = vld [vmem:[%s1 + $0x28] sm:$0xf]
  %v282 = vld [vmem:[%s1 + $0x2c] sm:$0xf]
  %v283 = vld [vmem:[%s1 + $0x30] sm:$0xf]
  %v284 = vld [vmem:[%s1 + $0x34] sm:$0xf]
  %v285 = vld [vmem:[%s1 + $0x38] sm:$0xf]
  %v286 = vld [vmem:[%s1 + $0x3c] sm:$0xf]
  %v287 = vld [vmem:[%s1 + $0x40] sm:$0xf]
  %v288 = vld [vmem:[%s1 + $0x44] sm:$0xf]
  %v289 = vld [vmem:[%s1 + $0x48] sm:$0xf]
  %v290 = vld [vmem:[%s1 + $0x4c] sm:$0xf]
  %v291 = vld [vmem:[%s1 + $0x50] sm:$0xf]
  %v292 = vld [vmem:[%s1 + $0x54] sm:$0xf]
  %v293 = vld [vmem:[%s1 + $0x58] sm:$0xf]
  %v294 = vld [vmem:[%s1 + $0x5c] sm:$0xf]
  %v295 = vld [vmem:[%s1 + $0x60] sm:$0xf]
  %v296 = vld [vmem:[%s1 + $0x64] sm:$0xf]
  %v297 = vld [vmem:[%s1 + $0x68] sm:$0xf]
  %v298 = vld [vmem:[%s1 + $0x6c] sm:$0xf]
  %v299 = vld [vmem:[%s1 + $0x70] sm:$0xf]
  %v300 = vld [vmem:[%s1 + $0x74] sm:$0xf]
  %v301 = vld [vmem:[%s1 + $0x78] sm:$0xf]
  %v302 = vld [vmem:[%s1 + $0x7c] sm:$0xf]
  %v303 = vld [vmem:[%s2] sm:$0x1]
  %v305 = vlaneseq
  %v306 = vshrl.u32 %v305, 7
  %v307 = vsub.s32 0, %v306
  %v308 = vrot.slane %v303, %v307
  %v342 = vunpack.c.l.b16 %v271
  %v343 = vunpack.c.l.b16 %v272
  %v344 = vunpack.c.l.b16 %v273
  %v345 = vunpack.c.l.b16 %v274
  %v346 = vunpack.c.l.b16 %v275
  %v347 = vunpack.c.l.b16 %v276
  %v348 = vunpack.c.l.b16 %v277
  %v349 = vunpack.c.l.b16 %v278
  %v350 = vunpack.c.l.b16 %v279
  %v351 = vunpack.c.l.b16 %v280
  %v352 = vunpack.c.l.b16 %v281
  %v353 = vunpack.c.l.b16 %v282
  %v354 = vunpack.c.l.b16 %v283
  %v355 = vunpack.c.l.b16 %v284
  %v356 = vunpack.c.l.b16 %v285
  %v357 = vunpack.c.l.b16 %v286
  %v358 = vunpack.c.l.b16 %v287
  %v359 = vunpack.c.l.b16 %v288
  %v360 = vunpack.c.l.b16 %v289
  %v361 = vunpack.c.l.b16 %v290
  %v362 = vunpack.c.l.b16 %v291
  %v363 = vunpack.c.l.b16 %v292
  %v364 = vunpack.c.l.b16 %v293
  %v365 = vunpack.c.l.b16 %v294
  %v366 = vunpack.c.l.b16 %v295
  %v367 = vunpack.c.l.b16 %v296
  %v368 = vunpack.c.l.b16 %v297
  %v369 = vunpack.c.l.b16 %v298
  %v370 = vunpack.c.l.b16 %v299
  %v371 = vunpack.c.l.b16 %v300
  %v372 = vunpack.c.l.b16 %v301
  %v373 = vunpack.c.l.b16 %v302
  %v374 = vpack.c.b16 %v343, %v342
  %v375 = vpack.c.b16 %v345, %v344
  %v376 = vpack.c.b16 %v347, %v346
  %v377 = vpack.c.b16 %v349, %v348
  %v378 = vpack.c.b16 %v351, %v350
  %v379 = vpack.c.b16 %v353, %v352
  %v380 = vpack.c.b16 %v355, %v354
  %v381 = vpack.c.b16 %v357, %v356
  %v382 = vpack.c.b16 %v359, %v358
  %v383 = vpack.c.b16 %v361, %v360
  %v384 = vpack.c.b16 %v363, %v362
  %v385 = vpack.c.b16 %v365, %v364
  %v386 = vpack.c.b16 %v367, %v366
  %v387 = vpack.c.b16 %v369, %v368
  %v388 = vpack.c.b16 %v371, %v370
  %v389 = vpack.c.b16 %v373, %v372
  %406 = vmatprep.subr.bf16.mxu0 0
  %407 = vmatpush1.bf16.msra.mxu0 %v374
  %408 = vmatprep.subr.bf16.mxu0 0
  %409 = vmatpush1.bf16.msra.mxu0 %v375
  %410 = vmatprep.subr.bf16.mxu0 0
  %411 = vmatpush1.bf16.msra.mxu0 %v376
  %412 = vmatprep.subr.bf16.mxu0 0
  %413 = vmatpush1.bf16.msra.mxu0 %v377
  %414 = vmatprep.subr.bf16.mxu0 0
  %415 = vmatpush1.bf16.msra.mxu0 %v378
  %416 = vmatprep.subr.bf16.mxu0 0
  %417 = vmatpush1.bf16.msra.mxu0 %v379
  %418 = vmatprep.subr.bf16.mxu0 0
  %419 = vmatpush1.bf16.msra.mxu0 %v380
  %420 = vmatprep.subr.bf16.mxu0 0
  %421 = vmatpush1.bf16.msra.mxu0 %v381
  %422 = vmatprep.subr.bf16.mxu0 0
  %423 = vmatpush1.bf16.msra.mxu0 %v382
  %424 = vmatprep.subr.bf16.mxu0 0
  %425 = vmatpush1.bf16.msra.mxu0 %v383
  %426 = vmatprep.subr.bf16.mxu0 0
  %427 = vmatpush1.bf16.msra.mxu0 %v384
  %428 = vmatprep.subr.bf16.mxu0 0
  %429 = vmatpush1.bf16.msra.mxu0 %v385
  %430 = vmatprep.subr.bf16.mxu0 0
  %431 = vmatpush1.bf16.msra.mxu0 %v386
  %432 = vmatprep.subr.bf16.mxu0 0
  %433 = vmatpush1.bf16.msra.mxu0 %v387
  %434 = vmatprep.subr.bf16.mxu0 0
  %435 = vmatpush1.bf16.msra.mxu0 %v388
  %436 = vmatprep.subr.bf16.mxu0 0
  %437 = vmatpush1.bf16.msra.mxu0 %v389
  %438 = vmatprep.mubr.bf16.mxu0 %v256
  %439 = vmatmul.mubr.bf16.gmra.mrb[0].mxu0 %v255
  %v440 = vpop.f32.mrb[0].mxu0
  %v441 = vadd.f32 %v308, %v440
  %v442 = vpop.f32.mrb[0].mxu0
  %v443 = vpop.f32.mrb[0].mxu0
  %v444 = vadd.f32 %v308, %v443
  %v445 = vpop.f32.mrb[0].mxu0
  %446 = vmatprep.mubr.bf16.mxu0 %v258
  %447 = vmatmul.mubr.bf16.gmra.mrb[0].mxu0 %v257
  %v448 = vpop.f32.mrb[0].mxu0
  %v449 = vadd.f32 %v308, %v448
  %v450 = vpop.f32.mrb[0].mxu0
  %v451 = vpop.f32.mrb[0].mxu0
  %v452 = vadd.f32 %v308, %v451
  %v453 = vpop.f32.mrb[0].mxu0
  %454 = vmatprep.mubr.bf16.mxu0 %v260
  %455 = vmatmul.mubr.bf16.gmra.mrb[0].mxu0 %v259
  %v456 = vpop.f32.mrb[0].mxu0
  %v457 = vadd.f32 %v308, %v456
  %v458 = vpop.f32.mrb[0].mxu0
  %v459 = vpop.f32.mrb[0].mxu0
  %v460 = vadd.f32 %v308, %v459
  %v461 = vpop.f32.mrb[0].mxu0
  %462 = vmatprep.mubr.bf16.mxu0 %v262
  %463 = vmatmul.mubr.bf16.gmra.mrb[0].mxu0 %v261
  %v464 = vpop.f32.mrb[0].mxu0
  %v465 = vadd.f32 %v308, %v464
  %v466 = vpop.f32.mrb[0].mxu0
  %v467 = vpop.f32.mrb[0].mxu0
  %v468 = vadd.f32 %v308, %v467
  %v469 = vpop.f32.mrb[0].mxu0
  %470 = vmatprep.mubr.bf16.mxu0 %v264
  %471 = vmatmul.mubr.bf16.gmra.mrb[0].mxu0 %v263
  %v472 = vpop.f32.mrb[0].mxu0
  %v473 = vadd.f32 %v308, %v472
  %v474 = vpop.f32.mrb[0].mxu0
  %v475 = vpop.f32.mrb[0].mxu0
  %v476 = vadd.f32 %v308, %v475
  %v477 = vpop.f32.mrb[0].mxu0
  %478 = vmatprep.mubr.bf16.mxu0 %v266
  %479 = vmatmul.mubr.bf16.gmra.mrb[0].mxu0 %v265
  %v480 = vpop.f32.mrb[0].mxu0
  %v481 = vadd.f32 %v308, %v480
  %v482 = vpop.f32.mrb[0].mxu0
  %v483 = vpop.f32.mrb[0].mxu0
  %v484 = vadd.f32 %v308, %v483
  %v485 = vpop.f32.mrb[0].mxu0
  %486 = vmatprep.mubr.bf16.mxu0 %v268
  %487 = vmatmul.mubr.bf16.gmra.mrb[0].mxu0 %v267
  %v488 = vpop.f32.mrb[0].mxu0
  %v489 = vadd.f32 %v308, %v488
  %v490 = vpop.f32.mrb[0].mxu0
  %v491 = vpop.f32.mrb[0].mxu0
  %v492 = vadd.f32 %v308, %v491
  %v493 = vpop.f32.mrb[0].mxu0
  %494 = vmatprep.mubr.bf16.mxu0 %v270
  %495 = vmatmul.mubr.bf16.gmra.mrb[0].mxu0 %v269
  %v496 = vpop.f32.mrb[0].mxu0
  %v497 = vadd.f32 %v308, %v496
  %v498 = vpop.f32.mrb[0].mxu0
  %v499 = vpop.f32.mrb[0].mxu0
  %v500 = vadd.f32 %v308, %v499
  %v501 = vpop.f32.mrb[0].mxu0
  %502 = vdwg.mxu0
  %v503 = vpack.c.bf16 %v444, %v441
  %v504 = vpack.c.bf16 %v452, %v449
  %v505 = vpack.c.bf16 %v460, %v457
  %v506 = vpack.c.bf16 %v468, %v465
  %v507 = vpack.c.bf16 %v476, %v473
  %v508 = vpack.c.bf16 %v484, %v481
  %v509 = vpack.c.bf16 %v492, %v489
  %v510 = vpack.c.bf16 %v500, %v497
  %v519 = vunpack.c.l.b16 %v503
  %v520 = vunpack.c.h.b16 %v503
  %v521 = vunpack.c.l.b16 %v504
  %v522 = vunpack.c.h.b16 %v504
  %v523 = vunpack.c.l.b16 %v505
  %v524 = vunpack.c.h.b16 %v505
  %v525 = vunpack.c.l.b16 %v506
  %v526 = vunpack.c.h.b16 %v506
  %v527 = vunpack.c.l.b16 %v507
  %v528 = vunpack.c.h.b16 %v507
  %v529 = vunpack.c.l.b16 %v508
  %v530 = vunpack.c.h.b16 %v508
  %v531 = vunpack.c.l.b16 %v509
  %v532 = vunpack.c.h.b16 %v509
  %v533 = vunpack.c.l.b16 %v510
  %v534 = vunpack.c.h.b16 %v510
  %v535 = vpack.c.b16 %v519, %v519
  %v536 = vpack.c.b16 %v520, %v520
  %v537 = vpack.c.b16 %v521, %v521
  %v538 = vpack.c.b16 %v522, %v522
  %v539 = vpack.c.b16 %v523, %v523
  %v540 = vpack.c.b16 %v524, %v524
  %v541 = vpack.c.b16 %v525, %v525
  %v542 = vpack.c.b16 %v526, %v526
  %v543 = vpack.c.b16 %v527, %v527
  %v544 = vpack.c.b16 %v528, %v528
  %v545 = vpack.c.b16 %v529, %v529
  %v546 = vpack.c.b16 %v530, %v530
  %v547 = vpack.c.b16 %v531, %v531
  %v548 = vpack.c.b16 %v532, %v532
  %v549 = vpack.c.b16 %v533, %v533
  %v550 = vpack.c.b16 %v534, %v534
  %567 = vst [vmem:[%s5] sm:$0xf] %v535
  %568 = vst [vmem:[%s5 + $0x4] sm:$0xf] %v536
  %569 = vst [vmem:[%s5 + $0x8] sm:$0xf] %v537
  %570 = vst [vmem:[%s5 + $0xc] sm:$0xf] %v538
  %571 = vst [vmem:[%s5 + $0x10] sm:$0xf] %v539
  %572 = vst [vmem:[%s5 + $0x14] sm:$0xf] %v540
  %573 = vst [vmem:[%s5 + $0x18] sm:$0xf] %v541
  %574 = vst [vmem:[%s5 + $0x1c] sm:$0xf] %v542
  %575 = vst [vmem:[%s5 + $0x20] sm:$0xf] %v543
  %576 = vst [vmem:[%s5 + $0x24] sm:$0xf] %v544
  %577 = vst [vmem:[%s5 + $0x28] sm:$0xf] %v545
  %578 = vst [vmem:[%s5 + $0x2c] sm:$0xf] %v546
  %579 = vst [vmem:[%s5 + $0x30] sm:$0xf] %v547
  %580 = vst [vmem:[%s5 + $0x34] sm:$0xf] %v548
  %581 = vst [vmem:[%s5 + $0x38] sm:$0xf] %v549
  %582 = vst [vmem:[%s5 + $0x3c] sm:$0xf] %v550
  %v583 = vlaneseq
  %v584 = vshrl.u32 %v583, 7
  %v585 = vadd.s32 %v584, 8
  %v586 = vadd.s32 %v584, 16
  %v587 = vadd.s32 %v584, 24
  %v588 = vadd.s32 %v584, 32
  %v589 = vadd.s32 %v584, 40
  %v590 = vadd.s32 %v584, 48
  %v591 = vadd.s32 %v584, 56
  %v592 = vadd.s32 %v584, 64
  %v593 = vadd.s32 %v584, 72
  %v594 = vadd.s32 %v584, 80
  %v595 = vadd.s32 %v584, 88
  %v596 = vadd.s32 %v584, 96
  %v597 = vadd.s32 %v584, 104
  %v598 = vadd.s32 %v584, 112
  %v599 = vadd.s32 %v584, 120
  %s600 = smul.u32 0, 128
  %s601 = ssub.s32 32, %s600
  %v602 = vstv %s601
  %vm603 = vcmp.lt.s32.totalorder %v584, %v602
  %vm604 = vcmp.lt.s32.totalorder %v585, %v602
  %vm605 = vcmp.lt.s32.totalorder %v586, %v602
  %vm606 = vcmp.lt.s32.totalorder %v587, %v602
  %vm607 = vcmp.lt.s32.totalorder %v588, %v602
  %vm608 = vcmp.lt.s32.totalorder %v589, %v602
  %vm609 = vcmp.lt.s32.totalorder %v590, %v602
  %vm610 = vcmp.lt.s32.totalorder %v591, %v602
  %vm611 = vcmp.lt.s32.totalorder %v592, %v602
  %vm612 = vcmp.lt.s32.totalorder %v593, %v602
  %vm613 = vcmp.lt.s32.totalorder %v594, %v602
  %vm614 = vcmp.lt.s32.totalorder %v595, %v602
  %vm615 = vcmp.lt.s32.totalorder %v596, %v602
  %vm616 = vcmp.lt.s32.totalorder %v597, %v602
  %vm617 = vcmp.lt.s32.totalorder %v598, %v602
  %vm618 = vcmp.lt.s32.totalorder %v599, %v602
  %v619 = vsel %vm603, 1, 0
  %v620 = vsel %vm604, 1, 0
  %v621 = vsel %vm605, 1, 0
  %v622 = vsel %vm606, 1, 0
  %v623 = vsel %vm607, 1, 0
  %v624 = vsel %vm608, 1, 0
  %v625 = vsel %vm609, 1, 0
  %v626 = vsel %vm610, 1, 0
  %v627 = vsel %vm611, 1, 0
  %v628 = vsel %vm612, 1, 0
  %v629 = vsel %vm613, 1, 0
  %v630 = vsel %vm614, 1, 0
  %v631 = vsel %vm615, 1, 0
  %v632 = vsel %vm616, 1, 0
  %v633 = vsel %vm617, 1, 0
  %v634 = vsel %vm618, 1, 0
  %vm635 = vcmp.eq.s32.totalorder %v619, 1
  %vm636 = vcmp.eq.s32.totalorder %v620, 1
  %vm637 = vcmp.eq.s32.totalorder %v621, 1
  %vm638 = vcmp.eq.s32.totalorder %v622, 1
  %vm639 = vcmp.eq.s32.totalorder %v623, 1
  %vm640 = vcmp.eq.s32.totalorder %v624, 1
  %vm641 = vcmp.eq.s32.totalorder %v625, 1
  %vm642 = vcmp.eq.s32.totalorder %v626, 1
  %vm643 = vcmp.eq.s32.totalorder %v627, 1
  %vm644 = vcmp.eq.s32.totalorder %v628, 1
  %vm645 = vcmp.eq.s32.totalorder %v629, 1
  %vm646 = vcmp.eq.s32.totalorder %v630, 1
  %vm647 = vcmp.eq.s32.totalorder %v631, 1
  %vm648 = vcmp.eq.s32.totalorder %v632, 1
  %vm649 = vcmp.eq.s32.totalorder %v633, 1
  %vm650 = vcmp.eq.s32.totalorder %v634, 1
  %v651 = vsel %vm635, %v441, 0.0
  %v652 = vsel %vm636, %v444, 0.0
  %v653 = vsel %vm637, %v449, 0.0
  %v654 = vsel %vm638, %v452, 0.0
  %v655 = vsel %vm639, %v457, 0.0
  %v656 = vsel %vm640, %v460, 0.0
  %v657 = vsel %vm641, %v465, 0.0
  %v658 = vsel %vm642, %v468, 0.0
  %v659 = vsel %vm643, %v473, 0.0
  %v660 = vsel %vm644, %v476, 0.0
  %v661 = vsel %vm645, %v481, 0.0
  %v662 = vsel %vm646, %v484, 0.0
  %v663 = vsel %vm647, %v489, 0.0
  %v664 = vsel %vm648, %v492, 0.0
  %v665 = vsel %vm649, %v497, 0.0
  %v666 = vsel %vm650, %v500, 0.0
  %v667 = vadd.f32 %v651, %v652
  %v668 = vadd.f32 %v667, %v653
  %v669 = vadd.f32 %v668, %v654
  %v670 = vadd.f32 %v669, %v655
  %v671 = vadd.f32 %v670, %v656
  %v672 = vadd.f32 %v671, %v657
  %v673 = vadd.f32 %v672, %v658
  %v674 = vadd.f32 %v673, %v659
  %v675 = vadd.f32 %v674, %v660
  %v676 = vadd.f32 %v675, %v661
  %v677 = vadd.f32 %v676, %v662
  %v678 = vadd.f32 %v677, %v663
  %v679 = vadd.f32 %v678, %v664
  %v680 = vadd.f32 %v679, %v665
  %v681 = vadd.f32 %v680, %v666
  %v682 = vrot.slane %v681, 4
  %v683 = vadd.f32 %v681, %v682
  %v684 = vrot.slane %v683, 2
  %v685 = vadd.f32 %v683, %v684
  %v686 = vrot.slane %v685, 1
  %v687 = vadd.f32 %v685, %v686
  %v688 = vmul.f32 %v651, %v651
  %v689 = vmul.f32 %v652, %v652
  %v690 = vmul.f32 %v653, %v653
  %v691 = vmul.f32 %v654, %v654
  %v692 = vmul.f32 %v655, %v655
  %v693 = vmul.f32 %v656, %v656
  %v694 = vmul.f32 %v657, %v657
  %v695 = vmul.f32 %v658, %v658
  %v696 = vmul.f32 %v659, %v659
  %v697 = vmul.f32 %v660, %v660
  %v698 = vmul.f32 %v661, %v661
  %v699 = vmul.f32 %v662, %v662
  %v700 = vmul.f32 %v663, %v663
  %v701 = vmul.f32 %v664, %v664
  %v702 = vmul.f32 %v665, %v665
  %v703 = vmul.f32 %v666, %v666
  %v704 = vadd.f32 %v688, %v689
  %v705 = vadd.f32 %v704, %v690
  %v706 = vadd.f32 %v705, %v691
  %v707 = vadd.f32 %v706, %v692
  %v708 = vadd.f32 %v707, %v693
  %v709 = vadd.f32 %v708, %v694
  %v710 = vadd.f32 %v709, %v695
  %v711 = vadd.f32 %v710, %v696
  %v712 = vadd.f32 %v711, %v697
  %v713 = vadd.f32 %v712, %v698
  %v714 = vadd.f32 %v713, %v699
  %v715 = vadd.f32 %v714, %v700
  %v716 = vadd.f32 %v715, %v701
  %v717 = vadd.f32 %v716, %v702
  %v718 = vadd.f32 %v717, %v703
  %v719 = vrot.slane %v718, 4
  %v720 = vadd.f32 %v718, %v719
  %v721 = vrot.slane %v720, 2
  %v722 = vadd.f32 %v720, %v721
  %v723 = vrot.slane %v722, 1
  %v724 = vadd.f32 %v722, %v723
  %vm725 = vcmask 1040384
  %v726 = vsel %vm725, %v687, %v724
  %vm727 = vcmask 1041408
  %v728 = vsel %vm727, %v726, 0.0
  %729 = vst [vmem:[%s6] sm:$0xff] %v728
  // Predicated region
  $region22: #{unet_generator_forward.12} parent=0 // pred_check
    _
  $region23: #{unet_generator_forward.12} parent=0 // pred_check_branch
    %731 = sbr.rel (0) target = $region25
  $region24: #{unet_generator_forward.12} parent=0 // pred_region
    _
  $region25: #{unet_generator_forward.12} parent=0 // pred_fallthru
    _
  // Predicated region
  $region26: #{unet_generator_forward.12} parent=0 // pred_check
    _
  $region27: #{unet_generator_forward.12} parent=0 // pred_check_branch
    %733 = sbr.rel (0) target = $region29
  $region28: #{unet_generator_forward.12} parent=0 // pred_region
    _
  $region29: #{unet_generator_forward.12} parent=0 // pred_fallthru
    _
  // Predicated region
  $region30: #{unet_generator_forward.12} parent=0 // pred_check
    _
  $region31: #{unet_generator_forward.12} parent=0 // pred_check_branch
    %735 = sbr.rel (0) target = $region33
  $region32: #{unet_generator_forward.12} parent=0 // pred_region
    _
  $region33: #{unet_generator_forward.12} parent=0 // pred_fallthru
    _
  // Predicated region
  $region34: #{unet_generator_forward.12} parent=0 // pred_check
    _
  $region35: #{unet_generator_forward.12} parent=0 // pred_check_branch
    %737 = sbr.rel (0) target = $region37
  $region36: #{unet_generator_forward.12} parent=0 // pred_region
    _
  $region37: #{unet_generator_forward.12} parent=0 // pred_fallthru
    _

// kernel: tile.88
$region0: #{tile.88}
  #allocation0 [shape = 's32[1]{0}', space=sflag, size = 0x4, scoped, tag = 'scoped memory for tile.88']
  %s0 = inlined_call_operand.vmem [shape: f32[32], index: 0, kind: input, shape index: {}]
  %s1 = inlined_call_operand.vmem [shape: f32[16,32], index: 1, kind: output, shape index: {}]
  // Predicated region
  $region2: #{tile.88} parent=0 // pred_check
    _
  $region3: #{tile.88} parent=0 // pred_check_branch
    %3 = sbr.rel (0) target = $region5
  $region4: #{tile.88} parent=0 // pred_region
    _
  $region5: #{tile.88} parent=0 // pred_fallthru
    _
  %v4 = vld [vmem:[%s0] ss:$0 sm:$0xff]
  %5 = vst [vmem:[%s1] sm:$0xff] %v4
  %s6 = scalar_lea.vmem %s1, 8
  %7 = vst [vmem:[%s6] sm:$0xff] %v4

// kernel: tile.98
$region0: #{tile.98}
  #allocation0 [shape = 's32[1]{0}', space=sflag, size = 0x4, scoped, tag = 'scoped memory for tile.98']
  %s0 = inlined_call_operand.vmem [shape: f32[64], index: 0, kind: input, shape index: {}]
  %s1 = inlined_call_operand.vmem [shape: f32[16,64], index: 1, kind: output, shape index: {}]
  // Predicated region
  $region2: #{tile.98} parent=0 // pred_check
    _
  $region3: #{tile.98} parent=0 // pred_check_branch
    %3 = sbr.rel (0) target = $region5
  $region4: #{tile.98} parent=0 // pred_region
    _
  $region5: #{tile.98} parent=0 // pred_fallthru
    _
  %v4 = vld [vmem:[%s0] ss:$0 sm:$0xff]
  %5 = vst [vmem:[%s1] sm:$0xff] %v4
  %s6 = scalar_lea.vmem %s1, 8
  %7 = vst [vmem:[%s6] sm:$0xff] %v4

// kernel: unet_generator_forward.13
$region0: #{unet_generator_forward.13}
  #allocation0 [shape = 'u32[]', space=smem, size = 0x4, offset = 0x4, fixed_abs, tag = 'smem constant byte address 0x4 - core index']
  #allocation1 [shape = 'u32[144,128]{1,0:T(1,128)}', space=vmem, size = 0x12000, scoped, tag = 'internal scratch']
  %s0 = inlined_call_operand.vmem [shape: bf16[128,512], index: 0, kind: input, shape index: {}]
  %s1 = inlined_call_operand.vmem [shape: bf16[512,128], index: 1, kind: input, shape index: {}]
  %s2 = inlined_call_operand.vmem [shape: f32[1,128], index: 2, kind: input, shape index: {}]
  %s3 = inlined_call_operand.vmem [shape: f32[1,512], index: 3, kind: input, shape index: {}]
  %s4 = inlined_call_operand.vmem [shape: f32[1,512], index: 4, kind: input, shape index: {}]
  %s5 = inlined_call_operand.vmem [shape: bf16[128,128], index: 5, kind: output, shape index: {0}]
  %s6 = inlined_call_operand.vmem [shape: f32[1,8,128], index: 6, kind: output, shape index: {1}]
  %7 = xla_tuple %s5, %s6
  %s8 = sld [smem:[#allocation0]]
  $region38: #{unet_generator_forward.13} parent=0
    _
  %s10 = ssub.s32 1, %s8
  %s11 = scalar_select 0, %s10, %s8
  // Predicated region
  $region2: #{unet_generator_forward.13} parent=0 // pred_check
    _
  $region3: #{unet_generator_forward.13} parent=0 // pred_check_branch
    %13 = sbr.rel (0) target = $region5
  $region4: #{unet_generator_forward.13} parent=0 // pred_region
    _
  $region5: #{unet_generator_forward.13} parent=0 // pred_fallthru
    _
  // Predicated region
  $region6: #{unet_generator_forward.13} parent=0 // pred_check
    _
  $region7: #{unet_generator_forward.13} parent=0 // pred_check_branch
    %15 = sbr.rel (0) target = $region9
  $region8: #{unet_generator_forward.13} parent=0 // pred_region
    _
  $region9: #{unet_generator_forward.13} parent=0 // pred_fallthru
    _
  // Predicated region
  $region10: #{unet_generator_forward.13} parent=0 // pred_check
    _
  $region11: #{unet_generator_forward.13} parent=0 // pred_check_branch
    %17 = sbr.rel (0) target = $region13
  $region12: #{unet_generator_forward.13} parent=0 // pred_region
    _
  $region13: #{unet_generator_forward.13} parent=0 // pred_fallthru
    _
  // Predicated region
  $region14: #{unet_generator_forward.13} parent=0 // pred_check
    _
  $region15: #{unet_generator_forward.13} parent=0 // pred_check_branch
    %19 = sbr.rel (0) target = $region17
  $region16: #{unet_generator_forward.13} parent=0 // pred_region
    _
  $region17: #{unet_generator_forward.13} parent=0 // pred_fallthru
    _
  // Predicated region
  $region18: #{unet_generator_forward.13} parent=0 // pred_check
    _
  $region19: #{unet_generator_forward.13} parent=0 // pred_check_branch
    %21 = sbr.rel (0) target = $region21
  $region20: #{unet_generator_forward.13} parent=0 // pred_region
    _
  $region21: #{unet_generator_forward.13} parent=0 // pred_fallthru
    _
  %v23 = vld [vmem:[%s0] sm:$0xff]
  %v24 = vld [vmem:[%s0 + $0x8] sm:$0xff]
  %v25 = vld [vmem:[%s0 + $0x10] sm:$0xff]
  %v26 = vld [vmem:[%s0 + $0x18] sm:$0xff]
  %v27 = vld [vmem:[%s0 + $0x20] sm:$0xff]
  %v28 = vld [vmem:[%s0 + $0x28] sm:$0xff]
  %v29 = vld [vmem:[%s0 + $0x30] sm:$0xff]
  %v30 = vld [vmem:[%s0 + $0x38] sm:$0xff]
  %v31 = vld [vmem:[%s0 + $0x40] sm:$0xff]
  %v32 = vld [vmem:[%s0 + $0x48] sm:$0xff]
  %v33 = vld [vmem:[%s0 + $0x50] sm:$0xff]
  %v34 = vld [vmem:[%s0 + $0x58] sm:$0xff]
  %v35 = vld [vmem:[%s0 + $0x60] sm:$0xff]
  %v36 = vld [vmem:[%s0 + $0x68] sm:$0xff]
  %v37 = vld [vmem:[%s0 + $0x70] sm:$0xff]
  %v38 = vld [vmem:[%s0 + $0x78] sm:$0xff]
  %v39 = vld [vmem:[%s0 + $0x80] sm:$0xff]
  %v40 = vld [vmem:[%s0 + $0x88] sm:$0xff]
  %v41 = vld [vmem:[%s0 + $0x90] sm:$0xff]
  %v42 = vld [vmem:[%s0 + $0x98] sm:$0xff]
  %v43 = vld [vmem:[%s0 + $0xa0] sm:$0xff]
  %v44 = vld [vmem:[%s0 + $0xa8] sm:$0xff]
  %v45 = vld [vmem:[%s0 + $0xb0] sm:$0xff]
  %v46 = vld [vmem:[%s0 + $0xb8] sm:$0xff]
  %v47 = vld [vmem:[%s0 + $0xc0] sm:$0xff]
  %v48 = vld [vmem:[%s0 + $0xc8] sm:$0xff]
  %v49 = vld [vmem:[%s0 + $0xd0] sm:$0xff]
  %v50 = vld [vmem:[%s0 + $0xd8] sm:$0xff]
  %v51 = vld [vmem:[%s0 + $0xe0] sm:$0xff]
  %v52 = vld [vmem:[%s0 + $0xe8] sm:$0xff]
  %v53 = vld [vmem:[%s0 + $0xf0] sm:$0xff]
  %v54 = vld [vmem:[%s0 + $0xf8] sm:$0xff]
  %v55 = vunpack.c.l.bf16 %v23
  %v56 = vunpack.c.h.bf16 %v23
  %v57 = vunpack.c.l.bf16 %v24
  %v58 = vunpack.c.h.bf16 %v24
  %v59 = vunpack.c.l.bf16 %v25
  %v60 = vunpack.c.h.bf16 %v25
  %v61 = vunpack.c.l.bf16 %v26
  %v62 = vunpack.c.h.bf16 %v26
  %v63 = vunpack.c.l.bf16 %v27
  %v64 = vunpack.c.h.bf16 %v27
  %v65 = vunpack.c.l.bf16 %v28
  %v66 = vunpack.c.h.bf16 %v28
  %v67 = vunpack.c.l.bf16 %v29
  %v68 = vunpack.c.h.bf16 %v29
  %v69 = vunpack.c.l.bf16 %v30
  %v70 = vunpack.c.h.bf16 %v30
  %v71 = vunpack.c.l.bf16 %v31
  %v72 = vunpack.c.h.bf16 %v31
  %v73 = vunpack.c.l.bf16 %v32
  %v74 = vunpack.c.h.bf16 %v32
  %v75 = vunpack.c.l.bf16 %v33
  %v76 = vunpack.c.h.bf16 %v33
  %v77 = vunpack.c.l.bf16 %v34
  %v78 = vunpack.c.h.bf16 %v34
  %v79 = vunpack.c.l.bf16 %v35
  %v80 = vunpack.c.h.bf16 %v35
  %v81 = vunpack.c.l.bf16 %v36
  %v82 = vunpack.c.h.bf16 %v36
  %v83 = vunpack.c.l.bf16 %v37
  %v84 = vunpack.c.h.bf16 %v37
  %v85 = vunpack.c.l.bf16 %v38
  %v86 = vunpack.c.h.bf16 %v38
  %v87 = vunpack.c.l.bf16 %v39
  %v88 = vunpack.c.h.bf16 %v39
  %v89 = vunpack.c.l.bf16 %v40
  %v90 = vunpack.c.h.bf16 %v40
  %v91 = vunpack.c.l.bf16 %v41
  %v92 = vunpack.c.h.bf16 %v41
  %v93 = vunpack.c.l.bf16 %v42
  %v94 = vunpack.c.h.bf16 %v42
  %v95 = vunpack.c.l.bf16 %v43
  %v96 = vunpack.c.h.bf16 %v43
  %v97 = vunpack.c.l.bf16 %v44
  %v98 = vunpack.c.h.bf16 %v44
  %v99 = vunpack.c.l.bf16 %v45
  %v100 = vunpack.c.h.bf16 %v45
  %v101 = vunpack.c.l.bf16 %v46
  %v102 = vunpack.c.h.bf16 %v46
  %v103 = vunpack.c.l.bf16 %v47
  %v104 = vunpack.c.h.bf16 %v47
  %v105 = vunpack.c.l.bf16 %v48
  %v106 = vunpack.c.h.bf16 %v48
  %v107 = vunpack.c.l.bf16 %v49
  %v108 = vunpack.c.h.bf16 %v49
  %v109 = vunpack.c.l.bf16 %v50
  %v110 = vunpack.c.h.bf16 %v50
  %v111 = vunpack.c.l.bf16 %v51
  %v112 = vunpack.c.h.bf16 %v51
  %v113 = vunpack.c.l.bf16 %v52
  %v114 = vunpack.c.h.bf16 %v52
  %v115 = vunpack.c.l.bf16 %v53
  %v116 = vunpack.c.h.bf16 %v53
  %v117 = vunpack.c.l.bf16 %v54
  %v118 = vunpack.c.h.bf16 %v54
  %v119 = vld [vmem:[%s3] sm:$0xf]
  %v121 = vlaneseq
  %v122 = vshrl.u32 %v121, 7
  %v123 = vsub.s32 0, %v122
  %v124 = vrot.slane %v119, %v123
  %v125 = vlaneseq
  %v126 = vshrl.u32 %v125, 7
  %v127 = vsub.s32 1, %v126
  %v128 = vrot.slane %v119, %v127
  %v129 = vlaneseq
  %v130 = vshrl.u32 %v129, 7
  %v131 = vsub.s32 2, %v130
  %v132 = vrot.slane %v119, %v131
  %v133 = vlaneseq
  %v134 = vshrl.u32 %v133, 7
  %v135 = vsub.s32 3, %v134
  %v136 = vrot.slane %v119, %v135
  %v141 = vmul.f32 %v55, %v124
  %v142 = vmul.f32 %v56, %v128
  %v143 = vmul.f32 %v57, %v132
  %v144 = vmul.f32 %v58, %v136
  %v145 = vmul.f32 %v59, %v124
  %v146 = vmul.f32 %v60, %v128
  %v147 = vmul.f32 %v61, %v132
  %v148 = vmul.f32 %v62, %v136
  %v149 = vmul.f32 %v63, %v124
  %v150 = vmul.f32 %v64, %v128
  %v151 = vmul.f32 %v65, %v132
  %v152 = vmul.f32 %v66, %v136
  %v153 = vmul.f32 %v67, %v124
  %v154 = vmul.f32 %v68, %v128
  %v155 = vmul.f32 %v69, %v132
  %v156 = vmul.f32 %v70, %v136
  %v157 = vmul.f32 %v71, %v124
  %v158 = vmul.f32 %v72, %v128
  %v159 = vmul.f32 %v73, %v132
  %v160 = vmul.f32 %v74, %v136
  %v161 = vmul.f32 %v75, %v124
  %v162 = vmul.f32 %v76, %v128
  %v163 = vmul.f32 %v77, %v132
  %v164 = vmul.f32 %v78, %v136
  %v165 = vmul.f32 %v79, %v124
  %v166 = vmul.f32 %v80, %v128
  %v167 = vmul.f32 %v81, %v132
  %v168 = vmul.f32 %v82, %v136
  %v169 = vmul.f32 %v83, %v124
  %v170 = vmul.f32 %v84, %v128
  %v171 = vmul.f32 %v85, %v132
  %v172 = vmul.f32 %v86, %v136
  %v173 = vmul.f32 %v87, %v124
  %v174 = vmul.f32 %v88, %v128
  %v175 = vmul.f32 %v89, %v132
  %v176 = vmul.f32 %v90, %v136
  %v177 = vmul.f32 %v91, %v124
  %v178 = vmul.f32 %v92, %v128
  %v179 = vmul.f32 %v93, %v132
  %v180 = vmul.f32 %v94, %v136
  %v181 = vmul.f32 %v95, %v124
  %v182 = vmul.f32 %v96, %v128
  %v183 = vmul.f32 %v97, %v132
  %v184 = vmul.f32 %v98, %v136
  %v185 = vmul.f32 %v99, %v124
  %v186 = vmul.f32 %v100, %v128
  %v187 = vmul.f32 %v101, %v132
  %v188 = vmul.f32 %v102, %v136
  %v189 = vmul.f32 %v103, %v124
  %v190 = vmul.f32 %v104, %v128
  %v191 = vmul.f32 %v105, %v132
  %v192 = vmul.f32 %v106, %v136
  %v193 = vmul.f32 %v107, %v124
  %v194 = vmul.f32 %v108, %v128
  %v195 = vmul.f32 %v109, %v132
  %v196 = vmul.f32 %v110, %v136
  %v197 = vmul.f32 %v111, %v124
  %v198 = vmul.f32 %v112, %v128
  %v199 = vmul.f32 %v113, %v132
  %v200 = vmul.f32 %v114, %v136
  %v201 = vmul.f32 %v115, %v124
  %v202 = vmul.f32 %v116, %v128
  %v203 = vmul.f32 %v117, %v132
  %v204 = vmul.f32 %v118, %v136
  %v205 = vld [vmem:[%s4] sm:$0xf]
  %v207 = vlaneseq
  %v208 = vshrl.u32 %v207, 7
  %v209 = vsub.s32 0, %v208
  %v210 = vrot.slane %v205, %v209
  %v211 = vlaneseq
  %v212 = vshrl.u32 %v211, 7
  %v213 = vsub.s32 1, %v212
  %v214 = vrot.slane %v205, %v213
  %v215 = vlaneseq
  %v216 = vshrl.u32 %v215, 7
  %v217 = vsub.s32 2, %v216
  %v218 = vrot.slane %v205, %v217
  %v219 = vlaneseq
  %v220 = vshrl.u32 %v219, 7
  %v221 = vsub.s32 3, %v220
  %v222 = vrot.slane %v205, %v221
  %v227 = vadd.f32 %v141, %v210
  %v228 = vadd.f32 %v142, %v214
  %v229 = vadd.f32 %v143, %v218
  %v230 = vadd.f32 %v144, %v222
  %v231 = vadd.f32 %v145, %v210
  %v232 = vadd.f32 %v146, %v214
  %v233 = vadd.f32 %v147, %v218
  %v234 = vadd.f32 %v148, %v222
  %v235 = vadd.f32 %v149, %v210
  %v236 = vadd.f32 %v150, %v214
  %v237 = vadd.f32 %v151, %v218
  %v238 = vadd.f32 %v152, %v222
  %v239 = vadd.f32 %v153, %v210
  %v240 = vadd.f32 %v154, %v214
  %v241 = vadd.f32 %v155, %v218
  %v242 = vadd.f32 %v156, %v222
  %v243 = vadd.f32 %v157, %v210
  %v244 = vadd.f32 %v158, %v214
  %v245 = vadd.f32 %v159, %v218
  %v246 = vadd.f32 %v160, %v222
  %v247 = vadd.f32 %v161, %v210
  %v248 = vadd.f32 %v162, %v214
  %v249 = vadd.f32 %v163, %v218
  %v250 = vadd.f32 %v164, %v222
  %v251 = vadd.f32 %v165, %v210
  %v252 = vadd.f32 %v166, %v214
  %v253 = vadd.f32 %v167, %v218
  %v254 = vadd.f32 %v168, %v222
  %v255 = vadd.f32 %v169, %v210
  %v256 = vadd.f32 %v170, %v214
  %v257 = vadd.f32 %v171, %v218
  %v258 = vadd.f32 %v172, %v222
  %v259 = vadd.f32 %v173, %v210
  %v260 = vadd.f32 %v174, %v214
  %v261 = vadd.f32 %v175, %v218
  %v262 = vadd.f32 %v176, %v222
  %v263 = vadd.f32 %v177, %v210
  %v264 = vadd.f32 %v178, %v214
  %v265 = vadd.f32 %v179, %v218
  %v266 = vadd.f32 %v180, %v222
  %v267 = vadd.f32 %v181, %v210
  %v268 = vadd.f32 %v182, %v214
  %v269 = vadd.f32 %v183, %v218
  %v270 = vadd.f32 %v184, %v222
  %v271 = vadd.f32 %v185, %v210
  %v272 = vadd.f32 %v186, %v214
  %v273 = vadd.f32 %v187, %v218
  %v274 = vadd.f32 %v188, %v222
  %v275 = vadd.f32 %v189, %v210
  %v276 = vadd.f32 %v190, %v214
  %v277 = vadd.f32 %v191, %v218
  %v278 = vadd.f32 %v192, %v222
  %v279 = vadd.f32 %v193, %v210
  %v280 = vadd.f32 %v194, %v214
  %v281 = vadd.f32 %v195, %v218
  %v282 = vadd.f32 %v196, %v222
  %v283 = vadd.f32 %v197, %v210
  %v284 = vadd.f32 %v198, %v214
  %v285 = vadd.f32 %v199, %v218
  %v286 = vadd.f32 %v200, %v222
  %v287 = vadd.f32 %v201, %v210
  %v288 = vadd.f32 %v202, %v214
  %v289 = vadd.f32 %v203, %v218
  %v290 = vadd.f32 %v204, %v222
  %vm291 = vcmp.ge.f32.partialorder %v227, 0.0
  %vm292 = vcmp.ge.f32.partialorder %v228, 0.0
  %vm293 = vcmp.ge.f32.partialorder %v229, 0.0
  %vm294 = vcmp.ge.f32.partialorder %v230, 0.0
  %vm295 = vcmp.ge.f32.partialorder %v231, 0.0
  %vm296 = vcmp.ge.f32.partialorder %v232, 0.0
  %vm297 = vcmp.ge.f32.partialorder %v233, 0.0
  %vm298 = vcmp.ge.f32.partialorder %v234, 0.0
  %vm299 = vcmp.ge.f32.partialorder %v235, 0.0
  %vm300 = vcmp.ge.f32.partialorder %v236, 0.0
  %vm301 = vcmp.ge.f32.partialorder %v237, 0.0
  %vm302 = vcmp.ge.f32.partialorder %v238, 0.0
  %vm303 = vcmp.ge.f32.partialorder %v239, 0.0
  %vm304 = vcmp.ge.f32.partialorder %v240, 0.0
  %vm305 = vcmp.ge.f32.partialorder %v241, 0.0
  %vm306 = vcmp.ge.f32.partialorder %v242, 0.0
  %vm307 = vcmp.ge.f32.partialorder %v243, 0.0
  %vm308 = vcmp.ge.f32.partialorder %v244, 0.0
  %vm309 = vcmp.ge.f32.partialorder %v245, 0.0
  %vm310 = vcmp.ge.f32.partialorder %v246, 0.0
  %vm311 = vcmp.ge.f32.partialorder %v247, 0.0
  %vm312 = vcmp.ge.f32.partialorder %v248, 0.0
  %vm313 = vcmp.ge.f32.partialorder %v249, 0.0
  %vm314 = vcmp.ge.f32.partialorder %v250, 0.0
  %vm315 = vcmp.ge.f32.partialorder %v251, 0.0
  %vm316 = vcmp.ge.f32.partialorder %v252, 0.0
  %vm317 = vcmp.ge.f32.partialorder %v253, 0.0
  %vm318 = vcmp.ge.f32.partialorder %v254, 0.0
  %vm319 = vcmp.ge.f32.partialorder %v255, 0.0
  %vm320 = vcmp.ge.f32.partialorder %v256, 0.0
  %vm321 = vcmp.ge.f32.partialorder %v257, 0.0
  %vm322 = vcmp.ge.f32.partialorder %v258, 0.0
  %vm323 = vcmp.ge.f32.partialorder %v259, 0.0
  %vm324 = vcmp.ge.f32.partialorder %v260, 0.0
  %vm325 = vcmp.ge.f32.partialorder %v261, 0.0
  %vm326 = vcmp.ge.f32.partialorder %v262, 0.0
  %vm327 = vcmp.ge.f32.partialorder %v263, 0.0
  %vm328 = vcmp.ge.f32.partialorder %v264, 0.0
  %vm329 = vcmp.ge.f32.partialorder %v265, 0.0
  %vm330 = vcmp.ge.f32.partialorder %v266, 0.0
  %vm331 = vcmp.ge.f32.partialorder %v267, 0.0
  %vm332 = vcmp.ge.f32.partialorder %v268, 0.0
  %vm333 = vcmp.ge.f32.partialorder %v269, 0.0
  %vm334 = vcmp.ge.f32.partialorder %v270, 0.0
  %vm335 = vcmp.ge.f32.partialorder %v271, 0.0
  %vm336 = vcmp.ge.f32.partialorder %v272, 0.0
  %vm337 = vcmp.ge.f32.partialorder %v273, 0.0
  %vm338 = vcmp.ge.f32.partialorder %v274, 0.0
  %vm339 = vcmp.ge.f32.partialorder %v275, 0.0
  %vm340 = vcmp.ge.f32.partialorder %v276, 0.0
  %vm341 = vcmp.ge.f32.partialorder %v277, 0.0
  %vm342 = vcmp.ge.f32.partialorder %v278, 0.0
  %vm343 = vcmp.ge.f32.partialorder %v279, 0.0
  %vm344 = vcmp.ge.f32.partialorder %v280, 0.0
  %vm345 = vcmp.ge.f32.partialorder %v281, 0.0
  %vm346 = vcmp.ge.f32.partialorder %v282, 0.0
  %vm347 = vcmp.ge.f32.partialorder %v283, 0.0
  %vm348 = vcmp.ge.f32.partialorder %v284, 0.0
  %vm349 = vcmp.ge.f32.partialorder %v285, 0.0
  %vm350 = vcmp.ge.f32.partialorder %v286, 0.0
  %vm351 = vcmp.ge.f32.partialorder %v287, 0.0
  %vm352 = vcmp.ge.f32.partialorder %v288, 0.0
  %vm353 = vcmp.ge.f32.partialorder %v289, 0.0
  %vm354 = vcmp.ge.f32.partialorder %v290, 0.0
  %v355 = vmul.f32 %v227, 0.2
  %v356 = vmul.f32 %v228, 0.2
  %v357 = vmul.f32 %v229, 0.2
  %v358 = vmul.f32 %v230, 0.2
  %v359 = vmul.f32 %v231, 0.2
  %v360 = vmul.f32 %v232, 0.2
  %v361 = vmul.f32 %v233, 0.2
  %v362 = vmul.f32 %v234, 0.2
  %v363 = vmul.f32 %v235, 0.2
  %v364 = vmul.f32 %v236, 0.2
  %v365 = vmul.f32 %v237, 0.2
  %v366 = vmul.f32 %v238, 0.2
  %v367 = vmul.f32 %v239, 0.2
  %v368 = vmul.f32 %v240, 0.2
  %v369 = vmul.f32 %v241, 0.2
  %v370 = vmul.f32 %v242, 0.2
  %v371 = vmul.f32 %v243, 0.2
  %v372 = vmul.f32 %v244, 0.2
  %v373 = vmul.f32 %v245, 0.2
  %v374 = vmul.f32 %v246, 0.2
  %v375 = vmul.f32 %v247, 0.2
  %v376 = vmul.f32 %v248, 0.2
  %v377 = vmul.f32 %v249, 0.2
  %v378 = vmul.f32 %v250, 0.2
  %v379 = vmul.f32 %v251, 0.2
  %v380 = vmul.f32 %v252, 0.2
  %v381 = vmul.f32 %v253, 0.2
  %v382 = vmul.f32 %v254, 0.2
  %v383 = vmul.f32 %v255, 0.2
  %v384 = vmul.f32 %v256, 0.2
  %v385 = vmul.f32 %v257, 0.2
  %v386 = vmul.f32 %v258, 0.2
  %v387 = vmul.f32 %v259, 0.2
  %v388 = vmul.f32 %v260, 0.2
  %v389 = vmul.f32 %v261, 0.2
  %v390 = vmul.f32 %v262, 0.2
  %v391 = vmul.f32 %v263, 0.2
  %v392 = vmul.f32 %v264, 0.2
  %v393 = vmul.f32 %v265, 0.2
  %v394 = vmul.f32 %v266, 0.2
  %v395 = vmul.f32 %v267, 0.2
  %v396 = vmul.f32 %v268, 0.2
  %v397 = vmul.f32 %v269, 0.2
  %v398 = vmul.f32 %v270, 0.2
  %v399 = vmul.f32 %v271, 0.2
  %v400 = vmul.f32 %v272, 0.2
  %v401 = vmul.f32 %v273, 0.2
  %v402 = vmul.f32 %v274, 0.2
  %v403 = vmul.f32 %v275, 0.2
  %v404 = vmul.f32 %v276, 0.2
  %v405 = vmul.f32 %v277, 0.2
  %v406 = vmul.f32 %v278, 0.2
  %v407 = vmul.f32 %v279, 0.2
  %v408 = vmul.f32 %v280, 0.2
  %v409 = vmul.f32 %v281, 0.2
  %v410 = vmul.f32 %v282, 0.2
  %v411 = vmul.f32 %v283, 0.2
  %v412 = vmul.f32 %v284, 0.2
  %v413 = vmul.f32 %v285, 0.2
  %v414 = vmul.f32 %v286, 0.2
  %v415 = vmul.f32 %v287, 0.2
  %v416 = vmul.f32 %v288, 0.2
  %v417 = vmul.f32 %v289, 0.2
  %v418 = vmul.f32 %v290, 0.2
  %v419 = vsel %vm291, %v227, %v355
  %v420 = vsel %vm292, %v228, %v356
  %v421 = vsel %vm293, %v229, %v357
  %v422 = vsel %vm294, %v230, %v358
  %v423 = vsel %vm295, %v231, %v359
  %v424 = vsel %vm296, %v232, %v360
  %v425 = vsel %vm297, %v233, %v361
  %v426 = vsel %vm298, %v234, %v362
  %v427 = vsel %vm299, %v235, %v363
  %v428 = vsel %vm300, %v236, %v364
  %v429 = vsel %vm301, %v237, %v365
  %v430 = vsel %vm302, %v238, %v366
  %v431 = vsel %vm303, %v239, %v367
  %v432 = vsel %vm304, %v240, %v368
  %v433 = vsel %vm305, %v241, %v369
  %v434 = vsel %vm306, %v242, %v370
  %v435 = vsel %vm307, %v243, %v371
  %v436 = vsel %vm308, %v244, %v372
  %v437 = vsel %vm309, %v245, %v373
  %v438 = vsel %vm310, %v246, %v374
  %v439 = vsel %vm311, %v247, %v375
  %v440 = vsel %vm312, %v248, %v376
  %v441 = vsel %vm313, %v249, %v377
  %v442 = vsel %vm314, %v250, %v378
  %v443 = vsel %vm315, %v251, %v379
  %v444 = vsel %vm316, %v252, %v380
  %v445 = vsel %vm317, %v253, %v381
  %v446 = vsel %vm318, %v254, %v382
  %v447 = vsel %vm319, %v255, %v383
  %v448 = vsel %vm320, %v256, %v384
  %v449 = vsel %vm321, %v257, %v385
  %v450 = vsel %vm322, %v258, %v386
  %v451 = vsel %vm323, %v259, %v387
  %v452 = vsel %vm324, %v260, %v388
  %v453 = vsel %vm325, %v261, %v389
  %v454 = vsel %vm326, %v262, %v390
  %v455 = vsel %vm327, %v263, %v391
  %v456 = vsel %vm328, %v264, %v392
  %v457 = vsel %vm329, %v265, %v393
  %v458 = vsel %vm330, %v266, %v394
  %v459 = vsel %vm331, %v267, %v395
  %v460 = vsel %vm332, %v268, %v396
  %v461 = vsel %vm333, %v269, %v397
  %v462 = vsel %vm334, %v270, %v398
  %v463 = vsel %vm335, %v271, %v399
  %v464 = vsel %vm336, %v272, %v400
  %v465 = vsel %vm337, %v273, %v401
  %v466 = vsel %vm338, %v274, %v402
  %v467 = vsel %vm339, %v275, %v403
  %v468 = vsel %vm340, %v276, %v404
  %v469 = vsel %vm341, %v277, %v405
  %v470 = vsel %vm342, %v278, %v406
  %v471 = vsel %vm343, %v279, %v407
  %v472 = vsel %vm344, %v280, %v408
  %v473 = vsel %vm345, %v281, %v409
  %v474 = vsel %vm346, %v282, %v410
  %v475 = vsel %vm347, %v283, %v411
  %v476 = vsel %vm348, %v284, %v412
  %v477 = vsel %vm349, %v285, %v413
  %v478 = vsel %vm350, %v286, %v414
  %v479 = vsel %vm351, %v287, %v415
  %v480 = vsel %vm352, %v288, %v416
  %v481 = vsel %vm353, %v289, %v417
  %v482 = vsel %vm354, %v290, %v418
  %v483 = vpack.c.bf16 %v423, %v419
  %v484 = vpack.c.bf16 %v424, %v420
  %v485 = vpack.c.bf16 %v425, %v421
  %v486 = vpack.c.bf16 %v426, %v422
  %v487 = vpack.c.bf16 %v431, %v427
  %v488 = vpack.c.bf16 %v432, %v428
  %v489 = vpack.c.bf16 %v433, %v429
  %v490 = vpack.c.bf16 %v434, %v430
  %v491 = vpack.c.bf16 %v439, %v435
  %v492 = vpack.c.bf16 %v440, %v436
  %v493 = vpack.c.bf16 %v441, %v437
  %v494 = vpack.c.bf16 %v442, %v438
  %v495 = vpack.c.bf16 %v447, %v443
  %v496 = vpack.c.bf16 %v448, %v444
  %v497 = vpack.c.bf16 %v449, %v445
  %v498 = vpack.c.bf16 %v450, %v446
  %v499 = vpack.c.bf16 %v455, %v451
  %v500 = vpack.c.bf16 %v456, %v452
  %v501 = vpack.c.bf16 %v457, %v453
  %v502 = vpack.c.bf16 %v458, %v454
  %v503 = vpack.c.bf16 %v463, %v459
  %v504 = vpack.c.bf16 %v464, %v460
  %v505 = vpack.c.bf16 %v465, %v461
  %v506 = vpack.c.bf16 %v466, %v462
  %v507 = vpack.c.bf16 %v471, %v467
  %v508 = vpack.c.bf16 %v472, %v468
  %v509 = vpack.c.bf16 %v473, %v469
  %v510 = vpack.c.bf16 %v474, %v470
  %v511 = vpack.c.bf16 %v479, %v475
  %v512 = vpack.c.bf16 %v480, %v476
  %v513 = vpack.c.bf16 %v481, %v477
  %v514 = vpack.c.bf16 %v482, %v478
  %v515 = vld [vmem:[%s1] sm:$0xf]
  %v516 = vld [vmem:[%s1 + $0x4] sm:$0xf]
  %v517 = vld [vmem:[%s1 + $0x8] sm:$0xf]
  %v518 = vld [vmem:[%s1 + $0xc] sm:$0xf]
  %v519 = vld [vmem:[%s1 + $0x10] sm:$0xf]
  %v520 = vld [vmem:[%s1 + $0x14] sm:$0xf]
  %v521 = vld [vmem:[%s1 + $0x18] sm:$0xf]
  %v522 = vld [vmem:[%s1 + $0x1c] sm:$0xf]
  %v523 = vld [vmem:[%s1 + $0x20] sm:$0xf]
  %v524 = vld [vmem:[%s1 + $0x24] sm:$0xf]
  %v525 = vld [vmem:[%s1 + $0x28] sm:$0xf]
  %v526 = vld [vmem:[%s1 + $0x2c] sm:$0xf]
  %v527 = vld [vmem:[%s1 + $0x30] sm:$0xf]
  %v528 = vld [vmem:[%s1 + $0x34] sm:$0xf]
  %v529 = vld [vmem:[%s1 + $0x38] sm:$0xf]
  %v530 = vld [vmem:[%s1 + $0x3c] sm:$0xf]
  %v531 = vld [vmem:[%s1 + $0x40] sm:$0xf]
  %v532 = vld [vmem:[%s1 + $0x44] sm:$0xf]
  %v533 = vld [vmem:[%s1 + $0x48] sm:$0xf]
  %v534 = vld [vmem:[%s1 + $0x4c] sm:$0xf]
  %v535 = vld [vmem:[%s1 + $0x50] sm:$0xf]
  %v536 = vld [vmem:[%s1 + $0x54] sm:$0xf]
  %v537 = vld [vmem:[%s1 + $0x58] sm:$0xf]
  %v538 = vld [vmem:[%s1 + $0x5c] sm:$0xf]
  %v539 = vld [vmem:[%s1 + $0x60] sm:$0xf]
  %v540 = vld [vmem:[%s1 + $0x64] sm:$0xf]
  %v541 = vld [vmem:[%s1 + $0x68] sm:$0xf]
  %v542 = vld [vmem:[%s1 + $0x6c] sm:$0xf]
  %v543 = vld [vmem:[%s1 + $0x70] sm:$0xf]
  %v544 = vld [vmem:[%s1 + $0x74] sm:$0xf]
  %v545 = vld [vmem:[%s1 + $0x78] sm:$0xf]
  %v546 = vld [vmem:[%s1 + $0x7c] sm:$0xf]
  %v547 = vld [vmem:[%s1 + $0x80] sm:$0xf]
  %v548 = vld [vmem:[%s1 + $0x84] sm:$0xf]
  %v549 = vld [vmem:[%s1 + $0x88] sm:$0xf]
  %v550 = vld [vmem:[%s1 + $0x8c] sm:$0xf]
  %v551 = vld [vmem:[%s1 + $0x90] sm:$0xf]
  %v552 = vld [vmem:[%s1 + $0x94] sm:$0xf]
  %v553 = vld [vmem:[%s1 + $0x98] sm:$0xf]
  %v554 = vld [vmem:[%s1 + $0x9c] sm:$0xf]
  %v555 = vld [vmem:[%s1 + $0xa0] sm:$0xf]
  %v556 = vld [vmem:[%s1 + $0xa4] sm:$0xf]
  %v557 = vld [vmem:[%s1 + $0xa8] sm:$0xf]
  %v558 = vld [vmem:[%s1 + $0xac] sm:$0xf]
  %v559 = vld [vmem:[%s1 + $0xb0] sm:$0xf]
  %v560 = vld [vmem:[%s1 + $0xb4] sm:$0xf]
  %v561 = vld [vmem:[%s1 + $0xb8] sm:$0xf]
  %v562 = vld [vmem:[%s1 + $0xbc] sm:$0xf]
  %v563 = vld [vmem:[%s1 + $0xc0] sm:$0xf]
  %v564 = vld [vmem:[%s1 + $0xc4] sm:$0xf]
  %v565 = vld [vmem:[%s1 + $0xc8] sm:$0xf]
  %v566 = vld [vmem:[%s1 + $0xcc] sm:$0xf]
  %v567 = vld [vmem:[%s1 + $0xd0] sm:$0xf]
  %v568 = vld [vmem:[%s1 + $0xd4] sm:$0xf]
  %v569 = vld [vmem:[%s1 + $0xd8] sm:$0xf]
  %v570 = vld [vmem:[%s1 + $0xdc] sm:$0xf]
  %v571 = vld [vmem:[%s1 + $0xe0] sm:$0xf]
  %v572 = vld [vmem:[%s1 + $0xe4] sm:$0xf]
  %v573 = vld [vmem:[%s1 + $0xe8] sm:$0xf]
  %v574 = vld [vmem:[%s1 + $0xec] sm:$0xf]
  %v575 = vld [vmem:[%s1 + $0xf0] sm:$0xf]
  %v576 = vld [vmem:[%s1 + $0xf4] sm:$0xf]
  %v577 = vld [vmem:[%s1 + $0xf8] sm:$0xf]
  %v578 = vld [vmem:[%s1 + $0xfc] sm:$0xf]
  %v579 = vld [vmem:[%s2] sm:$0x1]
  %v581 = vlaneseq
  %v582 = vshrl.u32 %v581, 7
  %v583 = vsub.s32 0, %v582
  %v584 = vrot.slane %v579, %v583
  %v650 = vunpack.c.l.b16 %v515
  %v651 = vunpack.c.l.b16 %v516
  %v652 = vunpack.c.l.b16 %v517
  %v653 = vunpack.c.l.b16 %v518
  %v654 = vunpack.c.l.b16 %v519
  %v655 = vunpack.c.l.b16 %v520
  %v656 = vunpack.c.l.b16 %v521
  %v657 = vunpack.c.l.b16 %v522
  %v658 = vunpack.c.l.b16 %v523
  %v659 = vunpack.c.l.b16 %v524
  %v660 = vunpack.c.l.b16 %v525
  %v661 = vunpack.c.l.b16 %v526
  %v662 = vunpack.c.l.b16 %v527
  %v663 = vunpack.c.l.b16 %v528
  %v664 = vunpack.c.l.b16 %v529
  %v665 = vunpack.c.l.b16 %v530
  %v666 = vunpack.c.l.b16 %v531
  %v667 = vunpack.c.l.b16 %v532
  %v668 = vunpack.c.l.b16 %v533
  %v669 = vunpack.c.l.b16 %v534
  %v670 = vunpack.c.l.b16 %v535
  %v671 = vunpack.c.l.b16 %v536
  %v672 = vunpack.c.l.b16 %v537
  %v673 = vunpack.c.l.b16 %v538
  %v674 = vunpack.c.l.b16 %v539
  %v675 = vunpack.c.l.b16 %v540
  %v676 = vunpack.c.l.b16 %v541
  %v677 = vunpack.c.l.b16 %v542
  %v678 = vunpack.c.l.b16 %v543
  %v679 = vunpack.c.l.b16 %v544
  %v680 = vunpack.c.l.b16 %v545
  %v681 = vunpack.c.l.b16 %v546
  %v682 = vunpack.c.l.b16 %v547
  %v683 = vunpack.c.l.b16 %v548
  %v684 = vunpack.c.l.b16 %v549
  %v685 = vunpack.c.l.b16 %v550
  %v686 = vunpack.c.l.b16 %v551
  %v687 = vunpack.c.l.b16 %v552
  %v688 = vunpack.c.l.b16 %v553
  %v689 = vunpack.c.l.b16 %v554
  %v690 = vunpack.c.l.b16 %v555
  %v691 = vunpack.c.l.b16 %v556
  %v692 = vunpack.c.l.b16 %v557
  %v693 = vunpack.c.l.b16 %v558
  %v694 = vunpack.c.l.b16 %v559
  %v695 = vunpack.c.l.b16 %v560
  %v696 = vunpack.c.l.b16 %v561
  %v697 = vunpack.c.l.b16 %v562
  %v698 = vunpack.c.l.b16 %v563
  %v699 = vunpack.c.l.b16 %v564
  %v700 = vunpack.c.l.b16 %v565
  %v701 = vunpack.c.l.b16 %v566
  %v702 = vunpack.c.l.b16 %v567
  %v703 = vunpack.c.l.b16 %v568
  %v704 = vunpack.c.l.b16 %v569
  %v705 = vunpack.c.l.b16 %v570
  %v706 = vunpack.c.l.b16 %v571
  %v707 = vunpack.c.l.b16 %v572
  %v708 = vunpack.c.l.b16 %v573
  %v709 = vunpack.c.l.b16 %v574
  %v710 = vunpack.c.l.b16 %v575
  %v711 = vunpack.c.l.b16 %v576
  %v712 = vunpack.c.l.b16 %v577
  %v713 = vunpack.c.l.b16 %v578
  %v714 = vpack.c.b16 %v651, %v650
  %v715 = vpack.c.b16 %v653, %v652
  %v716 = vpack.c.b16 %v655, %v654
  %v717 = vpack.c.b16 %v657, %v656
  %v718 = vpack.c.b16 %v659, %v658
  %v719 = vpack.c.b16 %v661, %v660
  %v720 = vpack.c.b16 %v663, %v662
  %v721 = vpack.c.b16 %v665, %v664
  %v722 = vpack.c.b16 %v667, %v666
  %v723 = vpack.c.b16 %v669, %v668
  %v724 = vpack.c.b16 %v671, %v670
  %v725 = vpack.c.b16 %v673, %v672
  %v726 = vpack.c.b16 %v675, %v674
  %v727 = vpack.c.b16 %v677, %v676
  %v728 = vpack.c.b16 %v679, %v678
  %v729 = vpack.c.b16 %v681, %v680
  %v730 = vpack.c.b16 %v683, %v682
  %v731 = vpack.c.b16 %v685, %v684
  %v732 = vpack.c.b16 %v687, %v686
  %v733 = vpack.c.b16 %v689, %v688
  %v734 = vpack.c.b16 %v691, %v690
  %v735 = vpack.c.b16 %v693, %v692
  %v736 = vpack.c.b16 %v695, %v694
  %v737 = vpack.c.b16 %v697, %v696
  %v738 = vpack.c.b16 %v699, %v698
  %v739 = vpack.c.b16 %v701, %v700
  %v740 = vpack.c.b16 %v703, %v702
  %v741 = vpack.c.b16 %v705, %v704
  %v742 = vpack.c.b16 %v707, %v706
  %v743 = vpack.c.b16 %v709, %v708
  %v744 = vpack.c.b16 %v711, %v710
  %v745 = vpack.c.b16 %v713, %v712
  %778 = vmatprep.subr.bf16.mxu0 0
  %779 = vmatpush1.bf16.msra.mxu0 %v714
  %780 = vmatprep.subr.bf16.mxu0 0
  %781 = vmatpush1.bf16.msra.mxu0 %v715
  %782 = vmatprep.subr.bf16.mxu0 0
  %783 = vmatpush1.bf16.msra.mxu0 %v716
  %784 = vmatprep.subr.bf16.mxu0 0
  %785 = vmatpush1.bf16.msra.mxu0 %v717
  %786 = vmatprep.subr.bf16.mxu0 0
  %787 = vmatpush1.bf16.msra.mxu0 %v718
  %788 = vmatprep.subr.bf16.mxu0 0
  %789 = vmatpush1.bf16.msra.mxu0 %v719
  %790 = vmatprep.subr.bf16.mxu0 0
  %791 = vmatpush1.bf16.msra.mxu0 %v720
  %792 = vmatprep.subr.bf16.mxu0 0
  %793 = vmatpush1.bf16.msra.mxu0 %v721
  %794 = vmatprep.subr.bf16.mxu0 0
  %795 = vmatpush1.bf16.msra.mxu0 %v722
  %796 = vmatprep.subr.bf16.mxu0 0
  %797 = vmatpush1.bf16.msra.mxu0 %v723
  %798 = vmatprep.subr.bf16.mxu0 0
  %799 = vmatpush1.bf16.msra.mxu0 %v724
  %800 = vmatprep.subr.bf16.mxu0 0
  %801 = vmatpush1.bf16.msra.mxu0 %v725
  %802 = vmatprep.subr.bf16.mxu0 0
  %803 = vmatpush1.bf16.msra.mxu0 %v726
  %804 = vmatprep.subr.bf16.mxu0 0
  %805 = vmatpush1.bf16.msra.mxu0 %v727
  %806 = vmatprep.subr.bf16.mxu0 0
  %807 = vmatpush1.bf16.msra.mxu0 %v728
  %808 = vmatprep.subr.bf16.mxu0 0
  %809 = vmatpush1.bf16.msra.mxu0 %v729
  %810 = vmatprep.mubr.bf16.mxu0 %v484
  %811 = vmatmul.mubr.bf16.gmra.mrb[0].mxu0 %v483
  %v812 = vpop.f32.mrb[0].mxu0
  %v813 = vadd.f32 %v584, %v812
  %v814 = vpop.f32.mrb[0].mxu0
  %v815 = vpop.f32.mrb[0].mxu0
  %v816 = vadd.f32 %v584, %v815
  %v817 = vpop.f32.mrb[0].mxu0
  %818 = vmatprep.mubr.bf16.mxu0 %v488
  %819 = vmatmul.mubr.bf16.gmra.mrb[0].mxu0 %v487
  %v820 = vpop.f32.mrb[0].mxu0
  %v821 = vadd.f32 %v584, %v820
  %v822 = vpop.f32.mrb[0].mxu0
  %v823 = vpop.f32.mrb[0].mxu0
  %v824 = vadd.f32 %v584, %v823
  %v825 = vpop.f32.mrb[0].mxu0
  %826 = vmatprep.mubr.bf16.mxu0 %v492
  %827 = vmatmul.mubr.bf16.gmra.mrb[0].mxu0 %v491
  %v828 = vpop.f32.mrb[0].mxu0
  %v829 = vadd.f32 %v584, %v828
  %v830 = vpop.f32.mrb[0].mxu0
  %v831 = vpop.f32.mrb[0].mxu0
  %v832 = vadd.f32 %v584, %v831
  %v833 = vpop.f32.mrb[0].mxu0
  %834 = vmatprep.mubr.bf16.mxu0 %v496
  %835 = vmatmul.mubr.bf16.gmra.mrb[0].mxu0 %v495
  %v836 = vpop.f32.mrb[0].mxu0
  %v837 = vadd.f32 %v584, %v836
  %v838 = vpop.f32.mrb[0].mxu0
  %v839 = vpop.f32.mrb[0].mxu0
  %v840 = vadd.f32 %v584, %v839
  %v841 = vpop.f32.mrb[0].mxu0
  %842 = vmatprep.mubr.bf16.mxu0 %v500
  %843 = vmatmul.mubr.bf16.gmra.mrb[0].mxu0 %v499
  %v844 = vpop.f32.mrb[0].mxu0
  %v845 = vadd.f32 %v584, %v844
  %v846 = vpop.f32.mrb[0].mxu0
  %v847 = vpop.f32.mrb[0].mxu0
  %v848 = vadd.f32 %v584, %v847
  %v849 = vpop.f32.mrb[0].mxu0
  %850 = vmatprep.mubr.bf16.mxu0 %v504
  %851 = vmatmul.mubr.bf16.gmra.mrb[0].mxu0 %v503
  %v852 = vpop.f32.mrb[0].mxu0
  %v853 = vadd.f32 %v584, %v852
  %v854 = vpop.f32.mrb[0].mxu0
  %v855 = vpop.f32.mrb[0].mxu0
  %v856 = vadd.f32 %v584, %v855
  %v857 = vpop.f32.mrb[0].mxu0
  %858 = vmatprep.mubr.bf16.mxu0 %v508
  %859 = vmatmul.mubr.bf16.gmra.mrb[0].mxu0 %v507
  %v860 = vpop.f32.mrb[0].mxu0
  %v861 = vadd.f32 %v584, %v860
  %v862 = vpop.f32.mrb[0].mxu0
  %v863 = vpop.f32.mrb[0].mxu0
  %v864 = vadd.f32 %v584, %v863
  %v865 = vpop.f32.mrb[0].mxu0
  %866 = vmatprep.mubr.bf16.mxu0 %v512
  %867 = vmatmul.mubr.bf16.gmra.mrb[0].mxu0 %v511
  %v868 = vpop.f32.mrb[0].mxu0
  %v869 = vadd.f32 %v584, %v868
  %v870 = vpop.f32.mrb[0].mxu0
  %v871 = vpop.f32.mrb[0].mxu0
  %v872 = vadd.f32 %v584, %v871
  %v873 = vpop.f32.mrb[0].mxu0
  %874 = vdwg.mxu0
  %875 = vmatprep.subr.bf16.mxu0 0
  %876 = vmatpush1.bf16.msra.mxu0 %v730
  %877 = vmatprep.subr.bf16.mxu0 0
  %878 = vmatpush1.bf16.msra.mxu0 %v731
  %879 = vmatprep.subr.bf16.mxu0 0
  %880 = vmatpush1.bf16.msra.mxu0 %v732
  %881 = vmatprep.subr.bf16.mxu0 0
  %882 = vmatpush1.bf16.msra.mxu0 %v733
  %883 = vmatprep.subr.bf16.mxu0 0
  %884 = vmatpush1.bf16.msra.mxu0 %v734
  %885 = vmatprep.subr.bf16.mxu0 0
  %886 = vmatpush1.bf16.msra.mxu0 %v735
  %887 = vmatprep.subr.bf16.mxu0 0
  %888 = vmatpush1.bf16.msra.mxu0 %v736
  %889 = vmatprep.subr.bf16.mxu0 0
  %890 = vmatpush1.bf16.msra.mxu0 %v737
  %891 = vmatprep.subr.bf16.mxu0 0
  %892 = vmatpush1.bf16.msra.mxu0 %v738
  %893 = vmatprep.subr.bf16.mxu0 0
  %894 = vmatpush1.bf16.msra.mxu0 %v739
  %895 = vmatprep.subr.bf16.mxu0 0
  %896 = vmatpush1.bf16.msra.mxu0 %v740
  %897 = vmatprep.subr.bf16.mxu0 0
  %898 = vmatpush1.bf16.msra.mxu0 %v741
  %899 = vmatprep.subr.bf16.mxu0 0
  %900 = vmatpush1.bf16.msra.mxu0 %v742
  %901 = vmatprep.subr.bf16.mxu0 0
  %902 = vmatpush1.bf16.msra.mxu0 %v743
  %903 = vmatprep.subr.bf16.mxu0 0
  %904 = vmatpush1.bf16.msra.mxu0 %v744
  %905 = vmatprep.subr.bf16.mxu0 0
  %906 = vmatpush1.bf16.msra.mxu0 %v745
  %907 = vmatprep.mubr.bf16.mxu0 %v486
  %908 = vmatmul.mubr.bf16.gmra.mrb[0].mxu0 %v485
  %v909 = vpop.f32.mrb[0].mxu0
  %v910 = vadd.f32 %v813, %v909
  %v911 = vpop.f32.mrb[0].mxu0
  %v912 = vpop.f32.mrb[0].mxu0
  %v913 = vadd.f32 %v816, %v912
  %v914 = vpop.f32.mrb[0].mxu0
  %915 = vmatprep.mubr.bf16.mxu0 %v490
  %916 = vmatmul.mubr.bf16.gmra.mrb[0].mxu0 %v489
  %v917 = vpop.f32.mrb[0].mxu0
  %v918 = vadd.f32 %v821, %v917
  %v919 = vpop.f32.mrb[0].mxu0
  %v920 = vpop.f32.mrb[0].mxu0
  %v921 = vadd.f32 %v824, %v920
  %v922 = vpop.f32.mrb[0].mxu0
  %923 = vmatprep.mubr.bf16.mxu0 %v494
  %924 = vmatmul.mubr.bf16.gmra.mrb[0].mxu0 %v493
  %v925 = vpop.f32.mrb[0].mxu0
  %v926 = vadd.f32 %v829, %v925
  %v927 = vpop.f32.mrb[0].mxu0
  %v928 = vpop.f32.mrb[0].mxu0
  %v929 = vadd.f32 %v832, %v928
  %v930 = vpop.f32.mrb[0].mxu0
  %931 = vmatprep.mubr.bf16.mxu0 %v498
  %932 = vmatmul.mubr.bf16.gmra.mrb[0].mxu0 %v497
  %v933 = vpop.f32.mrb[0].mxu0
  %v934 = vadd.f32 %v837, %v933
  %v935 = vpop.f32.mrb[0].mxu0
  %v936 = vpop.f32.mrb[0].mxu0
  %v937 = vadd.f32 %v840, %v936
  %v938 = vpop.f32.mrb[0].mxu0
  %939 = vmatprep.mubr.bf16.mxu0 %v502
  %940 = vmatmul.mubr.bf16.gmra.mrb[0].mxu0 %v501
  %v941 = vpop.f32.mrb[0].mxu0
  %v942 = vadd.f32 %v845, %v941
  %v943 = vpop.f32.mrb[0].mxu0
  %v944 = vpop.f32.mrb[0].mxu0
  %v945 = vadd.f32 %v848, %v944
  %v946 = vpop.f32.mrb[0].mxu0
  %947 = vmatprep.mubr.bf16.mxu0 %v506
  %948 = vmatmul.mubr.bf16.gmra.mrb[0].mxu0 %v505
  %v949 = vpop.f32.mrb[0].mxu0
  %v950 = vadd.f32 %v853, %v949
  %v951 = vpop.f32.mrb[0].mxu0
  %v952 = vpop.f32.mrb[0].mxu0
  %v953 = vadd.f32 %v856, %v952
  %v954 = vpop.f32.mrb[0].mxu0
  %955 = vmatprep.mubr.bf16.mxu0 %v510
  %956 = vmatmul.mubr.bf16.gmra.mrb[0].mxu0 %v509
  %v957 = vpop.f32.mrb[0].mxu0
  %v958 = vadd.f32 %v861, %v957
  %v959 = vpop.f32.mrb[0].mxu0
  %v960 = vpop.f32.mrb[0].mxu0
  %v961 = vadd.f32 %v864, %v960
  %v962 = vpop.f32.mrb[0].mxu0
  %963 = vmatprep.mubr.bf16.mxu0 %v514
  %964 = vmatmul.mubr.bf16.gmra.mrb[0].mxu0 %v513
  %v965 = vpop.f32.mrb[0].mxu0
  %v966 = vadd.f32 %v869, %v965
  %v967 = vpop.f32.mrb[0].mxu0
  %v968 = vpop.f32.mrb[0].mxu0
  %v969 = vadd.f32 %v872, %v968
  %v970 = vpop.f32.mrb[0].mxu0
  %971 = vdwg.mxu0
  %v972 = vpack.c.bf16 %v913, %v910
  %v973 = vpack.c.bf16 %v921, %v918
  %v974 = vpack.c.bf16 %v929, %v926
  %v975 = vpack.c.bf16 %v937, %v934
  %v976 = vpack.c.bf16 %v945, %v942
  %v977 = vpack.c.bf16 %v953, %v950
  %v978 = vpack.c.bf16 %v961, %v958
  %v979 = vpack.c.bf16 %v969, %v966
  %v988 = vunpack.c.l.b16 %v972
  %v989 = vunpack.c.h.b16 %v972
  %v990 = vunpack.c.l.b16 %v973
  %v991 = vunpack.c.h.b16 %v973
  %v992 = vunpack.c.l.b16 %v974
  %v993 = vunpack.c.h.b16 %v974
  %v994 = vunpack.c.l.b16 %v975
  %v995 = vunpack.c.h.b16 %v975
  %v996 = vunpack.c.l.b16 %v976
  %v997 = vunpack.c.h.b16 %v976
  %v998 = vunpack.c.l.b16 %v977
  %v999 = vunpack.c.h.b16 %v977
  %v1000 = vunpack.c.l.b16 %v978
  %v1001 = vunpack.c.h.b16 %v978
  %v1002 = vunpack.c.l.b16 %v979
  %v1003 = vunpack.c.h.b16 %v979
  %v1004 = vpack.c.b16 %v988, %v988
  %v1005 = vpack.c.b16 %v989, %v989
  %v1006 = vpack.c.b16 %v990, %v990
  %v1007 = vpack.c.b16 %v991, %v991
  %v1008 = vpack.c.b16 %v992, %v992
  %v1009 = vpack.c.b16 %v993, %v993
  %v1010 = vpack.c.b16 %v994, %v994
  %v1011 = vpack.c.b16 %v995, %v995
  %v1012 = vpack.c.b16 %v996, %v996
  %v1013 = vpack.c.b16 %v997, %v997
  %v1014 = vpack.c.b16 %v998, %v998
  %v1015 = vpack.c.b16 %v999, %v999
  %v1016 = vpack.c.b16 %v1000, %v1000
  %v1017 = vpack.c.b16 %v1001, %v1001
  %v1018 = vpack.c.b16 %v1002, %v1002
  %v1019 = vpack.c.b16 %v1003, %v1003
  %1036 = vst [vmem:[%s5] sm:$0xf] %v1004
  %1037 = vst [vmem:[%s5 + $0x4] sm:$0xf] %v1005
  %1038 = vst [vmem:[%s5 + $0x8] sm:$0xf] %v1006
  %1039 = vst [vmem:[%s5 + $0xc] sm:$0xf] %v1007
  %1040 = vst [vmem:[%s5 + $0x10] sm:$0xf] %v1008
  %1041 = vst [vmem:[%s5 + $0x14] sm:$0xf] %v1009
  %1042 = vst [vmem:[%s5 + $0x18] sm:$0xf] %v1010
  %1043 = vst [vmem:[%s5 + $0x1c] sm:$0xf] %v1011
  %1044 = vst [vmem:[%s5 + $0x20] sm:$0xf] %v1012
  %1045 = vst [vmem:[%s5 + $0x24] sm:$0xf] %v1013
  %1046 = vst [vmem:[%s5 + $0x28] sm:$0xf] %v1014
  %1047 = vst [vmem:[%s5 + $0x2c] sm:$0xf] %v1015
  %1048 = vst [vmem:[%s5 + $0x30] sm:$0xf] %v1016
  %1049 = vst [vmem:[%s5 + $0x34] sm:$0xf] %v1017
  %1050 = vst [vmem:[%s5 + $0x38] sm:$0xf] %v1018
  %1051 = vst [vmem:[%s5 + $0x3c] sm:$0xf] %v1019
  %v1052 = vlaneseq
  %v1053 = vshrl.u32 %v1052, 7
  %v1054 = vadd.s32 %v1053, 8
  %v1055 = vadd.s32 %v1053, 16
  %v1056 = vadd.s32 %v1053, 24
  %v1057 = vadd.s32 %v1053, 32
  %v1058 = vadd.s32 %v1053, 40
  %v1059 = vadd.s32 %v1053, 48
  %v1060 = vadd.s32 %v1053, 56
  %v1061 = vadd.s32 %v1053, 64
  %v1062 = vadd.s32 %v1053, 72
  %v1063 = vadd.s32 %v1053, 80
  %v1064 = vadd.s32 %v1053, 88
  %v1065 = vadd.s32 %v1053, 96
  %v1066 = vadd.s32 %v1053, 104
  %v1067 = vadd.s32 %v1053, 112
  %v1068 = vadd.s32 %v1053, 120
  %s1069 = smul.u32 0, 128
  %s1070 = ssub.s32 8, %s1069
  %v1071 = vstv %s1070
  %vm1072 = vcmp.lt.s32.totalorder %v1053, %v1071
  %vm1073 = vcmp.lt.s32.totalorder %v1054, %v1071
  %vm1074 = vcmp.lt.s32.totalorder %v1055, %v1071
  %vm1075 = vcmp.lt.s32.totalorder %v1056, %v1071
  %vm1076 = vcmp.lt.s32.totalorder %v1057, %v1071
  %vm1077 = vcmp.lt.s32.totalorder %v1058, %v1071
  %vm1078 = vcmp.lt.s32.totalorder %v1059, %v1071
  %vm1079 = vcmp.lt.s32.totalorder %v1060, %v1071
  %vm1080 = vcmp.lt.s32.totalorder %v1061, %v1071
  %vm1081 = vcmp.lt.s32.totalorder %v1062, %v1071
  %vm1082 = vcmp.lt.s32.totalorder %v1063, %v1071
  %vm1083 = vcmp.lt.s32.totalorder %v1064, %v1071
  %vm1084 = vcmp.lt.s32.totalorder %v1065, %v1071
  %vm1085 = vcmp.lt.s32.totalorder %v1066, %v1071
  %vm1086 = vcmp.lt.s32.totalorder %v1067, %v1071
  %vm1087 = vcmp.lt.s32.totalorder %v1068, %v1071
  %v1088 = vsel %vm1072, 1, 0
  %v1089 = vsel %vm1073, 1, 0
  %v1090 = vsel %vm1074, 1, 0
  %v1091 = vsel %vm1075, 1, 0
  %v1092 = vsel %vm1076, 1, 0
  %v1093 = vsel %vm1077, 1, 0
  %v1094 = vsel %vm1078, 1, 0
  %v1095 = vsel %vm1079, 1, 0
  %v1096 = vsel %vm1080, 1, 0
  %v1097 = vsel %vm1081, 1, 0
  %v1098 = vsel %vm1082, 1, 0
  %v1099 = vsel %vm1083, 1, 0
  %v1100 = vsel %vm1084, 1, 0
  %v1101 = vsel %vm1085, 1, 0
  %v1102 = vsel %vm1086, 1, 0
  %v1103 = vsel %vm1087, 1, 0
  %vm1104 = vcmp.eq.s32.totalorder %v1088, 1
  %vm1105 = vcmp.eq.s32.totalorder %v1089, 1
  %vm1106 = vcmp.eq.s32.totalorder %v1090, 1
  %vm1107 = vcmp.eq.s32.totalorder %v1091, 1
  %vm1108 = vcmp.eq.s32.totalorder %v1092, 1
  %vm1109 = vcmp.eq.s32.totalorder %v1093, 1
  %vm1110 = vcmp.eq.s32.totalorder %v1094, 1
  %vm1111 = vcmp.eq.s32.totalorder %v1095, 1
  %vm1112 = vcmp.eq.s32.totalorder %v1096, 1
  %vm1113 = vcmp.eq.s32.totalorder %v1097, 1
  %vm1114 = vcmp.eq.s32.totalorder %v1098, 1
  %vm1115 = vcmp.eq.s32.totalorder %v1099, 1
  %vm1116 = vcmp.eq.s32.totalorder %v1100, 1
  %vm1117 = vcmp.eq.s32.totalorder %v1101, 1
  %vm1118 = vcmp.eq.s32.totalorder %v1102, 1
  %vm1119 = vcmp.eq.s32.totalorder %v1103, 1
  %v1120 = vsel %vm1104, %v910, 0.0
  %v1121 = vsel %vm1105, %v913, 0.0
  %v1122 = vsel %vm1106, %v918, 0.0
  %v1123 = vsel %vm1107, %v921, 0.0
  %v1124 = vsel %vm1108, %v926, 0.0
  %v1125 = vsel %vm1109, %v929, 0.0
  %v1126 = vsel %vm1110, %v934, 0.0
  %v1127 = vsel %vm1111, %v937, 0.0
  %v1128 = vsel %vm1112, %v942, 0.0
  %v1129 = vsel %vm1113, %v945, 0.0
  %v1130 = vsel %vm1114, %v950, 0.0
  %v1131 = vsel %vm1115, %v953, 0.0
  %v1132 = vsel %vm1116, %v958, 0.0
  %v1133 = vsel %vm1117, %v961, 0.0
  %v1134 = vsel %vm1118, %v966, 0.0
  %v1135 = vsel %vm1119, %v969, 0.0
  %v1136 = vadd.f32 %v1120, %v1121
  %v1137 = vadd.f32 %v1136, %v1122
  %v1138 = vadd.f32 %v1137, %v1123
  %v1139 = vadd.f32 %v1138, %v1124
  %v1140 = vadd.f32 %v1139, %v1125
  %v1141 = vadd.f32 %v1140, %v1126
  %v1142 = vadd.f32 %v1141, %v1127
  %v1143 = vadd.f32 %v1142, %v1128
  %v1144 = vadd.f32 %v1143, %v1129
  %v1145 = vadd.f32 %v1144, %v1130
  %v1146 = vadd.f32 %v1145, %v1131
  %v1147 = vadd.f32 %v1146, %v1132
  %v1148 = vadd.f32 %v1147, %v1133
  %v1149 = vadd.f32 %v1148, %v1134
  %v1150 = vadd.f32 %v1149, %v1135
  %v1151 = vrot.slane %v1150, 4
  %v1152 = vadd.f32 %v1150, %v1151
  %v1153 = vrot.slane %v1152, 2
  %v1154 = vadd.f32 %v1152, %v1153
  %v1155 = vrot.slane %v1154, 1
  %v1156 = vadd.f32 %v1154, %v1155
  %v1157 = vmul.f32 %v1120, %v1120
  %v1158 = vmul.f32 %v1121, %v1121
  %v1159 = vmul.f32 %v1122, %v1122
  %v1160 = vmul.f32 %v1123, %v1123
  %v1161 = vmul.f32 %v1124, %v1124
  %v1162 = vmul.f32 %v1125, %v1125
  %v1163 = vmul.f32 %v1126, %v1126
  %v1164 = vmul.f32 %v1127, %v1127
  %v1165 = vmul.f32 %v1128, %v1128
  %v1166 = vmul.f32 %v1129, %v1129
  %v1167 = vmul.f32 %v1130, %v1130
  %v1168 = vmul.f32 %v1131, %v1131
  %v1169 = vmul.f32 %v1132, %v1132
  %v1170 = vmul.f32 %v1133, %v1133
  %v1171 = vmul.f32 %v1134, %v1134
  %v1172 = vmul.f32 %v1135, %v1135
  %v1173 = vadd.f32 %v1157, %v1158
  %v1174 = vadd.f32 %v1173, %v1159
  %v1175 = vadd.f32 %v1174, %v1160
  %v1176 = vadd.f32 %v1175, %v1161
  %v1177 = vadd.f32 %v1176, %v1162
  %v1178 = vadd.f32 %v1177, %v1163
  %v1179 = vadd.f32 %v1178, %v1164
  %v1180 = vadd.f32 %v1179, %v1165
  %v1181 = vadd.f32 %v1180, %v1166
  %v1182 = vadd.f32 %v1181, %v1167
  %v1183 = vadd.f32 %v1182, %v1168
  %v1184 = vadd.f32 %v1183, %v1169
  %v1185 = vadd.f32 %v1184, %v1170
  %v1186 = vadd.f32 %v1185, %v1171
  %v1187 = vadd.f32 %v1186, %v1172
  %v1188 = vrot.slane %v1187, 4
  %v1189 = vadd.f32 %v1187, %v1188
  %v1190 = vrot.slane %v1189, 2
  %v1191 = vadd.f32 %v1189, %v1190
  %v1192 = vrot.slane %v1191, 1
  %v1193 = vadd.f32 %v1191, %v1192
  %vm1194 = vcmask 1040384
  %v1195 = vsel %vm1194, %v1156, %v1193
  %vm1196 = vcmask 1041408
  %v1197 = vsel %vm1196, %v1195, 0.0
  %1198 = vst [vmem:[%s6] sm:$0xff] %v1197
  // Predicated region
  $region22: #{unet_generator_forward.13} parent=0 // pred_check
    _
  $region23: #{unet_generator_forward.13} parent=0 // pred_check_branch
    %1200 = sbr.rel (0) target = $region25
  $region24: #{unet_generator_forward.13} parent=0 // pred_region
    _
  $region25: #{unet_generator_forward.13} parent=0 // pred_fallthru
    _
  // Predicated region
  $region26: #{unet_generator_forward.13} parent=0 // pred_check
    _
  $region27: #{unet_generator_forward.13} parent=0 // pred_check_branch
    %1202 = sbr.rel (0) target = $region29
  $region28: #{unet_generator_forward.13} parent=0 // pred_region
    _
  $region29: #{unet_generator_forward.13} parent=0 // pred_fallthru
    _
  // Predicated region
  $region30: #{unet_generator_forward.13} parent=0 // pred_check
    _
  $region31: #{unet_generator_forward.13} parent=0 // pred_check_branch
    %1204 = sbr.rel (0) target = $region33
  $region32: #{unet_generator_forward.13} parent=0 // pred_region
    _
  $region33: #{unet_generator_forward.13} parent=0 // pred_fallthru
    _
  // Predicated region
  $region34: #{unet_generator_forward.13} parent=0 // pred_check
    _
  $region35: #{unet_generator_forward.13} parent=0 // pred_check_branch
    %1206 = sbr.rel (0) target = $region37
  $region36: #{unet_generator_forward.13} parent=0 // pred_region
    _
  $region37: #{unet_generator_forward.13} parent=0 // pred_fallthru
    _

// kernel: unet_generator_forward.14
$region0: #{unet_generator_forward.14}
  #allocation0 [shape = 'u32[]', space=smem, size = 0x4, offset = 0x4, fixed_abs, tag = 'smem constant byte address 0x4 - core index']
  #allocation1 [shape = 'u32[144,128]{1,0:T(1,128)}', space=vmem, size = 0x12000, scoped, tag = 'internal scratch']
  %s0 = inlined_call_operand.vmem [shape: bf16[128,1024], index: 0, kind: input, shape index: {}]
  %s1 = inlined_call_operand.vmem [shape: bf16[1024,128], index: 1, kind: input, shape index: {}]
  %s2 = inlined_call_operand.vmem [shape: f32[1,128], index: 2, kind: input, shape index: {}]
  %s3 = inlined_call_operand.vmem [shape: f32[1,1024], index: 3, kind: input, shape index: {}]
  %s4 = inlined_call_operand.vmem [shape: f32[1,1024], index: 4, kind: input, shape index: {}]
  %s5 = inlined_call_operand.vmem [shape: bf16[128,128], index: 5, kind: output, shape index: {}]
  %s6 = sld [smem:[#allocation0]]
  $region30: #{unet_generator_forward.14} parent=0
    _
  %s8 = ssub.s32 1, %s6
  %s9 = scalar_select 0, %s8, %s6
  // Predicated region
  $region2: #{unet_generator_forward.14} parent=0 // pred_check
    _
  $region3: #{unet_generator_forward.14} parent=0 // pred_check_branch
    %11 = sbr.rel (0) target = $region5
  $region4: #{unet_generator_forward.14} parent=0 // pred_region
    _
  $region5: #{unet_generator_forward.14} parent=0 // pred_fallthru
    _
  // Predicated region
  $region6: #{unet_generator_forward.14} parent=0 // pred_check
    _
  $region7: #{unet_generator_forward.14} parent=0 // pred_check_branch
    %13 = sbr.rel (0) target = $region9
  $region8: #{unet_generator_forward.14} parent=0 // pred_region
    _
  $region9: #{unet_generator_forward.14} parent=0 // pred_fallthru
    _
  // Predicated region
  $region10: #{unet_generator_forward.14} parent=0 // pred_check
    _
  $region11: #{unet_generator_forward.14} parent=0 // pred_check_branch
    %15 = sbr.rel (0) target = $region13
  $region12: #{unet_generator_forward.14} parent=0 // pred_region
    _
  $region13: #{unet_generator_forward.14} parent=0 // pred_fallthru
    _
  // Predicated region
  $region14: #{unet_generator_forward.14} parent=0 // pred_check
    _
  $region15: #{unet_generator_forward.14} parent=0 // pred_check_branch
    %17 = sbr.rel (0) target = $region17
  $region16: #{unet_generator_forward.14} parent=0 // pred_region
    _
  $region17: #{unet_generator_forward.14} parent=0 // pred_fallthru
    _
  // Predicated region
  $region18: #{unet_generator_forward.14} parent=0 // pred_check
    _
  $region19: #{unet_generator_forward.14} parent=0 // pred_check_branch
    %19 = sbr.rel (0) target = $region21
  $region20: #{unet_generator_forward.14} parent=0 // pred_region
    _
  $region21: #{unet_generator_forward.14} parent=0 // pred_fallthru
    _
  %v21 = vld [vmem:[%s0] sm:$0xff]
  %v22 = vld [vmem:[%s0 + $0x8] sm:$0xff]
  %v23 = vld [vmem:[%s0 + $0x10] sm:$0xff]
  %v24 = vld [vmem:[%s0 + $0x18] sm:$0xff]
  %v25 = vld [vmem:[%s0 + $0x20] sm:$0xff]
  %v26 = vld [vmem:[%s0 + $0x28] sm:$0xff]
  %v27 = vld [vmem:[%s0 + $0x30] sm:$0xff]
  %v28 = vld [vmem:[%s0 + $0x38] sm:$0xff]
  %v29 = vld [vmem:[%s0 + $0x40] sm:$0xff]
  %v30 = vld [vmem:[%s0 + $0x48] sm:$0xff]
  %v31 = vld [vmem:[%s0 + $0x50] sm:$0xff]
  %v32 = vld [vmem:[%s0 + $0x58] sm:$0xff]
  %v33 = vld [vmem:[%s0 + $0x60] sm:$0xff]
  %v34 = vld [vmem:[%s0 + $0x68] sm:$0xff]
  %v35 = vld [vmem:[%s0 + $0x70] sm:$0xff]
  %v36 = vld [vmem:[%s0 + $0x78] sm:$0xff]
  %v37 = vld [vmem:[%s0 + $0x80] sm:$0xff]
  %v38 = vld [vmem:[%s0 + $0x88] sm:$0xff]
  %v39 = vld [vmem:[%s0 + $0x90] sm:$0xff]
  %v40 = vld [vmem:[%s0 + $0x98] sm:$0xff]
  %v41 = vld [vmem:[%s0 + $0xa0] sm:$0xff]
  %v42 = vld [vmem:[%s0 + $0xa8] sm:$0xff]
  %v43 = vld [vmem:[%s0 + $0xb0] sm:$0xff]
  %v44 = vld [vmem:[%s0 + $0xb8] sm:$0xff]
  %v45 = vld [vmem:[%s0 + $0xc0] sm:$0xff]
  %v46 = vld [vmem:[%s0 + $0xc8] sm:$0xff]
  %v47 = vld [vmem:[%s0 + $0xd0] sm:$0xff]
  %v48 = vld [vmem:[%s0 + $0xd8] sm:$0xff]
  %v49 = vld [vmem:[%s0 + $0xe0] sm:$0xff]
  %v50 = vld [vmem:[%s0 + $0xe8] sm:$0xff]
  %v51 = vld [vmem:[%s0 + $0xf0] sm:$0xff]
  %v52 = vld [vmem:[%s0 + $0xf8] sm:$0xff]
  %v53 = vld [vmem:[%s0 + $0x100] sm:$0xff]
  %v54 = vld [vmem:[%s0 + $0x108] sm:$0xff]
  %v55 = vld [vmem:[%s0 + $0x110] sm:$0xff]
  %v56 = vld [vmem:[%s0 + $0x118] sm:$0xff]
  %v57 = vld [vmem:[%s0 + $0x120] sm:$0xff]
  %v58 = vld [vmem:[%s0 + $0x128] sm:$0xff]
  %v59 = vld [vmem:[%s0 + $0x130] sm:$0xff]
  %v60 = vld [vmem:[%s0 + $0x138] sm:$0xff]
  %v61 = vld [vmem:[%s0 + $0x140] sm:$0xff]
  %v62 = vld [vmem:[%s0 + $0x148] sm:$0xff]
  %v63 = vld [vmem:[%s0 + $0x150] sm:$0xff]
  %v64 = vld [vmem:[%s0 + $0x158] sm:$0xff]
  %v65 = vld [vmem:[%s0 + $0x160] sm:$0xff]
  %v66 = vld [vmem:[%s0 + $0x168] sm:$0xff]
  %v67 = vld [vmem:[%s0 + $0x170] sm:$0xff]
  %v68 = vld [vmem:[%s0 + $0x178] sm:$0xff]
  %v69 = vld [vmem:[%s0 + $0x180] sm:$0xff]
  %v70 = vld [vmem:[%s0 + $0x188] sm:$0xff]
  %v71 = vld [vmem:[%s0 + $0x190] sm:$0xff]
  %v72 = vld [vmem:[%s0 + $0x198] sm:$0xff]
  %v73 = vld [vmem:[%s0 + $0x1a0] sm:$0xff]
  %v74 = vld [vmem:[%s0 + $0x1a8] sm:$0xff]
  %v75 = vld [vmem:[%s0 + $0x1b0] sm:$0xff]
  %v76 = vld [vmem:[%s0 + $0x1b8] sm:$0xff]
  %v77 = vld [vmem:[%s0 + $0x1c0] sm:$0xff]
  %v78 = vld [vmem:[%s0 + $0x1c8] sm:$0xff]
  %v79 = vld [vmem:[%s0 + $0x1d0] sm:$0xff]
  %v80 = vld [vmem:[%s0 + $0x1d8] sm:$0xff]
  %v81 = vld [vmem:[%s0 + $0x1e0] sm:$0xff]
  %v82 = vld [vmem:[%s0 + $0x1e8] sm:$0xff]
  %v83 = vld [vmem:[%s0 + $0x1f0] sm:$0xff]
  %v84 = vld [vmem:[%s0 + $0x1f8] sm:$0xff]
  %v85 = vunpack.c.l.bf16 %v21
  %v86 = vunpack.c.h.bf16 %v21
  %v87 = vunpack.c.l.bf16 %v22
  %v88 = vunpack.c.h.bf16 %v22
  %v89 = vunpack.c.l.bf16 %v23
  %v90 = vunpack.c.h.bf16 %v23
  %v91 = vunpack.c.l.bf16 %v24
  %v92 = vunpack.c.h.bf16 %v24
  %v93 = vunpack.c.l.bf16 %v25
  %v94 = vunpack.c.h.bf16 %v25
  %v95 = vunpack.c.l.bf16 %v26
  %v96 = vunpack.c.h.bf16 %v26
  %v97 = vunpack.c.l.bf16 %v27
  %v98 = vunpack.c.h.bf16 %v27
  %v99 = vunpack.c.l.bf16 %v28
  %v100 = vunpack.c.h.bf16 %v28
  %v101 = vunpack.c.l.bf16 %v29
  %v102 = vunpack.c.h.bf16 %v29
  %v103 = vunpack.c.l.bf16 %v30
  %v104 = vunpack.c.h.bf16 %v30
  %v105 = vunpack.c.l.bf16 %v31
  %v106 = vunpack.c.h.bf16 %v31
  %v107 = vunpack.c.l.bf16 %v32
  %v108 = vunpack.c.h.bf16 %v32
  %v109 = vunpack.c.l.bf16 %v33
  %v110 = vunpack.c.h.bf16 %v33
  %v111 = vunpack.c.l.bf16 %v34
  %v112 = vunpack.c.h.bf16 %v34
  %v113 = vunpack.c.l.bf16 %v35
  %v114 = vunpack.c.h.bf16 %v35
  %v115 = vunpack.c.l.bf16 %v36
  %v116 = vunpack.c.h.bf16 %v36
  %v117 = vunpack.c.l.bf16 %v37
  %v118 = vunpack.c.h.bf16 %v37
  %v119 = vunpack.c.l.bf16 %v38
  %v120 = vunpack.c.h.bf16 %v38
  %v121 = vunpack.c.l.bf16 %v39
  %v122 = vunpack.c.h.bf16 %v39
  %v123 = vunpack.c.l.bf16 %v40
  %v124 = vunpack.c.h.bf16 %v40
  %v125 = vunpack.c.l.bf16 %v41
  %v126 = vunpack.c.h.bf16 %v41
  %v127 = vunpack.c.l.bf16 %v42
  %v128 = vunpack.c.h.bf16 %v42
  %v129 = vunpack.c.l.bf16 %v43
  %v130 = vunpack.c.h.bf16 %v43
  %v131 = vunpack.c.l.bf16 %v44
  %v132 = vunpack.c.h.bf16 %v44
  %v133 = vunpack.c.l.bf16 %v45
  %v134 = vunpack.c.h.bf16 %v45
  %v135 = vunpack.c.l.bf16 %v46
  %v136 = vunpack.c.h.bf16 %v46
  %v137 = vunpack.c.l.bf16 %v47
  %v138 = vunpack.c.h.bf16 %v47
  %v139 = vunpack.c.l.bf16 %v48
  %v140 = vunpack.c.h.bf16 %v48
  %v141 = vunpack.c.l.bf16 %v49
  %v142 = vunpack.c.h.bf16 %v49
  %v143 = vunpack.c.l.bf16 %v50
  %v144 = vunpack.c.h.bf16 %v50
  %v145 = vunpack.c.l.bf16 %v51
  %v146 = vunpack.c.h.bf16 %v51
  %v147 = vunpack.c.l.bf16 %v52
  %v148 = vunpack.c.h.bf16 %v52
  %v149 = vunpack.c.l.bf16 %v53
  %v150 = vunpack.c.h.bf16 %v53
  %v151 = vunpack.c.l.bf16 %v54
  %v152 = vunpack.c.h.bf16 %v54
  %v153 = vunpack.c.l.bf16 %v55
  %v154 = vunpack.c.h.bf16 %v55
  %v155 = vunpack.c.l.bf16 %v56
  %v156 = vunpack.c.h.bf16 %v56
  %v157 = vunpack.c.l.bf16 %v57
  %v158 = vunpack.c.h.bf16 %v57
  %v159 = vunpack.c.l.bf16 %v58
  %v160 = vunpack.c.h.bf16 %v58
  %v161 = vunpack.c.l.bf16 %v59
  %v162 = vunpack.c.h.bf16 %v59
  %v163 = vunpack.c.l.bf16 %v60
  %v164 = vunpack.c.h.bf16 %v60
  %v165 = vunpack.c.l.bf16 %v61
  %v166 = vunpack.c.h.bf16 %v61
  %v167 = vunpack.c.l.bf16 %v62
  %v168 = vunpack.c.h.bf16 %v62
  %v169 = vunpack.c.l.bf16 %v63
  %v170 = vunpack.c.h.bf16 %v63
  %v171 = vunpack.c.l.bf16 %v64
  %v172 = vunpack.c.h.bf16 %v64
  %v173 = vunpack.c.l.bf16 %v65
  %v174 = vunpack.c.h.bf16 %v65
  %v175 = vunpack.c.l.bf16 %v66
  %v176 = vunpack.c.h.bf16 %v66
  %v177 = vunpack.c.l.bf16 %v67
  %v178 = vunpack.c.h.bf16 %v67
  %v179 = vunpack.c.l.bf16 %v68
  %v180 = vunpack.c.h.bf16 %v68
  %v181 = vunpack.c.l.bf16 %v69
  %v182 = vunpack.c.h.bf16 %v69
  %v183 = vunpack.c.l.bf16 %v70
  %v184 = vunpack.c.h.bf16 %v70
  %v185 = vunpack.c.l.bf16 %v71
  %v186 = vunpack.c.h.bf16 %v71
  %v187 = vunpack.c.l.bf16 %v72
  %v188 = vunpack.c.h.bf16 %v72
  %v189 = vunpack.c.l.bf16 %v73
  %v190 = vunpack.c.h.bf16 %v73
  %v191 = vunpack.c.l.bf16 %v74
  %v192 = vunpack.c.h.bf16 %v74
  %v193 = vunpack.c.l.bf16 %v75
  %v194 = vunpack.c.h.bf16 %v75
  %v195 = vunpack.c.l.bf16 %v76
  %v196 = vunpack.c.h.bf16 %v76
  %v197 = vunpack.c.l.bf16 %v77
  %v198 = vunpack.c.h.bf16 %v77
  %v199 = vunpack.c.l.bf16 %v78
  %v200 = vunpack.c.h.bf16 %v78
  %v201 = vunpack.c.l.bf16 %v79
  %v202 = vunpack.c.h.bf16 %v79
  %v203 = vunpack.c.l.bf16 %v80
  %v204 = vunpack.c.h.bf16 %v80
  %v205 = vunpack.c.l.bf16 %v81
  %v206 = vunpack.c.h.bf16 %v81
  %v207 = vunpack.c.l.bf16 %v82
  %v208 = vunpack.c.h.bf16 %v82
  %v209 = vunpack.c.l.bf16 %v83
  %v210 = vunpack.c.h.bf16 %v83
  %v211 = vunpack.c.l.bf16 %v84
  %v212 = vunpack.c.h.bf16 %v84
  %v213 = vld [vmem:[%s3] sm:$0xff]
  %v215 = vlaneseq
  %v216 = vshrl.u32 %v215, 7
  %v217 = vsub.s32 0, %v216
  %v218 = vrot.slane %v213, %v217
  %v219 = vlaneseq
  %v220 = vshrl.u32 %v219, 7
  %v221 = vsub.s32 1, %v220
  %v222 = vrot.slane %v213, %v221
  %v223 = vlaneseq
  %v224 = vshrl.u32 %v223, 7
  %v225 = vsub.s32 2, %v224
  %v226 = vrot.slane %v213, %v225
  %v227 = vlaneseq
  %v228 = vshrl.u32 %v227, 7
  %v229 = vsub.s32 3, %v228
  %v230 = vrot.slane %v213, %v229
  %v231 = vlaneseq
  %v232 = vshrl.u32 %v231, 7
  %v233 = vsub.s32 4, %v232
  %v234 = vrot.slane %v213, %v233
  %v235 = vlaneseq
  %v236 = vshrl.u32 %v235, 7
  %v237 = vsub.s32 5, %v236
  %v238 = vrot.slane %v213, %v237
  %v239 = vlaneseq
  %v240 = vshrl.u32 %v239, 7
  %v241 = vsub.s32 6, %v240
  %v242 = vrot.slane %v213, %v241
  %v243 = vlaneseq
  %v244 = vshrl.u32 %v243, 7
  %v245 = vsub.s32 7, %v244
  %v246 = vrot.slane %v213, %v245
  %v255 = vmul.f32 %v85, %v218
  %v256 = vmul.f32 %v86, %v222
  %v257 = vmul.f32 %v87, %v226
  %v258 = vmul.f32 %v88, %v230
  %v259 = vmul.f32 %v89, %v234
  %v260 = vmul.f32 %v90, %v238
  %v261 = vmul.f32 %v91, %v242
  %v262 = vmul.f32 %v92, %v246
  %v263 = vmul.f32 %v93, %v218
  %v264 = vmul.f32 %v94, %v222
  %v265 = vmul.f32 %v95, %v226
  %v266 = vmul.f32 %v96, %v230
  %v267 = vmul.f32 %v97, %v234
  %v268 = vmul.f32 %v98, %v238
  %v269 = vmul.f32 %v99, %v242
  %v270 = vmul.f32 %v100, %v246
  %v271 = vmul.f32 %v101, %v218
  %v272 = vmul.f32 %v102, %v222
  %v273 = vmul.f32 %v103, %v226
  %v274 = vmul.f32 %v104, %v230
  %v275 = vmul.f32 %v105, %v234
  %v276 = vmul.f32 %v106, %v238
  %v277 = vmul.f32 %v107, %v242
  %v278 = vmul.f32 %v108, %v246
  %v279 = vmul.f32 %v109, %v218
  %v280 = vmul.f32 %v110, %v222
  %v281 = vmul.f32 %v111, %v226
  %v282 = vmul.f32 %v112, %v230
  %v283 = vmul.f32 %v113, %v234
  %v284 = vmul.f32 %v114, %v238
  %v285 = vmul.f32 %v115, %v242
  %v286 = vmul.f32 %v116, %v246
  %v287 = vmul.f32 %v117, %v218
  %v288 = vmul.f32 %v118, %v222
  %v289 = vmul.f32 %v119, %v226
  %v290 = vmul.f32 %v120, %v230
  %v291 = vmul.f32 %v121, %v234
  %v292 = vmul.f32 %v122, %v238
  %v293 = vmul.f32 %v123, %v242
  %v294 = vmul.f32 %v124, %v246
  %v295 = vmul.f32 %v125, %v218
  %v296 = vmul.f32 %v126, %v222
  %v297 = vmul.f32 %v127, %v226
  %v298 = vmul.f32 %v128, %v230
  %v299 = vmul.f32 %v129, %v234
  %v300 = vmul.f32 %v130, %v238
  %v301 = vmul.f32 %v131, %v242
  %v302 = vmul.f32 %v132, %v246
  %v303 = vmul.f32 %v133, %v218
  %v304 = vmul.f32 %v134, %v222
  %v305 = vmul.f32 %v135, %v226
  %v306 = vmul.f32 %v136, %v230
  %v307 = vmul.f32 %v137, %v234
  %v308 = vmul.f32 %v138, %v238
  %v309 = vmul.f32 %v139, %v242
  %v310 = vmul.f32 %v140, %v246
  %v311 = vmul.f32 %v141, %v218
  %v312 = vmul.f32 %v142, %v222
  %v313 = vmul.f32 %v143, %v226
  %v314 = vmul.f32 %v144, %v230
  %v315 = vmul.f32 %v145, %v234
  %v316 = vmul.f32 %v146, %v238
  %v317 = vmul.f32 %v147, %v242
  %v318 = vmul.f32 %v148, %v246
  %v319 = vmul.f32 %v149, %v218
  %v320 = vmul.f32 %v150, %v222
  %v321 = vmul.f32 %v151, %v226
  %v322 = vmul.f32 %v152, %v230
  %v323 = vmul.f32 %v153, %v234
  %v324 = vmul.f32 %v154, %v238
  %v325 = vmul.f32 %v155, %v242
  %v326 = vmul.f32 %v156, %v246
  %v327 = vmul.f32 %v157, %v218
  %v328 = vmul.f32 %v158, %v222
  %v329 = vmul.f32 %v159, %v226
  %v330 = vmul.f32 %v160, %v230
  %v331 = vmul.f32 %v161, %v234
  %v332 = vmul.f32 %v162, %v238
  %v333 = vmul.f32 %v163, %v242
  %v334 = vmul.f32 %v164, %v246
  %v335 = vmul.f32 %v165, %v218
  %v336 = vmul.f32 %v166, %v222
  %v337 = vmul.f32 %v167, %v226
  %v338 = vmul.f32 %v168, %v230
  %v339 = vmul.f32 %v169, %v234
  %v340 = vmul.f32 %v170, %v238
  %v341 = vmul.f32 %v171, %v242
  %v342 = vmul.f32 %v172, %v246
  %v343 = vmul.f32 %v173, %v218
  %v344 = vmul.f32 %v174, %v222
  %v345 = vmul.f32 %v175, %v226
  %v346 = vmul.f32 %v176, %v230
  %v347 = vmul.f32 %v177, %v234
  %v348 = vmul.f32 %v178, %v238
  %v349 = vmul.f32 %v179, %v242
  %v350 = vmul.f32 %v180, %v246
  %v351 = vmul.f32 %v181, %v218
  %v352 = vmul.f32 %v182, %v222
  %v353 = vmul.f32 %v183, %v226
  %v354 = vmul.f32 %v184, %v230
  %v355 = vmul.f32 %v185, %v234
  %v356 = vmul.f32 %v186, %v238
  %v357 = vmul.f32 %v187, %v242
  %v358 = vmul.f32 %v188, %v246
  %v359 = vmul.f32 %v189, %v218
  %v360 = vmul.f32 %v190, %v222
  %v361 = vmul.f32 %v191, %v226
  %v362 = vmul.f32 %v192, %v230
  %v363 = vmul.f32 %v193, %v234
  %v364 = vmul.f32 %v194, %v238
  %v365 = vmul.f32 %v195, %v242
  %v366 = vmul.f32 %v196, %v246
  %v367 = vmul.f32 %v197, %v218
  %v368 = vmul.f32 %v198, %v222
  %v369 = vmul.f32 %v199, %v226
  %v370 = vmul.f32 %v200, %v230
  %v371 = vmul.f32 %v201, %v234
  %v372 = vmul.f32 %v202, %v238
  %v373 = vmul.f32 %v203, %v242
  %v374 = vmul.f32 %v204, %v246
  %v375 = vmul.f32 %v205, %v218
  %v376 = vmul.f32 %v206, %v222
  %v377 = vmul.f32 %v207, %v226
  %v378 = vmul.f32 %v208, %v230
  %v379 = vmul.f32 %v209, %v234
  %v380 = vmul.f32 %v210, %v238
  %v381 = vmul.f32 %v211, %v242
  %v382 = vmul.f32 %v212, %v246
  %v383 = vld [vmem:[%s4] sm:$0xff]
  %v385 = vlaneseq
  %v386 = vshrl.u32 %v385, 7
  %v387 = vsub.s32 0, %v386
  %v388 = vrot.slane %v383, %v387
  %v389 = vlaneseq
  %v390 = vshrl.u32 %v389, 7
  %v391 = vsub.s32 1, %v390
  %v392 = vrot.slane %v383, %v391
  %v393 = vlaneseq
  %v394 = vshrl.u32 %v393, 7
  %v395 = vsub.s32 2, %v394
  %v396 = vrot.slane %v383, %v395
  %v397 = vlaneseq
  %v398 = vshrl.u32 %v397, 7
  %v399 = vsub.s32 3, %v398
  %v400 = vrot.slane %v383, %v399
  %v401 = vlaneseq
  %v402 = vshrl.u32 %v401, 7
  %v403 = vsub.s32 4, %v402
  %v404 = vrot.slane %v383, %v403
  %v405 = vlaneseq
  %v406 = vshrl.u32 %v405, 7
  %v407 = vsub.s32 5, %v406
  %v408 = vrot.slane %v383, %v407
  %v409 = vlaneseq
  %v410 = vshrl.u32 %v409, 7
  %v411 = vsub.s32 6, %v410
  %v412 = vrot.slane %v383, %v411
  %v413 = vlaneseq
  %v414 = vshrl.u32 %v413, 7
  %v415 = vsub.s32 7, %v414
  %v416 = vrot.slane %v383, %v415
  %v425 = vadd.f32 %v255, %v388
  %v426 = vadd.f32 %v256, %v392
  %v427 = vadd.f32 %v257, %v396
  %v428 = vadd.f32 %v258, %v400
  %v429 = vadd.f32 %v259, %v404
  %v430 = vadd.f32 %v260, %v408
  %v431 = vadd.f32 %v261, %v412
  %v432 = vadd.f32 %v262, %v416
  %v433 = vadd.f32 %v263, %v388
  %v434 = vadd.f32 %v264, %v392
  %v435 = vadd.f32 %v265, %v396
  %v436 = vadd.f32 %v266, %v400
  %v437 = vadd.f32 %v267, %v404
  %v438 = vadd.f32 %v268, %v408
  %v439 = vadd.f32 %v269, %v412
  %v440 = vadd.f32 %v270, %v416
  %v441 = vadd.f32 %v271, %v388
  %v442 = vadd.f32 %v272, %v392
  %v443 = vadd.f32 %v273, %v396
  %v444 = vadd.f32 %v274, %v400
  %v445 = vadd.f32 %v275, %v404
  %v446 = vadd.f32 %v276, %v408
  %v447 = vadd.f32 %v277, %v412
  %v448 = vadd.f32 %v278, %v416
  %v449 = vadd.f32 %v279, %v388
  %v450 = vadd.f32 %v280, %v392
  %v451 = vadd.f32 %v281, %v396
  %v452 = vadd.f32 %v282, %v400
  %v453 = vadd.f32 %v283, %v404
  %v454 = vadd.f32 %v284, %v408
  %v455 = vadd.f32 %v285, %v412
  %v456 = vadd.f32 %v286, %v416
  %v457 = vadd.f32 %v287, %v388
  %v458 = vadd.f32 %v288, %v392
  %v459 = vadd.f32 %v289, %v396
  %v460 = vadd.f32 %v290, %v400
  %v461 = vadd.f32 %v291, %v404
  %v462 = vadd.f32 %v292, %v408
  %v463 = vadd.f32 %v293, %v412
  %v464 = vadd.f32 %v294, %v416
  %v465 = vadd.f32 %v295, %v388
  %v466 = vadd.f32 %v296, %v392
  %v467 = vadd.f32 %v297, %v396
  %v468 = vadd.f32 %v298, %v400
  %v469 = vadd.f32 %v299, %v404
  %v470 = vadd.f32 %v300, %v408
  %v471 = vadd.f32 %v301, %v412
  %v472 = vadd.f32 %v302, %v416
  %v473 = vadd.f32 %v303, %v388
  %v474 = vadd.f32 %v304, %v392
  %v475 = vadd.f32 %v305, %v396
  %v476 = vadd.f32 %v306, %v400
  %v477 = vadd.f32 %v307, %v404
  %v478 = vadd.f32 %v308, %v408
  %v479 = vadd.f32 %v309, %v412
  %v480 = vadd.f32 %v310, %v416
  %v481 = vadd.f32 %v311, %v388
  %v482 = vadd.f32 %v312, %v392
  %v483 = vadd.f32 %v313, %v396
  %v484 = vadd.f32 %v314, %v400
  %v485 = vadd.f32 %v315, %v404
  %v486 = vadd.f32 %v316, %v408
  %v487 = vadd.f32 %v317, %v412
  %v488 = vadd.f32 %v318, %v416
  %v489 = vadd.f32 %v319, %v388
  %v490 = vadd.f32 %v320, %v392
  %v491 = vadd.f32 %v321, %v396
  %v492 = vadd.f32 %v322, %v400
  %v493 = vadd.f32 %v323, %v404
  %v494 = vadd.f32 %v324, %v408
  %v495 = vadd.f32 %v325, %v412
  %v496 = vadd.f32 %v326, %v416
  %v497 = vadd.f32 %v327, %v388
  %v498 = vadd.f32 %v328, %v392
  %v499 = vadd.f32 %v329, %v396
  %v500 = vadd.f32 %v330, %v400
  %v501 = vadd.f32 %v331, %v404
  %v502 = vadd.f32 %v332, %v408
  %v503 = vadd.f32 %v333, %v412
  %v504 = vadd.f32 %v334, %v416
  %v505 = vadd.f32 %v335, %v388
  %v506 = vadd.f32 %v336, %v392
  %v507 = vadd.f32 %v337, %v396
  %v508 = vadd.f32 %v338, %v400
  %v509 = vadd.f32 %v339, %v404
  %v510 = vadd.f32 %v340, %v408
  %v511 = vadd.f32 %v341, %v412
  %v512 = vadd.f32 %v342, %v416
  %v513 = vadd.f32 %v343, %v388
  %v514 = vadd.f32 %v344, %v392
  %v515 = vadd.f32 %v345, %v396
  %v516 = vadd.f32 %v346, %v400
  %v517 = vadd.f32 %v347, %v404
  %v518 = vadd.f32 %v348, %v408
  %v519 = vadd.f32 %v349, %v412
  %v520 = vadd.f32 %v350, %v416
  %v521 = vadd.f32 %v351, %v388
  %v522 = vadd.f32 %v352, %v392
  %v523 = vadd.f32 %v353, %v396
  %v524 = vadd.f32 %v354, %v400
  %v525 = vadd.f32 %v355, %v404
  %v526 = vadd.f32 %v356, %v408
  %v527 = vadd.f32 %v357, %v412
  %v528 = vadd.f32 %v358, %v416
  %v529 = vadd.f32 %v359, %v388
  %v530 = vadd.f32 %v360, %v392
  %v531 = vadd.f32 %v361, %v396
  %v532 = vadd.f32 %v362, %v400
  %v533 = vadd.f32 %v363, %v404
  %v534 = vadd.f32 %v364, %v408
  %v535 = vadd.f32 %v365, %v412
  %v536 = vadd.f32 %v366, %v416
  %v537 = vadd.f32 %v367, %v388
  %v538 = vadd.f32 %v368, %v392
  %v539 = vadd.f32 %v369, %v396
  %v540 = vadd.f32 %v370, %v400
  %v541 = vadd.f32 %v371, %v404
  %v542 = vadd.f32 %v372, %v408
  %v543 = vadd.f32 %v373, %v412
  %v544 = vadd.f32 %v374, %v416
  %v545 = vadd.f32 %v375, %v388
  %v546 = vadd.f32 %v376, %v392
  %v547 = vadd.f32 %v377, %v396
  %v548 = vadd.f32 %v378, %v400
  %v549 = vadd.f32 %v379, %v404
  %v550 = vadd.f32 %v380, %v408
  %v551 = vadd.f32 %v381, %v412
  %v552 = vadd.f32 %v382, %v416
  %vm553 = vcmp.ge.f32.partialorder %v425, 0.0
  %vm554 = vcmp.ge.f32.partialorder %v426, 0.0
  %vm555 = vcmp.ge.f32.partialorder %v427, 0.0
  %vm556 = vcmp.ge.f32.partialorder %v428, 0.0
  %vm557 = vcmp.ge.f32.partialorder %v429, 0.0
  %vm558 = vcmp.ge.f32.partialorder %v430, 0.0
  %vm559 = vcmp.ge.f32.partialorder %v431, 0.0
  %vm560 = vcmp.ge.f32.partialorder %v432, 0.0
  %vm561 = vcmp.ge.f32.partialorder %v433, 0.0
  %vm562 = vcmp.ge.f32.partialorder %v434, 0.0
  %vm563 = vcmp.ge.f32.partialorder %v435, 0.0
  %vm564 = vcmp.ge.f32.partialorder %v436, 0.0
  %vm565 = vcmp.ge.f32.partialorder %v437, 0.0
  %vm566 = vcmp.ge.f32.partialorder %v438, 0.0
  %vm567 = vcmp.ge.f32.partialorder %v439, 0.0
  %vm568 = vcmp.ge.f32.partialorder %v440, 0.0
  %vm569 = vcmp.ge.f32.partialorder %v441, 0.0
  %vm570 = vcmp.ge.f32.partialorder %v442, 0.0
  %vm571 = vcmp.ge.f32.partialorder %v443, 0.0
  %vm572 = vcmp.ge.f32.partialorder %v444, 0.0
  %vm573 = vcmp.ge.f32.partialorder %v445, 0.0
  %vm574 = vcmp.ge.f32.partialorder %v446, 0.0
  %vm575 = vcmp.ge.f32.partialorder %v447, 0.0
  %vm576 = vcmp.ge.f32.partialorder %v448, 0.0
  %vm577 = vcmp.ge.f32.partialorder %v449, 0.0
  %vm578 = vcmp.ge.f32.partialorder %v450, 0.0
  %vm579 = vcmp.ge.f32.partialorder %v451, 0.0
  %vm580 = vcmp.ge.f32.partialorder %v452, 0.0
  %vm581 = vcmp.ge.f32.partialorder %v453, 0.0
  %vm582 = vcmp.ge.f32.partialorder %v454, 0.0
  %vm583 = vcmp.ge.f32.partialorder %v455, 0.0
  %vm584 = vcmp.ge.f32.partialorder %v456, 0.0
  %vm585 = vcmp.ge.f32.partialorder %v457, 0.0
  %vm586 = vcmp.ge.f32.partialorder %v458, 0.0
  %vm587 = vcmp.ge.f32.partialorder %v459, 0.0
  %vm588 = vcmp.ge.f32.partialorder %v460, 0.0
  %vm589 = vcmp.ge.f32.partialorder %v461, 0.0
  %vm590 = vcmp.ge.f32.partialorder %v462, 0.0
  %vm591 = vcmp.ge.f32.partialorder %v463, 0.0
  %vm592 = vcmp.ge.f32.partialorder %v464, 0.0
  %vm593 = vcmp.ge.f32.partialorder %v465, 0.0
  %vm594 = vcmp.ge.f32.partialorder %v466, 0.0
  %vm595 = vcmp.ge.f32.partialorder %v467, 0.0
  %vm596 = vcmp.ge.f32.partialorder %v468, 0.0
  %vm597 = vcmp.ge.f32.partialorder %v469, 0.0
  %vm598 = vcmp.ge.f32.partialorder %v470, 0.0
  %vm599 = vcmp.ge.f32.partialorder %v471, 0.0
  %vm600 = vcmp.ge.f32.partialorder %v472, 0.0
  %vm601 = vcmp.ge.f32.partialorder %v473, 0.0
  %vm602 = vcmp.ge.f32.partialorder %v474, 0.0
  %vm603 = vcmp.ge.f32.partialorder %v475, 0.0
  %vm604 = vcmp.ge.f32.partialorder %v476, 0.0
  %vm605 = vcmp.ge.f32.partialorder %v477, 0.0
  %vm606 = vcmp.ge.f32.partialorder %v478, 0.0
  %vm607 = vcmp.ge.f32.partialorder %v479, 0.0
  %vm608 = vcmp.ge.f32.partialorder %v480, 0.0
  %vm609 = vcmp.ge.f32.partialorder %v481, 0.0
  %vm610 = vcmp.ge.f32.partialorder %v482, 0.0
  %vm611 = vcmp.ge.f32.partialorder %v483, 0.0
  %vm612 = vcmp.ge.f32.partialorder %v484, 0.0
  %vm613 = vcmp.ge.f32.partialorder %v485, 0.0
  %vm614 = vcmp.ge.f32.partialorder %v486, 0.0
  %vm615 = vcmp.ge.f32.partialorder %v487, 0.0
  %vm616 = vcmp.ge.f32.partialorder %v488, 0.0
  %vm617 = vcmp.ge.f32.partialorder %v489, 0.0
  %vm618 = vcmp.ge.f32.partialorder %v490, 0.0
  %vm619 = vcmp.ge.f32.partialorder %v491, 0.0
  %vm620 = vcmp.ge.f32.partialorder %v492, 0.0
  %vm621 = vcmp.ge.f32.partialorder %v493, 0.0
  %vm622 = vcmp.ge.f32.partialorder %v494, 0.0
  %vm623 = vcmp.ge.f32.partialorder %v495, 0.0
  %vm624 = vcmp.ge.f32.partialorder %v496, 0.0
  %vm625 = vcmp.ge.f32.partialorder %v497, 0.0
  %vm626 = vcmp.ge.f32.partialorder %v498, 0.0
  %vm627 = vcmp.ge.f32.partialorder %v499, 0.0
  %vm628 = vcmp.ge.f32.partialorder %v500, 0.0
  %vm629 = vcmp.ge.f32.partialorder %v501, 0.0
  %vm630 = vcmp.ge.f32.partialorder %v502, 0.0
  %vm631 = vcmp.ge.f32.partialorder %v503, 0.0
  %vm632 = vcmp.ge.f32.partialorder %v504, 0.0
  %vm633 = vcmp.ge.f32.partialorder %v505, 0.0
  %vm634 = vcmp.ge.f32.partialorder %v506, 0.0
  %vm635 = vcmp.ge.f32.partialorder %v507, 0.0
  %vm636 = vcmp.ge.f32.partialorder %v508, 0.0
  %vm637 = vcmp.ge.f32.partialorder %v509, 0.0
  %vm638 = vcmp.ge.f32.partialorder %v510, 0.0
  %vm639 = vcmp.ge.f32.partialorder %v511, 0.0
  %vm640 = vcmp.ge.f32.partialorder %v512, 0.0
  %vm641 = vcmp.ge.f32.partialorder %v513, 0.0
  %vm642 = vcmp.ge.f32.partialorder %v514, 0.0
  %vm643 = vcmp.ge.f32.partialorder %v515, 0.0
  %vm644 = vcmp.ge.f32.partialorder %v516, 0.0
  %vm645 = vcmp.ge.f32.partialorder %v517, 0.0
  %vm646 = vcmp.ge.f32.partialorder %v518, 0.0
  %vm647 = vcmp.ge.f32.partialorder %v519, 0.0
  %vm648 = vcmp.ge.f32.partialorder %v520, 0.0
  %vm649 = vcmp.ge.f32.partialorder %v521, 0.0
  %vm650 = vcmp.ge.f32.partialorder %v522, 0.0
  %vm651 = vcmp.ge.f32.partialorder %v523, 0.0
  %vm652 = vcmp.ge.f32.partialorder %v524, 0.0
  %vm653 = vcmp.ge.f32.partialorder %v525, 0.0
  %vm654 = vcmp.ge.f32.partialorder %v526, 0.0
  %vm655 = vcmp.ge.f32.partialorder %v527, 0.0
  %vm656 = vcmp.ge.f32.partialorder %v528, 0.0
  %vm657 = vcmp.ge.f32.partialorder %v529, 0.0
  %vm658 = vcmp.ge.f32.partialorder %v530, 0.0
  %vm659 = vcmp.ge.f32.partialorder %v531, 0.0
  %vm660 = vcmp.ge.f32.partialorder %v532, 0.0
  %vm661 = vcmp.ge.f32.partialorder %v533, 0.0
  %vm662 = vcmp.ge.f32.partialorder %v534, 0.0
  %vm663 = vcmp.ge.f32.partialorder %v535, 0.0
  %vm664 = vcmp.ge.f32.partialorder %v536, 0.0
  %vm665 = vcmp.ge.f32.partialorder %v537, 0.0
  %vm666 = vcmp.ge.f32.partialorder %v538, 0.0
  %vm667 = vcmp.ge.f32.partialorder %v539, 0.0
  %vm668 = vcmp.ge.f32.partialorder %v540, 0.0
  %vm669 = vcmp.ge.f32.partialorder %v541, 0.0
  %vm670 = vcmp.ge.f32.partialorder %v542, 0.0
  %vm671 = vcmp.ge.f32.partialorder %v543, 0.0
  %vm672 = vcmp.ge.f32.partialorder %v544, 0.0
  %vm673 = vcmp.ge.f32.partialorder %v545, 0.0
  %vm674 = vcmp.ge.f32.partialorder %v546, 0.0
  %vm675 = vcmp.ge.f32.partialorder %v547, 0.0
  %vm676 = vcmp.ge.f32.partialorder %v548, 0.0
  %vm677 = vcmp.ge.f32.partialorder %v549, 0.0
  %vm678 = vcmp.ge.f32.partialorder %v550, 0.0
  %vm679 = vcmp.ge.f32.partialorder %v551, 0.0
  %vm680 = vcmp.ge.f32.partialorder %v552, 0.0
  %v681 = vmul.f32 %v425, 0.2
  %v682 = vmul.f32 %v426, 0.2
  %v683 = vmul.f32 %v427, 0.2
  %v684 = vmul.f32 %v428, 0.2
  %v685 = vmul.f32 %v429, 0.2
  %v686 = vmul.f32 %v430, 0.2
  %v687 = vmul.f32 %v431, 0.2
  %v688 = vmul.f32 %v432, 0.2
  %v689 = vmul.f32 %v433, 0.2
  %v690 = vmul.f32 %v434, 0.2
  %v691 = vmul.f32 %v435, 0.2
  %v692 = vmul.f32 %v436, 0.2
  %v693 = vmul.f32 %v437, 0.2
  %v694 = vmul.f32 %v438, 0.2
  %v695 = vmul.f32 %v439, 0.2
  %v696 = vmul.f32 %v440, 0.2
  %v697 = vmul.f32 %v441, 0.2
  %v698 = vmul.f32 %v442, 0.2
  %v699 = vmul.f32 %v443, 0.2
  %v700 = vmul.f32 %v444, 0.2
  %v701 = vmul.f32 %v445, 0.2
  %v702 = vmul.f32 %v446, 0.2
  %v703 = vmul.f32 %v447, 0.2
  %v704 = vmul.f32 %v448, 0.2
  %v705 = vmul.f32 %v449, 0.2
  %v706 = vmul.f32 %v450, 0.2
  %v707 = vmul.f32 %v451, 0.2
  %v708 = vmul.f32 %v452, 0.2
  %v709 = vmul.f32 %v453, 0.2
  %v710 = vmul.f32 %v454, 0.2
  %v711 = vmul.f32 %v455, 0.2
  %v712 = vmul.f32 %v456, 0.2
  %v713 = vmul.f32 %v457, 0.2
  %v714 = vmul.f32 %v458, 0.2
  %v715 = vmul.f32 %v459, 0.2
  %v716 = vmul.f32 %v460, 0.2
  %v717 = vmul.f32 %v461, 0.2
  %v718 = vmul.f32 %v462, 0.2
  %v719 = vmul.f32 %v463, 0.2
  %v720 = vmul.f32 %v464, 0.2
  %v721 = vmul.f32 %v465, 0.2
  %v722 = vmul.f32 %v466, 0.2
  %v723 = vmul.f32 %v467, 0.2
  %v724 = vmul.f32 %v468, 0.2
  %v725 = vmul.f32 %v469, 0.2
  %v726 = vmul.f32 %v470, 0.2
  %v727 = vmul.f32 %v471, 0.2
  %v728 = vmul.f32 %v472, 0.2
  %v729 = vmul.f32 %v473, 0.2
  %v730 = vmul.f32 %v474, 0.2
  %v731 = vmul.f32 %v475, 0.2
  %v732 = vmul.f32 %v476, 0.2
  %v733 = vmul.f32 %v477, 0.2
  %v734 = vmul.f32 %v478, 0.2
  %v735 = vmul.f32 %v479, 0.2
  %v736 = vmul.f32 %v480, 0.2
  %v737 = vmul.f32 %v481, 0.2
  %v738 = vmul.f32 %v482, 0.2
  %v739 = vmul.f32 %v483, 0.2
  %v740 = vmul.f32 %v484, 0.2
  %v741 = vmul.f32 %v485, 0.2
  %v742 = vmul.f32 %v486, 0.2
  %v743 = vmul.f32 %v487, 0.2
  %v744 = vmul.f32 %v488, 0.2
  %v745 = vmul.f32 %v489, 0.2
  %v746 = vmul.f32 %v490, 0.2
  %v747 = vmul.f32 %v491, 0.2
  %v748 = vmul.f32 %v492, 0.2
  %v749 = vmul.f32 %v493, 0.2
  %v750 = vmul.f32 %v494, 0.2
  %v751 = vmul.f32 %v495, 0.2
  %v752 = vmul.f32 %v496, 0.2
  %v753 = vmul.f32 %v497, 0.2
  %v754 = vmul.f32 %v498, 0.2
  %v755 = vmul.f32 %v499, 0.2
  %v756 = vmul.f32 %v500, 0.2
  %v757 = vmul.f32 %v501, 0.2
  %v758 = vmul.f32 %v502, 0.2
  %v759 = vmul.f32 %v503, 0.2
  %v760 = vmul.f32 %v504, 0.2
  %v761 = vmul.f32 %v505, 0.2
  %v762 = vmul.f32 %v506, 0.2
  %v763 = vmul.f32 %v507, 0.2
  %v764 = vmul.f32 %v508, 0.2
  %v765 = vmul.f32 %v509, 0.2
  %v766 = vmul.f32 %v510, 0.2
  %v767 = vmul.f32 %v511, 0.2
  %v768 = vmul.f32 %v512, 0.2
  %v769 = vmul.f32 %v513, 0.2
  %v770 = vmul.f32 %v514, 0.2
  %v771 = vmul.f32 %v515, 0.2
  %v772 = vmul.f32 %v516, 0.2
  %v773 = vmul.f32 %v517, 0.2
  %v774 = vmul.f32 %v518, 0.2
  %v775 = vmul.f32 %v519, 0.2
  %v776 = vmul.f32 %v520, 0.2
  %v777 = vmul.f32 %v521, 0.2
  %v778 = vmul.f32 %v522, 0.2
  %v779 = vmul.f32 %v523, 0.2
  %v780 = vmul.f32 %v524, 0.2
  %v781 = vmul.f32 %v525, 0.2
  %v782 = vmul.f32 %v526, 0.2
  %v783 = vmul.f32 %v527, 0.2
  %v784 = vmul.f32 %v528, 0.2
  %v785 = vmul.f32 %v529, 0.2
  %v786 = vmul.f32 %v530, 0.2
  %v787 = vmul.f32 %v531, 0.2
  %v788 = vmul.f32 %v532, 0.2
  %v789 = vmul.f32 %v533, 0.2
  %v790 = vmul.f32 %v534, 0.2
  %v791 = vmul.f32 %v535, 0.2
  %v792 = vmul.f32 %v536, 0.2
  %v793 = vmul.f32 %v537, 0.2
  %v794 = vmul.f32 %v538, 0.2
  %v795 = vmul.f32 %v539, 0.2
  %v796 = vmul.f32 %v540, 0.2
  %v797 = vmul.f32 %v541, 0.2
  %v798 = vmul.f32 %v542, 0.2
  %v799 = vmul.f32 %v543, 0.2
  %v800 = vmul.f32 %v544, 0.2
  %v801 = vmul.f32 %v545, 0.2
  %v802 = vmul.f32 %v546, 0.2
  %v803 = vmul.f32 %v547, 0.2
  %v804 = vmul.f32 %v548, 0.2
  %v805 = vmul.f32 %v549, 0.2
  %v806 = vmul.f32 %v550, 0.2
  %v807 = vmul.f32 %v551, 0.2
  %v808 = vmul.f32 %v552, 0.2
  %v809 = vsel %vm553, %v425, %v681
  %v810 = vsel %vm554, %v426, %v682
  %v811 = vsel %vm555, %v427, %v683
  %v812 = vsel %vm556, %v428, %v684
  %v813 = vsel %vm557, %v429, %v685
  %v814 = vsel %vm558, %v430, %v686
  %v815 = vsel %vm559, %v431, %v687
  %v816 = vsel %vm560, %v432, %v688
  %v817 = vsel %vm561, %v433, %v689
  %v818 = vsel %vm562, %v434, %v690
  %v819 = vsel %vm563, %v435, %v691
  %v820 = vsel %vm564, %v436, %v692
  %v821 = vsel %vm565, %v437, %v693
  %v822 = vsel %vm566, %v438, %v694
  %v823 = vsel %vm567, %v439, %v695
  %v824 = vsel %vm568, %v440, %v696
  %v825 = vsel %vm569, %v441, %v697
  %v826 = vsel %vm570, %v442, %v698
  %v827 = vsel %vm571, %v443, %v699
  %v828 = vsel %vm572, %v444, %v700
  %v829 = vsel %vm573, %v445, %v701
  %v830 = vsel %vm574, %v446, %v702
  %v831 = vsel %vm575, %v447, %v703
  %v832 = vsel %vm576, %v448, %v704
  %v833 = vsel %vm577, %v449, %v705
  %v834 = vsel %vm578, %v450, %v706
  %v835 = vsel %vm579, %v451, %v707
  %v836 = vsel %vm580, %v452, %v708
  %v837 = vsel %vm581, %v453, %v709
  %v838 = vsel %vm582, %v454, %v710
  %v839 = vsel %vm583, %v455, %v711
  %v840 = vsel %vm584, %v456, %v712
  %v841 = vsel %vm585, %v457, %v713
  %v842 = vsel %vm586, %v458, %v714
  %v843 = vsel %vm587, %v459, %v715
  %v844 = vsel %vm588, %v460, %v716
  %v845 = vsel %vm589, %v461, %v717
  %v846 = vsel %vm590, %v462, %v718
  %v847 = vsel %vm591, %v463, %v719
  %v848 = vsel %vm592, %v464, %v720
  %v849 = vsel %vm593, %v465, %v721
  %v850 = vsel %vm594, %v466, %v722
  %v851 = vsel %vm595, %v467, %v723
  %v852 = vsel %vm596, %v468, %v724
  %v853 = vsel %vm597, %v469, %v725
  %v854 = vsel %vm598, %v470, %v726
  %v855 = vsel %vm599, %v471, %v727
  %v856 = vsel %vm600, %v472, %v728
  %v857 = vsel %vm601, %v473, %v729
  %v858 = vsel %vm602, %v474, %v730
  %v859 = vsel %vm603, %v475, %v731
  %v860 = vsel %vm604, %v476, %v732
  %v861 = vsel %vm605, %v477, %v733
  %v862 = vsel %vm606, %v478, %v734
  %v863 = vsel %vm607, %v479, %v735
  %v864 = vsel %vm608, %v480, %v736
  %v865 = vsel %vm609, %v481, %v737
  %v866 = vsel %vm610, %v482, %v738
  %v867 = vsel %vm611, %v483, %v739
  %v868 = vsel %vm612, %v484, %v740
  %v869 = vsel %vm613, %v485, %v741
  %v870 = vsel %vm614, %v486, %v742
  %v871 = vsel %vm615, %v487, %v743
  %v872 = vsel %vm616, %v488, %v744
  %v873 = vsel %vm617, %v489, %v745
  %v874 = vsel %vm618, %v490, %v746
  %v875 = vsel %vm619, %v491, %v747
  %v876 = vsel %vm620, %v492, %v748
  %v877 = vsel %vm621, %v493, %v749
  %v878 = vsel %vm622, %v494, %v750
  %v879 = vsel %vm623, %v495, %v751
  %v880 = vsel %vm624, %v496, %v752
  %v881 = vsel %vm625, %v497, %v753
  %v882 = vsel %vm626, %v498, %v754
  %v883 = vsel %vm627, %v499, %v755
  %v884 = vsel %vm628, %v500, %v756
  %v885 = vsel %vm629, %v501, %v757
  %v886 = vsel %vm630, %v502, %v758
  %v887 = vsel %vm631, %v503, %v759
  %v888 = vsel %vm632, %v504, %v760
  %v889 = vsel %vm633, %v505, %v761
  %v890 = vsel %vm634, %v506, %v762
  %v891 = vsel %vm635, %v507, %v763
  %v892 = vsel %vm636, %v508, %v764
  %v893 = vsel %vm637, %v509, %v765
  %v894 = vsel %vm638, %v510, %v766
  %v895 = vsel %vm639, %v511, %v767
  %v896 = vsel %vm640, %v512, %v768
  %v897 = vsel %vm641, %v513, %v769
  %v898 = vsel %vm642, %v514, %v770
  %v899 = vsel %vm643, %v515, %v771
  %v900 = vsel %vm644, %v516, %v772
  %v901 = vsel %vm645, %v517, %v773
  %v902 = vsel %vm646, %v518, %v774
  %v903 = vsel %vm647, %v519, %v775
  %v904 = vsel %vm648, %v520, %v776
  %v905 = vsel %vm649, %v521, %v777
  %v906 = vsel %vm650, %v522, %v778
  %v907 = vsel %vm651, %v523, %v779
  %v908 = vsel %vm652, %v524, %v780
  %v909 = vsel %vm653, %v525, %v781
  %v910 = vsel %vm654, %v526, %v782
  %v911 = vsel %vm655, %v527, %v783
  %v912 = vsel %vm656, %v528, %v784
  %v913 = vsel %vm657, %v529, %v785
  %v914 = vsel %vm658, %v530, %v786
  %v915 = vsel %vm659, %v531, %v787
  %v916 = vsel %vm660, %v532, %v788
  %v917 = vsel %vm661, %v533, %v789
  %v918 = vsel %vm662, %v534, %v790
  %v919 = vsel %vm663, %v535, %v791
  %v920 = vsel %vm664, %v536, %v792
  %v921 = vsel %vm665, %v537, %v793
  %v922 = vsel %vm666, %v538, %v794
  %v923 = vsel %vm667, %v539, %v795
  %v924 = vsel %vm668, %v540, %v796
  %v925 = vsel %vm669, %v541, %v797
  %v926 = vsel %vm670, %v542, %v798
  %v927 = vsel %vm671, %v543, %v799
  %v928 = vsel %vm672, %v544, %v800
  %v929 = vsel %vm673, %v545, %v801
  %v930 = vsel %vm674, %v546, %v802
  %v931 = vsel %vm675, %v547, %v803
  %v932 = vsel %vm676, %v548, %v804
  %v933 = vsel %vm677, %v549, %v805
  %v934 = vsel %vm678, %v550, %v806
  %v935 = vsel %vm679, %v551, %v807
  %v936 = vsel %vm680, %v552, %v808
  %v937 = vpack.c.bf16 %v817, %v809
  %v938 = vpack.c.bf16 %v818, %v810
  %v939 = vpack.c.bf16 %v819, %v811
  %v940 = vpack.c.bf16 %v820, %v812
  %v941 = vpack.c.bf16 %v821, %v813
  %v942 = vpack.c.bf16 %v822, %v814
  %v943 = vpack.c.bf16 %v823, %v815
  %v944 = vpack.c.bf16 %v824, %v816
  %v945 = vpack.c.bf16 %v833, %v825
  %v946 = vpack.c.bf16 %v834, %v826
  %v947 = vpack.c.bf16 %v835, %v827
  %v948 = vpack.c.bf16 %v836, %v828
  %v949 = vpack.c.bf16 %v837, %v829
  %v950 = vpack.c.bf16 %v838, %v830
  %v951 = vpack.c.bf16 %v839, %v831
  %v952 = vpack.c.bf16 %v840, %v832
  %v953 = vpack.c.bf16 %v849, %v841
  %v954 = vpack.c.bf16 %v850, %v842
  %v955 = vpack.c.bf16 %v851, %v843
  %v956 = vpack.c.bf16 %v852, %v844
  %v957 = vpack.c.bf16 %v853, %v845
  %v958 = vpack.c.bf16 %v854, %v846
  %v959 = vpack.c.bf16 %v855, %v847
  %v960 = vpack.c.bf16 %v856, %v848
  %v961 = vpack.c.bf16 %v865, %v857
  %v962 = vpack.c.bf16 %v866, %v858
  %v963 = vpack.c.bf16 %v867, %v859
  %v964 = vpack.c.bf16 %v868, %v860
  %v965 = vpack.c.bf16 %v869, %v861
  %v966 = vpack.c.bf16 %v870, %v862
  %v967 = vpack.c.bf16 %v871, %v863
  %v968 = vpack.c.bf16 %v872, %v864
  %v969 = vpack.c.bf16 %v881, %v873
  %v970 = vpack.c.bf16 %v882, %v874
  %v971 = vpack.c.bf16 %v883, %v875
  %v972 = vpack.c.bf16 %v884, %v876
  %v973 = vpack.c.bf16 %v885, %v877
  %v974 = vpack.c.bf16 %v886, %v878
  %v975 = vpack.c.bf16 %v887, %v879
  %v976 = vpack.c.bf16 %v888, %v880
  %v977 = vpack.c.bf16 %v897, %v889
  %v978 = vpack.c.bf16 %v898, %v890
  %v979 = vpack.c.bf16 %v899, %v891
  %v980 = vpack.c.bf16 %v900, %v892
  %v981 = vpack.c.bf16 %v901, %v893
  %v982 = vpack.c.bf16 %v902, %v894
  %v983 = vpack.c.bf16 %v903, %v895
  %v984 = vpack.c.bf16 %v904, %v896
  %v985 = vpack.c.bf16 %v913, %v905
  %v986 = vpack.c.bf16 %v914, %v906
  %v987 = vpack.c.bf16 %v915, %v907
  %v988 = vpack.c.bf16 %v916, %v908
  %v989 = vpack.c.bf16 %v917, %v909
  %v990 = vpack.c.bf16 %v918, %v910
  %v991 = vpack.c.bf16 %v919, %v911
  %v992 = vpack.c.bf16 %v920, %v912
  %v993 = vpack.c.bf16 %v929, %v921
  %v994 = vpack.c.bf16 %v930, %v922
  %v995 = vpack.c.bf16 %v931, %v923
  %v996 = vpack.c.bf16 %v932, %v924
  %v997 = vpack.c.bf16 %v933, %v925
  %v998 = vpack.c.bf16 %v934, %v926
  %v999 = vpack.c.bf16 %v935, %v927
  %v1000 = vpack.c.bf16 %v936, %v928
  %v1001 = vld [vmem:[%s1] sm:$0xf]
  %v1002 = vld [vmem:[%s1 + $0x4] sm:$0xf]
  %v1003 = vld [vmem:[%s1 + $0x8] sm:$0xf]
  %v1004 = vld [vmem:[%s1 + $0xc] sm:$0xf]
  %v1005 = vld [vmem:[%s1 + $0x10] sm:$0xf]
  %v1006 = vld [vmem:[%s1 + $0x14] sm:$0xf]
  %v1007 = vld [vmem:[%s1 + $0x18] sm:$0xf]
  %v1008 = vld [vmem:[%s1 + $0x1c] sm:$0xf]
  %v1009 = vld [vmem:[%s1 + $0x20] sm:$0xf]
  %v1010 = vld [vmem:[%s1 + $0x24] sm:$0xf]
  %v1011 = vld [vmem:[%s1 + $0x28] sm:$0xf]
  %v1012 = vld [vmem:[%s1 + $0x2c] sm:$0xf]
  %v1013 = vld [vmem:[%s1 + $0x30] sm:$0xf]
  %v1014 = vld [vmem:[%s1 + $0x34] sm:$0xf]
  %v1015 = vld [vmem:[%s1 + $0x38] sm:$0xf]
  %v1016 = vld [vmem:[%s1 + $0x3c] sm:$0xf]
  %v1017 = vld [vmem:[%s1 + $0x40] sm:$0xf]
  %v1018 = vld [vmem:[%s1 + $0x44] sm:$0xf]
  %v1019 = vld [vmem:[%s1 + $0x48] sm:$0xf]
  %v1020 = vld [vmem:[%s1 + $0x4c] sm:$0xf]
  %v1021 = vld [vmem:[%s1 + $0x50] sm:$0xf]
  %v1022 = vld [vmem:[%s1 + $0x54] sm:$0xf]
  %v1023 = vld [vmem:[%s1 + $0x58] sm:$0xf]
  %v1024 = vld [vmem:[%s1 + $0x5c] sm:$0xf]
  %v1025 = vld [vmem:[%s1 + $0x60] sm:$0xf]
  %v1026 = vld [vmem:[%s1 + $0x64] sm:$0xf]
  %v1027 = vld [vmem:[%s1 + $0x68] sm:$0xf]
  %v1028 = vld [vmem:[%s1 + $0x6c] sm:$0xf]
  %v1029 = vld [vmem:[%s1 + $0x70] sm:$0xf]
  %v1030 = vld [vmem:[%s1 + $0x74] sm:$0xf]
  %v1031 = vld [vmem:[%s1 + $0x78] sm:$0xf]
  %v1032 = vld [vmem:[%s1 + $0x7c] sm:$0xf]
  %v1033 = vld [vmem:[%s1 + $0x80] sm:$0xf]
  %v1034 = vld [vmem:[%s1 + $0x84] sm:$0xf]
  %v1035 = vld [vmem:[%s1 + $0x88] sm:$0xf]
  %v1036 = vld [vmem:[%s1 + $0x8c] sm:$0xf]
  %v1037 = vld [vmem:[%s1 + $0x90] sm:$0xf]
  %v1038 = vld [vmem:[%s1 + $0x94] sm:$0xf]
  %v1039 = vld [vmem:[%s1 + $0x98] sm:$0xf]
  %v1040 = vld [vmem:[%s1 + $0x9c] sm:$0xf]
  %v1041 = vld [vmem:[%s1 + $0xa0] sm:$0xf]
  %v1042 = vld [vmem:[%s1 + $0xa4] sm:$0xf]
  %v1043 = vld [vmem:[%s1 + $0xa8] sm:$0xf]
  %v1044 = vld [vmem:[%s1 + $0xac] sm:$0xf]
  %v1045 = vld [vmem:[%s1 + $0xb0] sm:$0xf]
  %v1046 = vld [vmem:[%s1 + $0xb4] sm:$0xf]
  %v1047 = vld [vmem:[%s1 + $0xb8] sm:$0xf]
  %v1048 = vld [vmem:[%s1 + $0xbc] sm:$0xf]
  %v1049 = vld [vmem:[%s1 + $0xc0] sm:$0xf]
  %v1050 = vld [vmem:[%s1 + $0xc4] sm:$0xf]
  %v1051 = vld [vmem:[%s1 + $0xc8] sm:$0xf]
  %v1052 = vld [vmem:[%s1 + $0xcc] sm:$0xf]
  %v1053 = vld [vmem:[%s1 + $0xd0] sm:$0xf]
  %v1054 = vld [vmem:[%s1 + $0xd4] sm:$0xf]
  %v1055 = vld [vmem:[%s1 + $0xd8] sm:$0xf]
  %v1056 = vld [vmem:[%s1 + $0xdc] sm:$0xf]
  %v1057 = vld [vmem:[%s1 + $0xe0] sm:$0xf]
  %v1058 = vld [vmem:[%s1 + $0xe4] sm:$0xf]
  %v1059 = vld [vmem:[%s1 + $0xe8] sm:$0xf]
  %v1060 = vld [vmem:[%s1 + $0xec] sm:$0xf]
  %v1061 = vld [vmem:[%s1 + $0xf0] sm:$0xf]
  %v1062 = vld [vmem:[%s1 + $0xf4] sm:$0xf]
  %v1063 = vld [vmem:[%s1 + $0xf8] sm:$0xf]
  %v1064 = vld [vmem:[%s1 + $0xfc] sm:$0xf]
  %v1065 = vld [vmem:[%s1 + $0x100] sm:$0xf]
  %v1066 = vld [vmem:[%s1 + $0x104] sm:$0xf]
  %v1067 = vld [vmem:[%s1 + $0x108] sm:$0xf]
  %v1068 = vld [vmem:[%s1 + $0x10c] sm:$0xf]
  %v1069 = vld [vmem:[%s1 + $0x110] sm:$0xf]
  %v1070 = vld [vmem:[%s1 + $0x114] sm:$0xf]
  %v1071 = vld [vmem:[%s1 + $0x118] sm:$0xf]
  %v1072 = vld [vmem:[%s1 + $0x11c] sm:$0xf]
  %v1073 = vld [vmem:[%s1 + $0x120] sm:$0xf]
  %v1074 = vld [vmem:[%s1 + $0x124] sm:$0xf]
  %v1075 = vld [vmem:[%s1 + $0x128] sm:$0xf]
  %v1076 = vld [vmem:[%s1 + $0x12c] sm:$0xf]
  %v1077 = vld [vmem:[%s1 + $0x130] sm:$0xf]
  %v1078 = vld [vmem:[%s1 + $0x134] sm:$0xf]
  %v1079 = vld [vmem:[%s1 + $0x138] sm:$0xf]
  %v1080 = vld [vmem:[%s1 + $0x13c] sm:$0xf]
  %v1081 = vld [vmem:[%s1 + $0x140] sm:$0xf]
  %v1082 = vld [vmem:[%s1 + $0x144] sm:$0xf]
  %v1083 = vld [vmem:[%s1 + $0x148] sm:$0xf]
  %v1084 = vld [vmem:[%s1 + $0x14c] sm:$0xf]
  %v1085 = vld [vmem:[%s1 + $0x150] sm:$0xf]
  %v1086 = vld [vmem:[%s1 + $0x154] sm:$0xf]
  %v1087 = vld [vmem:[%s1 + $0x158] sm:$0xf]
  %v1088 = vld [vmem:[%s1 + $0x15c] sm:$0xf]
  %v1089 = vld [vmem:[%s1 + $0x160] sm:$0xf]
  %v1090 = vld [vmem:[%s1 + $0x164] sm:$0xf]
  %v1091 = vld [vmem:[%s1 + $0x168] sm:$0xf]
  %v1092 = vld [vmem:[%s1 + $0x16c] sm:$0xf]
  %v1093 = vld [vmem:[%s1 + $0x170] sm:$0xf]
  %v1094 = vld [vmem:[%s1 + $0x174] sm:$0xf]
  %v1095 = vld [vmem:[%s1 + $0x178] sm:$0xf]
  %v1096 = vld [vmem:[%s1 + $0x17c] sm:$0xf]
  %v1097 = vld [vmem:[%s1 + $0x180] sm:$0xf]
  %v1098 = vld [vmem:[%s1 + $0x184] sm:$0xf]
  %v1099 = vld [vmem:[%s1 + $0x188] sm:$0xf]
  %v1100 = vld [vmem:[%s1 + $0x18c] sm:$0xf]
  %v1101 = vld [vmem:[%s1 + $0x190] sm:$0xf]
  %v1102 = vld [vmem:[%s1 + $0x194] sm:$0xf]
  %v1103 = vld [vmem:[%s1 + $0x198] sm:$0xf]
  %v1104 = vld [vmem:[%s1 + $0x19c] sm:$0xf]
  %v1105 = vld [vmem:[%s1 + $0x1a0] sm:$0xf]
  %v1106 = vld [vmem:[%s1 + $0x1a4] sm:$0xf]
  %v1107 = vld [vmem:[%s1 + $0x1a8] sm:$0xf]
  %v1108 = vld [vmem:[%s1 + $0x1ac] sm:$0xf]
  %v1109 = vld [vmem:[%s1 + $0x1b0] sm:$0xf]
  %v1110 = vld [vmem:[%s1 + $0x1b4] sm:$0xf]
  %v1111 = vld [vmem:[%s1 + $0x1b8] sm:$0xf]
  %v1112 = vld [vmem:[%s1 + $0x1bc] sm:$0xf]
  %v1113 = vld [vmem:[%s1 + $0x1c0] sm:$0xf]
  %v1114 = vld [vmem:[%s1 + $0x1c4] sm:$0xf]
  %v1115 = vld [vmem:[%s1 + $0x1c8] sm:$0xf]
  %v1116 = vld [vmem:[%s1 + $0x1cc] sm:$0xf]
  %v1117 = vld [vmem:[%s1 + $0x1d0] sm:$0xf]
  %v1118 = vld [vmem:[%s1 + $0x1d4] sm:$0xf]
  %v1119 = vld [vmem:[%s1 + $0x1d8] sm:$0xf]
  %v1120 = vld [vmem:[%s1 + $0x1dc] sm:$0xf]
  %v1121 = vld [vmem:[%s1 + $0x1e0] sm:$0xf]
  %v1122 = vld [vmem:[%s1 + $0x1e4] sm:$0xf]
  %v1123 = vld [vmem:[%s1 + $0x1e8] sm:$0xf]
  %v1124 = vld [vmem:[%s1 + $0x1ec] sm:$0xf]
  %v1125 = vld [vmem:[%s1 + $0x1f0] sm:$0xf]
  %v1126 = vld [vmem:[%s1 + $0x1f4] sm:$0xf]
  %v1127 = vld [vmem:[%s1 + $0x1f8] sm:$0xf]
  %v1128 = vld [vmem:[%s1 + $0x1fc] sm:$0xf]
  %v1129 = vld [vmem:[%s2] sm:$0x1]
  %v1131 = vlaneseq
  %v1132 = vshrl.u32 %v1131, 7
  %v1133 = vsub.s32 0, %v1132
  %v1134 = vrot.slane %v1129, %v1133
  %v1264 = vunpack.c.l.b16 %v1001
  %v1265 = vunpack.c.l.b16 %v1002
  %v1266 = vunpack.c.l.b16 %v1003
  %v1267 = vunpack.c.l.b16 %v1004
  %v1268 = vunpack.c.l.b16 %v1005
  %v1269 = vunpack.c.l.b16 %v1006
  %v1270 = vunpack.c.l.b16 %v1007
  %v1271 = vunpack.c.l.b16 %v1008
  %v1272 = vunpack.c.l.b16 %v1009
  %v1273 = vunpack.c.l.b16 %v1010
  %v1274 = vunpack.c.l.b16 %v1011
  %v1275 = vunpack.c.l.b16 %v1012
  %v1276 = vunpack.c.l.b16 %v1013
  %v1277 = vunpack.c.l.b16 %v1014
  %v1278 = vunpack.c.l.b16 %v1015
  %v1279 = vunpack.c.l.b16 %v1016
  %v1280 = vunpack.c.l.b16 %v1017
  %v1281 = vunpack.c.l.b16 %v1018
  %v1282 = vunpack.c.l.b16 %v1019
  %v1283 = vunpack.c.l.b16 %v1020
  %v1284 = vunpack.c.l.b16 %v1021
  %v1285 = vunpack.c.l.b16 %v1022
  %v1286 = vunpack.c.l.b16 %v1023
  %v1287 = vunpack.c.l.b16 %v1024
  %v1288 = vunpack.c.l.b16 %v1025
  %v1289 = vunpack.c.l.b16 %v1026
  %v1290 = vunpack.c.l.b16 %v1027
  %v1291 = vunpack.c.l.b16 %v1028
  %v1292 = vunpack.c.l.b16 %v1029
  %v1293 = vunpack.c.l.b16 %v1030
  %v1294 = vunpack.c.l.b16 %v1031
  %v1295 = vunpack.c.l.b16 %v1032
  %v1296 = vunpack.c.l.b16 %v1033
  %v1297 = vunpack.c.l.b16 %v1034
  %v1298 = vunpack.c.l.b16 %v1035
  %v1299 = vunpack.c.l.b16 %v1036
  %v1300 = vunpack.c.l.b16 %v1037
  %v1301 = vunpack.c.l.b16 %v1038
  %v1302 = vunpack.c.l.b16 %v1039
  %v1303 = vunpack.c.l.b16 %v1040
  %v1304 = vunpack.c.l.b16 %v1041
  %v1305 = vunpack.c.l.b16 %v1042
  %v1306 = vunpack.c.l.b16 %v1043
  %v1307 = vunpack.c.l.b16 %v1044
  %v1308 = vunpack.c.l.b16 %v1045
  %v1309 = vunpack.c.l.b16 %v1046
  %v1310 = vunpack.c.l.b16 %v1047
  %v1311 = vunpack.c.l.b16 %v1048
  %v1312 = vunpack.c.l.b16 %v1049
  %v1313 = vunpack.c.l.b16 %v1050
  %v1314 = vunpack.c.l.b16 %v1051
  %v1315 = vunpack.c.l.b16 %v1052
  %v1316 = vunpack.c.l.b16 %v1053
  %v1317 = vunpack.c.l.b16 %v1054
  %v1318 = vunpack.c.l.b16 %v1055
  %v1319 = vunpack.c.l.b16 %v1056
  %v1320 = vunpack.c.l.b16 %v1057
  %v1321 = vunpack.c.l.b16 %v1058
  %v1322 = vunpack.c.l.b16 %v1059
  %v1323 = vunpack.c.l.b16 %v1060
  %v1324 = vunpack.c.l.b16 %v1061
  %v1325 = vunpack.c.l.b16 %v1062
  %v1326 = vunpack.c.l.b16 %v1063
  %v1327 = vunpack.c.l.b16 %v1064
  %v1328 = vunpack.c.l.b16 %v1065
  %v1329 = vunpack.c.l.b16 %v1066
  %v1330 = vunpack.c.l.b16 %v1067
  %v1331 = vunpack.c.l.b16 %v1068
  %v1332 = vunpack.c.l.b16 %v1069
  %v1333 = vunpack.c.l.b16 %v1070
  %v1334 = vunpack.c.l.b16 %v1071
  %v1335 = vunpack.c.l.b16 %v1072
  %v1336 = vunpack.c.l.b16 %v1073
  %v1337 = vunpack.c.l.b16 %v1074
  %v1338 = vunpack.c.l.b16 %v1075
  %v1339 = vunpack.c.l.b16 %v1076
  %v1340 = vunpack.c.l.b16 %v1077
  %v1341 = vunpack.c.l.b16 %v1078
  %v1342 = vunpack.c.l.b16 %v1079
  %v1343 = vunpack.c.l.b16 %v1080
  %v1344 = vunpack.c.l.b16 %v1081
  %v1345 = vunpack.c.l.b16 %v1082
  %v1346 = vunpack.c.l.b16 %v1083
  %v1347 = vunpack.c.l.b16 %v1084
  %v1348 = vunpack.c.l.b16 %v1085
  %v1349 = vunpack.c.l.b16 %v1086
  %v1350 = vunpack.c.l.b16 %v1087
  %v1351 = vunpack.c.l.b16 %v1088
  %v1352 = vunpack.c.l.b16 %v1089
  %v1353 = vunpack.c.l.b16 %v1090
  %v1354 = vunpack.c.l.b16 %v1091
  %v1355 = vunpack.c.l.b16 %v1092
  %v1356 = vunpack.c.l.b16 %v1093
  %v1357 = vunpack.c.l.b16 %v1094
  %v1358 = vunpack.c.l.b16 %v1095
  %v1359 = vunpack.c.l.b16 %v1096
  %v1360 = vunpack.c.l.b16 %v1097
  %v1361 = vunpack.c.l.b16 %v1098
  %v1362 = vunpack.c.l.b16 %v1099
  %v1363 = vunpack.c.l.b16 %v1100
  %v1364 = vunpack.c.l.b16 %v1101
  %v1365 = vunpack.c.l.b16 %v1102
  %v1366 = vunpack.c.l.b16 %v1103
  %v1367 = vunpack.c.l.b16 %v1104
  %v1368 = vunpack.c.l.b16 %v1105
  %v1369 = vunpack.c.l.b16 %v1106
  %v1370 = vunpack.c.l.b16 %v1107
  %v1371 = vunpack.c.l.b16 %v1108
  %v1372 = vunpack.c.l.b16 %v1109
  %v1373 = vunpack.c.l.b16 %v1110
  %v1374 = vunpack.c.l.b16 %v1111
  %v1375 = vunpack.c.l.b16 %v1112
  %v1376 = vunpack.c.l.b16 %v1113
  %v1377 = vunpack.c.l.b16 %v1114
  %v1378 = vunpack.c.l.b16 %v1115
  %v1379 = vunpack.c.l.b16 %v1116
  %v1380 = vunpack.c.l.b16 %v1117
  %v1381 = vunpack.c.l.b16 %v1118
  %v1382 = vunpack.c.l.b16 %v1119
  %v1383 = vunpack.c.l.b16 %v1120
  %v1384 = vunpack.c.l.b16 %v1121
  %v1385 = vunpack.c.l.b16 %v1122
  %v1386 = vunpack.c.l.b16 %v1123
  %v1387 = vunpack.c.l.b16 %v1124
  %v1388 = vunpack.c.l.b16 %v1125
  %v1389 = vunpack.c.l.b16 %v1126
  %v1390 = vunpack.c.l.b16 %v1127
  %v1391 = vunpack.c.l.b16 %v1128
  %v1392 = vpack.c.b16 %v1265, %v1264
  %v1393 = vpack.c.b16 %v1267, %v1266
  %v1394 = vpack.c.b16 %v1269, %v1268
  %v1395 = vpack.c.b16 %v1271, %v1270
  %v1396 = vpack.c.b16 %v1273, %v1272
  %v1397 = vpack.c.b16 %v1275, %v1274
  %v1398 = vpack.c.b16 %v1277, %v1276
  %v1399 = vpack.c.b16 %v1279, %v1278
  %v1400 = vpack.c.b16 %v1281, %v1280
  %v1401 = vpack.c.b16 %v1283, %v1282
  %v1402 = vpack.c.b16 %v1285, %v1284
  %v1403 = vpack.c.b16 %v1287, %v1286
  %v1404 = vpack.c.b16 %v1289, %v1288
  %v1405 = vpack.c.b16 %v1291, %v1290
  %v1406 = vpack.c.b16 %v1293, %v1292
  %v1407 = vpack.c.b16 %v1295, %v1294
  %v1408 = vpack.c.b16 %v1297, %v1296
  %v1409 = vpack.c.b16 %v1299, %v1298
  %v1410 = vpack.c.b16 %v1301, %v1300
  %v1411 = vpack.c.b16 %v1303, %v1302
  %v1412 = vpack.c.b16 %v1305, %v1304
  %v1413 = vpack.c.b16 %v1307, %v1306
  %v1414 = vpack.c.b16 %v1309, %v1308
  %v1415 = vpack.c.b16 %v1311, %v1310
  %v1416 = vpack.c.b16 %v1313, %v1312
  %v1417 = vpack.c.b16 %v1315, %v1314
  %v1418 = vpack.c.b16 %v1317, %v1316
  %v1419 = vpack.c.b16 %v1319, %v1318
  %v1420 = vpack.c.b16 %v1321, %v1320
  %v1421 = vpack.c.b16 %v1323, %v1322
  %v1422 = vpack.c.b16 %v1325, %v1324
  %v1423 = vpack.c.b16 %v1327, %v1326
  %v1424 = vpack.c.b16 %v1329, %v1328
  %v1425 = vpack.c.b16 %v1331, %v1330
  %v1426 = vpack.c.b16 %v1333, %v1332
  %v1427 = vpack.c.b16 %v1335, %v1334
  %v1428 = vpack.c.b16 %v1337, %v1336
  %v1429 = vpack.c.b16 %v1339, %v1338
  %v1430 = vpack.c.b16 %v1341, %v1340
  %v1431 = vpack.c.b16 %v1343, %v1342
  %v1432 = vpack.c.b16 %v1345, %v1344
  %v1433 = vpack.c.b16 %v1347, %v1346
  %v1434 = vpack.c.b16 %v1349, %v1348
  %v1435 = vpack.c.b16 %v1351, %v1350
  %v1436 = vpack.c.b16 %v1353, %v1352
  %v1437 = vpack.c.b16 %v1355, %v1354
  %v1438 = vpack.c.b16 %v1357, %v1356
  %v1439 = vpack.c.b16 %v1359, %v1358
  %v1440 = vpack.c.b16 %v1361, %v1360
  %v1441 = vpack.c.b16 %v1363, %v1362
  %v1442 = vpack.c.b16 %v1365, %v1364
  %v1443 = vpack.c.b16 %v1367, %v1366
  %v1444 = vpack.c.b16 %v1369, %v1368
  %v1445 = vpack.c.b16 %v1371, %v1370
  %v1446 = vpack.c.b16 %v1373, %v1372
  %v1447 = vpack.c.b16 %v1375, %v1374
  %v1448 = vpack.c.b16 %v1377, %v1376
  %v1449 = vpack.c.b16 %v1379, %v1378
  %v1450 = vpack.c.b16 %v1381, %v1380
  %v1451 = vpack.c.b16 %v1383, %v1382
  %v1452 = vpack.c.b16 %v1385, %v1384
  %v1453 = vpack.c.b16 %v1387, %v1386
  %v1454 = vpack.c.b16 %v1389, %v1388
  %v1455 = vpack.c.b16 %v1391, %v1390
  %1520 = vmatprep.subr.bf16.mxu0 0
  %1521 = vmatpush1.bf16.msra.mxu0 %v1392
  %1522 = vmatprep.subr.bf16.mxu0 0
  %1523 = vmatpush1.bf16.msra.mxu0 %v1393
  %1524 = vmatprep.subr.bf16.mxu0 0
  %1525 = vmatpush1.bf16.msra.mxu0 %v1394
  %1526 = vmatprep.subr.bf16.mxu0 0
  %1527 = vmatpush1.bf16.msra.mxu0 %v1395
  %1528 = vmatprep.subr.bf16.mxu0 0
  %1529 = vmatpush1.bf16.msra.mxu0 %v1396
  %1530 = vmatprep.subr.bf16.mxu0 0
  %1531 = vmatpush1.bf16.msra.mxu0 %v1397
  %1532 = vmatprep.subr.bf16.mxu0 0
  %1533 = vmatpush1.bf16.msra.mxu0 %v1398
  %1534 = vmatprep.subr.bf16.mxu0 0
  %1535 = vmatpush1.bf16.msra.mxu0 %v1399
  %1536 = vmatprep.subr.bf16.mxu0 0
  %1537 = vmatpush1.bf16.msra.mxu0 %v1400
  %1538 = vmatprep.subr.bf16.mxu0 0
  %1539 = vmatpush1.bf16.msra.mxu0 %v1401
  %1540 = vmatprep.subr.bf16.mxu0 0
  %1541 = vmatpush1.bf16.msra.mxu0 %v1402
  %1542 = vmatprep.subr.bf16.mxu0 0
  %1543 = vmatpush1.bf16.msra.mxu0 %v1403
  %1544 = vmatprep.subr.bf16.mxu0 0
  %1545 = vmatpush1.bf16.msra.mxu0 %v1404
  %1546 = vmatprep.subr.bf16.mxu0 0
  %1547 = vmatpush1.bf16.msra.mxu0 %v1405
  %1548 = vmatprep.subr.bf16.mxu0 0
  %1549 = vmatpush1.bf16.msra.mxu0 %v1406
  %1550 = vmatprep.subr.bf16.mxu0 0
  %1551 = vmatpush1.bf16.msra.mxu0 %v1407
  %1552 = vmatprep.mubr.bf16.mxu0 %v938
  %1553 = vmatmul.mubr.bf16.gmra.mrb[0].mxu0 %v937
  %v1554 = vpop.f32.mrb[0].mxu0
  %v1555 = vadd.f32 %v1134, %v1554
  %v1556 = vpop.f32.mrb[0].mxu0
  %v1557 = vpop.f32.mrb[0].mxu0
  %v1558 = vadd.f32 %v1134, %v1557
  %v1559 = vpop.f32.mrb[0].mxu0
  %1560 = vmatprep.mubr.bf16.mxu0 %v946
  %1561 = vmatmul.mubr.bf16.gmra.mrb[0].mxu0 %v945
  %v1562 = vpop.f32.mrb[0].mxu0
  %v1563 = vadd.f32 %v1134, %v1562
  %v1564 = vpop.f32.mrb[0].mxu0
  %v1565 = vpop.f32.mrb[0].mxu0
  %v1566 = vadd.f32 %v1134, %v1565
  %v1567 = vpop.f32.mrb[0].mxu0
  %1568 = vmatprep.mubr.bf16.mxu0 %v954
  %1569 = vmatmul.mubr.bf16.gmra.mrb[0].mxu0 %v953
  %v1570 = vpop.f32.mrb[0].mxu0
  %v1571 = vadd.f32 %v1134, %v1570
  %v1572 = vpop.f32.mrb[0].mxu0
  %v1573 = vpop.f32.mrb[0].mxu0
  %v1574 = vadd.f32 %v1134, %v1573
  %v1575 = vpop.f32.mrb[0].mxu0
  %1576 = vmatprep.mubr.bf16.mxu0 %v962
  %1577 = vmatmul.mubr.bf16.gmra.mrb[0].mxu0 %v961
  %v1578 = vpop.f32.mrb[0].mxu0
  %v1579 = vadd.f32 %v1134, %v1578
  %v1580 = vpop.f32.mrb[0].mxu0
  %v1581 = vpop.f32.mrb[0].mxu0
  %v1582 = vadd.f32 %v1134, %v1581
  %v1583 = vpop.f32.mrb[0].mxu0
  %1584 = vmatprep.mubr.bf16.mxu0 %v970
  %1585 = vmatmul.mubr.bf16.gmra.mrb[0].mxu0 %v969
  %v1586 = vpop.f32.mrb[0].mxu0
  %v1587 = vadd.f32 %v1134, %v1586
  %v1588 = vpop.f32.mrb[0].mxu0
  %v1589 = vpop.f32.mrb[0].mxu0
  %v1590 = vadd.f32 %v1134, %v1589
  %v1591 = vpop.f32.mrb[0].mxu0
  %1592 = vmatprep.mubr.bf16.mxu0 %v978
  %1593 = vmatmul.mubr.bf16.gmra.mrb[0].mxu0 %v977
  %v1594 = vpop.f32.mrb[0].mxu0
  %v1595 = vadd.f32 %v1134, %v1594
  %v1596 = vpop.f32.mrb[0].mxu0
  %v1597 = vpop.f32.mrb[0].mxu0
  %v1598 = vadd.f32 %v1134, %v1597
  %v1599 = vpop.f32.mrb[0].mxu0
  %1600 = vmatprep.mubr.bf16.mxu0 %v986
  %1601 = vmatmul.mubr.bf16.gmra.mrb[0].mxu0 %v985
  %v1602 = vpop.f32.mrb[0].mxu0
  %v1603 = vadd.f32 %v1134, %v1602
  %v1604 = vpop.f32.mrb[0].mxu0
  %v1605 = vpop.f32.mrb[0].mxu0
  %v1606 = vadd.f32 %v1134, %v1605
  %v1607 = vpop.f32.mrb[0].mxu0
  %1608 = vmatprep.mubr.bf16.mxu0 %v994
  %1609 = vmatmul.mubr.bf16.gmra.mrb[0].mxu0 %v993
  %v1610 = vpop.f32.mrb[0].mxu0
  %v1611 = vadd.f32 %v1134, %v1610
  %v1612 = vpop.f32.mrb[0].mxu0
  %v1613 = vpop.f32.mrb[0].mxu0
  %v1614 = vadd.f32 %v1134, %v1613
  %v1615 = vpop.f32.mrb[0].mxu0
  %1616 = vdwg.mxu0
  %1617 = vmatprep.subr.bf16.mxu0 0
  %1618 = vmatpush1.bf16.msra.mxu0 %v1408
  %1619 = vmatprep.subr.bf16.mxu0 0
  %1620 = vmatpush1.bf16.msra.mxu0 %v1409
  %1621 = vmatprep.subr.bf16.mxu0 0
  %1622 = vmatpush1.bf16.msra.mxu0 %v1410
  %1623 = vmatprep.subr.bf16.mxu0 0
  %1624 = vmatpush1.bf16.msra.mxu0 %v1411
  %1625 = vmatprep.subr.bf16.mxu0 0
  %1626 = vmatpush1.bf16.msra.mxu0 %v1412
  %1627 = vmatprep.subr.bf16.mxu0 0
  %1628 = vmatpush1.bf16.msra.mxu0 %v1413
  %1629 = vmatprep.subr.bf16.mxu0 0
  %1630 = vmatpush1.bf16.msra.mxu0 %v1414
  %1631 = vmatprep.subr.bf16.mxu0 0
  %1632 = vmatpush1.bf16.msra.mxu0 %v1415
  %1633 = vmatprep.subr.bf16.mxu0 0
  %1634 = vmatpush1.bf16.msra.mxu0 %v1416
  %1635 = vmatprep.subr.bf16.mxu0 0
  %1636 = vmatpush1.bf16.msra.mxu0 %v1417
  %1637 = vmatprep.subr.bf16.mxu0 0
  %1638 = vmatpush1.bf16.msra.mxu0 %v1418
  %1639 = vmatprep.subr.bf16.mxu0 0
  %1640 = vmatpush1.bf16.msra.mxu0 %v1419
  %1641 = vmatprep.subr.bf16.mxu0 0
  %1642 = vmatpush1.bf16.msra.mxu0 %v1420
  %1643 = vmatprep.subr.bf16.mxu0 0
  %1644 = vmatpush1.bf16.msra.mxu0 %v1421
  %1645 = vmatprep.subr.bf16.mxu0 0
  %1646 = vmatpush1.bf16.msra.mxu0 %v1422
  %1647 = vmatprep.subr.bf16.mxu0 0
  %1648 = vmatpush1.bf16.msra.mxu0 %v1423
  %1649 = vmatprep.mubr.bf16.mxu0 %v940
  %1650 = vmatmul.mubr.bf16.gmra.mrb[0].mxu0 %v939
  %v1651 = vpop.f32.mrb[0].mxu0
  %v1652 = vadd.f32 %v1555, %v1651
  %v1653 = vpop.f32.mrb[0].mxu0
  %v1654 = vpop.f32.mrb[0].mxu0
  %v1655 = vadd.f32 %v1558, %v1654
  %v1656 = vpop.f32.mrb[0].mxu0
  %1657 = vmatprep.mubr.bf16.mxu0 %v948
  %1658 = vmatmul.mubr.bf16.gmra.mrb[0].mxu0 %v947
  %v1659 = vpop.f32.mrb[0].mxu0
  %v1660 = vadd.f32 %v1563, %v1659
  %v1661 = vpop.f32.mrb[0].mxu0
  %v1662 = vpop.f32.mrb[0].mxu0
  %v1663 = vadd.f32 %v1566, %v1662
  %v1664 = vpop.f32.mrb[0].mxu0
  %1665 = vmatprep.mubr.bf16.mxu0 %v956
  %1666 = vmatmul.mubr.bf16.gmra.mrb[0].mxu0 %v955
  %v1667 = vpop.f32.mrb[0].mxu0
  %v1668 = vadd.f32 %v1571, %v1667
  %v1669 = vpop.f32.mrb[0].mxu0
  %v1670 = vpop.f32.mrb[0].mxu0
  %v1671 = vadd.f32 %v1574, %v1670
  %v1672 = vpop.f32.mrb[0].mxu0
  %1673 = vmatprep.mubr.bf16.mxu0 %v964
  %1674 = vmatmul.mubr.bf16.gmra.mrb[0].mxu0 %v963
  %v1675 = vpop.f32.mrb[0].mxu0
  %v1676 = vadd.f32 %v1579, %v1675
  %v1677 = vpop.f32.mrb[0].mxu0
  %v1678 = vpop.f32.mrb[0].mxu0
  %v1679 = vadd.f32 %v1582, %v1678
  %v1680 = vpop.f32.mrb[0].mxu0
  %1681 = vmatprep.mubr.bf16.mxu0 %v972
  %1682 = vmatmul.mubr.bf16.gmra.mrb[0].mxu0 %v971
  %v1683 = vpop.f32.mrb[0].mxu0
  %v1684 = vadd.f32 %v1587, %v1683
  %v1685 = vpop.f32.mrb[0].mxu0
  %v1686 = vpop.f32.mrb[0].mxu0
  %v1687 = vadd.f32 %v1590, %v1686
  %v1688 = vpop.f32.mrb[0].mxu0
  %1689 = vmatprep.mubr.bf16.mxu0 %v980
  %1690 = vmatmul.mubr.bf16.gmra.mrb[0].mxu0 %v979
  %v1691 = vpop.f32.mrb[0].mxu0
  %v1692 = vadd.f32 %v1595, %v1691
  %v1693 = vpop.f32.mrb[0].mxu0
  %v1694 = vpop.f32.mrb[0].mxu0
  %v1695 = vadd.f32 %v1598, %v1694
  %v1696 = vpop.f32.mrb[0].mxu0
  %1697 = vmatprep.mubr.bf16.mxu0 %v988
  %1698 = vmatmul.mubr.bf16.gmra.mrb[0].mxu0 %v987
  %v1699 = vpop.f32.mrb[0].mxu0
  %v1700 = vadd.f32 %v1603, %v1699
  %v1701 = vpop.f32.mrb[0].mxu0
  %v1702 = vpop.f32.mrb[0].mxu0
  %v1703 = vadd.f32 %v1606, %v1702
  %v1704 = vpop.f32.mrb[0].mxu0
  %1705 = vmatprep.mubr.bf16.mxu0 %v996
  %1706 = vmatmul.mubr.bf16.gmra.mrb[0].mxu0 %v995
  %v1707 = vpop.f32.mrb[0].mxu0
  %v1708 = vadd.f32 %v1611, %v1707
  %v1709 = vpop.f32.mrb[0].mxu0
  %v1710 = vpop.f32.mrb[0].mxu0
  %v1711 = vadd.f32 %v1614, %v1710
  %v1712 = vpop.f32.mrb[0].mxu0
  %1713 = vdwg.mxu0
  %1714 = vmatprep.subr.bf16.mxu0 0
  %1715 = vmatpush1.bf16.msra.mxu0 %v1424
  %1716 = vmatprep.subr.bf16.mxu0 0
  %1717 = vmatpush1.bf16.msra.mxu0 %v1425
  %1718 = vmatprep.subr.bf16.mxu0 0
  %1719 = vmatpush1.bf16.msra.mxu0 %v1426
  %1720 = vmatprep.subr.bf16.mxu0 0
  %1721 = vmatpush1.bf16.msra.mxu0 %v1427
  %1722 = vmatprep.subr.bf16.mxu0 0
  %1723 = vmatpush1.bf16.msra.mxu0 %v1428
  %1724 = vmatprep.subr.bf16.mxu0 0
  %1725 = vmatpush1.bf16.msra.mxu0 %v1429
  %1726 = vmatprep.subr.bf16.mxu0 0
  %1727 = vmatpush1.bf16.msra.mxu0 %v1430
  %1728 = vmatprep.subr.bf16.mxu0 0
  %1729 = vmatpush1.bf16.msra.mxu0 %v1431
  %1730 = vmatprep.subr.bf16.mxu0 0
  %1731 = vmatpush1.bf16.msra.mxu0 %v1432
  %1732 = vmatprep.subr.bf16.mxu0 0
  %1733 = vmatpush1.bf16.msra.mxu0 %v1433
  %1734 = vmatprep.subr.bf16.mxu0 0
  %1735 = vmatpush1.bf16.msra.mxu0 %v1434
  %1736 = vmatprep.subr.bf16.mxu0 0
  %1737 = vmatpush1.bf16.msra.mxu0 %v1435
  %1738 = vmatprep.subr.bf16.mxu0 0
  %1739 = vmatpush1.bf16.msra.mxu0 %v1436
  %1740 = vmatprep.subr.bf16.mxu0 0
  %1741 = vmatpush1.bf16.msra.mxu0 %v1437
  %1742 = vmatprep.subr.bf16.mxu0 0
  %1743 = vmatpush1.bf16.msra.mxu0 %v1438
  %1744 = vmatprep.subr.bf16.mxu0 0
  %1745 = vmatpush1.bf16.msra.mxu0 %v1439
  %1746 = vmatprep.mubr.bf16.mxu0 %v942
  %1747 = vmatmul.mubr.bf16.gmra.mrb[0].mxu0 %v941
  %v1748 = vpop.f32.mrb[0].mxu0
  %v1749 = vadd.f32 %v1652, %v1748
  %v1750 = vpop.f32.mrb[0].mxu0
  %v1751 = vpop.f32.mrb[0].mxu0
  %v1752 = vadd.f32 %v1655, %v1751
  %v1753 = vpop.f32.mrb[0].mxu0
  %1754 = vmatprep.mubr.bf16.mxu0 %v950
  %1755 = vmatmul.mubr.bf16.gmra.mrb[0].mxu0 %v949
  %v1756 = vpop.f32.mrb[0].mxu0
  %v1757 = vadd.f32 %v1660, %v1756
  %v1758 = vpop.f32.mrb[0].mxu0
  %v1759 = vpop.f32.mrb[0].mxu0
  %v1760 = vadd.f32 %v1663, %v1759
  %v1761 = vpop.f32.mrb[0].mxu0
  %1762 = vmatprep.mubr.bf16.mxu0 %v958
  %1763 = vmatmul.mubr.bf16.gmra.mrb[0].mxu0 %v957
  %v1764 = vpop.f32.mrb[0].mxu0
  %v1765 = vadd.f32 %v1668, %v1764
  %v1766 = vpop.f32.mrb[0].mxu0
  %v1767 = vpop.f32.mrb[0].mxu0
  %v1768 = vadd.f32 %v1671, %v1767
  %v1769 = vpop.f32.mrb[0].mxu0
  %1770 = vmatprep.mubr.bf16.mxu0 %v966
  %1771 = vmatmul.mubr.bf16.gmra.mrb[0].mxu0 %v965
  %v1772 = vpop.f32.mrb[0].mxu0
  %v1773 = vadd.f32 %v1676, %v1772
  %v1774 = vpop.f32.mrb[0].mxu0
  %v1775 = vpop.f32.mrb[0].mxu0
  %v1776 = vadd.f32 %v1679, %v1775
  %v1777 = vpop.f32.mrb[0].mxu0
  %1778 = vmatprep.mubr.bf16.mxu0 %v974
  %1779 = vmatmul.mubr.bf16.gmra.mrb[0].mxu0 %v973
  %v1780 = vpop.f32.mrb[0].mxu0
  %v1781 = vadd.f32 %v1684, %v1780
  %v1782 = vpop.f32.mrb[0].mxu0
  %v1783 = vpop.f32.mrb[0].mxu0
  %v1784 = vadd.f32 %v1687, %v1783
  %v1785 = vpop.f32.mrb[0].mxu0
  %1786 = vmatprep.mubr.bf16.mxu0 %v982
  %1787 = vmatmul.mubr.bf16.gmra.mrb[0].mxu0 %v981
  %v1788 = vpop.f32.mrb[0].mxu0
  %v1789 = vadd.f32 %v1692, %v1788
  %v1790 = vpop.f32.mrb[0].mxu0
  %v1791 = vpop.f32.mrb[0].mxu0
  %v1792 = vadd.f32 %v1695, %v1791
  %v1793 = vpop.f32.mrb[0].mxu0
  %1794 = vmatprep.mubr.bf16.mxu0 %v990
  %1795 = vmatmul.mubr.bf16.gmra.mrb[0].mxu0 %v989
  %v1796 = vpop.f32.mrb[0].mxu0
  %v1797 = vadd.f32 %v1700, %v1796
  %v1798 = vpop.f32.mrb[0].mxu0
  %v1799 = vpop.f32.mrb[0].mxu0
  %v1800 = vadd.f32 %v1703, %v1799
  %v1801 = vpop.f32.mrb[0].mxu0
  %1802 = vmatprep.mubr.bf16.mxu0 %v998
  %1803 = vmatmul.mubr.bf16.gmra.mrb[0].mxu0 %v997
  %v1804 = vpop.f32.mrb[0].mxu0
  %v1805 = vadd.f32 %v1708, %v1804
  %v1806 = vpop.f32.mrb[0].mxu0
  %v1807 = vpop.f32.mrb[0].mxu0
  %v1808 = vadd.f32 %v1711, %v1807
  %v1809 = vpop.f32.mrb[0].mxu0
  %1810 = vdwg.mxu0
  %1811 = vmatprep.subr.bf16.mxu0 0
  %1812 = vmatpush1.bf16.msra.mxu0 %v1440
  %1813 = vmatprep.subr.bf16.mxu0 0
  %1814 = vmatpush1.bf16.msra.mxu0 %v1441
  %1815 = vmatprep.subr.bf16.mxu0 0
  %1816 = vmatpush1.bf16.msra.mxu0 %v1442
  %1817 = vmatprep.subr.bf16.mxu0 0
  %1818 = vmatpush1.bf16.msra.mxu0 %v1443
  %1819 = vmatprep.subr.bf16.mxu0 0
  %1820 = vmatpush1.bf16.msra.mxu0 %v1444
  %1821 = vmatprep.subr.bf16.mxu0 0
  %1822 = vmatpush1.bf16.msra.mxu0 %v1445
  %1823 = vmatprep.subr.bf16.mxu0 0
  %1824 = vmatpush1.bf16.msra.mxu0 %v1446
  %1825 = vmatprep.subr.bf16.mxu0 0
  %1826 = vmatpush1.bf16.msra.mxu0 %v1447
  %1827 = vmatprep.subr.bf16.mxu0 0
  %1828 = vmatpush1.bf16.msra.mxu0 %v1448
  %1829 = vmatprep.subr.bf16.mxu0 0
  %1830 = vmatpush1.bf16.msra.mxu0 %v1449
  %1831 = vmatprep.subr.bf16.mxu0 0
  %1832 = vmatpush1.bf16.msra.mxu0 %v1450
  %1833 = vmatprep.subr.bf16.mxu0 0
  %1834 = vmatpush1.bf16.msra.mxu0 %v1451
  %1835 = vmatprep.subr.bf16.mxu0 0
  %1836 = vmatpush1.bf16.msra.mxu0 %v1452
  %1837 = vmatprep.subr.bf16.mxu0 0
  %1838 = vmatpush1.bf16.msra.mxu0 %v1453
  %1839 = vmatprep.subr.bf16.mxu0 0
  %1840 = vmatpush1.bf16.msra.mxu0 %v1454
  %1841 = vmatprep.subr.bf16.mxu0 0
  %1842 = vmatpush1.bf16.msra.mxu0 %v1455
  %1843 = vmatprep.mubr.bf16.mxu0 %v944
  %1844 = vmatmul.mubr.bf16.gmra.mrb[0].mxu0 %v943
  %v1845 = vpop.f32.mrb[0].mxu0
  %v1846 = vadd.f32 %v1749, %v1845
  %v1847 = vpop.f32.mrb[0].mxu0
  %v1848 = vpop.f32.mrb[0].mxu0
  %v1849 = vadd.f32 %v1752, %v1848
  %v1850 = vpop.f32.mrb[0].mxu0
  %1851 = vmatprep.mubr.bf16.mxu0 %v952
  %1852 = vmatmul.mubr.bf16.gmra.mrb[0].mxu0 %v951
  %v1853 = vpop.f32.mrb[0].mxu0
  %v1854 = vadd.f32 %v1757, %v1853
  %v1855 = vpop.f32.mrb[0].mxu0
  %v1856 = vpop.f32.mrb[0].mxu0
  %v1857 = vadd.f32 %v1760, %v1856
  %v1858 = vpop.f32.mrb[0].mxu0
  %1859 = vmatprep.mubr.bf16.mxu0 %v960
  %1860 = vmatmul.mubr.bf16.gmra.mrb[0].mxu0 %v959
  %v1861 = vpop.f32.mrb[0].mxu0
  %v1862 = vadd.f32 %v1765, %v1861
  %v1863 = vpop.f32.mrb[0].mxu0
  %v1864 = vpop.f32.mrb[0].mxu0
  %v1865 = vadd.f32 %v1768, %v1864
  %v1866 = vpop.f32.mrb[0].mxu0
  %1867 = vmatprep.mubr.bf16.mxu0 %v968
  %1868 = vmatmul.mubr.bf16.gmra.mrb[0].mxu0 %v967
  %v1869 = vpop.f32.mrb[0].mxu0
  %v1870 = vadd.f32 %v1773, %v1869
  %v1871 = vpop.f32.mrb[0].mxu0
  %v1872 = vpop.f32.mrb[0].mxu0
  %v1873 = vadd.f32 %v1776, %v1872
  %v1874 = vpop.f32.mrb[0].mxu0
  %1875 = vmatprep.mubr.bf16.mxu0 %v976
  %1876 = vmatmul.mubr.bf16.gmra.mrb[0].mxu0 %v975
  %v1877 = vpop.f32.mrb[0].mxu0
  %v1878 = vadd.f32 %v1781, %v1877
  %v1879 = vpop.f32.mrb[0].mxu0
  %v1880 = vpop.f32.mrb[0].mxu0
  %v1881 = vadd.f32 %v1784, %v1880
  %v1882 = vpop.f32.mrb[0].mxu0
  %1883 = vmatprep.mubr.bf16.mxu0 %v984
  %1884 = vmatmul.mubr.bf16.gmra.mrb[0].mxu0 %v983
  %v1885 = vpop.f32.mrb[0].mxu0
  %v1886 = vadd.f32 %v1789, %v1885
  %v1887 = vpop.f32.mrb[0].mxu0
  %v1888 = vpop.f32.mrb[0].mxu0
  %v1889 = vadd.f32 %v1792, %v1888
  %v1890 = vpop.f32.mrb[0].mxu0
  %1891 = vmatprep.mubr.bf16.mxu0 %v992
  %1892 = vmatmul.mubr.bf16.gmra.mrb[0].mxu0 %v991
  %v1893 = vpop.f32.mrb[0].mxu0
  %v1894 = vadd.f32 %v1797, %v1893
  %v1895 = vpop.f32.mrb[0].mxu0
  %v1896 = vpop.f32.mrb[0].mxu0
  %v1897 = vadd.f32 %v1800, %v1896
  %v1898 = vpop.f32.mrb[0].mxu0
  %1899 = vmatprep.mubr.bf16.mxu0 %v1000
  %1900 = vmatmul.mubr.bf16.gmra.mrb[0].mxu0 %v999
  %v1901 = vpop.f32.mrb[0].mxu0
  %v1902 = vadd.f32 %v1805, %v1901
  %v1903 = vpop.f32.mrb[0].mxu0
  %v1904 = vpop.f32.mrb[0].mxu0
  %v1905 = vadd.f32 %v1808, %v1904
  %v1906 = vpop.f32.mrb[0].mxu0
  %1907 = vdwg.mxu0
  %v1908 = vpack.c.bf16 %v1849, %v1846
  %v1909 = vpack.c.bf16 %v1857, %v1854
  %v1910 = vpack.c.bf16 %v1865, %v1862
  %v1911 = vpack.c.bf16 %v1873, %v1870
  %v1912 = vpack.c.bf16 %v1881, %v1878
  %v1913 = vpack.c.bf16 %v1889, %v1886
  %v1914 = vpack.c.bf16 %v1897, %v1894
  %v1915 = vpack.c.bf16 %v1905, %v1902
  %v1924 = vunpack.c.l.b16 %v1908
  %v1925 = vunpack.c.h.b16 %v1908
  %v1926 = vunpack.c.l.b16 %v1909
  %v1927 = vunpack.c.h.b16 %v1909
  %v1928 = vunpack.c.l.b16 %v1910
  %v1929 = vunpack.c.h.b16 %v1910
  %v1930 = vunpack.c.l.b16 %v1911
  %v1931 = vunpack.c.h.b16 %v1911
  %v1932 = vunpack.c.l.b16 %v1912
  %v1933 = vunpack.c.h.b16 %v1912
  %v1934 = vunpack.c.l.b16 %v1913
  %v1935 = vunpack.c.h.b16 %v1913
  %v1936 = vunpack.c.l.b16 %v1914
  %v1937 = vunpack.c.h.b16 %v1914
  %v1938 = vunpack.c.l.b16 %v1915
  %v1939 = vunpack.c.h.b16 %v1915
  %v1940 = vpack.c.b16 %v1924, %v1924
  %v1941 = vpack.c.b16 %v1925, %v1925
  %v1942 = vpack.c.b16 %v1926, %v1926
  %v1943 = vpack.c.b16 %v1927, %v1927
  %v1944 = vpack.c.b16 %v1928, %v1928
  %v1945 = vpack.c.b16 %v1929, %v1929
  %v1946 = vpack.c.b16 %v1930, %v1930
  %v1947 = vpack.c.b16 %v1931, %v1931
  %v1948 = vpack.c.b16 %v1932, %v1932
  %v1949 = vpack.c.b16 %v1933, %v1933
  %v1950 = vpack.c.b16 %v1934, %v1934
  %v1951 = vpack.c.b16 %v1935, %v1935
  %v1952 = vpack.c.b16 %v1936, %v1936
  %v1953 = vpack.c.b16 %v1937, %v1937
  %v1954 = vpack.c.b16 %v1938, %v1938
  %v1955 = vpack.c.b16 %v1939, %v1939
  %1972 = vst [vmem:[%s5] sm:$0xf] %v1940
  %1973 = vst [vmem:[%s5 + $0x4] sm:$0xf] %v1941
  %1974 = vst [vmem:[%s5 + $0x8] sm:$0xf] %v1942
  %1975 = vst [vmem:[%s5 + $0xc] sm:$0xf] %v1943
  %1976 = vst [vmem:[%s5 + $0x10] sm:$0xf] %v1944
  %1977 = vst [vmem:[%s5 + $0x14] sm:$0xf] %v1945
  %1978 = vst [vmem:[%s5 + $0x18] sm:$0xf] %v1946
  %1979 = vst [vmem:[%s5 + $0x1c] sm:$0xf] %v1947
  %1980 = vst [vmem:[%s5 + $0x20] sm:$0xf] %v1948
  %1981 = vst [vmem:[%s5 + $0x24] sm:$0xf] %v1949
  %1982 = vst [vmem:[%s5 + $0x28] sm:$0xf] %v1950
  %1983 = vst [vmem:[%s5 + $0x2c] sm:$0xf] %v1951
  %1984 = vst [vmem:[%s5 + $0x30] sm:$0xf] %v1952
  %1985 = vst [vmem:[%s5 + $0x34] sm:$0xf] %v1953
  %1986 = vst [vmem:[%s5 + $0x38] sm:$0xf] %v1954
  %1987 = vst [vmem:[%s5 + $0x3c] sm:$0xf] %v1955
  // Predicated region
  $region22: #{unet_generator_forward.14} parent=0 // pred_check
    _
  $region23: #{unet_generator_forward.14} parent=0 // pred_check_branch
    %1989 = sbr.rel (0) target = $region25
  $region24: #{unet_generator_forward.14} parent=0 // pred_region
    _
  $region25: #{unet_generator_forward.14} parent=0 // pred_fallthru
    _
  // Predicated region
  $region26: #{unet_generator_forward.14} parent=0 // pred_check
    _
  $region27: #{unet_generator_forward.14} parent=0 // pred_check_branch
    %1991 = sbr.rel (0) target = $region29
  $region28: #{unet_generator_forward.14} parent=0 // pred_region
    _
  $region29: #{unet_generator_forward.14} parent=0 // pred_fallthru
    _

// kernel: unet_generator_forward.15
$region0: #{unet_generator_forward.15}
  #allocation0 [shape = 'u32[]', space=smem, size = 0x4, offset = 0x4, fixed_abs, tag = 'smem constant byte address 0x4 - core index']
  #allocation1 [shape = 'u32[144,128]{1,0:T(1,128)}', space=vmem, size = 0x12000, scoped, tag = 'internal scratch']
  %s0 = inlined_call_operand.vmem [shape: bf16[128,576], index: 0, kind: input, shape index: {}]
  %s1 = inlined_call_operand.vmem [shape: bf16[576,256], index: 1, kind: input, shape index: {}]
  %s2 = inlined_call_operand.vmem [shape: f32[1,256], index: 2, kind: input, shape index: {}]
  %s3 = inlined_call_operand.vmem [shape: bf16[128,256], index: 3, kind: output, shape index: {0}]
  %s4 = inlined_call_operand.vmem [shape: f32[1,8,256], index: 4, kind: output, shape index: {1}]
  %5 = xla_tuple %s3, %s4
  %s6 = sld [smem:[#allocation0]]
  $region30: #{unet_generator_forward.15} parent=0
    _
  %s8 = ssub.s32 1, %s6
  %s9 = scalar_select 0, %s8, %s6
  // Predicated region
  $region2: #{unet_generator_forward.15} parent=0 // pred_check
    _
  $region3: #{unet_generator_forward.15} parent=0 // pred_check_branch
    %11 = sbr.rel (0) target = $region5
  $region4: #{unet_generator_forward.15} parent=0 // pred_region
    _
  $region5: #{unet_generator_forward.15} parent=0 // pred_fallthru
    _
  // Predicated region
  $region6: #{unet_generator_forward.15} parent=0 // pred_check
    _
  $region7: #{unet_generator_forward.15} parent=0 // pred_check_branch
    %13 = sbr.rel (0) target = $region9
  $region8: #{unet_generator_forward.15} parent=0 // pred_region
    _
  $region9: #{unet_generator_forward.15} parent=0 // pred_fallthru
    _
  // Predicated region
  $region10: #{unet_generator_forward.15} parent=0 // pred_check
    _
  $region11: #{unet_generator_forward.15} parent=0 // pred_check_branch
    %15 = sbr.rel (0) target = $region13
  $region12: #{unet_generator_forward.15} parent=0 // pred_region
    _
  $region13: #{unet_generator_forward.15} parent=0 // pred_fallthru
    _
  %v17 = vld [vmem:[%s0] sm:$0xff]
  %v18 = vld [vmem:[%s0 + $0x8] sm:$0xff]
  %v19 = vld [vmem:[%s0 + $0x10] sm:$0xf]
  %v20 = vld [vmem:[%s0 + $0x14] sm:$0xff]
  %v21 = vld [vmem:[%s0 + $0x1c] sm:$0xff]
  %v22 = vld [vmem:[%s0 + $0x24] sm:$0xf]
  %v23 = vld [vmem:[%s0 + $0x28] sm:$0xff]
  %v24 = vld [vmem:[%s0 + $0x30] sm:$0xff]
  %v25 = vld [vmem:[%s0 + $0x38] sm:$0xf]
  %v26 = vld [vmem:[%s0 + $0x3c] sm:$0xff]
  %v27 = vld [vmem:[%s0 + $0x44] sm:$0xff]
  %v28 = vld [vmem:[%s0 + $0x4c] sm:$0xf]
  %v29 = vld [vmem:[%s0 + $0x50] sm:$0xff]
  %v30 = vld [vmem:[%s0 + $0x58] sm:$0xff]
  %v31 = vld [vmem:[%s0 + $0x60] sm:$0xf]
  %v32 = vld [vmem:[%s0 + $0x64] sm:$0xff]
  %v33 = vld [vmem:[%s0 + $0x6c] sm:$0xff]
  %v34 = vld [vmem:[%s0 + $0x74] sm:$0xf]
  %v35 = vld [vmem:[%s0 + $0x78] sm:$0xff]
  %v36 = vld [vmem:[%s0 + $0x80] sm:$0xff]
  %v37 = vld [vmem:[%s0 + $0x88] sm:$0xf]
  %v38 = vld [vmem:[%s0 + $0x8c] sm:$0xff]
  %v39 = vld [vmem:[%s0 + $0x94] sm:$0xff]
  %v40 = vld [vmem:[%s0 + $0x9c] sm:$0xf]
  %v41 = vld [vmem:[%s0 + $0xa0] sm:$0xff]
  %v42 = vld [vmem:[%s0 + $0xa8] sm:$0xff]
  %v43 = vld [vmem:[%s0 + $0xb0] sm:$0xf]
  %v44 = vld [vmem:[%s0 + $0xb4] sm:$0xff]
  %v45 = vld [vmem:[%s0 + $0xbc] sm:$0xff]
  %v46 = vld [vmem:[%s0 + $0xc4] sm:$0xf]
  %v47 = vld [vmem:[%s0 + $0xc8] sm:$0xff]
  %v48 = vld [vmem:[%s0 + $0xd0] sm:$0xff]
  %v49 = vld [vmem:[%s0 + $0xd8] sm:$0xf]
  %v50 = vld [vmem:[%s0 + $0xdc] sm:$0xff]
  %v51 = vld [vmem:[%s0 + $0xe4] sm:$0xff]
  %v52 = vld [vmem:[%s0 + $0xec] sm:$0xf]
  %v53 = vld [vmem:[%s0 + $0xf0] sm:$0xff]
  %v54 = vld [vmem:[%s0 + $0xf8] sm:$0xff]
  %v55 = vld [vmem:[%s0 + $0x100] sm:$0xf]
  %v56 = vld [vmem:[%s0 + $0x104] sm:$0xff]
  %v57 = vld [vmem:[%s0 + $0x10c] sm:$0xff]
  %v58 = vld [vmem:[%s0 + $0x114] sm:$0xf]
  %v59 = vld [vmem:[%s0 + $0x118] sm:$0xff]
  %v60 = vld [vmem:[%s0 + $0x120] sm:$0xff]
  %v61 = vld [vmem:[%s0 + $0x128] sm:$0xf]
  %v62 = vld [vmem:[%s0 + $0x12c] sm:$0xff]
  %v63 = vld [vmem:[%s0 + $0x134] sm:$0xff]
  %v64 = vld [vmem:[%s0 + $0x13c] sm:$0xf]
  %v65 = vunpack.c.l.bf16 %v17
  %v66 = vunpack.c.h.bf16 %v17
  %v67 = vunpack.c.l.bf16 %v18
  %v68 = vunpack.c.h.bf16 %v18
  %v69 = vunpack.c.l.bf16 %v19
  %v70 = vunpack.c.l.bf16 %v20
  %v71 = vunpack.c.h.bf16 %v20
  %v72 = vunpack.c.l.bf16 %v21
  %v73 = vunpack.c.h.bf16 %v21
  %v74 = vunpack.c.l.bf16 %v22
  %v75 = vunpack.c.l.bf16 %v23
  %v76 = vunpack.c.h.bf16 %v23
  %v77 = vunpack.c.l.bf16 %v24
  %v78 = vunpack.c.h.bf16 %v24
  %v79 = vunpack.c.l.bf16 %v25
  %v80 = vunpack.c.l.bf16 %v26
  %v81 = vunpack.c.h.bf16 %v26
  %v82 = vunpack.c.l.bf16 %v27
  %v83 = vunpack.c.h.bf16 %v27
  %v84 = vunpack.c.l.bf16 %v28
  %v85 = vunpack.c.l.bf16 %v29
  %v86 = vunpack.c.h.bf16 %v29
  %v87 = vunpack.c.l.bf16 %v30
  %v88 = vunpack.c.h.bf16 %v30
  %v89 = vunpack.c.l.bf16 %v31
  %v90 = vunpack.c.l.bf16 %v32
  %v91 = vunpack.c.h.bf16 %v32
  %v92 = vunpack.c.l.bf16 %v33
  %v93 = vunpack.c.h.bf16 %v33
  %v94 = vunpack.c.l.bf16 %v34
  %v95 = vunpack.c.l.bf16 %v35
  %v96 = vunpack.c.h.bf16 %v35
  %v97 = vunpack.c.l.bf16 %v36
  %v98 = vunpack.c.h.bf16 %v36
  %v99 = vunpack.c.l.bf16 %v37
  %v100 = vunpack.c.l.bf16 %v38
  %v101 = vunpack.c.h.bf16 %v38
  %v102 = vunpack.c.l.bf16 %v39
  %v103 = vunpack.c.h.bf16 %v39
  %v104 = vunpack.c.l.bf16 %v40
  %v105 = vunpack.c.l.bf16 %v41
  %v106 = vunpack.c.h.bf16 %v41
  %v107 = vunpack.c.l.bf16 %v42
  %v108 = vunpack.c.h.bf16 %v42
  %v109 = vunpack.c.l.bf16 %v43
  %v110 = vunpack.c.l.bf16 %v44
  %v111 = vunpack.c.h.bf16 %v44
  %v112 = vunpack.c.l.bf16 %v45
  %v113 = vunpack.c.h.bf16 %v45
  %v114 = vunpack.c.l.bf16 %v46
  %v115 = vunpack.c.l.bf16 %v47
  %v116 = vunpack.c.h.bf16 %v47
  %v117 = vunpack.c.l.bf16 %v48
  %v118 = vunpack.c.h.bf16 %v48
  %v119 = vunpack.c.l.bf16 %v49
  %v120 = vunpack.c.l.bf16 %v50
  %v121 = vunpack.c.h.bf16 %v50
  %v122 = vunpack.c.l.bf16 %v51
  %v123 = vunpack.c.h.bf16 %v51
  %v124 = vunpack.c.l.bf16 %v52
  %v125 = vunpack.c.l.bf16 %v53
  %v126 = vunpack.c.h.bf16 %v53
  %v127 = vunpack.c.l.bf16 %v54
  %v128 = vunpack.c.h.bf16 %v54
  %v129 = vunpack.c.l.bf16 %v55
  %v130 = vunpack.c.l.bf16 %v56
  %v131 = vunpack.c.h.bf16 %v56
  %v132 = vunpack.c.l.bf16 %v57
  %v133 = vunpack.c.h.bf16 %v57
  %v134 = vunpack.c.l.bf16 %v58
  %v135 = vunpack.c.l.bf16 %v59
  %v136 = vunpack.c.h.bf16 %v59
  %v137 = vunpack.c.l.bf16 %v60
  %v138 = vunpack.c.h.bf16 %v60
  %v139 = vunpack.c.l.bf16 %v61
  %v140 = vunpack.c.l.bf16 %v62
  %v141 = vunpack.c.h.bf16 %v62
  %v142 = vunpack.c.l.bf16 %v63
  %v143 = vunpack.c.h.bf16 %v63
  %v144 = vunpack.c.l.bf16 %v64
  %v145 = vmax.f32 %v65, 0.0
  %v146 = vmax.f32 %v66, 0.0
  %v147 = vmax.f32 %v67, 0.0
  %v148 = vmax.f32 %v68, 0.0
  %v149 = vmax.f32 %v69, 0.0
  %v150 = vmax.f32 %v70, 0.0
  %v151 = vmax.f32 %v71, 0.0
  %v152 = vmax.f32 %v72, 0.0
  %v153 = vmax.f32 %v73, 0.0
  %v154 = vmax.f32 %v74, 0.0
  %v155 = vmax.f32 %v75, 0.0
  %v156 = vmax.f32 %v76, 0.0
  %v157 = vmax.f32 %v77, 0.0
  %v158 = vmax.f32 %v78, 0.0
  %v159 = vmax.f32 %v79, 0.0
  %v160 = vmax.f32 %v80, 0.0
  %v161 = vmax.f32 %v81, 0.0
  %v162 = vmax.f32 %v82, 0.0
  %v163 = vmax.f32 %v83, 0.0
  %v164 = vmax.f32 %v84, 0.0
  %v165 = vmax.f32 %v85, 0.0
  %v166 = vmax.f32 %v86, 0.0
  %v167 = vmax.f32 %v87, 0.0
  %v168 = vmax.f32 %v88, 0.0
  %v169 = vmax.f32 %v89, 0.0
  %v170 = vmax.f32 %v90, 0.0
  %v171 = vmax.f32 %v91, 0.0
  %v172 = vmax.f32 %v92, 0.0
  %v173 = vmax.f32 %v93, 0.0
  %v174 = vmax.f32 %v94, 0.0
  %v175 = vmax.f32 %v95, 0.0
  %v176 = vmax.f32 %v96, 0.0
  %v177 = vmax.f32 %v97, 0.0
  %v178 = vmax.f32 %v98, 0.0
  %v179 = vmax.f32 %v99, 0.0
  %v180 = vmax.f32 %v100, 0.0
  %v181 = vmax.f32 %v101, 0.0
  %v182 = vmax.f32 %v102, 0.0
  %v183 = vmax.f32 %v103, 0.0
  %v184 = vmax.f32 %v104, 0.0
  %v185 = vmax.f32 %v105, 0.0
  %v186 = vmax.f32 %v106, 0.0
  %v187 = vmax.f32 %v107, 0.0
  %v188 = vmax.f32 %v108, 0.0
  %v189 = vmax.f32 %v109, 0.0
  %v190 = vmax.f32 %v110, 0.0
  %v191 = vmax.f32 %v111, 0.0
  %v192 = vmax.f32 %v112, 0.0
  %v193 = vmax.f32 %v113, 0.0
  %v194 = vmax.f32 %v114, 0.0
  %v195 = vmax.f32 %v115, 0.0
  %v196 = vmax.f32 %v116, 0.0
  %v197 = vmax.f32 %v117, 0.0
  %v198 = vmax.f32 %v118, 0.0
  %v199 = vmax.f32 %v119, 0.0
  %v200 = vmax.f32 %v120, 0.0
  %v201 = vmax.f32 %v121, 0.0
  %v202 = vmax.f32 %v122, 0.0
  %v203 = vmax.f32 %v123, 0.0
  %v204 = vmax.f32 %v124, 0.0
  %v205 = vmax.f32 %v125, 0.0
  %v206 = vmax.f32 %v126, 0.0
  %v207 = vmax.f32 %v127, 0.0
  %v208 = vmax.f32 %v128, 0.0
  %v209 = vmax.f32 %v129, 0.0
  %v210 = vmax.f32 %v130, 0.0
  %v211 = vmax.f32 %v131, 0.0
  %v212 = vmax.f32 %v132, 0.0
  %v213 = vmax.f32 %v133, 0.0
  %v214 = vmax.f32 %v134, 0.0
  %v215 = vmax.f32 %v135, 0.0
  %v216 = vmax.f32 %v136, 0.0
  %v217 = vmax.f32 %v137, 0.0
  %v218 = vmax.f32 %v138, 0.0
  %v219 = vmax.f32 %v139, 0.0
  %v220 = vmax.f32 %v140, 0.0
  %v221 = vmax.f32 %v141, 0.0
  %v222 = vmax.f32 %v142, 0.0
  %v223 = vmax.f32 %v143, 0.0
  %v224 = vmax.f32 %v144, 0.0
  %v225 = vpack.c.bf16 %v150, %v145
  %v226 = vpack.c.bf16 %v151, %v146
  %v227 = vpack.c.bf16 %v152, %v147
  %v228 = vpack.c.bf16 %v153, %v148
  %v229 = vpack.c.bf16 %v154, %v149
  %v230 = vpack.c.bf16 %v160, %v155
  %v231 = vpack.c.bf16 %v161, %v156
  %v232 = vpack.c.bf16 %v162, %v157
  %v233 = vpack.c.bf16 %v163, %v158
  %v234 = vpack.c.bf16 %v164, %v159
  %v235 = vpack.c.bf16 %v170, %v165
  %v236 = vpack.c.bf16 %v171, %v166
  %v237 = vpack.c.bf16 %v172, %v167
  %v238 = vpack.c.bf16 %v173, %v168
  %v239 = vpack.c.bf16 %v174, %v169
  %v240 = vpack.c.bf16 %v180, %v175
  %v241 = vpack.c.bf16 %v181, %v176
  %v242 = vpack.c.bf16 %v182, %v177
  %v243 = vpack.c.bf16 %v183, %v178
  %v244 = vpack.c.bf16 %v184, %v179
  %v245 = vpack.c.bf16 %v190, %v185
  %v246 = vpack.c.bf16 %v191, %v186
  %v247 = vpack.c.bf16 %v192, %v187
  %v248 = vpack.c.bf16 %v193, %v188
  %v249 = vpack.c.bf16 %v194, %v189
  %v250 = vpack.c.bf16 %v200, %v195
  %v251 = vpack.c.bf16 %v201, %v196
  %v252 = vpack.c.bf16 %v202, %v197
  %v253 = vpack.c.bf16 %v203, %v198
  %v254 = vpack.c.bf16 %v204, %v199
  %v255 = vpack.c.bf16 %v210, %v205
  %v256 = vpack.c.bf16 %v211, %v206
  %v257 = vpack.c.bf16 %v212, %v207
  %v258 = vpack.c.bf16 %v213, %v208
  %v259 = vpack.c.bf16 %v214, %v209
  %v260 = vpack.c.bf16 %v220, %v215
  %v261 = vpack.c.bf16 %v221, %v216
  %v262 = vpack.c.bf16 %v222, %v217
  %v263 = vpack.c.bf16 %v223, %v218
  %v264 = vpack.c.bf16 %v224, %v219
  %v265 = vld [vmem:[%s1] sm:$0xff]
  %v266 = vld [vmem:[%s1 + $0x8] sm:$0xff]
  %v267 = vld [vmem:[%s1 + $0x10] sm:$0xff]
  %v268 = vld [vmem:[%s1 + $0x18] sm:$0xff]
  %v269 = vld [vmem:[%s1 + $0x20] sm:$0xff]
  %v270 = vld [vmem:[%s1 + $0x28] sm:$0xff]
  %v271 = vld [vmem:[%s1 + $0x30] sm:$0xff]
  %v272 = vld [vmem:[%s1 + $0x38] sm:$0xff]
  %v273 = vld [vmem:[%s1 + $0x40] sm:$0xff]
  %v274 = vld [vmem:[%s1 + $0x48] sm:$0xff]
  %v275 = vld [vmem:[%s1 + $0x50] sm:$0xff]
  %v276 = vld [vmem:[%s1 + $0x58] sm:$0xff]
  %v277 = vld [vmem:[%s1 + $0x60] sm:$0xff]
  %v278 = vld [vmem:[%s1 + $0x68] sm:$0xff]
  %v279 = vld [vmem:[%s1 + $0x70] sm:$0xff]
  %v280 = vld [vmem:[%s1 + $0x78] sm:$0xff]
  %v281 = vld [vmem:[%s1 + $0x80] sm:$0xff]
  %v282 = vld [vmem:[%s1 + $0x88] sm:$0xff]
  %v283 = vld [vmem:[%s1 + $0x90] sm:$0xff]
  %v284 = vld [vmem:[%s1 + $0x98] sm:$0xff]
  %v285 = vld [vmem:[%s1 + $0xa0] sm:$0xff]
  %v286 = vld [vmem:[%s1 + $0xa8] sm:$0xff]
  %v287 = vld [vmem:[%s1 + $0xb0] sm:$0xff]
  %v288 = vld [vmem:[%s1 + $0xb8] sm:$0xff]
  %v289 = vld [vmem:[%s1 + $0xc0] sm:$0xff]
  %v290 = vld [vmem:[%s1 + $0xc8] sm:$0xff]
  %v291 = vld [vmem:[%s1 + $0xd0] sm:$0xff]
  %v292 = vld [vmem:[%s1 + $0xd8] sm:$0xff]
  %v293 = vld [vmem:[%s1 + $0xe0] sm:$0xff]
  %v294 = vld [vmem:[%s1 + $0xe8] sm:$0xff]
  %v295 = vld [vmem:[%s1 + $0xf0] sm:$0xff]
  %v296 = vld [vmem:[%s1 + $0xf8] sm:$0xff]
  %v297 = vld [vmem:[%s1 + $0x100] sm:$0xff]
  %v298 = vld [vmem:[%s1 + $0x108] sm:$0xff]
  %v299 = vld [vmem:[%s1 + $0x110] sm:$0xff]
  %v300 = vld [vmem:[%s1 + $0x118] sm:$0xff]
  %v301 = vld [vmem:[%s1 + $0x120] sm:$0xff]
  %v302 = vld [vmem:[%s1 + $0x128] sm:$0xff]
  %v303 = vld [vmem:[%s1 + $0x130] sm:$0xff]
  %v304 = vld [vmem:[%s1 + $0x138] sm:$0xff]
  %v305 = vld [vmem:[%s1 + $0x140] sm:$0xff]
  %v306 = vld [vmem:[%s1 + $0x148] sm:$0xff]
  %v307 = vld [vmem:[%s1 + $0x150] sm:$0xff]
  %v308 = vld [vmem:[%s1 + $0x158] sm:$0xff]
  %v309 = vld [vmem:[%s1 + $0x160] sm:$0xff]
  %v310 = vld [vmem:[%s1 + $0x168] sm:$0xff]
  %v311 = vld [vmem:[%s1 + $0x170] sm:$0xff]
  %v312 = vld [vmem:[%s1 + $0x178] sm:$0xff]
  %v313 = vld [vmem:[%s1 + $0x180] sm:$0xff]
  %v314 = vld [vmem:[%s1 + $0x188] sm:$0xff]
  %v315 = vld [vmem:[%s1 + $0x190] sm:$0xff]
  %v316 = vld [vmem:[%s1 + $0x198] sm:$0xff]
  %v317 = vld [vmem:[%s1 + $0x1a0] sm:$0xff]
  %v318 = vld [vmem:[%s1 + $0x1a8] sm:$0xff]
  %v319 = vld [vmem:[%s1 + $0x1b0] sm:$0xff]
  %v320 = vld [vmem:[%s1 + $0x1b8] sm:$0xff]
  %v321 = vld [vmem:[%s1 + $0x1c0] sm:$0xff]
  %v322 = vld [vmem:[%s1 + $0x1c8] sm:$0xff]
  %v323 = vld [vmem:[%s1 + $0x1d0] sm:$0xff]
  %v324 = vld [vmem:[%s1 + $0x1d8] sm:$0xff]
  %v325 = vld [vmem:[%s1 + $0x1e0] sm:$0xff]
  %v326 = vld [vmem:[%s1 + $0x1e8] sm:$0xff]
  %v327 = vld [vmem:[%s1 + $0x1f0] sm:$0xff]
  %v328 = vld [vmem:[%s1 + $0x1f8] sm:$0xff]
  %v329 = vld [vmem:[%s1 + $0x200] sm:$0xff]
  %v330 = vld [vmem:[%s1 + $0x208] sm:$0xff]
  %v331 = vld [vmem:[%s1 + $0x210] sm:$0xff]
  %v332 = vld [vmem:[%s1 + $0x218] sm:$0xff]
  %v333 = vld [vmem:[%s1 + $0x220] sm:$0xff]
  %v334 = vld [vmem:[%s1 + $0x228] sm:$0xff]
  %v335 = vld [vmem:[%s1 + $0x230] sm:$0xff]
  %v336 = vld [vmem:[%s1 + $0x238] sm:$0xff]
  %v337 = vld [vmem:[%s2] sm:$0x3]
  %v339 = vlaneseq
  %v340 = vshrl.u32 %v339, 7
  %v341 = vsub.s32 0, %v340
  %v342 = vrot.slane %v337, %v341
  %v343 = vlaneseq
  %v344 = vshrl.u32 %v343, 7
  %v345 = vsub.s32 1, %v344
  %v346 = vrot.slane %v337, %v345
  %v421 = vunpack.c.l.b16 %v265
  %v422 = vunpack.c.h.b16 %v265
  %v423 = vunpack.c.l.b16 %v266
  %v424 = vunpack.c.h.b16 %v266
  %v425 = vunpack.c.l.b16 %v267
  %v426 = vunpack.c.h.b16 %v267
  %v427 = vunpack.c.l.b16 %v268
  %v428 = vunpack.c.h.b16 %v268
  %v429 = vunpack.c.l.b16 %v269
  %v430 = vunpack.c.h.b16 %v269
  %v431 = vunpack.c.l.b16 %v270
  %v432 = vunpack.c.h.b16 %v270
  %v433 = vunpack.c.l.b16 %v271
  %v434 = vunpack.c.h.b16 %v271
  %v435 = vunpack.c.l.b16 %v272
  %v436 = vunpack.c.h.b16 %v272
  %v437 = vunpack.c.l.b16 %v273
  %v438 = vunpack.c.h.b16 %v273
  %v439 = vunpack.c.l.b16 %v274
  %v440 = vunpack.c.h.b16 %v274
  %v441 = vunpack.c.l.b16 %v275
  %v442 = vunpack.c.h.b16 %v275
  %v443 = vunpack.c.l.b16 %v276
  %v444 = vunpack.c.h.b16 %v276
  %v445 = vunpack.c.l.b16 %v277
  %v446 = vunpack.c.h.b16 %v277
  %v447 = vunpack.c.l.b16 %v278
  %v448 = vunpack.c.h.b16 %v278
  %v449 = vunpack.c.l.b16 %v279
  %v450 = vunpack.c.h.b16 %v279
  %v451 = vunpack.c.l.b16 %v280
  %v452 = vunpack.c.h.b16 %v280
  %v453 = vunpack.c.l.b16 %v281
  %v454 = vunpack.c.h.b16 %v281
  %v455 = vunpack.c.l.b16 %v282
  %v456 = vunpack.c.h.b16 %v282
  %v457 = vunpack.c.l.b16 %v283
  %v458 = vunpack.c.h.b16 %v283
  %v459 = vunpack.c.l.b16 %v284
  %v460 = vunpack.c.h.b16 %v284
  %v461 = vunpack.c.l.b16 %v285
  %v462 = vunpack.c.h.b16 %v285
  %v463 = vunpack.c.l.b16 %v286
  %v464 = vunpack.c.h.b16 %v286
  %v465 = vunpack.c.l.b16 %v287
  %v466 = vunpack.c.h.b16 %v287
  %v467 = vunpack.c.l.b16 %v288
  %v468 = vunpack.c.h.b16 %v288
  %v469 = vunpack.c.l.b16 %v289
  %v470 = vunpack.c.h.b16 %v289
  %v471 = vunpack.c.l.b16 %v290
  %v472 = vunpack.c.h.b16 %v290
  %v473 = vunpack.c.l.b16 %v291
  %v474 = vunpack.c.h.b16 %v291
  %v475 = vunpack.c.l.b16 %v292
  %v476 = vunpack.c.h.b16 %v292
  %v477 = vunpack.c.l.b16 %v293
  %v478 = vunpack.c.h.b16 %v293
  %v479 = vunpack.c.l.b16 %v294
  %v480 = vunpack.c.h.b16 %v294
  %v481 = vunpack.c.l.b16 %v295
  %v482 = vunpack.c.h.b16 %v295
  %v483 = vunpack.c.l.b16 %v296
  %v484 = vunpack.c.h.b16 %v296
  %v485 = vunpack.c.l.b16 %v297
  %v486 = vunpack.c.h.b16 %v297
  %v487 = vunpack.c.l.b16 %v298
  %v488 = vunpack.c.h.b16 %v298
  %v489 = vunpack.c.l.b16 %v299
  %v490 = vunpack.c.h.b16 %v299
  %v491 = vunpack.c.l.b16 %v300
  %v492 = vunpack.c.h.b16 %v300
  %v493 = vunpack.c.l.b16 %v301
  %v494 = vunpack.c.h.b16 %v301
  %v495 = vunpack.c.l.b16 %v302
  %v496 = vunpack.c.h.b16 %v302
  %v497 = vunpack.c.l.b16 %v303
  %v498 = vunpack.c.h.b16 %v303
  %v499 = vunpack.c.l.b16 %v304
  %v500 = vunpack.c.h.b16 %v304
  %v501 = vunpack.c.l.b16 %v305
  %v502 = vunpack.c.h.b16 %v305
  %v503 = vunpack.c.l.b16 %v306
  %v504 = vunpack.c.h.b16 %v306
  %v505 = vunpack.c.l.b16 %v307
  %v506 = vunpack.c.h.b16 %v307
  %v507 = vunpack.c.l.b16 %v308
  %v508 = vunpack.c.h.b16 %v308
  %v509 = vunpack.c.l.b16 %v309
  %v510 = vunpack.c.h.b16 %v309
  %v511 = vunpack.c.l.b16 %v310
  %v512 = vunpack.c.h.b16 %v310
  %v513 = vunpack.c.l.b16 %v311
  %v514 = vunpack.c.h.b16 %v311
  %v515 = vunpack.c.l.b16 %v312
  %v516 = vunpack.c.h.b16 %v312
  %v517 = vunpack.c.l.b16 %v313
  %v518 = vunpack.c.h.b16 %v313
  %v519 = vunpack.c.l.b16 %v314
  %v520 = vunpack.c.h.b16 %v314
  %v521 = vunpack.c.l.b16 %v315
  %v522 = vunpack.c.h.b16 %v315
  %v523 = vunpack.c.l.b16 %v316
  %v524 = vunpack.c.h.b16 %v316
  %v525 = vunpack.c.l.b16 %v317
  %v526 = vunpack.c.h.b16 %v317
  %v527 = vunpack.c.l.b16 %v318
  %v528 = vunpack.c.h.b16 %v318
  %v529 = vunpack.c.l.b16 %v319
  %v530 = vunpack.c.h.b16 %v319
  %v531 = vunpack.c.l.b16 %v320
  %v532 = vunpack.c.h.b16 %v320
  %v533 = vunpack.c.l.b16 %v321
  %v534 = vunpack.c.h.b16 %v321
  %v535 = vunpack.c.l.b16 %v322
  %v536 = vunpack.c.h.b16 %v322
  %v537 = vunpack.c.l.b16 %v323
  %v538 = vunpack.c.h.b16 %v323
  %v539 = vunpack.c.l.b16 %v324
  %v540 = vunpack.c.h.b16 %v324
  %v541 = vunpack.c.l.b16 %v325
  %v542 = vunpack.c.h.b16 %v325
  %v543 = vunpack.c.l.b16 %v326
  %v544 = vunpack.c.h.b16 %v326
  %v545 = vunpack.c.l.b16 %v327
  %v546 = vunpack.c.h.b16 %v327
  %v547 = vunpack.c.l.b16 %v328
  %v548 = vunpack.c.h.b16 %v328
  %v549 = vunpack.c.l.b16 %v329
  %v550 = vunpack.c.h.b16 %v329
  %v551 = vunpack.c.l.b16 %v330
  %v552 = vunpack.c.h.b16 %v330
  %v553 = vunpack.c.l.b16 %v331
  %v554 = vunpack.c.h.b16 %v331
  %v555 = vunpack.c.l.b16 %v332
  %v556 = vunpack.c.h.b16 %v332
  %v557 = vunpack.c.l.b16 %v333
  %v558 = vunpack.c.h.b16 %v333
  %v559 = vunpack.c.l.b16 %v334
  %v560 = vunpack.c.h.b16 %v334
  %v561 = vunpack.c.l.b16 %v335
  %v562 = vunpack.c.h.b16 %v335
  %v563 = vunpack.c.l.b16 %v336
  %v564 = vunpack.c.h.b16 %v336
  %v565 = vpack.c.b16 %v423, %v421
  %v566 = vpack.c.b16 %v424, %v422
  %v567 = vpack.c.b16 %v427, %v425
  %v568 = vpack.c.b16 %v428, %v426
  %v569 = vpack.c.b16 %v431, %v429
  %v570 = vpack.c.b16 %v432, %v430
  %v571 = vpack.c.b16 %v435, %v433
  %v572 = vpack.c.b16 %v436, %v434
  %v573 = vpack.c.b16 %v439, %v437
  %v574 = vpack.c.b16 %v440, %v438
  %v575 = vpack.c.b16 %v443, %v441
  %v576 = vpack.c.b16 %v444, %v442
  %v577 = vpack.c.b16 %v447, %v445
  %v578 = vpack.c.b16 %v448, %v446
  %v579 = vpack.c.b16 %v451, %v449
  %v580 = vpack.c.b16 %v452, %v450
  %v581 = vpack.c.b16 %v455, %v453
  %v582 = vpack.c.b16 %v456, %v454
  %v583 = vpack.c.b16 %v459, %v457
  %v584 = vpack.c.b16 %v460, %v458
  %v585 = vpack.c.b16 %v463, %v461
  %v586 = vpack.c.b16 %v464, %v462
  %v587 = vpack.c.b16 %v467, %v465
  %v588 = vpack.c.b16 %v468, %v466
  %v589 = vpack.c.b16 %v471, %v469
  %v590 = vpack.c.b16 %v472, %v470
  %v591 = vpack.c.b16 %v475, %v473
  %v592 = vpack.c.b16 %v476, %v474
  %v593 = vpack.c.b16 %v479, %v477
  %v594 = vpack.c.b16 %v480, %v478
  %v595 = vpack.c.b16 %v483, %v481
  %v596 = vpack.c.b16 %v484, %v482
  %v597 = vpack.c.b16 %v487, %v485
  %v598 = vpack.c.b16 %v488, %v486
  %v599 = vpack.c.b16 %v491, %v489
  %v600 = vpack.c.b16 %v492, %v490
  %v601 = vpack.c.b16 %v495, %v493
  %v602 = vpack.c.b16 %v496, %v494
  %v603 = vpack.c.b16 %v499, %v497
  %v604 = vpack.c.b16 %v500, %v498
  %v605 = vpack.c.b16 %v503, %v501
  %v606 = vpack.c.b16 %v504, %v502
  %v607 = vpack.c.b16 %v507, %v505
  %v608 = vpack.c.b16 %v508, %v506
  %v609 = vpack.c.b16 %v511, %v509
  %v610 = vpack.c.b16 %v512, %v510
  %v611 = vpack.c.b16 %v515, %v513
  %v612 = vpack.c.b16 %v516, %v514
  %v613 = vpack.c.b16 %v519, %v517
  %v614 = vpack.c.b16 %v520, %v518
  %v615 = vpack.c.b16 %v523, %v521
  %v616 = vpack.c.b16 %v524, %v522
  %v617 = vpack.c.b16 %v527, %v525
  %v618 = vpack.c.b16 %v528, %v526
  %v619 = vpack.c.b16 %v531, %v529
  %v620 = vpack.c.b16 %v532, %v530
  %v621 = vpack.c.b16 %v535, %v533
  %v622 = vpack.c.b16 %v536, %v534
  %v623 = vpack.c.b16 %v539, %v537
  %v624 = vpack.c.b16 %v540, %v538
  %v625 = vpack.c.b16 %v543, %v541
  %v626 = vpack.c.b16 %v544, %v542
  %v627 = vpack.c.b16 %v547, %v545
  %v628 = vpack.c.b16 %v548, %v546
  %v629 = vpack.c.b16 %v551, %v549
  %v630 = vpack.c.b16 %v552, %v550
  %v631 = vpack.c.b16 %v555, %v553
  %v632 = vpack.c.b16 %v556, %v554
  %v633 = vpack.c.b16 %v559, %v557
  %v634 = vpack.c.b16 %v560, %v558
  %v635 = vpack.c.b16 %v563, %v561
  %v636 = vpack.c.b16 %v564, %v562
  %vm709 = vcmask 523264
  %v711 = vsel %vm709, %v229, 0
  %v714 = vsel %vm709, %v234, 0
  %v717 = vsel %vm709, %v239, 0
  %v720 = vsel %vm709, %v244, 0
  %v723 = vsel %vm709, %v249, 0
  %v726 = vsel %vm709, %v254, 0
  %v729 = vsel %vm709, %v259, 0
  %v732 = vsel %vm709, %v264, 0
  %734 = vmatprep.subr.bf16.mxu0 %v566
  %735 = vmatpush1.bf16.msra.mxu0 %v565
  %736 = vmatprep.subr.bf16.mxu0 %v568
  %737 = vmatpush1.bf16.msra.mxu0 %v567
  %738 = vmatprep.subr.bf16.mxu0 %v570
  %739 = vmatpush1.bf16.msra.mxu0 %v569
  %740 = vmatprep.subr.bf16.mxu0 %v572
  %741 = vmatpush1.bf16.msra.mxu0 %v571
  %742 = vmatprep.subr.bf16.mxu0 %v574
  %743 = vmatpush1.bf16.msra.mxu0 %v573
  %744 = vmatprep.subr.bf16.mxu0 %v576
  %745 = vmatpush1.bf16.msra.mxu0 %v575
  %746 = vmatprep.subr.bf16.mxu0 %v578
  %747 = vmatpush1.bf16.msra.mxu0 %v577
  %748 = vmatprep.subr.bf16.mxu0 %v580
  %749 = vmatpush1.bf16.msra.mxu0 %v579
  %750 = vmatprep.subr.bf16.mxu0 %v582
  %751 = vmatpush1.bf16.msra.mxu0 %v581
  %752 = vmatprep.subr.bf16.mxu0 %v584
  %753 = vmatpush1.bf16.msra.mxu0 %v583
  %754 = vmatprep.subr.bf16.mxu0 %v586
  %755 = vmatpush1.bf16.msra.mxu0 %v585
  %756 = vmatprep.subr.bf16.mxu0 %v588
  %757 = vmatpush1.bf16.msra.mxu0 %v587
  %758 = vmatprep.subr.bf16.mxu0 %v590
  %759 = vmatpush1.bf16.msra.mxu0 %v589
  %760 = vmatprep.subr.bf16.mxu0 %v592
  %761 = vmatpush1.bf16.msra.mxu0 %v591
  %762 = vmatprep.subr.bf16.mxu0 %v594
  %763 = vmatpush1.bf16.msra.mxu0 %v593
  %764 = vmatprep.subr.bf16.mxu0 %v596
  %765 = vmatpush1.bf16.msra.mxu0 %v595
  %766 = vmatprep.mubr.bf16.mxu0 %v226
  %767 = vmatmul.mubr.bf16.gmra.mrb[0].mxu0 %v225
  %v768 = vpop.f32.mrb[0].mxu0
  %v769 = vadd.f32 %v342, %v768
  %v770 = vpop.f32.mrb[0].mxu0
  %v771 = vadd.f32 %v346, %v770
  %v772 = vpop.f32.mrb[0].mxu0
  %v773 = vadd.f32 %v342, %v772
  %v774 = vpop.f32.mrb[0].mxu0
  %v775 = vadd.f32 %v346, %v774
  %776 = vmatprep.mubr.bf16.mxu0 %v231
  %777 = vmatmul.mubr.bf16.gmra.mrb[0].mxu0 %v230
  %v778 = vpop.f32.mrb[0].mxu0
  %v779 = vadd.f32 %v342, %v778
  %v780 = vpop.f32.mrb[0].mxu0
  %v781 = vadd.f32 %v346, %v780
  %v782 = vpop.f32.mrb[0].mxu0
  %v783 = vadd.f32 %v342, %v782
  %v784 = vpop.f32.mrb[0].mxu0
  %v785 = vadd.f32 %v346, %v784
  %786 = vmatprep.mubr.bf16.mxu0 %v236
  %787 = vmatmul.mubr.bf16.gmra.mrb[0].mxu0 %v235
  %v788 = vpop.f32.mrb[0].mxu0
  %v789 = vadd.f32 %v342, %v788
  %v790 = vpop.f32.mrb[0].mxu0
  %v791 = vadd.f32 %v346, %v790
  %v792 = vpop.f32.mrb[0].mxu0
  %v793 = vadd.f32 %v342, %v792
  %v794 = vpop.f32.mrb[0].mxu0
  %v795 = vadd.f32 %v346, %v794
  %796 = vmatprep.mubr.bf16.mxu0 %v241
  %797 = vmatmul.mubr.bf16.gmra.mrb[0].mxu0 %v240
  %v798 = vpop.f32.mrb[0].mxu0
  %v799 = vadd.f32 %v342, %v798
  %v800 = vpop.f32.mrb[0].mxu0
  %v801 = vadd.f32 %v346, %v800
  %v802 = vpop.f32.mrb[0].mxu0
  %v803 = vadd.f32 %v342, %v802
  %v804 = vpop.f32.mrb[0].mxu0
  %v805 = vadd.f32 %v346, %v804
  %806 = vmatprep.mubr.bf16.mxu0 %v246
  %807 = vmatmul.mubr.bf16.gmra.mrb[0].mxu0 %v245
  %v808 = vpop.f32.mrb[0].mxu0
  %v809 = vadd.f32 %v342, %v808
  %v810 = vpop.f32.mrb[0].mxu0
  %v811 = vadd.f32 %v346, %v810
  %v812 = vpop.f32.mrb[0].mxu0
  %v813 = vadd.f32 %v342, %v812
  %v814 = vpop.f32.mrb[0].mxu0
  %v815 = vadd.f32 %v346, %v814
  %816 = vmatprep.mubr.bf16.mxu0 %v251
  %817 = vmatmul.mubr.bf16.gmra.mrb[0].mxu0 %v250
  %v818 = vpop.f32.mrb[0].mxu0
  %v819 = vadd.f32 %v342, %v818
  %v820 = vpop.f32.mrb[0].mxu0
  %v821 = vadd.f32 %v346, %v820
  %v822 = vpop.f32.mrb[0].mxu0
  %v823 = vadd.f32 %v342, %v822
  %v824 = vpop.f32.mrb[0].mxu0
  %v825 = vadd.f32 %v346, %v824
  %826 = vmatprep.mubr.bf16.mxu0 %v256
  %827 = vmatmul.mubr.bf16.gmra.mrb[0].mxu0 %v255
  %v828 = vpop.f32.mrb[0].mxu0
  %v829 = vadd.f32 %v342, %v828
  %v830 = vpop.f32.mrb[0].mxu0
  %v831 = vadd.f32 %v346, %v830
  %v832 = vpop.f32.mrb[0].mxu0
  %v833 = vadd.f32 %v342, %v832
  %v834 = vpop.f32.mrb[0].mxu0
  %v835 = vadd.f32 %v346, %v834
  %836 = vmatprep.mubr.bf16.mxu0 %v261
  %837 = vmatmul.mubr.bf16.gmra.mrb[0].mxu0 %v260
  %v838 = vpop.f32.mrb[0].mxu0
  %v839 = vadd.f32 %v342, %v838
  %v840 = vpop.f32.mrb[0].mxu0
  %v841 = vadd.f32 %v346, %v840
  %v842 = vpop.f32.mrb[0].mxu0
  %v843 = vadd.f32 %v342, %v842
  %v844 = vpop.f32.mrb[0].mxu0
  %v845 = vadd.f32 %v346, %v844
  %846 = vdwg.mxu0
  %847 = vmatprep.subr.bf16.mxu0 %v598
  %848 = vmatpush1.bf16.msra.mxu0 %v597
  %849 = vmatprep.subr.bf16.mxu0 %v600
  %850 = vmatpush1.bf16.msra.mxu0 %v599
  %851 = vmatprep.subr.bf16.mxu0 %v602
  %852 = vmatpush1.bf16.msra.mxu0 %v601
  %853 = vmatprep.subr.bf16.mxu0 %v604
  %854 = vmatpush1.bf16.msra.mxu0 %v603
  %855 = vmatprep.subr.bf16.mxu0 %v606
  %856 = vmatpush1.bf16.msra.mxu0 %v605
  %857 = vmatprep.subr.bf16.mxu0 %v608
  %858 = vmatpush1.bf16.msra.mxu0 %v607
  %859 = vmatprep.subr.bf16.mxu0 %v610
  %860 = vmatpush1.bf16.msra.mxu0 %v609
  %861 = vmatprep.subr.bf16.mxu0 %v612
  %862 = vmatpush1.bf16.msra.mxu0 %v611
  %863 = vmatprep.subr.bf16.mxu0 %v614
  %864 = vmatpush1.bf16.msra.mxu0 %v613
  %865 = vmatprep.subr.bf16.mxu0 %v616
  %866 = vmatpush1.bf16.msra.mxu0 %v615
  %867 = vmatprep.subr.bf16.mxu0 %v618
  %868 = vmatpush1.bf16.msra.mxu0 %v617
  %869 = vmatprep.subr.bf16.mxu0 %v620
  %870 = vmatpush1.bf16.msra.mxu0 %v619
  %871 = vmatprep.subr.bf16.mxu0 %v622
  %872 = vmatpush1.bf16.msra.mxu0 %v621
  %873 = vmatprep.subr.bf16.mxu0 %v624
  %874 = vmatpush1.bf16.msra.mxu0 %v623
  %875 = vmatprep.subr.bf16.mxu0 %v626
  %876 = vmatpush1.bf16.msra.mxu0 %v625
  %877 = vmatprep.subr.bf16.mxu0 %v628
  %878 = vmatpush1.bf16.msra.mxu0 %v627
  %879 = vmatprep.mubr.bf16.mxu0 %v228
  %880 = vmatmul.mubr.bf16.gmra.mrb[0].mxu0 %v227
  %v881 = vpop.f32.mrb[0].mxu0
  %v882 = vadd.f32 %v769, %v881
  %v883 = vpop.f32.mrb[0].mxu0
  %v884 = vadd.f32 %v771, %v883
  %v885 = vpop.f32.mrb[0].mxu0
  %v886 = vadd.f32 %v773, %v885
  %v887 = vpop.f32.mrb[0].mxu0
  %v888 = vadd.f32 %v775, %v887
  %889 = vmatprep.mubr.bf16.mxu0 %v233
  %890 = vmatmul.mubr.bf16.gmra.mrb[0].mxu0 %v232
  %v891 = vpop.f32.mrb[0].mxu0
  %v892 = vadd.f32 %v779, %v891
  %v893 = vpop.f32.mrb[0].mxu0
  %v894 = vadd.f32 %v781, %v893
  %v895 = vpop.f32.mrb[0].mxu0
  %v896 = vadd.f32 %v783, %v895
  %v897 = vpop.f32.mrb[0].mxu0
  %v898 = vadd.f32 %v785, %v897
  %899 = vmatprep.mubr.bf16.mxu0 %v238
  %900 = vmatmul.mubr.bf16.gmra.mrb[0].mxu0 %v237
  %v901 = vpop.f32.mrb[0].mxu0
  %v902 = vadd.f32 %v789, %v901
  %v903 = vpop.f32.mrb[0].mxu0
  %v904 = vadd.f32 %v791, %v903
  %v905 = vpop.f32.mrb[0].mxu0
  %v906 = vadd.f32 %v793, %v905
  %v907 = vpop.f32.mrb[0].mxu0
  %v908 = vadd.f32 %v795, %v907
  %909 = vmatprep.mubr.bf16.mxu0 %v243
  %910 = vmatmul.mubr.bf16.gmra.mrb[0].mxu0 %v242
  %v911 = vpop.f32.mrb[0].mxu0
  %v912 = vadd.f32 %v799, %v911
  %v913 = vpop.f32.mrb[0].mxu0
  %v914 = vadd.f32 %v801, %v913
  %v915 = vpop.f32.mrb[0].mxu0
  %v916 = vadd.f32 %v803, %v915
  %v917 = vpop.f32.mrb[0].mxu0
  %v918 = vadd.f32 %v805, %v917
  %919 = vmatprep.mubr.bf16.mxu0 %v248
  %920 = vmatmul.mubr.bf16.gmra.mrb[0].mxu0 %v247
  %v921 = vpop.f32.mrb[0].mxu0
  %v922 = vadd.f32 %v809, %v921
  %v923 = vpop.f32.mrb[0].mxu0
  %v924 = vadd.f32 %v811, %v923
  %v925 = vpop.f32.mrb[0].mxu0
  %v926 = vadd.f32 %v813, %v925
  %v927 = vpop.f32.mrb[0].mxu0
  %v928 = vadd.f32 %v815, %v927
  %929 = vmatprep.mubr.bf16.mxu0 %v253
  %930 = vmatmul.mubr.bf16.gmra.mrb[0].mxu0 %v252
  %v931 = vpop.f32.mrb[0].mxu0
  %v932 = vadd.f32 %v819, %v931
  %v933 = vpop.f32.mrb[0].mxu0
  %v934 = vadd.f32 %v821, %v933
  %v935 = vpop.f32.mrb[0].mxu0
  %v936 = vadd.f32 %v823, %v935
  %v937 = vpop.f32.mrb[0].mxu0
  %v938 = vadd.f32 %v825, %v937
  %939 = vmatprep.mubr.bf16.mxu0 %v258
  %940 = vmatmul.mubr.bf16.gmra.mrb[0].mxu0 %v257
  %v941 = vpop.f32.mrb[0].mxu0
  %v942 = vadd.f32 %v829, %v941
  %v943 = vpop.f32.mrb[0].mxu0
  %v944 = vadd.f32 %v831, %v943
  %v945 = vpop.f32.mrb[0].mxu0
  %v946 = vadd.f32 %v833, %v945
  %v947 = vpop.f32.mrb[0].mxu0
  %v948 = vadd.f32 %v835, %v947
  %949 = vmatprep.mubr.bf16.mxu0 %v263
  %950 = vmatmul.mubr.bf16.gmra.mrb[0].mxu0 %v262
  %v951 = vpop.f32.mrb[0].mxu0
  %v952 = vadd.f32 %v839, %v951
  %v953 = vpop.f32.mrb[0].mxu0
  %v954 = vadd.f32 %v841, %v953
  %v955 = vpop.f32.mrb[0].mxu0
  %v956 = vadd.f32 %v843, %v955
  %v957 = vpop.f32.mrb[0].mxu0
  %v958 = vadd.f32 %v845, %v957
  %959 = vdwg.mxu0
  %960 = vmatprep.subr.bf16.mxu0 %v630
  %961 = vmatpush1.bf16.msra.mxu0 %v629
  %962 = vmatprep.subr.bf16.mxu0 %v632
  %963 = vmatpush1.bf16.msra.mxu0 %v631
  %964 = vmatprep.subr.bf16.mxu0 %v634
  %965 = vmatpush1.bf16.msra.mxu0 %v633
  %966 = vmatprep.subr.bf16.mxu0 %v636
  %967 = vmatpush1.bf16.msra.mxu0 %v635
  %968 = vmatprep.subr.bf16.mxu0 0
  %969 = vmatpush1.bf16.msra.mxu0 0
  %970 = vmatprep.subr.bf16.mxu0 0
  %971 = vmatpush1.bf16.msra.mxu0 0
  %972 = vmatprep.subr.bf16.mxu0 0
  %973 = vmatpush1.bf16.msra.mxu0 0
  %974 = vmatprep.subr.bf16.mxu0 0
  %975 = vmatpush1.bf16.msra.mxu0 0
  %976 = vmatprep.subr.bf16.mxu0 0
  %977 = vmatpush1.bf16.msra.mxu0 0
  %978 = vmatprep.subr.bf16.mxu0 0
  %979 = vmatpush1.bf16.msra.mxu0 0
  %980 = vmatprep.subr.bf16.mxu0 0
  %981 = vmatpush1.bf16.msra.mxu0 0
  %982 = vmatprep.subr.bf16.mxu0 0
  %983 = vmatpush1.bf16.msra.mxu0 0
  %984 = vmatprep.subr.bf16.mxu0 0
  %985 = vmatpush1.bf16.msra.mxu0 0
  %986 = vmatprep.subr.bf16.mxu0 0
  %987 = vmatpush1.bf16.msra.mxu0 0
  %988 = vmatprep.subr.bf16.mxu0 0
  %989 = vmatpush1.bf16.msra.mxu0 0
  %990 = vmatprep.subr.bf16.mxu0 0
  %991 = vmatpush1.bf16.msra.mxu0 0
  %992 = vmatprep.mubr.bf16.mxu0 0
  %993 = vmatmul.mubr.bf16.gmra.mrb[0].mxu0 %v711
  %v994 = vpop.f32.mrb[0].mxu0
  %v995 = vadd.f32 %v882, %v994
  %v996 = vpop.f32.mrb[0].mxu0
  %v997 = vadd.f32 %v884, %v996
  %v998 = vpop.f32.mrb[0].mxu0
  %v999 = vadd.f32 %v886, %v998
  %v1000 = vpop.f32.mrb[0].mxu0
  %v1001 = vadd.f32 %v888, %v1000
  %1002 = vmatprep.mubr.bf16.mxu0 0
  %1003 = vmatmul.mubr.bf16.gmra.mrb[0].mxu0 %v714
  %v1004 = vpop.f32.mrb[0].mxu0
  %v1005 = vadd.f32 %v892, %v1004
  %v1006 = vpop.f32.mrb[0].mxu0
  %v1007 = vadd.f32 %v894, %v1006
  %v1008 = vpop.f32.mrb[0].mxu0
  %v1009 = vadd.f32 %v896, %v1008
  %v1010 = vpop.f32.mrb[0].mxu0
  %v1011 = vadd.f32 %v898, %v1010
  %1012 = vmatprep.mubr.bf16.mxu0 0
  %1013 = vmatmul.mubr.bf16.gmra.mrb[0].mxu0 %v717
  %v1014 = vpop.f32.mrb[0].mxu0
  %v1015 = vadd.f32 %v902, %v1014
  %v1016 = vpop.f32.mrb[0].mxu0
  %v1017 = vadd.f32 %v904, %v1016
  %v1018 = vpop.f32.mrb[0].mxu0
  %v1019 = vadd.f32 %v906, %v1018
  %v1020 = vpop.f32.mrb[0].mxu0
  %v1021 = vadd.f32 %v908, %v1020
  %1022 = vmatprep.mubr.bf16.mxu0 0
  %1023 = vmatmul.mubr.bf16.gmra.mrb[0].mxu0 %v720
  %v1024 = vpop.f32.mrb[0].mxu0
  %v1025 = vadd.f32 %v912, %v1024
  %v1026 = vpop.f32.mrb[0].mxu0
  %v1027 = vadd.f32 %v914, %v1026
  %v1028 = vpop.f32.mrb[0].mxu0
  %v1029 = vadd.f32 %v916, %v1028
  %v1030 = vpop.f32.mrb[0].mxu0
  %v1031 = vadd.f32 %v918, %v1030
  %1032 = vmatprep.mubr.bf16.mxu0 0
  %1033 = vmatmul.mubr.bf16.gmra.mrb[0].mxu0 %v723
  %v1034 = vpop.f32.mrb[0].mxu0
  %v1035 = vadd.f32 %v922, %v1034
  %v1036 = vpop.f32.mrb[0].mxu0
  %v1037 = vadd.f32 %v924, %v1036
  %v1038 = vpop.f32.mrb[0].mxu0
  %v1039 = vadd.f32 %v926, %v1038
  %v1040 = vpop.f32.mrb[0].mxu0
  %v1041 = vadd.f32 %v928, %v1040
  %1042 = vmatprep.mubr.bf16.mxu0 0
  %1043 = vmatmul.mubr.bf16.gmra.mrb[0].mxu0 %v726
  %v1044 = vpop.f32.mrb[0].mxu0
  %v1045 = vadd.f32 %v932, %v1044
  %v1046 = vpop.f32.mrb[0].mxu0
  %v1047 = vadd.f32 %v934, %v1046
  %v1048 = vpop.f32.mrb[0].mxu0
  %v1049 = vadd.f32 %v936, %v1048
  %v1050 = vpop.f32.mrb[0].mxu0
  %v1051 = vadd.f32 %v938, %v1050
  %1052 = vmatprep.mubr.bf16.mxu0 0
  %1053 = vmatmul.mubr.bf16.gmra.mrb[0].mxu0 %v729
  %v1054 = vpop.f32.mrb[0].mxu0
  %v1055 = vadd.f32 %v942, %v1054
  %v1056 = vpop.f32.mrb[0].mxu0
  %v1057 = vadd.f32 %v944, %v1056
  %v1058 = vpop.f32.mrb[0].mxu0
  %v1059 = vadd.f32 %v946, %v1058
  %v1060 = vpop.f32.mrb[0].mxu0
  %v1061 = vadd.f32 %v948, %v1060
  %1062 = vmatprep.mubr.bf16.mxu0 0
  %1063 = vmatmul.mubr.bf16.gmra.mrb[0].mxu0 %v732
  %v1064 = vpop.f32.mrb[0].mxu0
  %v1065 = vadd.f32 %v952, %v1064
  %v1066 = vpop.f32.mrb[0].mxu0
  %v1067 = vadd.f32 %v954, %v1066
  %v1068 = vpop.f32.mrb[0].mxu0
  %v1069 = vadd.f32 %v956, %v1068
  %v1070 = vpop.f32.mrb[0].mxu0
  %v1071 = vadd.f32 %v958, %v1070
  %1072 = vdwg.mxu0
  %v1073 = vpack.c.bf16 %v999, %v995
  %v1074 = vpack.c.bf16 %v1001, %v997
  %v1075 = vpack.c.bf16 %v1009, %v1005
  %v1076 = vpack.c.bf16 %v1011, %v1007
  %v1077 = vpack.c.bf16 %v1019, %v1015
  %v1078 = vpack.c.bf16 %v1021, %v1017
  %v1079 = vpack.c.bf16 %v1029, %v1025
  %v1080 = vpack.c.bf16 %v1031, %v1027
  %v1081 = vpack.c.bf16 %v1039, %v1035
  %v1082 = vpack.c.bf16 %v1041, %v1037
  %v1083 = vpack.c.bf16 %v1049, %v1045
  %v1084 = vpack.c.bf16 %v1051, %v1047
  %v1085 = vpack.c.bf16 %v1059, %v1055
  %v1086 = vpack.c.bf16 %v1061, %v1057
  %v1087 = vpack.c.bf16 %v1069, %v1065
  %v1088 = vpack.c.bf16 %v1071, %v1067
  %v1105 = vunpack.c.l.b16 %v1073
  %v1106 = vunpack.c.l.b16 %v1074
  %v1107 = vunpack.c.h.b16 %v1073
  %v1108 = vunpack.c.h.b16 %v1074
  %v1109 = vunpack.c.l.b16 %v1075
  %v1110 = vunpack.c.l.b16 %v1076
  %v1111 = vunpack.c.h.b16 %v1075
  %v1112 = vunpack.c.h.b16 %v1076
  %v1113 = vunpack.c.l.b16 %v1077
  %v1114 = vunpack.c.l.b16 %v1078
  %v1115 = vunpack.c.h.b16 %v1077
  %v1116 = vunpack.c.h.b16 %v1078
  %v1117 = vunpack.c.l.b16 %v1079
  %v1118 = vunpack.c.l.b16 %v1080
  %v1119 = vunpack.c.h.b16 %v1079
  %v1120 = vunpack.c.h.b16 %v1080
  %v1121 = vunpack.c.l.b16 %v1081
  %v1122 = vunpack.c.l.b16 %v1082
  %v1123 = vunpack.c.h.b16 %v1081
  %v1124 = vunpack.c.h.b16 %v1082
  %v1125 = vunpack.c.l.b16 %v1083
  %v1126 = vunpack.c.l.b16 %v1084
  %v1127 = vunpack.c.h.b16 %v1083
  %v1128 = vunpack.c.h.b16 %v1084
  %v1129 = vunpack.c.l.b16 %v1085
  %v1130 = vunpack.c.l.b16 %v1086
  %v1131 = vunpack.c.h.b16 %v1085
  %v1132 = vunpack.c.h.b16 %v1086
  %v1133 = vunpack.c.l.b16 %v1087
  %v1134 = vunpack.c.l.b16 %v1088
  %v1135 = vunpack.c.h.b16 %v1087
  %v1136 = vunpack.c.h.b16 %v1088
  %v1137 = vpack.c.b16 %v1106, %v1105
  %v1138 = vpack.c.b16 %v1108, %v1107
  %v1139 = vpack.c.b16 %v1110, %v1109
  %v1140 = vpack.c.b16 %v1112, %v1111
  %v1141 = vpack.c.b16 %v1114, %v1113
  %v1142 = vpack.c.b16 %v1116, %v1115
  %v1143 = vpack.c.b16 %v1118, %v1117
  %v1144 = vpack.c.b16 %v1120, %v1119
  %v1145 = vpack.c.b16 %v1122, %v1121
  %v1146 = vpack.c.b16 %v1124, %v1123
  %v1147 = vpack.c.b16 %v1126, %v1125
  %v1148 = vpack.c.b16 %v1128, %v1127
  %v1149 = vpack.c.b16 %v1130, %v1129
  %v1150 = vpack.c.b16 %v1132, %v1131
  %v1151 = vpack.c.b16 %v1134, %v1133
  %v1152 = vpack.c.b16 %v1136, %v1135
  %1169 = vst [vmem:[%s3] sm:$0xff] %v1137
  %1170 = vst [vmem:[%s3 + $0x8] sm:$0xff] %v1138
  %1171 = vst [vmem:[%s3 + $0x10] sm:$0xff] %v1139
  %1172 = vst [vmem:[%s3 + $0x18] sm:$0xff] %v1140
  %1173 = vst [vmem:[%s3 + $0x20] sm:$0xff] %v1141
  %1174 = vst [vmem:[%s3 + $0x28] sm:$0xff] %v1142
  %1175 = vst [vmem:[%s3 + $0x30] sm:$0xff] %v1143
  %1176 = vst [vmem:[%s3 + $0x38] sm:$0xff] %v1144
  %1177 = vst [vmem:[%s3 + $0x40] sm:$0xff] %v1145
  %1178 = vst [vmem:[%s3 + $0x48] sm:$0xff] %v1146
  %1179 = vst [vmem:[%s3 + $0x50] sm:$0xff] %v1147
  %1180 = vst [vmem:[%s3 + $0x58] sm:$0xff] %v1148
  %1181 = vst [vmem:[%s3 + $0x60] sm:$0xff] %v1149
  %1182 = vst [vmem:[%s3 + $0x68] sm:$0xff] %v1150
  %1183 = vst [vmem:[%s3 + $0x70] sm:$0xff] %v1151
  %1184 = vst [vmem:[%s3 + $0x78] sm:$0xff] %v1152
  %v1185 = vlaneseq
  %v1186 = vshrl.u32 %v1185, 7
  %v1187 = vadd.s32 %v1186, 8
  %v1188 = vadd.s32 %v1186, 16
  %v1189 = vadd.s32 %v1186, 24
  %v1190 = vadd.s32 %v1186, 32
  %v1191 = vadd.s32 %v1186, 40
  %v1192 = vadd.s32 %v1186, 48
  %v1193 = vadd.s32 %v1186, 56
  %v1194 = vadd.s32 %v1186, 64
  %v1195 = vadd.s32 %v1186, 72
  %v1196 = vadd.s32 %v1186, 80
  %v1197 = vadd.s32 %v1186, 88
  %v1198 = vadd.s32 %v1186, 96
  %v1199 = vadd.s32 %v1186, 104
  %v1200 = vadd.s32 %v1186, 112
  %v1201 = vadd.s32 %v1186, 120
  %s1202 = smul.u32 0, 128
  %s1203 = ssub.s32 2, %s1202
  %v1204 = vstv %s1203
  %vm1205 = vcmp.lt.s32.totalorder %v1186, %v1204
  %vm1206 = vcmp.lt.s32.totalorder %v1187, %v1204
  %vm1207 = vcmp.lt.s32.totalorder %v1188, %v1204
  %vm1208 = vcmp.lt.s32.totalorder %v1189, %v1204
  %vm1209 = vcmp.lt.s32.totalorder %v1190, %v1204
  %vm1210 = vcmp.lt.s32.totalorder %v1191, %v1204
  %vm1211 = vcmp.lt.s32.totalorder %v1192, %v1204
  %vm1212 = vcmp.lt.s32.totalorder %v1193, %v1204
  %vm1213 = vcmp.lt.s32.totalorder %v1194, %v1204
  %vm1214 = vcmp.lt.s32.totalorder %v1195, %v1204
  %vm1215 = vcmp.lt.s32.totalorder %v1196, %v1204
  %vm1216 = vcmp.lt.s32.totalorder %v1197, %v1204
  %vm1217 = vcmp.lt.s32.totalorder %v1198, %v1204
  %vm1218 = vcmp.lt.s32.totalorder %v1199, %v1204
  %vm1219 = vcmp.lt.s32.totalorder %v1200, %v1204
  %vm1220 = vcmp.lt.s32.totalorder %v1201, %v1204
  %v1221 = vsel %vm1205, 1, 0
  %v1222 = vsel %vm1206, 1, 0
  %v1223 = vsel %vm1207, 1, 0
  %v1224 = vsel %vm1208, 1, 0
  %v1225 = vsel %vm1209, 1, 0
  %v1226 = vsel %vm1210, 1, 0
  %v1227 = vsel %vm1211, 1, 0
  %v1228 = vsel %vm1212, 1, 0
  %v1229 = vsel %vm1213, 1, 0
  %v1230 = vsel %vm1214, 1, 0
  %v1231 = vsel %vm1215, 1, 0
  %v1232 = vsel %vm1216, 1, 0
  %v1233 = vsel %vm1217, 1, 0
  %v1234 = vsel %vm1218, 1, 0
  %v1235 = vsel %vm1219, 1, 0
  %v1236 = vsel %vm1220, 1, 0
  %vm1237 = vcmp.eq.s32.totalorder %v1221, 1
  %vm1238 = vcmp.eq.s32.totalorder %v1222, 1
  %vm1239 = vcmp.eq.s32.totalorder %v1223, 1
  %vm1240 = vcmp.eq.s32.totalorder %v1224, 1
  %vm1241 = vcmp.eq.s32.totalorder %v1225, 1
  %vm1242 = vcmp.eq.s32.totalorder %v1226, 1
  %vm1243 = vcmp.eq.s32.totalorder %v1227, 1
  %vm1244 = vcmp.eq.s32.totalorder %v1228, 1
  %vm1245 = vcmp.eq.s32.totalorder %v1229, 1
  %vm1246 = vcmp.eq.s32.totalorder %v1230, 1
  %vm1247 = vcmp.eq.s32.totalorder %v1231, 1
  %vm1248 = vcmp.eq.s32.totalorder %v1232, 1
  %vm1249 = vcmp.eq.s32.totalorder %v1233, 1
  %vm1250 = vcmp.eq.s32.totalorder %v1234, 1
  %vm1251 = vcmp.eq.s32.totalorder %v1235, 1
  %vm1252 = vcmp.eq.s32.totalorder %v1236, 1
  %v1253 = vsel %vm1237, %v995, 0.0
  %v1254 = vsel %vm1237, %v997, 0.0
  %v1255 = vsel %vm1238, %v999, 0.0
  %v1256 = vsel %vm1238, %v1001, 0.0
  %v1257 = vsel %vm1239, %v1005, 0.0
  %v1258 = vsel %vm1239, %v1007, 0.0
  %v1259 = vsel %vm1240, %v1009, 0.0
  %v1260 = vsel %vm1240, %v1011, 0.0
  %v1261 = vsel %vm1241, %v1015, 0.0
  %v1262 = vsel %vm1241, %v1017, 0.0
  %v1263 = vsel %vm1242, %v1019, 0.0
  %v1264 = vsel %vm1242, %v1021, 0.0
  %v1265 = vsel %vm1243, %v1025, 0.0
  %v1266 = vsel %vm1243, %v1027, 0.0
  %v1267 = vsel %vm1244, %v1029, 0.0
  %v1268 = vsel %vm1244, %v1031, 0.0
  %v1269 = vsel %vm1245, %v1035, 0.0
  %v1270 = vsel %vm1245, %v1037, 0.0
  %v1271 = vsel %vm1246, %v1039, 0.0
  %v1272 = vsel %vm1246, %v1041, 0.0
  %v1273 = vsel %vm1247, %v1045, 0.0
  %v1274 = vsel %vm1247, %v1047, 0.0
  %v1275 = vsel %vm1248, %v1049, 0.0
  %v1276 = vsel %vm1248, %v1051, 0.0
  %v1277 = vsel %vm1249, %v1055, 0.0
  %v1278 = vsel %vm1249, %v1057, 0.0
  %v1279 = vsel %vm1250, %v1059, 0.0
  %v1280 = vsel %vm1250, %v1061, 0.0
  %v1281 = vsel %vm1251, %v1065, 0.0
  %v1282 = vsel %vm1251, %v1067, 0.0
  %v1283 = vsel %vm1252, %v1069, 0.0
  %v1284 = vsel %vm1252, %v1071, 0.0
  %v1285 = vadd.f32 %v1253, %v1255
  %v1286 = vadd.f32 %v1285, %v1257
  %v1287 = vadd.f32 %v1286, %v1259
  %v1288 = vadd.f32 %v1287, %v1261
  %v1289 = vadd.f32 %v1288, %v1263
  %v1290 = vadd.f32 %v1289, %v1265
  %v1291 = vadd.f32 %v1290, %v1267
  %v1292 = vadd.f32 %v1291, %v1269
  %v1293 = vadd.f32 %v1292, %v1271
  %v1294 = vadd.f32 %v1293, %v1273
  %v1295 = vadd.f32 %v1294, %v1275
  %v1296 = vadd.f32 %v1295, %v1277
  %v1297 = vadd.f32 %v1296, %v1279
  %v1298 = vadd.f32 %v1297, %v1281
  %v1299 = vadd.f32 %v1298, %v1283
  %v1300 = vrot.slane %v1299, 4
  %v1301 = vadd.f32 %v1299, %v1300
  %v1302 = vrot.slane %v1301, 2
  %v1303 = vadd.f32 %v1301, %v1302
  %v1304 = vrot.slane %v1303, 1
  %v1305 = vadd.f32 %v1303, %v1304
  %v1306 = vadd.f32 %v1254, %v1256
  %v1307 = vadd.f32 %v1306, %v1258
  %v1308 = vadd.f32 %v1307, %v1260
  %v1309 = vadd.f32 %v1308, %v1262
  %v1310 = vadd.f32 %v1309, %v1264
  %v1311 = vadd.f32 %v1310, %v1266
  %v1312 = vadd.f32 %v1311, %v1268
  %v1313 = vadd.f32 %v1312, %v1270
  %v1314 = vadd.f32 %v1313, %v1272
  %v1315 = vadd.f32 %v1314, %v1274
  %v1316 = vadd.f32 %v1315, %v1276
  %v1317 = vadd.f32 %v1316, %v1278
  %v1318 = vadd.f32 %v1317, %v1280
  %v1319 = vadd.f32 %v1318, %v1282
  %v1320 = vadd.f32 %v1319, %v1284
  %v1321 = vrot.slane %v1320, 4
  %v1322 = vadd.f32 %v1320, %v1321
  %v1323 = vrot.slane %v1322, 2
  %v1324 = vadd.f32 %v1322, %v1323
  %v1325 = vrot.slane %v1324, 1
  %v1326 = vadd.f32 %v1324, %v1325
  %v1327 = vmul.f32 %v1253, %v1253
  %v1328 = vmul.f32 %v1254, %v1254
  %v1329 = vmul.f32 %v1255, %v1255
  %v1330 = vmul.f32 %v1256, %v1256
  %v1331 = vmul.f32 %v1257, %v1257
  %v1332 = vmul.f32 %v1258, %v1258
  %v1333 = vmul.f32 %v1259, %v1259
  %v1334 = vmul.f32 %v1260, %v1260
  %v1335 = vmul.f32 %v1261, %v1261
  %v1336 = vmul.f32 %v1262, %v1262
  %v1337 = vmul.f32 %v1263, %v1263
  %v1338 = vmul.f32 %v1264, %v1264
  %v1339 = vmul.f32 %v1265, %v1265
  %v1340 = vmul.f32 %v1266, %v1266
  %v1341 = vmul.f32 %v1267, %v1267
  %v1342 = vmul.f32 %v1268, %v1268
  %v1343 = vmul.f32 %v1269, %v1269
  %v1344 = vmul.f32 %v1270, %v1270
  %v1345 = vmul.f32 %v1271, %v1271
  %v1346 = vmul.f32 %v1272, %v1272
  %v1347 = vmul.f32 %v1273, %v1273
  %v1348 = vmul.f32 %v1274, %v1274
  %v1349 = vmul.f32 %v1275, %v1275
  %v1350 = vmul.f32 %v1276, %v1276
  %v1351 = vmul.f32 %v1277, %v1277
  %v1352 = vmul.f32 %v1278, %v1278
  %v1353 = vmul.f32 %v1279, %v1279
  %v1354 = vmul.f32 %v1280, %v1280
  %v1355 = vmul.f32 %v1281, %v1281
  %v1356 = vmul.f32 %v1282, %v1282
  %v1357 = vmul.f32 %v1283, %v1283
  %v1358 = vmul.f32 %v1284, %v1284
  %v1359 = vadd.f32 %v1327, %v1329
  %v1360 = vadd.f32 %v1359, %v1331
  %v1361 = vadd.f32 %v1360, %v1333
  %v1362 = vadd.f32 %v1361, %v1335
  %v1363 = vadd.f32 %v1362, %v1337
  %v1364 = vadd.f32 %v1363, %v1339
  %v1365 = vadd.f32 %v1364, %v1341
  %v1366 = vadd.f32 %v1365, %v1343
  %v1367 = vadd.f32 %v1366, %v1345
  %v1368 = vadd.f32 %v1367, %v1347
  %v1369 = vadd.f32 %v1368, %v1349
  %v1370 = vadd.f32 %v1369, %v1351
  %v1371 = vadd.f32 %v1370, %v1353
  %v1372 = vadd.f32 %v1371, %v1355
  %v1373 = vadd.f32 %v1372, %v1357
  %v1374 = vrot.slane %v1373, 4
  %v1375 = vadd.f32 %v1373, %v1374
  %v1376 = vrot.slane %v1375, 2
  %v1377 = vadd.f32 %v1375, %v1376
  %v1378 = vrot.slane %v1377, 1
  %v1379 = vadd.f32 %v1377, %v1378
  %v1380 = vadd.f32 %v1328, %v1330
  %v1381 = vadd.f32 %v1380, %v1332
  %v1382 = vadd.f32 %v1381, %v1334
  %v1383 = vadd.f32 %v1382, %v1336
  %v1384 = vadd.f32 %v1383, %v1338
  %v1385 = vadd.f32 %v1384, %v1340
  %v1386 = vadd.f32 %v1385, %v1342
  %v1387 = vadd.f32 %v1386, %v1344
  %v1388 = vadd.f32 %v1387, %v1346
  %v1389 = vadd.f32 %v1388, %v1348
  %v1390 = vadd.f32 %v1389, %v1350
  %v1391 = vadd.f32 %v1390, %v1352
  %v1392 = vadd.f32 %v1391, %v1354
  %v1393 = vadd.f32 %v1392, %v1356
  %v1394 = vadd.f32 %v1393, %v1358
  %v1395 = vrot.slane %v1394, 4
  %v1396 = vadd.f32 %v1394, %v1395
  %v1397 = vrot.slane %v1396, 2
  %v1398 = vadd.f32 %v1396, %v1397
  %v1399 = vrot.slane %v1398, 1
  %v1400 = vadd.f32 %v1398, %v1399
  %vm1401 = vcmask 1040384
  %v1402 = vsel %vm1401, %v1305, %v1379
  %v1403 = vsel %vm1401, %v1326, %v1400
  %vm1404 = vcmask 1041408
  %v1405 = vsel %vm1404, %v1402, 0.0
  %v1406 = vsel %vm1404, %v1403, 0.0
  %1407 = vst [vmem:[%s4] sm:$0xff] %v1405
  %1408 = vst [vmem:[%s4 + $0x8] sm:$0xff] %v1406
  // Predicated region
  $region14: #{unet_generator_forward.15} parent=0 // pred_check
    _
  $region15: #{unet_generator_forward.15} parent=0 // pred_check_branch
    %1410 = sbr.rel (0) target = $region17
  $region16: #{unet_generator_forward.15} parent=0 // pred_region
    _
  $region17: #{unet_generator_forward.15} parent=0 // pred_fallthru
    _
  // Predicated region
  $region18: #{unet_generator_forward.15} parent=0 // pred_check
    _
  $region19: #{unet_generator_forward.15} parent=0 // pred_check_branch
    %1412 = sbr.rel (0) target = $region21
  $region20: #{unet_generator_forward.15} parent=0 // pred_region
    _
  $region21: #{unet_generator_forward.15} parent=0 // pred_fallthru
    _
  // Predicated region
  $region22: #{unet_generator_forward.15} parent=0 // pred_check
    _
  $region23: #{unet_generator_forward.15} parent=0 // pred_check_branch
    %1414 = sbr.rel (0) target = $region25
  $region24: #{unet_generator_forward.15} parent=0 // pred_region
    _
  $region25: #{unet_generator_forward.15} parent=0 // pred_fallthru
    _
  // Predicated region
  $region26: #{unet_generator_forward.15} parent=0 // pred_check
    _
  $region27: #{unet_generator_forward.15} parent=0 // pred_check_branch
    %1416 = sbr.rel (0) target = $region29
  $region28: #{unet_generator_forward.15} parent=0 // pred_region
    _
  $region29: #{unet_generator_forward.15} parent=0 // pred_fallthru
    _

// kernel: tile.118
$region0: #{tile.118}
  #allocation0 [shape = 's32[1]{0}', space=sflag, size = 0x4, scoped, tag = 'scoped memory for tile.118']
  %s0 = inlined_call_operand.vmem [shape: f32[64], index: 0, kind: input, shape index: {}]
  %s1 = inlined_call_operand.vmem [shape: f32[9,64], index: 1, kind: output, shape index: {}]
  // Predicated region
  $region2: #{tile.118} parent=0 // pred_check
    _
  $region3: #{tile.118} parent=0 // pred_check_branch
    %3 = sbr.rel (0) target = $region5
  $region4: #{tile.118} parent=0 // pred_region
    _
  $region5: #{tile.118} parent=0 // pred_fallthru
    _
  %v4 = vld [vmem:[%s0] ss:$0 sm:$0xff]
  %5 = vst [vmem:[%s1] sm:$0xff] %v4
  %s6 = scalar_lea.vmem %s1, 8
  %7 = vst [vmem:[%s6] sm:$0xff] %v4

// kernel: unet_generator_forward.16
$region0: #{unet_generator_forward.16}
  #allocation0 [shape = 'u32[]', space=smem, size = 0x4, offset = 0x4, fixed_abs, tag = 'smem constant byte address 0x4 - core index']
  #allocation1 [shape = 'u32[144,128]{1,0:T(1,128)}', space=vmem, size = 0x12000, scoped, tag = 'internal scratch']
  %s0 = inlined_call_operand.vmem [shape: bf16[128,1152], index: 0, kind: input, shape index: {}]
  %s1 = inlined_call_operand.vmem [shape: bf16[1152,128], index: 1, kind: input, shape index: {}]
  %s2 = inlined_call_operand.vmem [shape: f32[1,128], index: 2, kind: input, shape index: {}]
  %s3 = inlined_call_operand.vmem [shape: f32[1,1152], index: 3, kind: input, shape index: {}]
  %s4 = inlined_call_operand.vmem [shape: f32[1,1152], index: 4, kind: input, shape index: {}]
  %s5 = inlined_call_operand.vmem [shape: bf16[128,128], index: 5, kind: output, shape index: {0}]
  %s6 = inlined_call_operand.vmem [shape: f32[1,8,128], index: 6, kind: output, shape index: {1}]
  %7 = xla_tuple %s5, %s6
  %s8 = sld [smem:[#allocation0]]
  $region38: #{unet_generator_forward.16} parent=0
    _
  %s10 = ssub.s32 1, %s8
  %s11 = scalar_select 0, %s10, %s8
  // Predicated region
  $region2: #{unet_generator_forward.16} parent=0 // pred_check
    _
  $region3: #{unet_generator_forward.16} parent=0 // pred_check_branch
    %13 = sbr.rel (0) target = $region5
  $region4: #{unet_generator_forward.16} parent=0 // pred_region
    _
  $region5: #{unet_generator_forward.16} parent=0 // pred_fallthru
    _
  // Predicated region
  $region6: #{unet_generator_forward.16} parent=0 // pred_check
    _
  $region7: #{unet_generator_forward.16} parent=0 // pred_check_branch
    %15 = sbr.rel (0) target = $region9
  $region8: #{unet_generator_forward.16} parent=0 // pred_region
    _
  $region9: #{unet_generator_forward.16} parent=0 // pred_fallthru
    _
  // Predicated region
  $region10: #{unet_generator_forward.16} parent=0 // pred_check
    _
  $region11: #{unet_generator_forward.16} parent=0 // pred_check_branch
    %17 = sbr.rel (0) target = $region13
  $region12: #{unet_generator_forward.16} parent=0 // pred_region
    _
  $region13: #{unet_generator_forward.16} parent=0 // pred_fallthru
    _
  // Predicated region
  $region14: #{unet_generator_forward.16} parent=0 // pred_check
    _
  $region15: #{unet_generator_forward.16} parent=0 // pred_check_branch
    %19 = sbr.rel (0) target = $region17
  $region16: #{unet_generator_forward.16} parent=0 // pred_region
    _
  $region17: #{unet_generator_forward.16} parent=0 // pred_fallthru
    _
  // Predicated region
  $region18: #{unet_generator_forward.16} parent=0 // pred_check
    _
  $region19: #{unet_generator_forward.16} parent=0 // pred_check_branch
    %21 = sbr.rel (0) target = $region21
  $region20: #{unet_generator_forward.16} parent=0 // pred_region
    _
  $region21: #{unet_generator_forward.16} parent=0 // pred_fallthru
    _
  %v23 = vld [vmem:[%s0] sm:$0xff]
  %v24 = vld [vmem:[%s0 + $0x8] sm:$0xff]
  %v25 = vld [vmem:[%s0 + $0x10] sm:$0xff]
  %v26 = vld [vmem:[%s0 + $0x18] sm:$0xff]
  %v27 = vld [vmem:[%s0 + $0x20] sm:$0xf]
  %v28 = vld [vmem:[%s0 + $0x24] sm:$0xff]
  %v29 = vld [vmem:[%s0 + $0x2c] sm:$0xff]
  %v30 = vld [vmem:[%s0 + $0x34] sm:$0xff]
  %v31 = vld [vmem:[%s0 + $0x3c] sm:$0xff]
  %v32 = vld [vmem:[%s0 + $0x44] sm:$0xf]
  %v33 = vld [vmem:[%s0 + $0x48] sm:$0xff]
  %v34 = vld [vmem:[%s0 + $0x50] sm:$0xff]
  %v35 = vld [vmem:[%s0 + $0x58] sm:$0xff]
  %v36 = vld [vmem:[%s0 + $0x60] sm:$0xff]
  %v37 = vld [vmem:[%s0 + $0x68] sm:$0xf]
  %v38 = vld [vmem:[%s0 + $0x6c] sm:$0xff]
  %v39 = vld [vmem:[%s0 + $0x74] sm:$0xff]
  %v40 = vld [vmem:[%s0 + $0x7c] sm:$0xff]
  %v41 = vld [vmem:[%s0 + $0x84] sm:$0xff]
  %v42 = vld [vmem:[%s0 + $0x8c] sm:$0xf]
  %v43 = vld [vmem:[%s0 + $0x90] sm:$0xff]
  %v44 = vld [vmem:[%s0 + $0x98] sm:$0xff]
  %v45 = vld [vmem:[%s0 + $0xa0] sm:$0xff]
  %v46 = vld [vmem:[%s0 + $0xa8] sm:$0xff]
  %v47 = vld [vmem:[%s0 + $0xb0] sm:$0xf]
  %v48 = vld [vmem:[%s0 + $0xb4] sm:$0xff]
  %v49 = vld [vmem:[%s0 + $0xbc] sm:$0xff]
  %v50 = vld [vmem:[%s0 + $0xc4] sm:$0xff]
  %v51 = vld [vmem:[%s0 + $0xcc] sm:$0xff]
  %v52 = vld [vmem:[%s0 + $0xd4] sm:$0xf]
  %v53 = vld [vmem:[%s0 + $0xd8] sm:$0xff]
  %v54 = vld [vmem:[%s0 + $0xe0] sm:$0xff]
  %v55 = vld [vmem:[%s0 + $0xe8] sm:$0xff]
  %v56 = vld [vmem:[%s0 + $0xf0] sm:$0xff]
  %v57 = vld [vmem:[%s0 + $0xf8] sm:$0xf]
  %v58 = vld [vmem:[%s0 + $0xfc] sm:$0xff]
  %v59 = vld [vmem:[%s0 + $0x104] sm:$0xff]
  %v60 = vld [vmem:[%s0 + $0x10c] sm:$0xff]
  %v61 = vld [vmem:[%s0 + $0x114] sm:$0xff]
  %v62 = vld [vmem:[%s0 + $0x11c] sm:$0xf]
  %v63 = vld [vmem:[%s0 + $0x120] sm:$0xff]
  %v64 = vld [vmem:[%s0 + $0x128] sm:$0xff]
  %v65 = vld [vmem:[%s0 + $0x130] sm:$0xff]
  %v66 = vld [vmem:[%s0 + $0x138] sm:$0xff]
  %v67 = vld [vmem:[%s0 + $0x140] sm:$0xf]
  %v68 = vld [vmem:[%s0 + $0x144] sm:$0xff]
  %v69 = vld [vmem:[%s0 + $0x14c] sm:$0xff]
  %v70 = vld [vmem:[%s0 + $0x154] sm:$0xff]
  %v71 = vld [vmem:[%s0 + $0x15c] sm:$0xff]
  %v72 = vld [vmem:[%s0 + $0x164] sm:$0xf]
  %v73 = vld [vmem:[%s0 + $0x168] sm:$0xff]
  %v74 = vld [vmem:[%s0 + $0x170] sm:$0xff]
  %v75 = vld [vmem:[%s0 + $0x178] sm:$0xff]
  %v76 = vld [vmem:[%s0 + $0x180] sm:$0xff]
  %v77 = vld [vmem:[%s0 + $0x188] sm:$0xf]
  %v78 = vld [vmem:[%s0 + $0x18c] sm:$0xff]
  %v79 = vld [vmem:[%s0 + $0x194] sm:$0xff]
  %v80 = vld [vmem:[%s0 + $0x19c] sm:$0xff]
  %v81 = vld [vmem:[%s0 + $0x1a4] sm:$0xff]
  %v82 = vld [vmem:[%s0 + $0x1ac] sm:$0xf]
  %v83 = vld [vmem:[%s0 + $0x1b0] sm:$0xff]
  %v84 = vld [vmem:[%s0 + $0x1b8] sm:$0xff]
  %v85 = vld [vmem:[%s0 + $0x1c0] sm:$0xff]
  %v86 = vld [vmem:[%s0 + $0x1c8] sm:$0xff]
  %v87 = vld [vmem:[%s0 + $0x1d0] sm:$0xf]
  %v88 = vld [vmem:[%s0 + $0x1d4] sm:$0xff]
  %v89 = vld [vmem:[%s0 + $0x1dc] sm:$0xff]
  %v90 = vld [vmem:[%s0 + $0x1e4] sm:$0xff]
  %v91 = vld [vmem:[%s0 + $0x1ec] sm:$0xff]
  %v92 = vld [vmem:[%s0 + $0x1f4] sm:$0xf]
  %v93 = vld [vmem:[%s0 + $0x1f8] sm:$0xff]
  %v94 = vld [vmem:[%s0 + $0x200] sm:$0xff]
  %v95 = vld [vmem:[%s0 + $0x208] sm:$0xff]
  %v96 = vld [vmem:[%s0 + $0x210] sm:$0xff]
  %v97 = vld [vmem:[%s0 + $0x218] sm:$0xf]
  %v98 = vld [vmem:[%s0 + $0x21c] sm:$0xff]
  %v99 = vld [vmem:[%s0 + $0x224] sm:$0xff]
  %v100 = vld [vmem:[%s0 + $0x22c] sm:$0xff]
  %v101 = vld [vmem:[%s0 + $0x234] sm:$0xff]
  %v102 = vld [vmem:[%s0 + $0x23c] sm:$0xf]
  %v103 = vunpack.c.l.bf16 %v23
  %v104 = vunpack.c.h.bf16 %v23
  %v105 = vunpack.c.l.bf16 %v24
  %v106 = vunpack.c.h.bf16 %v24
  %v107 = vunpack.c.l.bf16 %v25
  %v108 = vunpack.c.h.bf16 %v25
  %v109 = vunpack.c.l.bf16 %v26
  %v110 = vunpack.c.h.bf16 %v26
  %v111 = vunpack.c.l.bf16 %v27
  %v112 = vunpack.c.l.bf16 %v28
  %v113 = vunpack.c.h.bf16 %v28
  %v114 = vunpack.c.l.bf16 %v29
  %v115 = vunpack.c.h.bf16 %v29
  %v116 = vunpack.c.l.bf16 %v30
  %v117 = vunpack.c.h.bf16 %v30
  %v118 = vunpack.c.l.bf16 %v31
  %v119 = vunpack.c.h.bf16 %v31
  %v120 = vunpack.c.l.bf16 %v32
  %v121 = vunpack.c.l.bf16 %v33
  %v122 = vunpack.c.h.bf16 %v33
  %v123 = vunpack.c.l.bf16 %v34
  %v124 = vunpack.c.h.bf16 %v34
  %v125 = vunpack.c.l.bf16 %v35
  %v126 = vunpack.c.h.bf16 %v35
  %v127 = vunpack.c.l.bf16 %v36
  %v128 = vunpack.c.h.bf16 %v36
  %v129 = vunpack.c.l.bf16 %v37
  %v130 = vunpack.c.l.bf16 %v38
  %v131 = vunpack.c.h.bf16 %v38
  %v132 = vunpack.c.l.bf16 %v39
  %v133 = vunpack.c.h.bf16 %v39
  %v134 = vunpack.c.l.bf16 %v40
  %v135 = vunpack.c.h.bf16 %v40
  %v136 = vunpack.c.l.bf16 %v41
  %v137 = vunpack.c.h.bf16 %v41
  %v138 = vunpack.c.l.bf16 %v42
  %v139 = vunpack.c.l.bf16 %v43
  %v140 = vunpack.c.h.bf16 %v43
  %v141 = vunpack.c.l.bf16 %v44
  %v142 = vunpack.c.h.bf16 %v44
  %v143 = vunpack.c.l.bf16 %v45
  %v144 = vunpack.c.h.bf16 %v45
  %v145 = vunpack.c.l.bf16 %v46
  %v146 = vunpack.c.h.bf16 %v46
  %v147 = vunpack.c.l.bf16 %v47
  %v148 = vunpack.c.l.bf16 %v48
  %v149 = vunpack.c.h.bf16 %v48
  %v150 = vunpack.c.l.bf16 %v49
  %v151 = vunpack.c.h.bf16 %v49
  %v152 = vunpack.c.l.bf16 %v50
  %v153 = vunpack.c.h.bf16 %v50
  %v154 = vunpack.c.l.bf16 %v51
  %v155 = vunpack.c.h.bf16 %v51
  %v156 = vunpack.c.l.bf16 %v52
  %v157 = vunpack.c.l.bf16 %v53
  %v158 = vunpack.c.h.bf16 %v53
  %v159 = vunpack.c.l.bf16 %v54
  %v160 = vunpack.c.h.bf16 %v54
  %v161 = vunpack.c.l.bf16 %v55
  %v162 = vunpack.c.h.bf16 %v55
  %v163 = vunpack.c.l.bf16 %v56
  %v164 = vunpack.c.h.bf16 %v56
  %v165 = vunpack.c.l.bf16 %v57
  %v166 = vunpack.c.l.bf16 %v58
  %v167 = vunpack.c.h.bf16 %v58
  %v168 = vunpack.c.l.bf16 %v59
  %v169 = vunpack.c.h.bf16 %v59
  %v170 = vunpack.c.l.bf16 %v60
  %v171 = vunpack.c.h.bf16 %v60
  %v172 = vunpack.c.l.bf16 %v61
  %v173 = vunpack.c.h.bf16 %v61
  %v174 = vunpack.c.l.bf16 %v62
  %v175 = vunpack.c.l.bf16 %v63
  %v176 = vunpack.c.h.bf16 %v63
  %v177 = vunpack.c.l.bf16 %v64
  %v178 = vunpack.c.h.bf16 %v64
  %v179 = vunpack.c.l.bf16 %v65
  %v180 = vunpack.c.h.bf16 %v65
  %v181 = vunpack.c.l.bf16 %v66
  %v182 = vunpack.c.h.bf16 %v66
  %v183 = vunpack.c.l.bf16 %v67
  %v184 = vunpack.c.l.bf16 %v68
  %v185 = vunpack.c.h.bf16 %v68
  %v186 = vunpack.c.l.bf16 %v69
  %v187 = vunpack.c.h.bf16 %v69
  %v188 = vunpack.c.l.bf16 %v70
  %v189 = vunpack.c.h.bf16 %v70
  %v190 = vunpack.c.l.bf16 %v71
  %v191 = vunpack.c.h.bf16 %v71
  %v192 = vunpack.c.l.bf16 %v72
  %v193 = vunpack.c.l.bf16 %v73
  %v194 = vunpack.c.h.bf16 %v73
  %v195 = vunpack.c.l.bf16 %v74
  %v196 = vunpack.c.h.bf16 %v74
  %v197 = vunpack.c.l.bf16 %v75
  %v198 = vunpack.c.h.bf16 %v75
  %v199 = vunpack.c.l.bf16 %v76
  %v200 = vunpack.c.h.bf16 %v76
  %v201 = vunpack.c.l.bf16 %v77
  %v202 = vunpack.c.l.bf16 %v78
  %v203 = vunpack.c.h.bf16 %v78
  %v204 = vunpack.c.l.bf16 %v79
  %v205 = vunpack.c.h.bf16 %v79
  %v206 = vunpack.c.l.bf16 %v80
  %v207 = vunpack.c.h.bf16 %v80
  %v208 = vunpack.c.l.bf16 %v81
  %v209 = vunpack.c.h.bf16 %v81
  %v210 = vunpack.c.l.bf16 %v82
  %v211 = vunpack.c.l.bf16 %v83
  %v212 = vunpack.c.h.bf16 %v83
  %v213 = vunpack.c.l.bf16 %v84
  %v214 = vunpack.c.h.bf16 %v84
  %v215 = vunpack.c.l.bf16 %v85
  %v216 = vunpack.c.h.bf16 %v85
  %v217 = vunpack.c.l.bf16 %v86
  %v218 = vunpack.c.h.bf16 %v86
  %v219 = vunpack.c.l.bf16 %v87
  %v220 = vunpack.c.l.bf16 %v88
  %v221 = vunpack.c.h.bf16 %v88
  %v222 = vunpack.c.l.bf16 %v89
  %v223 = vunpack.c.h.bf16 %v89
  %v224 = vunpack.c.l.bf16 %v90
  %v225 = vunpack.c.h.bf16 %v90
  %v226 = vunpack.c.l.bf16 %v91
  %v227 = vunpack.c.h.bf16 %v91
  %v228 = vunpack.c.l.bf16 %v92
  %v229 = vunpack.c.l.bf16 %v93
  %v230 = vunpack.c.h.bf16 %v93
  %v231 = vunpack.c.l.bf16 %v94
  %v232 = vunpack.c.h.bf16 %v94
  %v233 = vunpack.c.l.bf16 %v95
  %v234 = vunpack.c.h.bf16 %v95
  %v235 = vunpack.c.l.bf16 %v96
  %v236 = vunpack.c.h.bf16 %v96
  %v237 = vunpack.c.l.bf16 %v97
  %v238 = vunpack.c.l.bf16 %v98
  %v239 = vunpack.c.h.bf16 %v98
  %v240 = vunpack.c.l.bf16 %v99
  %v241 = vunpack.c.h.bf16 %v99
  %v242 = vunpack.c.l.bf16 %v100
  %v243 = vunpack.c.h.bf16 %v100
  %v244 = vunpack.c.l.bf16 %v101
  %v245 = vunpack.c.h.bf16 %v101
  %v246 = vunpack.c.l.bf16 %v102
  %v247 = vld [vmem:[%s3] sm:$0xff]
  %v248 = vld [vmem:[%s3 + $0x8] sm:$0x1]
  %v251 = vlaneseq
  %v252 = vshrl.u32 %v251, 7
  %v253 = vsub.s32 0, %v252
  %v254 = vrot.slane %v247, %v253
  %v255 = vlaneseq
  %v256 = vshrl.u32 %v255, 7
  %v257 = vsub.s32 1, %v256
  %v258 = vrot.slane %v247, %v257
  %v259 = vlaneseq
  %v260 = vshrl.u32 %v259, 7
  %v261 = vsub.s32 2, %v260
  %v262 = vrot.slane %v247, %v261
  %v263 = vlaneseq
  %v264 = vshrl.u32 %v263, 7
  %v265 = vsub.s32 3, %v264
  %v266 = vrot.slane %v247, %v265
  %v267 = vlaneseq
  %v268 = vshrl.u32 %v267, 7
  %v269 = vsub.s32 4, %v268
  %v270 = vrot.slane %v247, %v269
  %v271 = vlaneseq
  %v272 = vshrl.u32 %v271, 7
  %v273 = vsub.s32 5, %v272
  %v274 = vrot.slane %v247, %v273
  %v275 = vlaneseq
  %v276 = vshrl.u32 %v275, 7
  %v277 = vsub.s32 6, %v276
  %v278 = vrot.slane %v247, %v277
  %v279 = vlaneseq
  %v280 = vshrl.u32 %v279, 7
  %v281 = vsub.s32 7, %v280
  %v282 = vrot.slane %v247, %v281
  %v283 = vlaneseq
  %v284 = vshrl.u32 %v283, 7
  %v285 = vsub.s32 0, %v284
  %v286 = vrot.slane %v248, %v285
  %v296 = vmul.f32 %v103, %v254
  %v297 = vmul.f32 %v104, %v258
  %v298 = vmul.f32 %v105, %v262
  %v299 = vmul.f32 %v106, %v266
  %v300 = vmul.f32 %v107, %v270
  %v301 = vmul.f32 %v108, %v274
  %v302 = vmul.f32 %v109, %v278
  %v303 = vmul.f32 %v110, %v282
  %v304 = vmul.f32 %v111, %v286
  %v305 = vmul.f32 %v112, %v254
  %v306 = vmul.f32 %v113, %v258
  %v307 = vmul.f32 %v114, %v262
  %v308 = vmul.f32 %v115, %v266
  %v309 = vmul.f32 %v116, %v270
  %v310 = vmul.f32 %v117, %v274
  %v311 = vmul.f32 %v118, %v278
  %v312 = vmul.f32 %v119, %v282
  %v313 = vmul.f32 %v120, %v286
  %v314 = vmul.f32 %v121, %v254
  %v315 = vmul.f32 %v122, %v258
  %v316 = vmul.f32 %v123, %v262
  %v317 = vmul.f32 %v124, %v266
  %v318 = vmul.f32 %v125, %v270
  %v319 = vmul.f32 %v126, %v274
  %v320 = vmul.f32 %v127, %v278
  %v321 = vmul.f32 %v128, %v282
  %v322 = vmul.f32 %v129, %v286
  %v323 = vmul.f32 %v130, %v254
  %v324 = vmul.f32 %v131, %v258
  %v325 = vmul.f32 %v132, %v262
  %v326 = vmul.f32 %v133, %v266
  %v327 = vmul.f32 %v134, %v270
  %v328 = vmul.f32 %v135, %v274
  %v329 = vmul.f32 %v136, %v278
  %v330 = vmul.f32 %v137, %v282
  %v331 = vmul.f32 %v138, %v286
  %v332 = vmul.f32 %v139, %v254
  %v333 = vmul.f32 %v140, %v258
  %v334 = vmul.f32 %v141, %v262
  %v335 = vmul.f32 %v142, %v266
  %v336 = vmul.f32 %v143, %v270
  %v337 = vmul.f32 %v144, %v274
  %v338 = vmul.f32 %v145, %v278
  %v339 = vmul.f32 %v146, %v282
  %v340 = vmul.f32 %v147, %v286
  %v341 = vmul.f32 %v148, %v254
  %v342 = vmul.f32 %v149, %v258
  %v343 = vmul.f32 %v150, %v262
  %v344 = vmul.f32 %v151, %v266
  %v345 = vmul.f32 %v152, %v270
  %v346 = vmul.f32 %v153, %v274
  %v347 = vmul.f32 %v154, %v278
  %v348 = vmul.f32 %v155, %v282
  %v349 = vmul.f32 %v156, %v286
  %v350 = vmul.f32 %v157, %v254
  %v351 = vmul.f32 %v158, %v258
  %v352 = vmul.f32 %v159, %v262
  %v353 = vmul.f32 %v160, %v266
  %v354 = vmul.f32 %v161, %v270
  %v355 = vmul.f32 %v162, %v274
  %v356 = vmul.f32 %v163, %v278
  %v357 = vmul.f32 %v164, %v282
  %v358 = vmul.f32 %v165, %v286
  %v359 = vmul.f32 %v166, %v254
  %v360 = vmul.f32 %v167, %v258
  %v361 = vmul.f32 %v168, %v262
  %v362 = vmul.f32 %v169, %v266
  %v363 = vmul.f32 %v170, %v270
  %v364 = vmul.f32 %v171, %v274
  %v365 = vmul.f32 %v172, %v278
  %v366 = vmul.f32 %v173, %v282
  %v367 = vmul.f32 %v174, %v286
  %v368 = vmul.f32 %v175, %v254
  %v369 = vmul.f32 %v176, %v258
  %v370 = vmul.f32 %v177, %v262
  %v371 = vmul.f32 %v178, %v266
  %v372 = vmul.f32 %v179, %v270
  %v373 = vmul.f32 %v180, %v274
  %v374 = vmul.f32 %v181, %v278
  %v375 = vmul.f32 %v182, %v282
  %v376 = vmul.f32 %v183, %v286
  %v377 = vmul.f32 %v184, %v254
  %v378 = vmul.f32 %v185, %v258
  %v379 = vmul.f32 %v186, %v262
  %v380 = vmul.f32 %v187, %v266
  %v381 = vmul.f32 %v188, %v270
  %v382 = vmul.f32 %v189, %v274
  %v383 = vmul.f32 %v190, %v278
  %v384 = vmul.f32 %v191, %v282
  %v385 = vmul.f32 %v192, %v286
  %v386 = vmul.f32 %v193, %v254
  %v387 = vmul.f32 %v194, %v258
  %v388 = vmul.f32 %v195, %v262
  %v389 = vmul.f32 %v196, %v266
  %v390 = vmul.f32 %v197, %v270
  %v391 = vmul.f32 %v198, %v274
  %v392 = vmul.f32 %v199, %v278
  %v393 = vmul.f32 %v200, %v282
  %v394 = vmul.f32 %v201, %v286
  %v395 = vmul.f32 %v202, %v254
  %v396 = vmul.f32 %v203, %v258
  %v397 = vmul.f32 %v204, %v262
  %v398 = vmul.f32 %v205, %v266
  %v399 = vmul.f32 %v206, %v270
  %v400 = vmul.f32 %v207, %v274
  %v401 = vmul.f32 %v208, %v278
  %v402 = vmul.f32 %v209, %v282
  %v403 = vmul.f32 %v210, %v286
  %v404 = vmul.f32 %v211, %v254
  %v405 = vmul.f32 %v212, %v258
  %v406 = vmul.f32 %v213, %v262
  %v407 = vmul.f32 %v214, %v266
  %v408 = vmul.f32 %v215, %v270
  %v409 = vmul.f32 %v216, %v274
  %v410 = vmul.f32 %v217, %v278
  %v411 = vmul.f32 %v218, %v282
  %v412 = vmul.f32 %v219, %v286
  %v413 = vmul.f32 %v220, %v254
  %v414 = vmul.f32 %v221, %v258
  %v415 = vmul.f32 %v222, %v262
  %v416 = vmul.f32 %v223, %v266
  %v417 = vmul.f32 %v224, %v270
  %v418 = vmul.f32 %v225, %v274
  %v419 = vmul.f32 %v226, %v278
  %v420 = vmul.f32 %v227, %v282
  %v421 = vmul.f32 %v228, %v286
  %v422 = vmul.f32 %v229, %v254
  %v423 = vmul.f32 %v230, %v258
  %v424 = vmul.f32 %v231, %v262
  %v425 = vmul.f32 %v232, %v266
  %v426 = vmul.f32 %v233, %v270
  %v427 = vmul.f32 %v234, %v274
  %v428 = vmul.f32 %v235, %v278
  %v429 = vmul.f32 %v236, %v282
  %v430 = vmul.f32 %v237, %v286
  %v431 = vmul.f32 %v238, %v254
  %v432 = vmul.f32 %v239, %v258
  %v433 = vmul.f32 %v240, %v262
  %v434 = vmul.f32 %v241, %v266
  %v435 = vmul.f32 %v242, %v270
  %v436 = vmul.f32 %v243, %v274
  %v437 = vmul.f32 %v244, %v278
  %v438 = vmul.f32 %v245, %v282
  %v439 = vmul.f32 %v246, %v286
  %v440 = vld [vmem:[%s4] sm:$0xff]
  %v441 = vld [vmem:[%s4 + $0x8] sm:$0x1]
  %v444 = vlaneseq
  %v445 = vshrl.u32 %v444, 7
  %v446 = vsub.s32 0, %v445
  %v447 = vrot.slane %v440, %v446
  %v448 = vlaneseq
  %v449 = vshrl.u32 %v448, 7
  %v450 = vsub.s32 1, %v449
  %v451 = vrot.slane %v440, %v450
  %v452 = vlaneseq
  %v453 = vshrl.u32 %v452, 7
  %v454 = vsub.s32 2, %v453
  %v455 = vrot.slane %v440, %v454
  %v456 = vlaneseq
  %v457 = vshrl.u32 %v456, 7
  %v458 = vsub.s32 3, %v457
  %v459 = vrot.slane %v440, %v458
  %v460 = vlaneseq
  %v461 = vshrl.u32 %v460, 7
  %v462 = vsub.s32 4, %v461
  %v463 = vrot.slane %v440, %v462
  %v464 = vlaneseq
  %v465 = vshrl.u32 %v464, 7
  %v466 = vsub.s32 5, %v465
  %v467 = vrot.slane %v440, %v466
  %v468 = vlaneseq
  %v469 = vshrl.u32 %v468, 7
  %v470 = vsub.s32 6, %v469
  %v471 = vrot.slane %v440, %v470
  %v472 = vlaneseq
  %v473 = vshrl.u32 %v472, 7
  %v474 = vsub.s32 7, %v473
  %v475 = vrot.slane %v440, %v474
  %v476 = vlaneseq
  %v477 = vshrl.u32 %v476, 7
  %v478 = vsub.s32 0, %v477
  %v479 = vrot.slane %v441, %v478
  %v489 = vadd.f32 %v296, %v447
  %v490 = vadd.f32 %v297, %v451
  %v491 = vadd.f32 %v298, %v455
  %v492 = vadd.f32 %v299, %v459
  %v493 = vadd.f32 %v300, %v463
  %v494 = vadd.f32 %v301, %v467
  %v495 = vadd.f32 %v302, %v471
  %v496 = vadd.f32 %v303, %v475
  %v497 = vadd.f32 %v304, %v479
  %v498 = vadd.f32 %v305, %v447
  %v499 = vadd.f32 %v306, %v451
  %v500 = vadd.f32 %v307, %v455
  %v501 = vadd.f32 %v308, %v459
  %v502 = vadd.f32 %v309, %v463
  %v503 = vadd.f32 %v310, %v467
  %v504 = vadd.f32 %v311, %v471
  %v505 = vadd.f32 %v312, %v475
  %v506 = vadd.f32 %v313, %v479
  %v507 = vadd.f32 %v314, %v447
  %v508 = vadd.f32 %v315, %v451
  %v509 = vadd.f32 %v316, %v455
  %v510 = vadd.f32 %v317, %v459
  %v511 = vadd.f32 %v318, %v463
  %v512 = vadd.f32 %v319, %v467
  %v513 = vadd.f32 %v320, %v471
  %v514 = vadd.f32 %v321, %v475
  %v515 = vadd.f32 %v322, %v479
  %v516 = vadd.f32 %v323, %v447
  %v517 = vadd.f32 %v324, %v451
  %v518 = vadd.f32 %v325, %v455
  %v519 = vadd.f32 %v326, %v459
  %v520 = vadd.f32 %v327, %v463
  %v521 = vadd.f32 %v328, %v467
  %v522 = vadd.f32 %v329, %v471
  %v523 = vadd.f32 %v330, %v475
  %v524 = vadd.f32 %v331, %v479
  %v525 = vadd.f32 %v332, %v447
  %v526 = vadd.f32 %v333, %v451
  %v527 = vadd.f32 %v334, %v455
  %v528 = vadd.f32 %v335, %v459
  %v529 = vadd.f32 %v336, %v463
  %v530 = vadd.f32 %v337, %v467
  %v531 = vadd.f32 %v338, %v471
  %v532 = vadd.f32 %v339, %v475
  %v533 = vadd.f32 %v340, %v479
  %v534 = vadd.f32 %v341, %v447
  %v535 = vadd.f32 %v342, %v451
  %v536 = vadd.f32 %v343, %v455
  %v537 = vadd.f32 %v344, %v459
  %v538 = vadd.f32 %v345, %v463
  %v539 = vadd.f32 %v346, %v467
  %v540 = vadd.f32 %v347, %v471
  %v541 = vadd.f32 %v348, %v475
  %v542 = vadd.f32 %v349, %v479
  %v543 = vadd.f32 %v350, %v447
  %v544 = vadd.f32 %v351, %v451
  %v545 = vadd.f32 %v352, %v455
  %v546 = vadd.f32 %v353, %v459
  %v547 = vadd.f32 %v354, %v463
  %v548 = vadd.f32 %v355, %v467
  %v549 = vadd.f32 %v356, %v471
  %v550 = vadd.f32 %v357, %v475
  %v551 = vadd.f32 %v358, %v479
  %v552 = vadd.f32 %v359, %v447
  %v553 = vadd.f32 %v360, %v451
  %v554 = vadd.f32 %v361, %v455
  %v555 = vadd.f32 %v362, %v459
  %v556 = vadd.f32 %v363, %v463
  %v557 = vadd.f32 %v364, %v467
  %v558 = vadd.f32 %v365, %v471
  %v559 = vadd.f32 %v366, %v475
  %v560 = vadd.f32 %v367, %v479
  %v561 = vadd.f32 %v368, %v447
  %v562 = vadd.f32 %v369, %v451
  %v563 = vadd.f32 %v370, %v455
  %v564 = vadd.f32 %v371, %v459
  %v565 = vadd.f32 %v372, %v463
  %v566 = vadd.f32 %v373, %v467
  %v567 = vadd.f32 %v374, %v471
  %v568 = vadd.f32 %v375, %v475
  %v569 = vadd.f32 %v376, %v479
  %v570 = vadd.f32 %v377, %v447
  %v571 = vadd.f32 %v378, %v451
  %v572 = vadd.f32 %v379, %v455
  %v573 = vadd.f32 %v380, %v459
  %v574 = vadd.f32 %v381, %v463
  %v575 = vadd.f32 %v382, %v467
  %v576 = vadd.f32 %v383, %v471
  %v577 = vadd.f32 %v384, %v475
  %v578 = vadd.f32 %v385, %v479
  %v579 = vadd.f32 %v386, %v447
  %v580 = vadd.f32 %v387, %v451
  %v581 = vadd.f32 %v388, %v455
  %v582 = vadd.f32 %v389, %v459
  %v583 = vadd.f32 %v390, %v463
  %v584 = vadd.f32 %v391, %v467
  %v585 = vadd.f32 %v392, %v471
  %v586 = vadd.f32 %v393, %v475
  %v587 = vadd.f32 %v394, %v479
  %v588 = vadd.f32 %v395, %v447
  %v589 = vadd.f32 %v396, %v451
  %v590 = vadd.f32 %v397, %v455
  %v591 = vadd.f32 %v398, %v459
  %v592 = vadd.f32 %v399, %v463
  %v593 = vadd.f32 %v400, %v467
  %v594 = vadd.f32 %v401, %v471
  %v595 = vadd.f32 %v402, %v475
  %v596 = vadd.f32 %v403, %v479
  %v597 = vadd.f32 %v404, %v447
  %v598 = vadd.f32 %v405, %v451
  %v599 = vadd.f32 %v406, %v455
  %v600 = vadd.f32 %v407, %v459
  %v601 = vadd.f32 %v408, %v463
  %v602 = vadd.f32 %v409, %v467
  %v603 = vadd.f32 %v410, %v471
  %v604 = vadd.f32 %v411, %v475
  %v605 = vadd.f32 %v412, %v479
  %v606 = vadd.f32 %v413, %v447
  %v607 = vadd.f32 %v414, %v451
  %v608 = vadd.f32 %v415, %v455
  %v609 = vadd.f32 %v416, %v459
  %v610 = vadd.f32 %v417, %v463
  %v611 = vadd.f32 %v418, %v467
  %v612 = vadd.f32 %v419, %v471
  %v613 = vadd.f32 %v420, %v475
  %v614 = vadd.f32 %v421, %v479
  %v615 = vadd.f32 %v422, %v447
  %v616 = vadd.f32 %v423, %v451
  %v617 = vadd.f32 %v424, %v455
  %v618 = vadd.f32 %v425, %v459
  %v619 = vadd.f32 %v426, %v463
  %v620 = vadd.f32 %v427, %v467
  %v621 = vadd.f32 %v428, %v471
  %v622 = vadd.f32 %v429, %v475
  %v623 = vadd.f32 %v430, %v479
  %v624 = vadd.f32 %v431, %v447
  %v625 = vadd.f32 %v432, %v451
  %v626 = vadd.f32 %v433, %v455
  %v627 = vadd.f32 %v434, %v459
  %v628 = vadd.f32 %v435, %v463
  %v629 = vadd.f32 %v436, %v467
  %v630 = vadd.f32 %v437, %v471
  %v631 = vadd.f32 %v438, %v475
  %v632 = vadd.f32 %v439, %v479
  %v633 = vmax.f32 %v489, 0.0
  %v634 = vmax.f32 %v490, 0.0
  %v635 = vmax.f32 %v491, 0.0
  %v636 = vmax.f32 %v492, 0.0
  %v637 = vmax.f32 %v493, 0.0
  %v638 = vmax.f32 %v494, 0.0
  %v639 = vmax.f32 %v495, 0.0
  %v640 = vmax.f32 %v496, 0.0
  %v641 = vmax.f32 %v497, 0.0
  %v642 = vmax.f32 %v498, 0.0
  %v643 = vmax.f32 %v499, 0.0
  %v644 = vmax.f32 %v500, 0.0
  %v645 = vmax.f32 %v501, 0.0
  %v646 = vmax.f32 %v502, 0.0
  %v647 = vmax.f32 %v503, 0.0
  %v648 = vmax.f32 %v504, 0.0
  %v649 = vmax.f32 %v505, 0.0
  %v650 = vmax.f32 %v506, 0.0
  %v651 = vmax.f32 %v507, 0.0
  %v652 = vmax.f32 %v508, 0.0
  %v653 = vmax.f32 %v509, 0.0
  %v654 = vmax.f32 %v510, 0.0
  %v655 = vmax.f32 %v511, 0.0
  %v656 = vmax.f32 %v512, 0.0
  %v657 = vmax.f32 %v513, 0.0
  %v658 = vmax.f32 %v514, 0.0
  %v659 = vmax.f32 %v515, 0.0
  %v660 = vmax.f32 %v516, 0.0
  %v661 = vmax.f32 %v517, 0.0
  %v662 = vmax.f32 %v518, 0.0
  %v663 = vmax.f32 %v519, 0.0
  %v664 = vmax.f32 %v520, 0.0
  %v665 = vmax.f32 %v521, 0.0
  %v666 = vmax.f32 %v522, 0.0
  %v667 = vmax.f32 %v523, 0.0
  %v668 = vmax.f32 %v524, 0.0
  %v669 = vmax.f32 %v525, 0.0
  %v670 = vmax.f32 %v526, 0.0
  %v671 = vmax.f32 %v527, 0.0
  %v672 = vmax.f32 %v528, 0.0
  %v673 = vmax.f32 %v529, 0.0
  %v674 = vmax.f32 %v530, 0.0
  %v675 = vmax.f32 %v531, 0.0
  %v676 = vmax.f32 %v532, 0.0
  %v677 = vmax.f32 %v533, 0.0
  %v678 = vmax.f32 %v534, 0.0
  %v679 = vmax.f32 %v535, 0.0
  %v680 = vmax.f32 %v536, 0.0
  %v681 = vmax.f32 %v537, 0.0
  %v682 = vmax.f32 %v538, 0.0
  %v683 = vmax.f32 %v539, 0.0
  %v684 = vmax.f32 %v540, 0.0
  %v685 = vmax.f32 %v541, 0.0
  %v686 = vmax.f32 %v542, 0.0
  %v687 = vmax.f32 %v543, 0.0
  %v688 = vmax.f32 %v544, 0.0
  %v689 = vmax.f32 %v545, 0.0
  %v690 = vmax.f32 %v546, 0.0
  %v691 = vmax.f32 %v547, 0.0
  %v692 = vmax.f32 %v548, 0.0
  %v693 = vmax.f32 %v549, 0.0
  %v694 = vmax.f32 %v550, 0.0
  %v695 = vmax.f32 %v551, 0.0
  %v696 = vmax.f32 %v552, 0.0
  %v697 = vmax.f32 %v553, 0.0
  %v698 = vmax.f32 %v554, 0.0
  %v699 = vmax.f32 %v555, 0.0
  %v700 = vmax.f32 %v556, 0.0
  %v701 = vmax.f32 %v557, 0.0
  %v702 = vmax.f32 %v558, 0.0
  %v703 = vmax.f32 %v559, 0.0
  %v704 = vmax.f32 %v560, 0.0
  %v705 = vmax.f32 %v561, 0.0
  %v706 = vmax.f32 %v562, 0.0
  %v707 = vmax.f32 %v563, 0.0
  %v708 = vmax.f32 %v564, 0.0
  %v709 = vmax.f32 %v565, 0.0
  %v710 = vmax.f32 %v566, 0.0
  %v711 = vmax.f32 %v567, 0.0
  %v712 = vmax.f32 %v568, 0.0
  %v713 = vmax.f32 %v569, 0.0
  %v714 = vmax.f32 %v570, 0.0
  %v715 = vmax.f32 %v571, 0.0
  %v716 = vmax.f32 %v572, 0.0
  %v717 = vmax.f32 %v573, 0.0
  %v718 = vmax.f32 %v574, 0.0
  %v719 = vmax.f32 %v575, 0.0
  %v720 = vmax.f32 %v576, 0.0
  %v721 = vmax.f32 %v577, 0.0
  %v722 = vmax.f32 %v578, 0.0
  %v723 = vmax.f32 %v579, 0.0
  %v724 = vmax.f32 %v580, 0.0
  %v725 = vmax.f32 %v581, 0.0
  %v726 = vmax.f32 %v582, 0.0
  %v727 = vmax.f32 %v583, 0.0
  %v728 = vmax.f32 %v584, 0.0
  %v729 = vmax.f32 %v585, 0.0
  %v730 = vmax.f32 %v586, 0.0
  %v731 = vmax.f32 %v587, 0.0
  %v732 = vmax.f32 %v588, 0.0
  %v733 = vmax.f32 %v589, 0.0
  %v734 = vmax.f32 %v590, 0.0
  %v735 = vmax.f32 %v591, 0.0
  %v736 = vmax.f32 %v592, 0.0
  %v737 = vmax.f32 %v593, 0.0
  %v738 = vmax.f32 %v594, 0.0
  %v739 = vmax.f32 %v595, 0.0
  %v740 = vmax.f32 %v596, 0.0
  %v741 = vmax.f32 %v597, 0.0
  %v742 = vmax.f32 %v598, 0.0
  %v743 = vmax.f32 %v599, 0.0
  %v744 = vmax.f32 %v600, 0.0
  %v745 = vmax.f32 %v601, 0.0
  %v746 = vmax.f32 %v602, 0.0
  %v747 = vmax.f32 %v603, 0.0
  %v748 = vmax.f32 %v604, 0.0
  %v749 = vmax.f32 %v605, 0.0
  %v750 = vmax.f32 %v606, 0.0
  %v751 = vmax.f32 %v607, 0.0
  %v752 = vmax.f32 %v608, 0.0
  %v753 = vmax.f32 %v609, 0.0
  %v754 = vmax.f32 %v610, 0.0
  %v755 = vmax.f32 %v611, 0.0
  %v756 = vmax.f32 %v612, 0.0
  %v757 = vmax.f32 %v613, 0.0
  %v758 = vmax.f32 %v614, 0.0
  %v759 = vmax.f32 %v615, 0.0
  %v760 = vmax.f32 %v616, 0.0
  %v761 = vmax.f32 %v617, 0.0
  %v762 = vmax.f32 %v618, 0.0
  %v763 = vmax.f32 %v619, 0.0
  %v764 = vmax.f32 %v620, 0.0
  %v765 = vmax.f32 %v621, 0.0
  %v766 = vmax.f32 %v622, 0.0
  %v767 = vmax.f32 %v623, 0.0
  %v768 = vmax.f32 %v624, 0.0
  %v769 = vmax.f32 %v625, 0.0
  %v770 = vmax.f32 %v626, 0.0
  %v771 = vmax.f32 %v627, 0.0
  %v772 = vmax.f32 %v628, 0.0
  %v773 = vmax.f32 %v629, 0.0
  %v774 = vmax.f32 %v630, 0.0
  %v775 = vmax.f32 %v631, 0.0
  %v776 = vmax.f32 %v632, 0.0
  %v777 = vpack.c.bf16 %v642, %v633
  %v778 = vpack.c.bf16 %v643, %v634
  %v779 = vpack.c.bf16 %v644, %v635
  %v780 = vpack.c.bf16 %v645, %v636
  %v781 = vpack.c.bf16 %v646, %v637
  %v782 = vpack.c.bf16 %v647, %v638
  %v783 = vpack.c.bf16 %v648, %v639
  %v784 = vpack.c.bf16 %v649, %v640
  %v785 = vpack.c.bf16 %v650, %v641
  %v786 = vpack.c.bf16 %v660, %v651
  %v787 = vpack.c.bf16 %v661, %v652
  %v788 = vpack.c.bf16 %v662, %v653
  %v789 = vpack.c.bf16 %v663, %v654
  %v790 = vpack.c.bf16 %v664, %v655
  %v791 = vpack.c.bf16 %v665, %v656
  %v792 = vpack.c.bf16 %v666, %v657
  %v793 = vpack.c.bf16 %v667, %v658
  %v794 = vpack.c.bf16 %v668, %v659
  %v795 = vpack.c.bf16 %v678, %v669
  %v796 = vpack.c.bf16 %v679, %v670
  %v797 = vpack.c.bf16 %v680, %v671
  %v798 = vpack.c.bf16 %v681, %v672
  %v799 = vpack.c.bf16 %v682, %v673
  %v800 = vpack.c.bf16 %v683, %v674
  %v801 = vpack.c.bf16 %v684, %v675
  %v802 = vpack.c.bf16 %v685, %v676
  %v803 = vpack.c.bf16 %v686, %v677
  %v804 = vpack.c.bf16 %v696, %v687
  %v805 = vpack.c.bf16 %v697, %v688
  %v806 = vpack.c.bf16 %v698, %v689
  %v807 = vpack.c.bf16 %v699, %v690
  %v808 = vpack.c.bf16 %v700, %v691
  %v809 = vpack.c.bf16 %v701, %v692
  %v810 = vpack.c.bf16 %v702, %v693
  %v811 = vpack.c.bf16 %v703, %v694
  %v812 = vpack.c.bf16 %v704, %v695
  %v813 = vpack.c.bf16 %v714, %v705
  %v814 = vpack.c.bf16 %v715, %v706
  %v815 = vpack.c.bf16 %v716, %v707
  %v816 = vpack.c.bf16 %v717, %v708
  %v817 = vpack.c.bf16 %v718, %v709
  %v818 = vpack.c.bf16 %v719, %v710
  %v819 = vpack.c.bf16 %v720, %v711
  %v820 = vpack.c.bf16 %v721, %v712
  %v821 = vpack.c.bf16 %v722, %v713
  %v822 = vpack.c.bf16 %v732, %v723
  %v823 = vpack.c.bf16 %v733, %v724
  %v824 = vpack.c.bf16 %v734, %v725
  %v825 = vpack.c.bf16 %v735, %v726
  %v826 = vpack.c.bf16 %v736, %v727
  %v827 = vpack.c.bf16 %v737, %v728
  %v828 = vpack.c.bf16 %v738, %v729
  %v829 = vpack.c.bf16 %v739, %v730
  %v830 = vpack.c.bf16 %v740, %v731
  %v831 = vpack.c.bf16 %v750, %v741
  %v832 = vpack.c.bf16 %v751, %v742
  %v833 = vpack.c.bf16 %v752, %v743
  %v834 = vpack.c.bf16 %v753, %v744
  %v835 = vpack.c.bf16 %v754, %v745
  %v836 = vpack.c.bf16 %v755, %v746
  %v837 = vpack.c.bf16 %v756, %v747
  %v838 = vpack.c.bf16 %v757, %v748
  %v839 = vpack.c.bf16 %v758, %v749
  %v840 = vpack.c.bf16 %v768, %v759
  %v841 = vpack.c.bf16 %v769, %v760
  %v842 = vpack.c.bf16 %v770, %v761
  %v843 = vpack.c.bf16 %v771, %v762
  %v844 = vpack.c.bf16 %v772, %v763
  %v845 = vpack.c.bf16 %v773, %v764
  %v846 = vpack.c.bf16 %v774, %v765
  %v847 = vpack.c.bf16 %v775, %v766
  %v848 = vpack.c.bf16 %v776, %v767
  %v849 = vld [vmem:[%s1] sm:$0xf]
  %v850 = vld [vmem:[%s1 + $0x4] sm:$0xf]
  %v851 = vld [vmem:[%s1 + $0x8] sm:$0xf]
  %v852 = vld [vmem:[%s1 + $0xc] sm:$0xf]
  %v853 = vld [vmem:[%s1 + $0x10] sm:$0xf]
  %v854 = vld [vmem:[%s1 + $0x14] sm:$0xf]
  %v855 = vld [vmem:[%s1 + $0x18] sm:$0xf]
  %v856 = vld [vmem:[%s1 + $0x1c] sm:$0xf]
  %v857 = vld [vmem:[%s1 + $0x20] sm:$0xf]
  %v858 = vld [vmem:[%s1 + $0x24] sm:$0xf]
  %v859 = vld [vmem:[%s1 + $0x28] sm:$0xf]
  %v860 = vld [vmem:[%s1 + $0x2c] sm:$0xf]
  %v861 = vld [vmem:[%s1 + $0x30] sm:$0xf]
  %v862 = vld [vmem:[%s1 + $0x34] sm:$0xf]
  %v863 = vld [vmem:[%s1 + $0x38] sm:$0xf]
  %v864 = vld [vmem:[%s1 + $0x3c] sm:$0xf]
  %v865 = vld [vmem:[%s1 + $0x40] sm:$0xf]
  %v866 = vld [vmem:[%s1 + $0x44] sm:$0xf]
  %v867 = vld [vmem:[%s1 + $0x48] sm:$0xf]
  %v868 = vld [vmem:[%s1 + $0x4c] sm:$0xf]
  %v869 = vld [vmem:[%s1 + $0x50] sm:$0xf]
  %v870 = vld [vmem:[%s1 + $0x54] sm:$0xf]
  %v871 = vld [vmem:[%s1 + $0x58] sm:$0xf]
  %v872 = vld [vmem:[%s1 + $0x5c] sm:$0xf]
  %v873 = vld [vmem:[%s1 + $0x60] sm:$0xf]
  %v874 = vld [vmem:[%s1 + $0x64] sm:$0xf]
  %v875 = vld [vmem:[%s1 + $0x68] sm:$0xf]
  %v876 = vld [vmem:[%s1 + $0x6c] sm:$0xf]
  %v877 = vld [vmem:[%s1 + $0x70] sm:$0xf]
  %v878 = vld [vmem:[%s1 + $0x74] sm:$0xf]
  %v879 = vld [vmem:[%s1 + $0x78] sm:$0xf]
  %v880 = vld [vmem:[%s1 + $0x7c] sm:$0xf]
  %v881 = vld [vmem:[%s1 + $0x80] sm:$0xf]
  %v882 = vld [vmem:[%s1 + $0x84] sm:$0xf]
  %v883 = vld [vmem:[%s1 + $0x88] sm:$0xf]
  %v884 = vld [vmem:[%s1 + $0x8c] sm:$0xf]
  %v885 = vld [vmem:[%s1 + $0x90] sm:$0xf]
  %v886 = vld [vmem:[%s1 + $0x94] sm:$0xf]
  %v887 = vld [vmem:[%s1 + $0x98] sm:$0xf]
  %v888 = vld [vmem:[%s1 + $0x9c] sm:$0xf]
  %v889 = vld [vmem:[%s1 + $0xa0] sm:$0xf]
  %v890 = vld [vmem:[%s1 + $0xa4] sm:$0xf]
  %v891 = vld [vmem:[%s1 + $0xa8] sm:$0xf]
  %v892 = vld [vmem:[%s1 + $0xac] sm:$0xf]
  %v893 = vld [vmem:[%s1 + $0xb0] sm:$0xf]
  %v894 = vld [vmem:[%s1 + $0xb4] sm:$0xf]
  %v895 = vld [vmem:[%s1 + $0xb8] sm:$0xf]
  %v896 = vld [vmem:[%s1 + $0xbc] sm:$0xf]
  %v897 = vld [vmem:[%s1 + $0xc0] sm:$0xf]
  %v898 = vld [vmem:[%s1 + $0xc4] sm:$0xf]
  %v899 = vld [vmem:[%s1 + $0xc8] sm:$0xf]
  %v900 = vld [vmem:[%s1 + $0xcc] sm:$0xf]
  %v901 = vld [vmem:[%s1 + $0xd0] sm:$0xf]
  %v902 = vld [vmem:[%s1 + $0xd4] sm:$0xf]
  %v903 = vld [vmem:[%s1 + $0xd8] sm:$0xf]
  %v904 = vld [vmem:[%s1 + $0xdc] sm:$0xf]
  %v905 = vld [vmem:[%s1 + $0xe0] sm:$0xf]
  %v906 = vld [vmem:[%s1 + $0xe4] sm:$0xf]
  %v907 = vld [vmem:[%s1 + $0xe8] sm:$0xf]
  %v908 = vld [vmem:[%s1 + $0xec] sm:$0xf]
  %v909 = vld [vmem:[%s1 + $0xf0] sm:$0xf]
  %v910 = vld [vmem:[%s1 + $0xf4] sm:$0xf]
  %v911 = vld [vmem:[%s1 + $0xf8] sm:$0xf]
  %v912 = vld [vmem:[%s1 + $0xfc] sm:$0xf]
  %v913 = vld [vmem:[%s1 + $0x100] sm:$0xf]
  %v914 = vld [vmem:[%s1 + $0x104] sm:$0xf]
  %v915 = vld [vmem:[%s1 + $0x108] sm:$0xf]
  %v916 = vld [vmem:[%s1 + $0x10c] sm:$0xf]
  %v917 = vld [vmem:[%s1 + $0x110] sm:$0xf]
  %v918 = vld [vmem:[%s1 + $0x114] sm:$0xf]
  %v919 = vld [vmem:[%s1 + $0x118] sm:$0xf]
  %v920 = vld [vmem:[%s1 + $0x11c] sm:$0xf]
  %v921 = vld [vmem:[%s1 + $0x120] sm:$0xf]
  %v922 = vld [vmem:[%s1 + $0x124] sm:$0xf]
  %v923 = vld [vmem:[%s1 + $0x128] sm:$0xf]
  %v924 = vld [vmem:[%s1 + $0x12c] sm:$0xf]
  %v925 = vld [vmem:[%s1 + $0x130] sm:$0xf]
  %v926 = vld [vmem:[%s1 + $0x134] sm:$0xf]
  %v927 = vld [vmem:[%s1 + $0x138] sm:$0xf]
  %v928 = vld [vmem:[%s1 + $0x13c] sm:$0xf]
  %v929 = vld [vmem:[%s1 + $0x140] sm:$0xf]
  %v930 = vld [vmem:[%s1 + $0x144] sm:$0xf]
  %v931 = vld [vmem:[%s1 + $0x148] sm:$0xf]
  %v932 = vld [vmem:[%s1 + $0x14c] sm:$0xf]
  %v933 = vld [vmem:[%s1 + $0x150] sm:$0xf]
  %v934 = vld [vmem:[%s1 + $0x154] sm:$0xf]
  %v935 = vld [vmem:[%s1 + $0x158] sm:$0xf]
  %v936 = vld [vmem:[%s1 + $0x15c] sm:$0xf]
  %v937 = vld [vmem:[%s1 + $0x160] sm:$0xf]
  %v938 = vld [vmem:[%s1 + $0x164] sm:$0xf]
  %v939 = vld [vmem:[%s1 + $0x168] sm:$0xf]
  %v940 = vld [vmem:[%s1 + $0x16c] sm:$0xf]
  %v941 = vld [vmem:[%s1 + $0x170] sm:$0xf]
  %v942 = vld [vmem:[%s1 + $0x174] sm:$0xf]
  %v943 = vld [vmem:[%s1 + $0x178] sm:$0xf]
  %v944 = vld [vmem:[%s1 + $0x17c] sm:$0xf]
  %v945 = vld [vmem:[%s1 + $0x180] sm:$0xf]
  %v946 = vld [vmem:[%s1 + $0x184] sm:$0xf]
  %v947 = vld [vmem:[%s1 + $0x188] sm:$0xf]
  %v948 = vld [vmem:[%s1 + $0x18c] sm:$0xf]
  %v949 = vld [vmem:[%s1 + $0x190] sm:$0xf]
  %v950 = vld [vmem:[%s1 + $0x194] sm:$0xf]
  %v951 = vld [vmem:[%s1 + $0x198] sm:$0xf]
  %v952 = vld [vmem:[%s1 + $0x19c] sm:$0xf]
  %v953 = vld [vmem:[%s1 + $0x1a0] sm:$0xf]
  %v954 = vld [vmem:[%s1 + $0x1a4] sm:$0xf]
  %v955 = vld [vmem:[%s1 + $0x1a8] sm:$0xf]
  %v956 = vld [vmem:[%s1 + $0x1ac] sm:$0xf]
  %v957 = vld [vmem:[%s1 + $0x1b0] sm:$0xf]
  %v958 = vld [vmem:[%s1 + $0x1b4] sm:$0xf]
  %v959 = vld [vmem:[%s1 + $0x1b8] sm:$0xf]
  %v960 = vld [vmem:[%s1 + $0x1bc] sm:$0xf]
  %v961 = vld [vmem:[%s1 + $0x1c0] sm:$0xf]
  %v962 = vld [vmem:[%s1 + $0x1c4] sm:$0xf]
  %v963 = vld [vmem:[%s1 + $0x1c8] sm:$0xf]
  %v964 = vld [vmem:[%s1 + $0x1cc] sm:$0xf]
  %v965 = vld [vmem:[%s1 + $0x1d0] sm:$0xf]
  %v966 = vld [vmem:[%s1 + $0x1d4] sm:$0xf]
  %v967 = vld [vmem:[%s1 + $0x1d8] sm:$0xf]
  %v968 = vld [vmem:[%s1 + $0x1dc] sm:$0xf]
  %v969 = vld [vmem:[%s1 + $0x1e0] sm:$0xf]
  %v970 = vld [vmem:[%s1 + $0x1e4] sm:$0xf]
  %v971 = vld [vmem:[%s1 + $0x1e8] sm:$0xf]
  %v972 = vld [vmem:[%s1 + $0x1ec] sm:$0xf]
  %v973 = vld [vmem:[%s1 + $0x1f0] sm:$0xf]
  %v974 = vld [vmem:[%s1 + $0x1f4] sm:$0xf]
  %v975 = vld [vmem:[%s1 + $0x1f8] sm:$0xf]
  %v976 = vld [vmem:[%s1 + $0x1fc] sm:$0xf]
  %v977 = vld [vmem:[%s1 + $0x200] sm:$0xf]
  %v978 = vld [vmem:[%s1 + $0x204] sm:$0xf]
  %v979 = vld [vmem:[%s1 + $0x208] sm:$0xf]
  %v980 = vld [vmem:[%s1 + $0x20c] sm:$0xf]
  %v981 = vld [vmem:[%s1 + $0x210] sm:$0xf]
  %v982 = vld [vmem:[%s1 + $0x214] sm:$0xf]
  %v983 = vld [vmem:[%s1 + $0x218] sm:$0xf]
  %v984 = vld [vmem:[%s1 + $0x21c] sm:$0xf]
  %v985 = vld [vmem:[%s1 + $0x220] sm:$0xf]
  %v986 = vld [vmem:[%s1 + $0x224] sm:$0xf]
  %v987 = vld [vmem:[%s1 + $0x228] sm:$0xf]
  %v988 = vld [vmem:[%s1 + $0x22c] sm:$0xf]
  %v989 = vld [vmem:[%s1 + $0x230] sm:$0xf]
  %v990 = vld [vmem:[%s1 + $0x234] sm:$0xf]
  %v991 = vld [vmem:[%s1 + $0x238] sm:$0xf]
  %v992 = vld [vmem:[%s1 + $0x23c] sm:$0xf]
  %v993 = vld [vmem:[%s2] sm:$0x1]
  %v995 = vlaneseq
  %v996 = vshrl.u32 %v995, 7
  %v997 = vsub.s32 0, %v996
  %v998 = vrot.slane %v993, %v997
  %v1144 = vunpack.c.l.b16 %v849
  %v1145 = vunpack.c.l.b16 %v850
  %v1146 = vunpack.c.l.b16 %v851
  %v1147 = vunpack.c.l.b16 %v852
  %v1148 = vunpack.c.l.b16 %v853
  %v1149 = vunpack.c.l.b16 %v854
  %v1150 = vunpack.c.l.b16 %v855
  %v1151 = vunpack.c.l.b16 %v856
  %v1152 = vunpack.c.l.b16 %v857
  %v1153 = vunpack.c.l.b16 %v858
  %v1154 = vunpack.c.l.b16 %v859
  %v1155 = vunpack.c.l.b16 %v860
  %v1156 = vunpack.c.l.b16 %v861
  %v1157 = vunpack.c.l.b16 %v862
  %v1158 = vunpack.c.l.b16 %v863
  %v1159 = vunpack.c.l.b16 %v864
  %v1160 = vunpack.c.l.b16 %v865
  %v1161 = vunpack.c.l.b16 %v866
  %v1162 = vunpack.c.l.b16 %v867
  %v1163 = vunpack.c.l.b16 %v868
  %v1164 = vunpack.c.l.b16 %v869
  %v1165 = vunpack.c.l.b16 %v870
  %v1166 = vunpack.c.l.b16 %v871
  %v1167 = vunpack.c.l.b16 %v872
  %v1168 = vunpack.c.l.b16 %v873
  %v1169 = vunpack.c.l.b16 %v874
  %v1170 = vunpack.c.l.b16 %v875
  %v1171 = vunpack.c.l.b16 %v876
  %v1172 = vunpack.c.l.b16 %v877
  %v1173 = vunpack.c.l.b16 %v878
  %v1174 = vunpack.c.l.b16 %v879
  %v1175 = vunpack.c.l.b16 %v880
  %v1176 = vunpack.c.l.b16 %v881
  %v1177 = vunpack.c.l.b16 %v882
  %v1178 = vunpack.c.l.b16 %v883
  %v1179 = vunpack.c.l.b16 %v884
  %v1180 = vunpack.c.l.b16 %v885
  %v1181 = vunpack.c.l.b16 %v886
  %v1182 = vunpack.c.l.b16 %v887
  %v1183 = vunpack.c.l.b16 %v888
  %v1184 = vunpack.c.l.b16 %v889
  %v1185 = vunpack.c.l.b16 %v890
  %v1186 = vunpack.c.l.b16 %v891
  %v1187 = vunpack.c.l.b16 %v892
  %v1188 = vunpack.c.l.b16 %v893
  %v1189 = vunpack.c.l.b16 %v894
  %v1190 = vunpack.c.l.b16 %v895
  %v1191 = vunpack.c.l.b16 %v896
  %v1192 = vunpack.c.l.b16 %v897
  %v1193 = vunpack.c.l.b16 %v898
  %v1194 = vunpack.c.l.b16 %v899
  %v1195 = vunpack.c.l.b16 %v900
  %v1196 = vunpack.c.l.b16 %v901
  %v1197 = vunpack.c.l.b16 %v902
  %v1198 = vunpack.c.l.b16 %v903
  %v1199 = vunpack.c.l.b16 %v904
  %v1200 = vunpack.c.l.b16 %v905
  %v1201 = vunpack.c.l.b16 %v906
  %v1202 = vunpack.c.l.b16 %v907
  %v1203 = vunpack.c.l.b16 %v908
  %v1204 = vunpack.c.l.b16 %v909
  %v1205 = vunpack.c.l.b16 %v910
  %v1206 = vunpack.c.l.b16 %v911
  %v1207 = vunpack.c.l.b16 %v912
  %v1208 = vunpack.c.l.b16 %v913
  %v1209 = vunpack.c.l.b16 %v914
  %v1210 = vunpack.c.l.b16 %v915
  %v1211 = vunpack.c.l.b16 %v916
  %v1212 = vunpack.c.l.b16 %v917
  %v1213 = vunpack.c.l.b16 %v918
  %v1214 = vunpack.c.l.b16 %v919
  %v1215 = vunpack.c.l.b16 %v920
  %v1216 = vunpack.c.l.b16 %v921
  %v1217 = vunpack.c.l.b16 %v922
  %v1218 = vunpack.c.l.b16 %v923
  %v1219 = vunpack.c.l.b16 %v924
  %v1220 = vunpack.c.l.b16 %v925
  %v1221 = vunpack.c.l.b16 %v926
  %v1222 = vunpack.c.l.b16 %v927
  %v1223 = vunpack.c.l.b16 %v928
  %v1224 = vunpack.c.l.b16 %v929
  %v1225 = vunpack.c.l.b16 %v930
  %v1226 = vunpack.c.l.b16 %v931
  %v1227 = vunpack.c.l.b16 %v932
  %v1228 = vunpack.c.l.b16 %v933
  %v1229 = vunpack.c.l.b16 %v934
  %v1230 = vunpack.c.l.b16 %v935
  %v1231 = vunpack.c.l.b16 %v936
  %v1232 = vunpack.c.l.b16 %v937
  %v1233 = vunpack.c.l.b16 %v938
  %v1234 = vunpack.c.l.b16 %v939
  %v1235 = vunpack.c.l.b16 %v940
  %v1236 = vunpack.c.l.b16 %v941
  %v1237 = vunpack.c.l.b16 %v942
  %v1238 = vunpack.c.l.b16 %v943
  %v1239 = vunpack.c.l.b16 %v944
  %v1240 = vunpack.c.l.b16 %v945
  %v1241 = vunpack.c.l.b16 %v946
  %v1242 = vunpack.c.l.b16 %v947
  %v1243 = vunpack.c.l.b16 %v948
  %v1244 = vunpack.c.l.b16 %v949
  %v1245 = vunpack.c.l.b16 %v950
  %v1246 = vunpack.c.l.b16 %v951
  %v1247 = vunpack.c.l.b16 %v952
  %v1248 = vunpack.c.l.b16 %v953
  %v1249 = vunpack.c.l.b16 %v954
  %v1250 = vunpack.c.l.b16 %v955
  %v1251 = vunpack.c.l.b16 %v956
  %v1252 = vunpack.c.l.b16 %v957
  %v1253 = vunpack.c.l.b16 %v958
  %v1254 = vunpack.c.l.b16 %v959
  %v1255 = vunpack.c.l.b16 %v960
  %v1256 = vunpack.c.l.b16 %v961
  %v1257 = vunpack.c.l.b16 %v962
  %v1258 = vunpack.c.l.b16 %v963
  %v1259 = vunpack.c.l.b16 %v964
  %v1260 = vunpack.c.l.b16 %v965
  %v1261 = vunpack.c.l.b16 %v966
  %v1262 = vunpack.c.l.b16 %v967
  %v1263 = vunpack.c.l.b16 %v968
  %v1264 = vunpack.c.l.b16 %v969
  %v1265 = vunpack.c.l.b16 %v970
  %v1266 = vunpack.c.l.b16 %v971
  %v1267 = vunpack.c.l.b16 %v972
  %v1268 = vunpack.c.l.b16 %v973
  %v1269 = vunpack.c.l.b16 %v974
  %v1270 = vunpack.c.l.b16 %v975
  %v1271 = vunpack.c.l.b16 %v976
  %v1272 = vunpack.c.l.b16 %v977
  %v1273 = vunpack.c.l.b16 %v978
  %v1274 = vunpack.c.l.b16 %v979
  %v1275 = vunpack.c.l.b16 %v980
  %v1276 = vunpack.c.l.b16 %v981
  %v1277 = vunpack.c.l.b16 %v982
  %v1278 = vunpack.c.l.b16 %v983
  %v1279 = vunpack.c.l.b16 %v984
  %v1280 = vunpack.c.l.b16 %v985
  %v1281 = vunpack.c.l.b16 %v986
  %v1282 = vunpack.c.l.b16 %v987
  %v1283 = vunpack.c.l.b16 %v988
  %v1284 = vunpack.c.l.b16 %v989
  %v1285 = vunpack.c.l.b16 %v990
  %v1286 = vunpack.c.l.b16 %v991
  %v1287 = vunpack.c.l.b16 %v992
  %v1288 = vpack.c.b16 %v1145, %v1144
  %v1289 = vpack.c.b16 %v1147, %v1146
  %v1290 = vpack.c.b16 %v1149, %v1148
  %v1291 = vpack.c.b16 %v1151, %v1150
  %v1292 = vpack.c.b16 %v1153, %v1152
  %v1293 = vpack.c.b16 %v1155, %v1154
  %v1294 = vpack.c.b16 %v1157, %v1156
  %v1295 = vpack.c.b16 %v1159, %v1158
  %v1296 = vpack.c.b16 %v1161, %v1160
  %v1297 = vpack.c.b16 %v1163, %v1162
  %v1298 = vpack.c.b16 %v1165, %v1164
  %v1299 = vpack.c.b16 %v1167, %v1166
  %v1300 = vpack.c.b16 %v1169, %v1168
  %v1301 = vpack.c.b16 %v1171, %v1170
  %v1302 = vpack.c.b16 %v1173, %v1172
  %v1303 = vpack.c.b16 %v1175, %v1174
  %v1304 = vpack.c.b16 %v1177, %v1176
  %v1305 = vpack.c.b16 %v1179, %v1178
  %v1306 = vpack.c.b16 %v1181, %v1180
  %v1307 = vpack.c.b16 %v1183, %v1182
  %v1308 = vpack.c.b16 %v1185, %v1184
  %v1309 = vpack.c.b16 %v1187, %v1186
  %v1310 = vpack.c.b16 %v1189, %v1188
  %v1311 = vpack.c.b16 %v1191, %v1190
  %v1312 = vpack.c.b16 %v1193, %v1192
  %v1313 = vpack.c.b16 %v1195, %v1194
  %v1314 = vpack.c.b16 %v1197, %v1196
  %v1315 = vpack.c.b16 %v1199, %v1198
  %v1316 = vpack.c.b16 %v1201, %v1200
  %v1317 = vpack.c.b16 %v1203, %v1202
  %v1318 = vpack.c.b16 %v1205, %v1204
  %v1319 = vpack.c.b16 %v1207, %v1206
  %v1320 = vpack.c.b16 %v1209, %v1208
  %v1321 = vpack.c.b16 %v1211, %v1210
  %v1322 = vpack.c.b16 %v1213, %v1212
  %v1323 = vpack.c.b16 %v1215, %v1214
  %v1324 = vpack.c.b16 %v1217, %v1216
  %v1325 = vpack.c.b16 %v1219, %v1218
  %v1326 = vpack.c.b16 %v1221, %v1220
  %v1327 = vpack.c.b16 %v1223, %v1222
  %v1328 = vpack.c.b16 %v1225, %v1224
  %v1329 = vpack.c.b16 %v1227, %v1226
  %v1330 = vpack.c.b16 %v1229, %v1228
  %v1331 = vpack.c.b16 %v1231, %v1230
  %v1332 = vpack.c.b16 %v1233, %v1232
  %v1333 = vpack.c.b16 %v1235, %v1234
  %v1334 = vpack.c.b16 %v1237, %v1236
  %v1335 = vpack.c.b16 %v1239, %v1238
  %v1336 = vpack.c.b16 %v1241, %v1240
  %v1337 = vpack.c.b16 %v1243, %v1242
  %v1338 = vpack.c.b16 %v1245, %v1244
  %v1339 = vpack.c.b16 %v1247, %v1246
  %v1340 = vpack.c.b16 %v1249, %v1248
  %v1341 = vpack.c.b16 %v1251, %v1250
  %v1342 = vpack.c.b16 %v1253, %v1252
  %v1343 = vpack.c.b16 %v1255, %v1254
  %v1344 = vpack.c.b16 %v1257, %v1256
  %v1345 = vpack.c.b16 %v1259, %v1258
  %v1346 = vpack.c.b16 %v1261, %v1260
  %v1347 = vpack.c.b16 %v1263, %v1262
  %v1348 = vpack.c.b16 %v1265, %v1264
  %v1349 = vpack.c.b16 %v1267, %v1266
  %v1350 = vpack.c.b16 %v1269, %v1268
  %v1351 = vpack.c.b16 %v1271, %v1270
  %v1352 = vpack.c.b16 %v1273, %v1272
  %v1353 = vpack.c.b16 %v1275, %v1274
  %v1354 = vpack.c.b16 %v1277, %v1276
  %v1355 = vpack.c.b16 %v1279, %v1278
  %v1356 = vpack.c.b16 %v1281, %v1280
  %v1357 = vpack.c.b16 %v1283, %v1282
  %v1358 = vpack.c.b16 %v1285, %v1284
  %v1359 = vpack.c.b16 %v1287, %v1286
  %1432 = vmatprep.subr.bf16.mxu0 0
  %1433 = vmatpush1.bf16.msra.mxu0 %v1288
  %1434 = vmatprep.subr.bf16.mxu0 0
  %1435 = vmatpush1.bf16.msra.mxu0 %v1289
  %1436 = vmatprep.subr.bf16.mxu0 0
  %1437 = vmatpush1.bf16.msra.mxu0 %v1290
  %1438 = vmatprep.subr.bf16.mxu0 0
  %1439 = vmatpush1.bf16.msra.mxu0 %v1291
  %1440 = vmatprep.subr.bf16.mxu0 0
  %1441 = vmatpush1.bf16.msra.mxu0 %v1292
  %1442 = vmatprep.subr.bf16.mxu0 0
  %1443 = vmatpush1.bf16.msra.mxu0 %v1293
  %1444 = vmatprep.subr.bf16.mxu0 0
  %1445 = vmatpush1.bf16.msra.mxu0 %v1294
  %1446 = vmatprep.subr.bf16.mxu0 0
  %1447 = vmatpush1.bf16.msra.mxu0 %v1295
  %1448 = vmatprep.subr.bf16.mxu0 0
  %1449 = vmatpush1.bf16.msra.mxu0 %v1296
  %1450 = vmatprep.subr.bf16.mxu0 0
  %1451 = vmatpush1.bf16.msra.mxu0 %v1297
  %1452 = vmatprep.subr.bf16.mxu0 0
  %1453 = vmatpush1.bf16.msra.mxu0 %v1298
  %1454 = vmatprep.subr.bf16.mxu0 0
  %1455 = vmatpush1.bf16.msra.mxu0 %v1299
  %1456 = vmatprep.subr.bf16.mxu0 0
  %1457 = vmatpush1.bf16.msra.mxu0 %v1300
  %1458 = vmatprep.subr.bf16.mxu0 0
  %1459 = vmatpush1.bf16.msra.mxu0 %v1301
  %1460 = vmatprep.subr.bf16.mxu0 0
  %1461 = vmatpush1.bf16.msra.mxu0 %v1302
  %1462 = vmatprep.subr.bf16.mxu0 0
  %1463 = vmatpush1.bf16.msra.mxu0 %v1303
  %1464 = vmatprep.mubr.bf16.mxu0 %v778
  %1465 = vmatmul.mubr.bf16.gmra.mrb[0].mxu0 %v777
  %v1466 = vpop.f32.mrb[0].mxu0
  %v1467 = vadd.f32 %v998, %v1466
  %v1468 = vpop.f32.mrb[0].mxu0
  %v1469 = vpop.f32.mrb[0].mxu0
  %v1470 = vadd.f32 %v998, %v1469
  %v1471 = vpop.f32.mrb[0].mxu0
  %1472 = vmatprep.mubr.bf16.mxu0 %v787
  %1473 = vmatmul.mubr.bf16.gmra.mrb[0].mxu0 %v786
  %v1474 = vpop.f32.mrb[0].mxu0
  %v1475 = vadd.f32 %v998, %v1474
  %v1476 = vpop.f32.mrb[0].mxu0
  %v1477 = vpop.f32.mrb[0].mxu0
  %v1478 = vadd.f32 %v998, %v1477
  %v1479 = vpop.f32.mrb[0].mxu0
  %1480 = vmatprep.mubr.bf16.mxu0 %v796
  %1481 = vmatmul.mubr.bf16.gmra.mrb[0].mxu0 %v795
  %v1482 = vpop.f32.mrb[0].mxu0
  %v1483 = vadd.f32 %v998, %v1482
  %v1484 = vpop.f32.mrb[0].mxu0
  %v1485 = vpop.f32.mrb[0].mxu0
  %v1486 = vadd.f32 %v998, %v1485
  %v1487 = vpop.f32.mrb[0].mxu0
  %1488 = vmatprep.mubr.bf16.mxu0 %v805
  %1489 = vmatmul.mubr.bf16.gmra.mrb[0].mxu0 %v804
  %v1490 = vpop.f32.mrb[0].mxu0
  %v1491 = vadd.f32 %v998, %v1490
  %v1492 = vpop.f32.mrb[0].mxu0
  %v1493 = vpop.f32.mrb[0].mxu0
  %v1494 = vadd.f32 %v998, %v1493
  %v1495 = vpop.f32.mrb[0].mxu0
  %1496 = vmatprep.mubr.bf16.mxu0 %v814
  %1497 = vmatmul.mubr.bf16.gmra.mrb[0].mxu0 %v813
  %v1498 = vpop.f32.mrb[0].mxu0
  %v1499 = vadd.f32 %v998, %v1498
  %v1500 = vpop.f32.mrb[0].mxu0
  %v1501 = vpop.f32.mrb[0].mxu0
  %v1502 = vadd.f32 %v998, %v1501
  %v1503 = vpop.f32.mrb[0].mxu0
  %1504 = vmatprep.mubr.bf16.mxu0 %v823
  %1505 = vmatmul.mubr.bf16.gmra.mrb[0].mxu0 %v822
  %v1506 = vpop.f32.mrb[0].mxu0
  %v1507 = vadd.f32 %v998, %v1506
  %v1508 = vpop.f32.mrb[0].mxu0
  %v1509 = vpop.f32.mrb[0].mxu0
  %v1510 = vadd.f32 %v998, %v1509
  %v1511 = vpop.f32.mrb[0].mxu0
  %1512 = vmatprep.mubr.bf16.mxu0 %v832
  %1513 = vmatmul.mubr.bf16.gmra.mrb[0].mxu0 %v831
  %v1514 = vpop.f32.mrb[0].mxu0
  %v1515 = vadd.f32 %v998, %v1514
  %v1516 = vpop.f32.mrb[0].mxu0
  %v1517 = vpop.f32.mrb[0].mxu0
  %v1518 = vadd.f32 %v998, %v1517
  %v1519 = vpop.f32.mrb[0].mxu0
  %1520 = vmatprep.mubr.bf16.mxu0 %v841
  %1521 = vmatmul.mubr.bf16.gmra.mrb[0].mxu0 %v840
  %v1522 = vpop.f32.mrb[0].mxu0
  %v1523 = vadd.f32 %v998, %v1522
  %v1524 = vpop.f32.mrb[0].mxu0
  %v1525 = vpop.f32.mrb[0].mxu0
  %v1526 = vadd.f32 %v998, %v1525
  %v1527 = vpop.f32.mrb[0].mxu0
  %1528 = vdwg.mxu0
  %1529 = vmatprep.subr.bf16.mxu0 0
  %1530 = vmatpush1.bf16.msra.mxu0 %v1304
  %1531 = vmatprep.subr.bf16.mxu0 0
  %1532 = vmatpush1.bf16.msra.mxu0 %v1305
  %1533 = vmatprep.subr.bf16.mxu0 0
  %1534 = vmatpush1.bf16.msra.mxu0 %v1306
  %1535 = vmatprep.subr.bf16.mxu0 0
  %1536 = vmatpush1.bf16.msra.mxu0 %v1307
  %1537 = vmatprep.subr.bf16.mxu0 0
  %1538 = vmatpush1.bf16.msra.mxu0 %v1308
  %1539 = vmatprep.subr.bf16.mxu0 0
  %1540 = vmatpush1.bf16.msra.mxu0 %v1309
  %1541 = vmatprep.subr.bf16.mxu0 0
  %1542 = vmatpush1.bf16.msra.mxu0 %v1310
  %1543 = vmatprep.subr.bf16.mxu0 0
  %1544 = vmatpush1.bf16.msra.mxu0 %v1311
  %1545 = vmatprep.subr.bf16.mxu0 0
  %1546 = vmatpush1.bf16.msra.mxu0 %v1312
  %1547 = vmatprep.subr.bf16.mxu0 0
  %1548 = vmatpush1.bf16.msra.mxu0 %v1313
  %1549 = vmatprep.subr.bf16.mxu0 0
  %1550 = vmatpush1.bf16.msra.mxu0 %v1314
  %1551 = vmatprep.subr.bf16.mxu0 0
  %1552 = vmatpush1.bf16.msra.mxu0 %v1315
  %1553 = vmatprep.subr.bf16.mxu0 0
  %1554 = vmatpush1.bf16.msra.mxu0 %v1316
  %1555 = vmatprep.subr.bf16.mxu0 0
  %1556 = vmatpush1.bf16.msra.mxu0 %v1317
  %1557 = vmatprep.subr.bf16.mxu0 0
  %1558 = vmatpush1.bf16.msra.mxu0 %v1318
  %1559 = vmatprep.subr.bf16.mxu0 0
  %1560 = vmatpush1.bf16.msra.mxu0 %v1319
  %1561 = vmatprep.mubr.bf16.mxu0 %v780
  %1562 = vmatmul.mubr.bf16.gmra.mrb[0].mxu0 %v779
  %v1563 = vpop.f32.mrb[0].mxu0
  %v1564 = vadd.f32 %v1467, %v1563
  %v1565 = vpop.f32.mrb[0].mxu0
  %v1566 = vpop.f32.mrb[0].mxu0
  %v1567 = vadd.f32 %v1470, %v1566
  %v1568 = vpop.f32.mrb[0].mxu0
  %1569 = vmatprep.mubr.bf16.mxu0 %v789
  %1570 = vmatmul.mubr.bf16.gmra.mrb[0].mxu0 %v788
  %v1571 = vpop.f32.mrb[0].mxu0
  %v1572 = vadd.f32 %v1475, %v1571
  %v1573 = vpop.f32.mrb[0].mxu0
  %v1574 = vpop.f32.mrb[0].mxu0
  %v1575 = vadd.f32 %v1478, %v1574
  %v1576 = vpop.f32.mrb[0].mxu0
  %1577 = vmatprep.mubr.bf16.mxu0 %v798
  %1578 = vmatmul.mubr.bf16.gmra.mrb[0].mxu0 %v797
  %v1579 = vpop.f32.mrb[0].mxu0
  %v1580 = vadd.f32 %v1483, %v1579
  %v1581 = vpop.f32.mrb[0].mxu0
  %v1582 = vpop.f32.mrb[0].mxu0
  %v1583 = vadd.f32 %v1486, %v1582
  %v1584 = vpop.f32.mrb[0].mxu0
  %1585 = vmatprep.mubr.bf16.mxu0 %v807
  %1586 = vmatmul.mubr.bf16.gmra.mrb[0].mxu0 %v806
  %v1587 = vpop.f32.mrb[0].mxu0
  %v1588 = vadd.f32 %v1491, %v1587
  %v1589 = vpop.f32.mrb[0].mxu0
  %v1590 = vpop.f32.mrb[0].mxu0
  %v1591 = vadd.f32 %v1494, %v1590
  %v1592 = vpop.f32.mrb[0].mxu0
  %1593 = vmatprep.mubr.bf16.mxu0 %v816
  %1594 = vmatmul.mubr.bf16.gmra.mrb[0].mxu0 %v815
  %v1595 = vpop.f32.mrb[0].mxu0
  %v1596 = vadd.f32 %v1499, %v1595
  %v1597 = vpop.f32.mrb[0].mxu0
  %v1598 = vpop.f32.mrb[0].mxu0
  %v1599 = vadd.f32 %v1502, %v1598
  %v1600 = vpop.f32.mrb[0].mxu0
  %1601 = vmatprep.mubr.bf16.mxu0 %v825
  %1602 = vmatmul.mubr.bf16.gmra.mrb[0].mxu0 %v824
  %v1603 = vpop.f32.mrb[0].mxu0
  %v1604 = vadd.f32 %v1507, %v1603
  %v1605 = vpop.f32.mrb[0].mxu0
  %v1606 = vpop.f32.mrb[0].mxu0
  %v1607 = vadd.f32 %v1510, %v1606
  %v1608 = vpop.f32.mrb[0].mxu0
  %1609 = vmatprep.mubr.bf16.mxu0 %v834
  %1610 = vmatmul.mubr.bf16.gmra.mrb[0].mxu0 %v833
  %v1611 = vpop.f32.mrb[0].mxu0
  %v1612 = vadd.f32 %v1515, %v1611
  %v1613 = vpop.f32.mrb[0].mxu0
  %v1614 = vpop.f32.mrb[0].mxu0
  %v1615 = vadd.f32 %v1518, %v1614
  %v1616 = vpop.f32.mrb[0].mxu0
  %1617 = vmatprep.mubr.bf16.mxu0 %v843
  %1618 = vmatmul.mubr.bf16.gmra.mrb[0].mxu0 %v842
  %v1619 = vpop.f32.mrb[0].mxu0
  %v1620 = vadd.f32 %v1523, %v1619
  %v1621 = vpop.f32.mrb[0].mxu0
  %v1622 = vpop.f32.mrb[0].mxu0
  %v1623 = vadd.f32 %v1526, %v1622
  %v1624 = vpop.f32.mrb[0].mxu0
  %1625 = vdwg.mxu0
  %1626 = vmatprep.subr.bf16.mxu0 0
  %1627 = vmatpush1.bf16.msra.mxu0 %v1320
  %1628 = vmatprep.subr.bf16.mxu0 0
  %1629 = vmatpush1.bf16.msra.mxu0 %v1321
  %1630 = vmatprep.subr.bf16.mxu0 0
  %1631 = vmatpush1.bf16.msra.mxu0 %v1322
  %1632 = vmatprep.subr.bf16.mxu0 0
  %1633 = vmatpush1.bf16.msra.mxu0 %v1323
  %1634 = vmatprep.subr.bf16.mxu0 0
  %1635 = vmatpush1.bf16.msra.mxu0 %v1324
  %1636 = vmatprep.subr.bf16.mxu0 0
  %1637 = vmatpush1.bf16.msra.mxu0 %v1325
  %1638 = vmatprep.subr.bf16.mxu0 0
  %1639 = vmatpush1.bf16.msra.mxu0 %v1326
  %1640 = vmatprep.subr.bf16.mxu0 0
  %1641 = vmatpush1.bf16.msra.mxu0 %v1327
  %1642 = vmatprep.subr.bf16.mxu0 0
  %1643 = vmatpush1.bf16.msra.mxu0 %v1328
  %1644 = vmatprep.subr.bf16.mxu0 0
  %1645 = vmatpush1.bf16.msra.mxu0 %v1329
  %1646 = vmatprep.subr.bf16.mxu0 0
  %1647 = vmatpush1.bf16.msra.mxu0 %v1330
  %1648 = vmatprep.subr.bf16.mxu0 0
  %1649 = vmatpush1.bf16.msra.mxu0 %v1331
  %1650 = vmatprep.subr.bf16.mxu0 0
  %1651 = vmatpush1.bf16.msra.mxu0 %v1332
  %1652 = vmatprep.subr.bf16.mxu0 0
  %1653 = vmatpush1.bf16.msra.mxu0 %v1333
  %1654 = vmatprep.subr.bf16.mxu0 0
  %1655 = vmatpush1.bf16.msra.mxu0 %v1334
  %1656 = vmatprep.subr.bf16.mxu0 0
  %1657 = vmatpush1.bf16.msra.mxu0 %v1335
  %1658 = vmatprep.mubr.bf16.mxu0 %v782
  %1659 = vmatmul.mubr.bf16.gmra.mrb[0].mxu0 %v781
  %v1660 = vpop.f32.mrb[0].mxu0
  %v1661 = vadd.f32 %v1564, %v1660
  %v1662 = vpop.f32.mrb[0].mxu0
  %v1663 = vpop.f32.mrb[0].mxu0
  %v1664 = vadd.f32 %v1567, %v1663
  %v1665 = vpop.f32.mrb[0].mxu0
  %1666 = vmatprep.mubr.bf16.mxu0 %v791
  %1667 = vmatmul.mubr.bf16.gmra.mrb[0].mxu0 %v790
  %v1668 = vpop.f32.mrb[0].mxu0
  %v1669 = vadd.f32 %v1572, %v1668
  %v1670 = vpop.f32.mrb[0].mxu0
  %v1671 = vpop.f32.mrb[0].mxu0
  %v1672 = vadd.f32 %v1575, %v1671
  %v1673 = vpop.f32.mrb[0].mxu0
  %1674 = vmatprep.mubr.bf16.mxu0 %v800
  %1675 = vmatmul.mubr.bf16.gmra.mrb[0].mxu0 %v799
  %v1676 = vpop.f32.mrb[0].mxu0
  %v1677 = vadd.f32 %v1580, %v1676
  %v1678 = vpop.f32.mrb[0].mxu0
  %v1679 = vpop.f32.mrb[0].mxu0
  %v1680 = vadd.f32 %v1583, %v1679
  %v1681 = vpop.f32.mrb[0].mxu0
  %1682 = vmatprep.mubr.bf16.mxu0 %v809
  %1683 = vmatmul.mubr.bf16.gmra.mrb[0].mxu0 %v808
  %v1684 = vpop.f32.mrb[0].mxu0
  %v1685 = vadd.f32 %v1588, %v1684
  %v1686 = vpop.f32.mrb[0].mxu0
  %v1687 = vpop.f32.mrb[0].mxu0
  %v1688 = vadd.f32 %v1591, %v1687
  %v1689 = vpop.f32.mrb[0].mxu0
  %1690 = vmatprep.mubr.bf16.mxu0 %v818
  %1691 = vmatmul.mubr.bf16.gmra.mrb[0].mxu0 %v817
  %v1692 = vpop.f32.mrb[0].mxu0
  %v1693 = vadd.f32 %v1596, %v1692
  %v1694 = vpop.f32.mrb[0].mxu0
  %v1695 = vpop.f32.mrb[0].mxu0
  %v1696 = vadd.f32 %v1599, %v1695
  %v1697 = vpop.f32.mrb[0].mxu0
  %1698 = vmatprep.mubr.bf16.mxu0 %v827
  %1699 = vmatmul.mubr.bf16.gmra.mrb[0].mxu0 %v826
  %v1700 = vpop.f32.mrb[0].mxu0
  %v1701 = vadd.f32 %v1604, %v1700
  %v1702 = vpop.f32.mrb[0].mxu0
  %v1703 = vpop.f32.mrb[0].mxu0
  %v1704 = vadd.f32 %v1607, %v1703
  %v1705 = vpop.f32.mrb[0].mxu0
  %1706 = vmatprep.mubr.bf16.mxu0 %v836
  %1707 = vmatmul.mubr.bf16.gmra.mrb[0].mxu0 %v835
  %v1708 = vpop.f32.mrb[0].mxu0
  %v1709 = vadd.f32 %v1612, %v1708
  %v1710 = vpop.f32.mrb[0].mxu0
  %v1711 = vpop.f32.mrb[0].mxu0
  %v1712 = vadd.f32 %v1615, %v1711
  %v1713 = vpop.f32.mrb[0].mxu0
  %1714 = vmatprep.mubr.bf16.mxu0 %v845
  %1715 = vmatmul.mubr.bf16.gmra.mrb[0].mxu0 %v844
  %v1716 = vpop.f32.mrb[0].mxu0
  %v1717 = vadd.f32 %v1620, %v1716
  %v1718 = vpop.f32.mrb[0].mxu0
  %v1719 = vpop.f32.mrb[0].mxu0
  %v1720 = vadd.f32 %v1623, %v1719
  %v1721 = vpop.f32.mrb[0].mxu0
  %1722 = vdwg.mxu0
  %1723 = vmatprep.subr.bf16.mxu0 0
  %1724 = vmatpush1.bf16.msra.mxu0 %v1336
  %1725 = vmatprep.subr.bf16.mxu0 0
  %1726 = vmatpush1.bf16.msra.mxu0 %v1337
  %1727 = vmatprep.subr.bf16.mxu0 0
  %1728 = vmatpush1.bf16.msra.mxu0 %v1338
  %1729 = vmatprep.subr.bf16.mxu0 0
  %1730 = vmatpush1.bf16.msra.mxu0 %v1339
  %1731 = vmatprep.subr.bf16.mxu0 0
  %1732 = vmatpush1.bf16.msra.mxu0 %v1340
  %1733 = vmatprep.subr.bf16.mxu0 0
  %1734 = vmatpush1.bf16.msra.mxu0 %v1341
  %1735 = vmatprep.subr.bf16.mxu0 0
  %1736 = vmatpush1.bf16.msra.mxu0 %v1342
  %1737 = vmatprep.subr.bf16.mxu0 0
  %1738 = vmatpush1.bf16.msra.mxu0 %v1343
  %1739 = vmatprep.subr.bf16.mxu0 0
  %1740 = vmatpush1.bf16.msra.mxu0 %v1344
  %1741 = vmatprep.subr.bf16.mxu0 0
  %1742 = vmatpush1.bf16.msra.mxu0 %v1345
  %1743 = vmatprep.subr.bf16.mxu0 0
  %1744 = vmatpush1.bf16.msra.mxu0 %v1346
  %1745 = vmatprep.subr.bf16.mxu0 0
  %1746 = vmatpush1.bf16.msra.mxu0 %v1347
  %1747 = vmatprep.subr.bf16.mxu0 0
  %1748 = vmatpush1.bf16.msra.mxu0 %v1348
  %1749 = vmatprep.subr.bf16.mxu0 0
  %1750 = vmatpush1.bf16.msra.mxu0 %v1349
  %1751 = vmatprep.subr.bf16.mxu0 0
  %1752 = vmatpush1.bf16.msra.mxu0 %v1350
  %1753 = vmatprep.subr.bf16.mxu0 0
  %1754 = vmatpush1.bf16.msra.mxu0 %v1351
  %1755 = vmatprep.mubr.bf16.mxu0 %v784
  %1756 = vmatmul.mubr.bf16.gmra.mrb[0].mxu0 %v783
  %v1757 = vpop.f32.mrb[0].mxu0
  %v1758 = vadd.f32 %v1661, %v1757
  %v1759 = vpop.f32.mrb[0].mxu0
  %v1760 = vpop.f32.mrb[0].mxu0
  %v1761 = vadd.f32 %v1664, %v1760
  %v1762 = vpop.f32.mrb[0].mxu0
  %1763 = vmatprep.mubr.bf16.mxu0 %v793
  %1764 = vmatmul.mubr.bf16.gmra.mrb[0].mxu0 %v792
  %v1765 = vpop.f32.mrb[0].mxu0
  %v1766 = vadd.f32 %v1669, %v1765
  %v1767 = vpop.f32.mrb[0].mxu0
  %v1768 = vpop.f32.mrb[0].mxu0
  %v1769 = vadd.f32 %v1672, %v1768
  %v1770 = vpop.f32.mrb[0].mxu0
  %1771 = vmatprep.mubr.bf16.mxu0 %v802
  %1772 = vmatmul.mubr.bf16.gmra.mrb[0].mxu0 %v801
  %v1773 = vpop.f32.mrb[0].mxu0
  %v1774 = vadd.f32 %v1677, %v1773
  %v1775 = vpop.f32.mrb[0].mxu0
  %v1776 = vpop.f32.mrb[0].mxu0
  %v1777 = vadd.f32 %v1680, %v1776
  %v1778 = vpop.f32.mrb[0].mxu0
  %1779 = vmatprep.mubr.bf16.mxu0 %v811
  %1780 = vmatmul.mubr.bf16.gmra.mrb[0].mxu0 %v810
  %v1781 = vpop.f32.mrb[0].mxu0
  %v1782 = vadd.f32 %v1685, %v1781
  %v1783 = vpop.f32.mrb[0].mxu0
  %v1784 = vpop.f32.mrb[0].mxu0
  %v1785 = vadd.f32 %v1688, %v1784
  %v1786 = vpop.f32.mrb[0].mxu0
  %1787 = vmatprep.mubr.bf16.mxu0 %v820
  %1788 = vmatmul.mubr.bf16.gmra.mrb[0].mxu0 %v819
  %v1789 = vpop.f32.mrb[0].mxu0
  %v1790 = vadd.f32 %v1693, %v1789
  %v1791 = vpop.f32.mrb[0].mxu0
  %v1792 = vpop.f32.mrb[0].mxu0
  %v1793 = vadd.f32 %v1696, %v1792
  %v1794 = vpop.f32.mrb[0].mxu0
  %1795 = vmatprep.mubr.bf16.mxu0 %v829
  %1796 = vmatmul.mubr.bf16.gmra.mrb[0].mxu0 %v828
  %v1797 = vpop.f32.mrb[0].mxu0
  %v1798 = vadd.f32 %v1701, %v1797
  %v1799 = vpop.f32.mrb[0].mxu0
  %v1800 = vpop.f32.mrb[0].mxu0
  %v1801 = vadd.f32 %v1704, %v1800
  %v1802 = vpop.f32.mrb[0].mxu0
  %1803 = vmatprep.mubr.bf16.mxu0 %v838
  %1804 = vmatmul.mubr.bf16.gmra.mrb[0].mxu0 %v837
  %v1805 = vpop.f32.mrb[0].mxu0
  %v1806 = vadd.f32 %v1709, %v1805
  %v1807 = vpop.f32.mrb[0].mxu0
  %v1808 = vpop.f32.mrb[0].mxu0
  %v1809 = vadd.f32 %v1712, %v1808
  %v1810 = vpop.f32.mrb[0].mxu0
  %1811 = vmatprep.mubr.bf16.mxu0 %v847
  %1812 = vmatmul.mubr.bf16.gmra.mrb[0].mxu0 %v846
  %v1813 = vpop.f32.mrb[0].mxu0
  %v1814 = vadd.f32 %v1717, %v1813
  %v1815 = vpop.f32.mrb[0].mxu0
  %v1816 = vpop.f32.mrb[0].mxu0
  %v1817 = vadd.f32 %v1720, %v1816
  %v1818 = vpop.f32.mrb[0].mxu0
  %1819 = vdwg.mxu0
  %1820 = vmatprep.subr.bf16.mxu0 0
  %1821 = vmatpush1.bf16.msra.mxu0 %v1352
  %1822 = vmatprep.subr.bf16.mxu0 0
  %1823 = vmatpush1.bf16.msra.mxu0 %v1353
  %1824 = vmatprep.subr.bf16.mxu0 0
  %1825 = vmatpush1.bf16.msra.mxu0 %v1354
  %1826 = vmatprep.subr.bf16.mxu0 0
  %1827 = vmatpush1.bf16.msra.mxu0 %v1355
  %1828 = vmatprep.subr.bf16.mxu0 0
  %1829 = vmatpush1.bf16.msra.mxu0 %v1356
  %1830 = vmatprep.subr.bf16.mxu0 0
  %1831 = vmatpush1.bf16.msra.mxu0 %v1357
  %1832 = vmatprep.subr.bf16.mxu0 0
  %1833 = vmatpush1.bf16.msra.mxu0 %v1358
  %1834 = vmatprep.subr.bf16.mxu0 0
  %1835 = vmatpush1.bf16.msra.mxu0 %v1359
  %1836 = vmatprep.subr.bf16.mxu0 0
  %1837 = vmatpush1.bf16.msra.mxu0 0
  %1838 = vmatprep.subr.bf16.mxu0 0
  %1839 = vmatpush1.bf16.msra.mxu0 0
  %1840 = vmatprep.subr.bf16.mxu0 0
  %1841 = vmatpush1.bf16.msra.mxu0 0
  %1842 = vmatprep.subr.bf16.mxu0 0
  %1843 = vmatpush1.bf16.msra.mxu0 0
  %1844 = vmatprep.subr.bf16.mxu0 0
  %1845 = vmatpush1.bf16.msra.mxu0 0
  %1846 = vmatprep.subr.bf16.mxu0 0
  %1847 = vmatpush1.bf16.msra.mxu0 0
  %1848 = vmatprep.subr.bf16.mxu0 0
  %1849 = vmatpush1.bf16.msra.mxu0 0
  %1850 = vmatprep.subr.bf16.mxu0 0
  %1851 = vmatpush1.bf16.msra.mxu0 0
  %1852 = vmatprep.mubr.bf16.mxu0 0
  %1853 = vmatmul.mubr.bf16.gmra.mrb[0].mxu0 %v785
  %v1854 = vpop.f32.mrb[0].mxu0
  %v1855 = vadd.f32 %v1758, %v1854
  %v1856 = vpop.f32.mrb[0].mxu0
  %v1857 = vpop.f32.mrb[0].mxu0
  %v1858 = vadd.f32 %v1761, %v1857
  %v1859 = vpop.f32.mrb[0].mxu0
  %1860 = vmatprep.mubr.bf16.mxu0 0
  %1861 = vmatmul.mubr.bf16.gmra.mrb[0].mxu0 %v794
  %v1862 = vpop.f32.mrb[0].mxu0
  %v1863 = vadd.f32 %v1766, %v1862
  %v1864 = vpop.f32.mrb[0].mxu0
  %v1865 = vpop.f32.mrb[0].mxu0
  %v1866 = vadd.f32 %v1769, %v1865
  %v1867 = vpop.f32.mrb[0].mxu0
  %1868 = vmatprep.mubr.bf16.mxu0 0
  %1869 = vmatmul.mubr.bf16.gmra.mrb[0].mxu0 %v803
  %v1870 = vpop.f32.mrb[0].mxu0
  %v1871 = vadd.f32 %v1774, %v1870
  %v1872 = vpop.f32.mrb[0].mxu0
  %v1873 = vpop.f32.mrb[0].mxu0
  %v1874 = vadd.f32 %v1777, %v1873
  %v1875 = vpop.f32.mrb[0].mxu0
  %1876 = vmatprep.mubr.bf16.mxu0 0
  %1877 = vmatmul.mubr.bf16.gmra.mrb[0].mxu0 %v812
  %v1878 = vpop.f32.mrb[0].mxu0
  %v1879 = vadd.f32 %v1782, %v1878
  %v1880 = vpop.f32.mrb[0].mxu0
  %v1881 = vpop.f32.mrb[0].mxu0
  %v1882 = vadd.f32 %v1785, %v1881
  %v1883 = vpop.f32.mrb[0].mxu0
  %1884 = vmatprep.mubr.bf16.mxu0 0
  %1885 = vmatmul.mubr.bf16.gmra.mrb[0].mxu0 %v821
  %v1886 = vpop.f32.mrb[0].mxu0
  %v1887 = vadd.f32 %v1790, %v1886
  %v1888 = vpop.f32.mrb[0].mxu0
  %v1889 = vpop.f32.mrb[0].mxu0
  %v1890 = vadd.f32 %v1793, %v1889
  %v1891 = vpop.f32.mrb[0].mxu0
  %1892 = vmatprep.mubr.bf16.mxu0 0
  %1893 = vmatmul.mubr.bf16.gmra.mrb[0].mxu0 %v830
  %v1894 = vpop.f32.mrb[0].mxu0
  %v1895 = vadd.f32 %v1798, %v1894
  %v1896 = vpop.f32.mrb[0].mxu0
  %v1897 = vpop.f32.mrb[0].mxu0
  %v1898 = vadd.f32 %v1801, %v1897
  %v1899 = vpop.f32.mrb[0].mxu0
  %1900 = vmatprep.mubr.bf16.mxu0 0
  %1901 = vmatmul.mubr.bf16.gmra.mrb[0].mxu0 %v839
  %v1902 = vpop.f32.mrb[0].mxu0
  %v1903 = vadd.f32 %v1806, %v1902
  %v1904 = vpop.f32.mrb[0].mxu0
  %v1905 = vpop.f32.mrb[0].mxu0
  %v1906 = vadd.f32 %v1809, %v1905
  %v1907 = vpop.f32.mrb[0].mxu0
  %1908 = vmatprep.mubr.bf16.mxu0 0
  %1909 = vmatmul.mubr.bf16.gmra.mrb[0].mxu0 %v848
  %v1910 = vpop.f32.mrb[0].mxu0
  %v1911 = vadd.f32 %v1814, %v1910
  %v1912 = vpop.f32.mrb[0].mxu0
  %v1913 = vpop.f32.mrb[0].mxu0
  %v1914 = vadd.f32 %v1817, %v1913
  %v1915 = vpop.f32.mrb[0].mxu0
  %1916 = vdwg.mxu0
  %v1917 = vpack.c.bf16 %v1858, %v1855
  %v1918 = vpack.c.bf16 %v1866, %v1863
  %v1919 = vpack.c.bf16 %v1874, %v1871
  %v1920 = vpack.c.bf16 %v1882, %v1879
  %v1921 = vpack.c.bf16 %v1890, %v1887
  %v1922 = vpack.c.bf16 %v1898, %v1895
  %v1923 = vpack.c.bf16 %v1906, %v1903
  %v1924 = vpack.c.bf16 %v1914, %v1911
  %v1933 = vunpack.c.l.b16 %v1917
  %v1934 = vunpack.c.h.b16 %v1917
  %v1935 = vunpack.c.l.b16 %v1918
  %v1936 = vunpack.c.h.b16 %v1918
  %v1937 = vunpack.c.l.b16 %v1919
  %v1938 = vunpack.c.h.b16 %v1919
  %v1939 = vunpack.c.l.b16 %v1920
  %v1940 = vunpack.c.h.b16 %v1920
  %v1941 = vunpack.c.l.b16 %v1921
  %v1942 = vunpack.c.h.b16 %v1921
  %v1943 = vunpack.c.l.b16 %v1922
  %v1944 = vunpack.c.h.b16 %v1922
  %v1945 = vunpack.c.l.b16 %v1923
  %v1946 = vunpack.c.h.b16 %v1923
  %v1947 = vunpack.c.l.b16 %v1924
  %v1948 = vunpack.c.h.b16 %v1924
  %v1949 = vpack.c.b16 %v1933, %v1933
  %v1950 = vpack.c.b16 %v1934, %v1934
  %v1951 = vpack.c.b16 %v1935, %v1935
  %v1952 = vpack.c.b16 %v1936, %v1936
  %v1953 = vpack.c.b16 %v1937, %v1937
  %v1954 = vpack.c.b16 %v1938, %v1938
  %v1955 = vpack.c.b16 %v1939, %v1939
  %v1956 = vpack.c.b16 %v1940, %v1940
  %v1957 = vpack.c.b16 %v1941, %v1941
  %v1958 = vpack.c.b16 %v1942, %v1942
  %v1959 = vpack.c.b16 %v1943, %v1943
  %v1960 = vpack.c.b16 %v1944, %v1944
  %v1961 = vpack.c.b16 %v1945, %v1945
  %v1962 = vpack.c.b16 %v1946, %v1946
  %v1963 = vpack.c.b16 %v1947, %v1947
  %v1964 = vpack.c.b16 %v1948, %v1948
  %1981 = vst [vmem:[%s5] sm:$0xf] %v1949
  %1982 = vst [vmem:[%s5 + $0x4] sm:$0xf] %v1950
  %1983 = vst [vmem:[%s5 + $0x8] sm:$0xf] %v1951
  %1984 = vst [vmem:[%s5 + $0xc] sm:$0xf] %v1952
  %1985 = vst [vmem:[%s5 + $0x10] sm:$0xf] %v1953
  %1986 = vst [vmem:[%s5 + $0x14] sm:$0xf] %v1954
  %1987 = vst [vmem:[%s5 + $0x18] sm:$0xf] %v1955
  %1988 = vst [vmem:[%s5 + $0x1c] sm:$0xf] %v1956
  %1989 = vst [vmem:[%s5 + $0x20] sm:$0xf] %v1957
  %1990 = vst [vmem:[%s5 + $0x24] sm:$0xf] %v1958
  %1991 = vst [vmem:[%s5 + $0x28] sm:$0xf] %v1959
  %1992 = vst [vmem:[%s5 + $0x2c] sm:$0xf] %v1960
  %1993 = vst [vmem:[%s5 + $0x30] sm:$0xf] %v1961
  %1994 = vst [vmem:[%s5 + $0x34] sm:$0xf] %v1962
  %1995 = vst [vmem:[%s5 + $0x38] sm:$0xf] %v1963
  %1996 = vst [vmem:[%s5 + $0x3c] sm:$0xf] %v1964
  %v1997 = vlaneseq
  %v1998 = vshrl.u32 %v1997, 7
  %v1999 = vadd.s32 %v1998, 8
  %v2000 = vadd.s32 %v1998, 16
  %v2001 = vadd.s32 %v1998, 24
  %v2002 = vadd.s32 %v1998, 32
  %v2003 = vadd.s32 %v1998, 40
  %v2004 = vadd.s32 %v1998, 48
  %v2005 = vadd.s32 %v1998, 56
  %v2006 = vadd.s32 %v1998, 64
  %v2007 = vadd.s32 %v1998, 72
  %v2008 = vadd.s32 %v1998, 80
  %v2009 = vadd.s32 %v1998, 88
  %v2010 = vadd.s32 %v1998, 96
  %v2011 = vadd.s32 %v1998, 104
  %v2012 = vadd.s32 %v1998, 112
  %v2013 = vadd.s32 %v1998, 120
  %s2014 = smul.u32 0, 128
  %s2015 = ssub.s32 8, %s2014
  %v2016 = vstv %s2015
  %vm2017 = vcmp.lt.s32.totalorder %v1998, %v2016
  %vm2018 = vcmp.lt.s32.totalorder %v1999, %v2016
  %vm2019 = vcmp.lt.s32.totalorder %v2000, %v2016
  %vm2020 = vcmp.lt.s32.totalorder %v2001, %v2016
  %vm2021 = vcmp.lt.s32.totalorder %v2002, %v2016
  %vm2022 = vcmp.lt.s32.totalorder %v2003, %v2016
  %vm2023 = vcmp.lt.s32.totalorder %v2004, %v2016
  %vm2024 = vcmp.lt.s32.totalorder %v2005, %v2016
  %vm2025 = vcmp.lt.s32.totalorder %v2006, %v2016
  %vm2026 = vcmp.lt.s32.totalorder %v2007, %v2016
  %vm2027 = vcmp.lt.s32.totalorder %v2008, %v2016
  %vm2028 = vcmp.lt.s32.totalorder %v2009, %v2016
  %vm2029 = vcmp.lt.s32.totalorder %v2010, %v2016
  %vm2030 = vcmp.lt.s32.totalorder %v2011, %v2016
  %vm2031 = vcmp.lt.s32.totalorder %v2012, %v2016
  %vm2032 = vcmp.lt.s32.totalorder %v2013, %v2016
  %v2033 = vsel %vm2017, 1, 0
  %v2034 = vsel %vm2018, 1, 0
  %v2035 = vsel %vm2019, 1, 0
  %v2036 = vsel %vm2020, 1, 0
  %v2037 = vsel %vm2021, 1, 0
  %v2038 = vsel %vm2022, 1, 0
  %v2039 = vsel %vm2023, 1, 0
  %v2040 = vsel %vm2024, 1, 0
  %v2041 = vsel %vm2025, 1, 0
  %v2042 = vsel %vm2026, 1, 0
  %v2043 = vsel %vm2027, 1, 0
  %v2044 = vsel %vm2028, 1, 0
  %v2045 = vsel %vm2029, 1, 0
  %v2046 = vsel %vm2030, 1, 0
  %v2047 = vsel %vm2031, 1, 0
  %v2048 = vsel %vm2032, 1, 0
  %vm2049 = vcmp.eq.s32.totalorder %v2033, 1
  %vm2050 = vcmp.eq.s32.totalorder %v2034, 1
  %vm2051 = vcmp.eq.s32.totalorder %v2035, 1
  %vm2052 = vcmp.eq.s32.totalorder %v2036, 1
  %vm2053 = vcmp.eq.s32.totalorder %v2037, 1
  %vm2054 = vcmp.eq.s32.totalorder %v2038, 1
  %vm2055 = vcmp.eq.s32.totalorder %v2039, 1
  %vm2056 = vcmp.eq.s32.totalorder %v2040, 1
  %vm2057 = vcmp.eq.s32.totalorder %v2041, 1
  %vm2058 = vcmp.eq.s32.totalorder %v2042, 1
  %vm2059 = vcmp.eq.s32.totalorder %v2043, 1
  %vm2060 = vcmp.eq.s32.totalorder %v2044, 1
  %vm2061 = vcmp.eq.s32.totalorder %v2045, 1
  %vm2062 = vcmp.eq.s32.totalorder %v2046, 1
  %vm2063 = vcmp.eq.s32.totalorder %v2047, 1
  %vm2064 = vcmp.eq.s32.totalorder %v2048, 1
  %v2065 = vsel %vm2049, %v1855, 0.0
  %v2066 = vsel %vm2050, %v1858, 0.0
  %v2067 = vsel %vm2051, %v1863, 0.0
  %v2068 = vsel %vm2052, %v1866, 0.0
  %v2069 = vsel %vm2053, %v1871, 0.0
  %v2070 = vsel %vm2054, %v1874, 0.0
  %v2071 = vsel %vm2055, %v1879, 0.0
  %v2072 = vsel %vm2056, %v1882, 0.0
  %v2073 = vsel %vm2057, %v1887, 0.0
  %v2074 = vsel %vm2058, %v1890, 0.0
  %v2075 = vsel %vm2059, %v1895, 0.0
  %v2076 = vsel %vm2060, %v1898, 0.0
  %v2077 = vsel %vm2061, %v1903, 0.0
  %v2078 = vsel %vm2062, %v1906, 0.0
  %v2079 = vsel %vm2063, %v1911, 0.0
  %v2080 = vsel %vm2064, %v1914, 0.0
  %v2081 = vadd.f32 %v2065, %v2066
  %v2082 = vadd.f32 %v2081, %v2067
  %v2083 = vadd.f32 %v2082, %v2068
  %v2084 = vadd.f32 %v2083, %v2069
  %v2085 = vadd.f32 %v2084, %v2070
  %v2086 = vadd.f32 %v2085, %v2071
  %v2087 = vadd.f32 %v2086, %v2072
  %v2088 = vadd.f32 %v2087, %v2073
  %v2089 = vadd.f32 %v2088, %v2074
  %v2090 = vadd.f32 %v2089, %v2075
  %v2091 = vadd.f32 %v2090, %v2076
  %v2092 = vadd.f32 %v2091, %v2077
  %v2093 = vadd.f32 %v2092, %v2078
  %v2094 = vadd.f32 %v2093, %v2079
  %v2095 = vadd.f32 %v2094, %v2080
  %v2096 = vrot.slane %v2095, 4
  %v2097 = vadd.f32 %v2095, %v2096
  %v2098 = vrot.slane %v2097, 2
  %v2099 = vadd.f32 %v2097, %v2098
  %v2100 = vrot.slane %v2099, 1
  %v2101 = vadd.f32 %v2099, %v2100
  %v2102 = vmul.f32 %v2065, %v2065
  %v2103 = vmul.f32 %v2066, %v2066
  %v2104 = vmul.f32 %v2067, %v2067
  %v2105 = vmul.f32 %v2068, %v2068
  %v2106 = vmul.f32 %v2069, %v2069
  %v2107 = vmul.f32 %v2070, %v2070
  %v2108 = vmul.f32 %v2071, %v2071
  %v2109 = vmul.f32 %v2072, %v2072
  %v2110 = vmul.f32 %v2073, %v2073
  %v2111 = vmul.f32 %v2074, %v2074
  %v2112 = vmul.f32 %v2075, %v2075
  %v2113 = vmul.f32 %v2076, %v2076
  %v2114 = vmul.f32 %v2077, %v2077
  %v2115 = vmul.f32 %v2078, %v2078
  %v2116 = vmul.f32 %v2079, %v2079
  %v2117 = vmul.f32 %v2080, %v2080
  %v2118 = vadd.f32 %v2102, %v2103
  %v2119 = vadd.f32 %v2118, %v2104
  %v2120 = vadd.f32 %v2119, %v2105
  %v2121 = vadd.f32 %v2120, %v2106
  %v2122 = vadd.f32 %v2121, %v2107
  %v2123 = vadd.f32 %v2122, %v2108
  %v2124 = vadd.f32 %v2123, %v2109
  %v2125 = vadd.f32 %v2124, %v2110
  %v2126 = vadd.f32 %v2125, %v2111
  %v2127 = vadd.f32 %v2126, %v2112
  %v2128 = vadd.f32 %v2127, %v2113
  %v2129 = vadd.f32 %v2128, %v2114
  %v2130 = vadd.f32 %v2129, %v2115
  %v2131 = vadd.f32 %v2130, %v2116
  %v2132 = vadd.f32 %v2131, %v2117
  %v2133 = vrot.slane %v2132, 4
  %v2134 = vadd.f32 %v2132, %v2133
  %v2135 = vrot.slane %v2134, 2
  %v2136 = vadd.f32 %v2134, %v2135
  %v2137 = vrot.slane %v2136, 1
  %v2138 = vadd.f32 %v2136, %v2137
  %vm2139 = vcmask 1040384
  %v2140 = vsel %vm2139, %v2101, %v2138
  %vm2141 = vcmask 1041408
  %v2142 = vsel %vm2141, %v2140, 0.0
  %2143 = vst [vmem:[%s6] sm:$0xff] %v2142
  // Predicated region
  $region22: #{unet_generator_forward.16} parent=0 // pred_check
    _
  $region23: #{unet_generator_forward.16} parent=0 // pred_check_branch
    %2145 = sbr.rel (0) target = $region25
  $region24: #{unet_generator_forward.16} parent=0 // pred_region
    _
  $region25: #{unet_generator_forward.16} parent=0 // pred_fallthru
    _
  // Predicated region
  $region26: #{unet_generator_forward.16} parent=0 // pred_check
    _
  $region27: #{unet_generator_forward.16} parent=0 // pred_check_branch
    %2147 = sbr.rel (0) target = $region29
  $region28: #{unet_generator_forward.16} parent=0 // pred_region
    _
  $region29: #{unet_generator_forward.16} parent=0 // pred_fallthru
    _
  // Predicated region
  $region30: #{unet_generator_forward.16} parent=0 // pred_check
    _
  $region31: #{unet_generator_forward.16} parent=0 // pred_check_branch
    %2149 = sbr.rel (0) target = $region33
  $region32: #{unet_generator_forward.16} parent=0 // pred_region
    _
  $region33: #{unet_generator_forward.16} parent=0 // pred_fallthru
    _
  // Predicated region
  $region34: #{unet_generator_forward.16} parent=0 // pred_check
    _
  $region35: #{unet_generator_forward.16} parent=0 // pred_check_branch
    %2151 = sbr.rel (0) target = $region37
  $region36: #{unet_generator_forward.16} parent=0 // pred_region
    _
  $region37: #{unet_generator_forward.16} parent=0 // pred_fallthru
    _

// kernel: unet_generator_forward.17
$region0: #{unet_generator_forward.17}
  #allocation0 [shape = 'u32[]', space=smem, size = 0x4, offset = 0x4, fixed_abs, tag = 'smem constant byte address 0x4 - core index']
  #allocation1 [shape = 'u32[144,128]{1,0:T(1,128)}', space=vmem, size = 0x12000, scoped, tag = 'internal scratch']
  %s0 = inlined_call_operand.vmem [shape: bf16[128,576], index: 0, kind: input, shape index: {}]
  %s1 = inlined_call_operand.vmem [shape: bf16[576,128], index: 1, kind: input, shape index: {}]
  %s2 = inlined_call_operand.vmem [shape: f32[1,128], index: 2, kind: input, shape index: {}]
  %s3 = inlined_call_operand.vmem [shape: f32[1,576], index: 3, kind: input, shape index: {}]
  %s4 = inlined_call_operand.vmem [shape: f32[1,576], index: 4, kind: input, shape index: {}]
  %s5 = inlined_call_operand.vmem [shape: bf16[128,128], index: 5, kind: output, shape index: {0}]
  %s6 = inlined_call_operand.vmem [shape: f32[1,8,128], index: 6, kind: output, shape index: {1}]
  %7 = xla_tuple %s5, %s6
  %s8 = sld [smem:[#allocation0]]
  $region38: #{unet_generator_forward.17} parent=0
    _
  %s10 = ssub.s32 1, %s8
  %s11 = scalar_select 0, %s10, %s8
  // Predicated region
  $region2: #{unet_generator_forward.17} parent=0 // pred_check
    _
  $region3: #{unet_generator_forward.17} parent=0 // pred_check_branch
    %13 = sbr.rel (0) target = $region5
  $region4: #{unet_generator_forward.17} parent=0 // pred_region
    _
  $region5: #{unet_generator_forward.17} parent=0 // pred_fallthru
    _
  // Predicated region
  $region6: #{unet_generator_forward.17} parent=0 // pred_check
    _
  $region7: #{unet_generator_forward.17} parent=0 // pred_check_branch
    %15 = sbr.rel (0) target = $region9
  $region8: #{unet_generator_forward.17} parent=0 // pred_region
    _
  $region9: #{unet_generator_forward.17} parent=0 // pred_fallthru
    _
  // Predicated region
  $region10: #{unet_generator_forward.17} parent=0 // pred_check
    _
  $region11: #{unet_generator_forward.17} parent=0 // pred_check_branch
    %17 = sbr.rel (0) target = $region13
  $region12: #{unet_generator_forward.17} parent=0 // pred_region
    _
  $region13: #{unet_generator_forward.17} parent=0 // pred_fallthru
    _
  // Predicated region
  $region14: #{unet_generator_forward.17} parent=0 // pred_check
    _
  $region15: #{unet_generator_forward.17} parent=0 // pred_check_branch
    %19 = sbr.rel (0) target = $region17
  $region16: #{unet_generator_forward.17} parent=0 // pred_region
    _
  $region17: #{unet_generator_forward.17} parent=0 // pred_fallthru
    _
  // Predicated region
  $region18: #{unet_generator_forward.17} parent=0 // pred_check
    _
  $region19: #{unet_generator_forward.17} parent=0 // pred_check_branch
    %21 = sbr.rel (0) target = $region21
  $region20: #{unet_generator_forward.17} parent=0 // pred_region
    _
  $region21: #{unet_generator_forward.17} parent=0 // pred_fallthru
    _
  %v23 = vld [vmem:[%s0] sm:$0xff]
  %v24 = vld [vmem:[%s0 + $0x8] sm:$0xff]
  %v25 = vld [vmem:[%s0 + $0x10] sm:$0xf]
  %v26 = vld [vmem:[%s0 + $0x14] sm:$0xff]
  %v27 = vld [vmem:[%s0 + $0x1c] sm:$0xff]
  %v28 = vld [vmem:[%s0 + $0x24] sm:$0xf]
  %v29 = vld [vmem:[%s0 + $0x28] sm:$0xff]
  %v30 = vld [vmem:[%s0 + $0x30] sm:$0xff]
  %v31 = vld [vmem:[%s0 + $0x38] sm:$0xf]
  %v32 = vld [vmem:[%s0 + $0x3c] sm:$0xff]
  %v33 = vld [vmem:[%s0 + $0x44] sm:$0xff]
  %v34 = vld [vmem:[%s0 + $0x4c] sm:$0xf]
  %v35 = vld [vmem:[%s0 + $0x50] sm:$0xff]
  %v36 = vld [vmem:[%s0 + $0x58] sm:$0xff]
  %v37 = vld [vmem:[%s0 + $0x60] sm:$0xf]
  %v38 = vld [vmem:[%s0 + $0x64] sm:$0xff]
  %v39 = vld [vmem:[%s0 + $0x6c] sm:$0xff]
  %v40 = vld [vmem:[%s0 + $0x74] sm:$0xf]
  %v41 = vld [vmem:[%s0 + $0x78] sm:$0xff]
  %v42 = vld [vmem:[%s0 + $0x80] sm:$0xff]
  %v43 = vld [vmem:[%s0 + $0x88] sm:$0xf]
  %v44 = vld [vmem:[%s0 + $0x8c] sm:$0xff]
  %v45 = vld [vmem:[%s0 + $0x94] sm:$0xff]
  %v46 = vld [vmem:[%s0 + $0x9c] sm:$0xf]
  %v47 = vld [vmem:[%s0 + $0xa0] sm:$0xff]
  %v48 = vld [vmem:[%s0 + $0xa8] sm:$0xff]
  %v49 = vld [vmem:[%s0 + $0xb0] sm:$0xf]
  %v50 = vld [vmem:[%s0 + $0xb4] sm:$0xff]
  %v51 = vld [vmem:[%s0 + $0xbc] sm:$0xff]
  %v52 = vld [vmem:[%s0 + $0xc4] sm:$0xf]
  %v53 = vld [vmem:[%s0 + $0xc8] sm:$0xff]
  %v54 = vld [vmem:[%s0 + $0xd0] sm:$0xff]
  %v55 = vld [vmem:[%s0 + $0xd8] sm:$0xf]
  %v56 = vld [vmem:[%s0 + $0xdc] sm:$0xff]
  %v57 = vld [vmem:[%s0 + $0xe4] sm:$0xff]
  %v58 = vld [vmem:[%s0 + $0xec] sm:$0xf]
  %v59 = vld [vmem:[%s0 + $0xf0] sm:$0xff]
  %v60 = vld [vmem:[%s0 + $0xf8] sm:$0xff]
  %v61 = vld [vmem:[%s0 + $0x100] sm:$0xf]
  %v62 = vld [vmem:[%s0 + $0x104] sm:$0xff]
  %v63 = vld [vmem:[%s0 + $0x10c] sm:$0xff]
  %v64 = vld [vmem:[%s0 + $0x114] sm:$0xf]
  %v65 = vld [vmem:[%s0 + $0x118] sm:$0xff]
  %v66 = vld [vmem:[%s0 + $0x120] sm:$0xff]
  %v67 = vld [vmem:[%s0 + $0x128] sm:$0xf]
  %v68 = vld [vmem:[%s0 + $0x12c] sm:$0xff]
  %v69 = vld [vmem:[%s0 + $0x134] sm:$0xff]
  %v70 = vld [vmem:[%s0 + $0x13c] sm:$0xf]
  %v71 = vunpack.c.l.bf16 %v23
  %v72 = vunpack.c.h.bf16 %v23
  %v73 = vunpack.c.l.bf16 %v24
  %v74 = vunpack.c.h.bf16 %v24
  %v75 = vunpack.c.l.bf16 %v25
  %v76 = vunpack.c.l.bf16 %v26
  %v77 = vunpack.c.h.bf16 %v26
  %v78 = vunpack.c.l.bf16 %v27
  %v79 = vunpack.c.h.bf16 %v27
  %v80 = vunpack.c.l.bf16 %v28
  %v81 = vunpack.c.l.bf16 %v29
  %v82 = vunpack.c.h.bf16 %v29
  %v83 = vunpack.c.l.bf16 %v30
  %v84 = vunpack.c.h.bf16 %v30
  %v85 = vunpack.c.l.bf16 %v31
  %v86 = vunpack.c.l.bf16 %v32
  %v87 = vunpack.c.h.bf16 %v32
  %v88 = vunpack.c.l.bf16 %v33
  %v89 = vunpack.c.h.bf16 %v33
  %v90 = vunpack.c.l.bf16 %v34
  %v91 = vunpack.c.l.bf16 %v35
  %v92 = vunpack.c.h.bf16 %v35
  %v93 = vunpack.c.l.bf16 %v36
  %v94 = vunpack.c.h.bf16 %v36
  %v95 = vunpack.c.l.bf16 %v37
  %v96 = vunpack.c.l.bf16 %v38
  %v97 = vunpack.c.h.bf16 %v38
  %v98 = vunpack.c.l.bf16 %v39
  %v99 = vunpack.c.h.bf16 %v39
  %v100 = vunpack.c.l.bf16 %v40
  %v101 = vunpack.c.l.bf16 %v41
  %v102 = vunpack.c.h.bf16 %v41
  %v103 = vunpack.c.l.bf16 %v42
  %v104 = vunpack.c.h.bf16 %v42
  %v105 = vunpack.c.l.bf16 %v43
  %v106 = vunpack.c.l.bf16 %v44
  %v107 = vunpack.c.h.bf16 %v44
  %v108 = vunpack.c.l.bf16 %v45
  %v109 = vunpack.c.h.bf16 %v45
  %v110 = vunpack.c.l.bf16 %v46
  %v111 = vunpack.c.l.bf16 %v47
  %v112 = vunpack.c.h.bf16 %v47
  %v113 = vunpack.c.l.bf16 %v48
  %v114 = vunpack.c.h.bf16 %v48
  %v115 = vunpack.c.l.bf16 %v49
  %v116 = vunpack.c.l.bf16 %v50
  %v117 = vunpack.c.h.bf16 %v50
  %v118 = vunpack.c.l.bf16 %v51
  %v119 = vunpack.c.h.bf16 %v51
  %v120 = vunpack.c.l.bf16 %v52
  %v121 = vunpack.c.l.bf16 %v53
  %v122 = vunpack.c.h.bf16 %v53
  %v123 = vunpack.c.l.bf16 %v54
  %v124 = vunpack.c.h.bf16 %v54
  %v125 = vunpack.c.l.bf16 %v55
  %v126 = vunpack.c.l.bf16 %v56
  %v127 = vunpack.c.h.bf16 %v56
  %v128 = vunpack.c.l.bf16 %v57
  %v129 = vunpack.c.h.bf16 %v57
  %v130 = vunpack.c.l.bf16 %v58
  %v131 = vunpack.c.l.bf16 %v59
  %v132 = vunpack.c.h.bf16 %v59
  %v133 = vunpack.c.l.bf16 %v60
  %v134 = vunpack.c.h.bf16 %v60
  %v135 = vunpack.c.l.bf16 %v61
  %v136 = vunpack.c.l.bf16 %v62
  %v137 = vunpack.c.h.bf16 %v62
  %v138 = vunpack.c.l.bf16 %v63
  %v139 = vunpack.c.h.bf16 %v63
  %v140 = vunpack.c.l.bf16 %v64
  %v141 = vunpack.c.l.bf16 %v65
  %v142 = vunpack.c.h.bf16 %v65
  %v143 = vunpack.c.l.bf16 %v66
  %v144 = vunpack.c.h.bf16 %v66
  %v145 = vunpack.c.l.bf16 %v67
  %v146 = vunpack.c.l.bf16 %v68
  %v147 = vunpack.c.h.bf16 %v68
  %v148 = vunpack.c.l.bf16 %v69
  %v149 = vunpack.c.h.bf16 %v69
  %v150 = vunpack.c.l.bf16 %v70
  %v151 = vld [vmem:[%s3] sm:$0x1f]
  %v153 = vlaneseq
  %v154 = vshrl.u32 %v153, 7
  %v155 = vsub.s32 0, %v154
  %v156 = vrot.slane %v151, %v155
  %v157 = vlaneseq
  %v158 = vshrl.u32 %v157, 7
  %v159 = vsub.s32 1, %v158
  %v160 = vrot.slane %v151, %v159
  %v161 = vlaneseq
  %v162 = vshrl.u32 %v161, 7
  %v163 = vsub.s32 2, %v162
  %v164 = vrot.slane %v151, %v163
  %v165 = vlaneseq
  %v166 = vshrl.u32 %v165, 7
  %v167 = vsub.s32 3, %v166
  %v168 = vrot.slane %v151, %v167
  %v169 = vlaneseq
  %v170 = vshrl.u32 %v169, 7
  %v171 = vsub.s32 4, %v170
  %v172 = vrot.slane %v151, %v171
  %v178 = vmul.f32 %v71, %v156
  %v179 = vmul.f32 %v72, %v160
  %v180 = vmul.f32 %v73, %v164
  %v181 = vmul.f32 %v74, %v168
  %v182 = vmul.f32 %v75, %v172
  %v183 = vmul.f32 %v76, %v156
  %v184 = vmul.f32 %v77, %v160
  %v185 = vmul.f32 %v78, %v164
  %v186 = vmul.f32 %v79, %v168
  %v187 = vmul.f32 %v80, %v172
  %v188 = vmul.f32 %v81, %v156
  %v189 = vmul.f32 %v82, %v160
  %v190 = vmul.f32 %v83, %v164
  %v191 = vmul.f32 %v84, %v168
  %v192 = vmul.f32 %v85, %v172
  %v193 = vmul.f32 %v86, %v156
  %v194 = vmul.f32 %v87, %v160
  %v195 = vmul.f32 %v88, %v164
  %v196 = vmul.f32 %v89, %v168
  %v197 = vmul.f32 %v90, %v172
  %v198 = vmul.f32 %v91, %v156
  %v199 = vmul.f32 %v92, %v160
  %v200 = vmul.f32 %v93, %v164
  %v201 = vmul.f32 %v94, %v168
  %v202 = vmul.f32 %v95, %v172
  %v203 = vmul.f32 %v96, %v156
  %v204 = vmul.f32 %v97, %v160
  %v205 = vmul.f32 %v98, %v164
  %v206 = vmul.f32 %v99, %v168
  %v207 = vmul.f32 %v100, %v172
  %v208 = vmul.f32 %v101, %v156
  %v209 = vmul.f32 %v102, %v160
  %v210 = vmul.f32 %v103, %v164
  %v211 = vmul.f32 %v104, %v168
  %v212 = vmul.f32 %v105, %v172
  %v213 = vmul.f32 %v106, %v156
  %v214 = vmul.f32 %v107, %v160
  %v215 = vmul.f32 %v108, %v164
  %v216 = vmul.f32 %v109, %v168
  %v217 = vmul.f32 %v110, %v172
  %v218 = vmul.f32 %v111, %v156
  %v219 = vmul.f32 %v112, %v160
  %v220 = vmul.f32 %v113, %v164
  %v221 = vmul.f32 %v114, %v168
  %v222 = vmul.f32 %v115, %v172
  %v223 = vmul.f32 %v116, %v156
  %v224 = vmul.f32 %v117, %v160
  %v225 = vmul.f32 %v118, %v164
  %v226 = vmul.f32 %v119, %v168
  %v227 = vmul.f32 %v120, %v172
  %v228 = vmul.f32 %v121, %v156
  %v229 = vmul.f32 %v122, %v160
  %v230 = vmul.f32 %v123, %v164
  %v231 = vmul.f32 %v124, %v168
  %v232 = vmul.f32 %v125, %v172
  %v233 = vmul.f32 %v126, %v156
  %v234 = vmul.f32 %v127, %v160
  %v235 = vmul.f32 %v128, %v164
  %v236 = vmul.f32 %v129, %v168
  %v237 = vmul.f32 %v130, %v172
  %v238 = vmul.f32 %v131, %v156
  %v239 = vmul.f32 %v132, %v160
  %v240 = vmul.f32 %v133, %v164
  %v241 = vmul.f32 %v134, %v168
  %v242 = vmul.f32 %v135, %v172
  %v243 = vmul.f32 %v136, %v156
  %v244 = vmul.f32 %v137, %v160
  %v245 = vmul.f32 %v138, %v164
  %v246 = vmul.f32 %v139, %v168
  %v247 = vmul.f32 %v140, %v172
  %v248 = vmul.f32 %v141, %v156
  %v249 = vmul.f32 %v142, %v160
  %v250 = vmul.f32 %v143, %v164
  %v251 = vmul.f32 %v144, %v168
  %v252 = vmul.f32 %v145, %v172
  %v253 = vmul.f32 %v146, %v156
  %v254 = vmul.f32 %v147, %v160
  %v255 = vmul.f32 %v148, %v164
  %v256 = vmul.f32 %v149, %v168
  %v257 = vmul.f32 %v150, %v172
  %v258 = vld [vmem:[%s4] sm:$0x1f]
  %v260 = vlaneseq
  %v261 = vshrl.u32 %v260, 7
  %v262 = vsub.s32 0, %v261
  %v263 = vrot.slane %v258, %v262
  %v264 = vlaneseq
  %v265 = vshrl.u32 %v264, 7
  %v266 = vsub.s32 1, %v265
  %v267 = vrot.slane %v258, %v266
  %v268 = vlaneseq
  %v269 = vshrl.u32 %v268, 7
  %v270 = vsub.s32 2, %v269
  %v271 = vrot.slane %v258, %v270
  %v272 = vlaneseq
  %v273 = vshrl.u32 %v272, 7
  %v274 = vsub.s32 3, %v273
  %v275 = vrot.slane %v258, %v274
  %v276 = vlaneseq
  %v277 = vshrl.u32 %v276, 7
  %v278 = vsub.s32 4, %v277
  %v279 = vrot.slane %v258, %v278
  %v285 = vadd.f32 %v178, %v263
  %v286 = vadd.f32 %v179, %v267
  %v287 = vadd.f32 %v180, %v271
  %v288 = vadd.f32 %v181, %v275
  %v289 = vadd.f32 %v182, %v279
  %v290 = vadd.f32 %v183, %v263
  %v291 = vadd.f32 %v184, %v267
  %v292 = vadd.f32 %v185, %v271
  %v293 = vadd.f32 %v186, %v275
  %v294 = vadd.f32 %v187, %v279
  %v295 = vadd.f32 %v188, %v263
  %v296 = vadd.f32 %v189, %v267
  %v297 = vadd.f32 %v190, %v271
  %v298 = vadd.f32 %v191, %v275
  %v299 = vadd.f32 %v192, %v279
  %v300 = vadd.f32 %v193, %v263
  %v301 = vadd.f32 %v194, %v267
  %v302 = vadd.f32 %v195, %v271
  %v303 = vadd.f32 %v196, %v275
  %v304 = vadd.f32 %v197, %v279
  %v305 = vadd.f32 %v198, %v263
  %v306 = vadd.f32 %v199, %v267
  %v307 = vadd.f32 %v200, %v271
  %v308 = vadd.f32 %v201, %v275
  %v309 = vadd.f32 %v202, %v279
  %v310 = vadd.f32 %v203, %v263
  %v311 = vadd.f32 %v204, %v267
  %v312 = vadd.f32 %v205, %v271
  %v313 = vadd.f32 %v206, %v275
  %v314 = vadd.f32 %v207, %v279
  %v315 = vadd.f32 %v208, %v263
  %v316 = vadd.f32 %v209, %v267
  %v317 = vadd.f32 %v210, %v271
  %v318 = vadd.f32 %v211, %v275
  %v319 = vadd.f32 %v212, %v279
  %v320 = vadd.f32 %v213, %v263
  %v321 = vadd.f32 %v214, %v267
  %v322 = vadd.f32 %v215, %v271
  %v323 = vadd.f32 %v216, %v275
  %v324 = vadd.f32 %v217, %v279
  %v325 = vadd.f32 %v218, %v263
  %v326 = vadd.f32 %v219, %v267
  %v327 = vadd.f32 %v220, %v271
  %v328 = vadd.f32 %v221, %v275
  %v329 = vadd.f32 %v222, %v279
  %v330 = vadd.f32 %v223, %v263
  %v331 = vadd.f32 %v224, %v267
  %v332 = vadd.f32 %v225, %v271
  %v333 = vadd.f32 %v226, %v275
  %v334 = vadd.f32 %v227, %v279
  %v335 = vadd.f32 %v228, %v263
  %v336 = vadd.f32 %v229, %v267
  %v337 = vadd.f32 %v230, %v271
  %v338 = vadd.f32 %v231, %v275
  %v339 = vadd.f32 %v232, %v279
  %v340 = vadd.f32 %v233, %v263
  %v341 = vadd.f32 %v234, %v267
  %v342 = vadd.f32 %v235, %v271
  %v343 = vadd.f32 %v236, %v275
  %v344 = vadd.f32 %v237, %v279
  %v345 = vadd.f32 %v238, %v263
  %v346 = vadd.f32 %v239, %v267
  %v347 = vadd.f32 %v240, %v271
  %v348 = vadd.f32 %v241, %v275
  %v349 = vadd.f32 %v242, %v279
  %v350 = vadd.f32 %v243, %v263
  %v351 = vadd.f32 %v244, %v267
  %v352 = vadd.f32 %v245, %v271
  %v353 = vadd.f32 %v246, %v275
  %v354 = vadd.f32 %v247, %v279
  %v355 = vadd.f32 %v248, %v263
  %v356 = vadd.f32 %v249, %v267
  %v357 = vadd.f32 %v250, %v271
  %v358 = vadd.f32 %v251, %v275
  %v359 = vadd.f32 %v252, %v279
  %v360 = vadd.f32 %v253, %v263
  %v361 = vadd.f32 %v254, %v267
  %v362 = vadd.f32 %v255, %v271
  %v363 = vadd.f32 %v256, %v275
  %v364 = vadd.f32 %v257, %v279
  %v365 = vmax.f32 %v285, 0.0
  %v366 = vmax.f32 %v286, 0.0
  %v367 = vmax.f32 %v287, 0.0
  %v368 = vmax.f32 %v288, 0.0
  %v369 = vmax.f32 %v289, 0.0
  %v370 = vmax.f32 %v290, 0.0
  %v371 = vmax.f32 %v291, 0.0
  %v372 = vmax.f32 %v292, 0.0
  %v373 = vmax.f32 %v293, 0.0
  %v374 = vmax.f32 %v294, 0.0
  %v375 = vmax.f32 %v295, 0.0
  %v376 = vmax.f32 %v296, 0.0
  %v377 = vmax.f32 %v297, 0.0
  %v378 = vmax.f32 %v298, 0.0
  %v379 = vmax.f32 %v299, 0.0
  %v380 = vmax.f32 %v300, 0.0
  %v381 = vmax.f32 %v301, 0.0
  %v382 = vmax.f32 %v302, 0.0
  %v383 = vmax.f32 %v303, 0.0
  %v384 = vmax.f32 %v304, 0.0
  %v385 = vmax.f32 %v305, 0.0
  %v386 = vmax.f32 %v306, 0.0
  %v387 = vmax.f32 %v307, 0.0
  %v388 = vmax.f32 %v308, 0.0
  %v389 = vmax.f32 %v309, 0.0
  %v390 = vmax.f32 %v310, 0.0
  %v391 = vmax.f32 %v311, 0.0
  %v392 = vmax.f32 %v312, 0.0
  %v393 = vmax.f32 %v313, 0.0
  %v394 = vmax.f32 %v314, 0.0
  %v395 = vmax.f32 %v315, 0.0
  %v396 = vmax.f32 %v316, 0.0
  %v397 = vmax.f32 %v317, 0.0
  %v398 = vmax.f32 %v318, 0.0
  %v399 = vmax.f32 %v319, 0.0
  %v400 = vmax.f32 %v320, 0.0
  %v401 = vmax.f32 %v321, 0.0
  %v402 = vmax.f32 %v322, 0.0
  %v403 = vmax.f32 %v323, 0.0
  %v404 = vmax.f32 %v324, 0.0
  %v405 = vmax.f32 %v325, 0.0
  %v406 = vmax.f32 %v326, 0.0
  %v407 = vmax.f32 %v327, 0.0
  %v408 = vmax.f32 %v328, 0.0
  %v409 = vmax.f32 %v329, 0.0
  %v410 = vmax.f32 %v330, 0.0
  %v411 = vmax.f32 %v331, 0.0
  %v412 = vmax.f32 %v332, 0.0
  %v413 = vmax.f32 %v333, 0.0
  %v414 = vmax.f32 %v334, 0.0
  %v415 = vmax.f32 %v335, 0.0
  %v416 = vmax.f32 %v336, 0.0
  %v417 = vmax.f32 %v337, 0.0
  %v418 = vmax.f32 %v338, 0.0
  %v419 = vmax.f32 %v339, 0.0
  %v420 = vmax.f32 %v340, 0.0
  %v421 = vmax.f32 %v341, 0.0
  %v422 = vmax.f32 %v342, 0.0
  %v423 = vmax.f32 %v343, 0.0
  %v424 = vmax.f32 %v344, 0.0
  %v425 = vmax.f32 %v345, 0.0
  %v426 = vmax.f32 %v346, 0.0
  %v427 = vmax.f32 %v347, 0.0
  %v428 = vmax.f32 %v348, 0.0
  %v429 = vmax.f32 %v349, 0.0
  %v430 = vmax.f32 %v350, 0.0
  %v431 = vmax.f32 %v351, 0.0
  %v432 = vmax.f32 %v352, 0.0
  %v433 = vmax.f32 %v353, 0.0
  %v434 = vmax.f32 %v354, 0.0
  %v435 = vmax.f32 %v355, 0.0
  %v436 = vmax.f32 %v356, 0.0
  %v437 = vmax.f32 %v357, 0.0
  %v438 = vmax.f32 %v358, 0.0
  %v439 = vmax.f32 %v359, 0.0
  %v440 = vmax.f32 %v360, 0.0
  %v441 = vmax.f32 %v361, 0.0
  %v442 = vmax.f32 %v362, 0.0
  %v443 = vmax.f32 %v363, 0.0
  %v444 = vmax.f32 %v364, 0.0
  %v445 = vpack.c.bf16 %v370, %v365
  %v446 = vpack.c.bf16 %v371, %v366
  %v447 = vpack.c.bf16 %v372, %v367
  %v448 = vpack.c.bf16 %v373, %v368
  %v449 = vpack.c.bf16 %v374, %v369
  %v450 = vpack.c.bf16 %v380, %v375
  %v451 = vpack.c.bf16 %v381, %v376
  %v452 = vpack.c.bf16 %v382, %v377
  %v453 = vpack.c.bf16 %v383, %v378
  %v454 = vpack.c.bf16 %v384, %v379
  %v455 = vpack.c.bf16 %v390, %v385
  %v456 = vpack.c.bf16 %v391, %v386
  %v457 = vpack.c.bf16 %v392, %v387
  %v458 = vpack.c.bf16 %v393, %v388
  %v459 = vpack.c.bf16 %v394, %v389
  %v460 = vpack.c.bf16 %v400, %v395
  %v461 = vpack.c.bf16 %v401, %v396
  %v462 = vpack.c.bf16 %v402, %v397
  %v463 = vpack.c.bf16 %v403, %v398
  %v464 = vpack.c.bf16 %v404, %v399
  %v465 = vpack.c.bf16 %v410, %v405
  %v466 = vpack.c.bf16 %v411, %v406
  %v467 = vpack.c.bf16 %v412, %v407
  %v468 = vpack.c.bf16 %v413, %v408
  %v469 = vpack.c.bf16 %v414, %v409
  %v470 = vpack.c.bf16 %v420, %v415
  %v471 = vpack.c.bf16 %v421, %v416
  %v472 = vpack.c.bf16 %v422, %v417
  %v473 = vpack.c.bf16 %v423, %v418
  %v474 = vpack.c.bf16 %v424, %v419
  %v475 = vpack.c.bf16 %v430, %v425
  %v476 = vpack.c.bf16 %v431, %v426
  %v477 = vpack.c.bf16 %v432, %v427
  %v478 = vpack.c.bf16 %v433, %v428
  %v479 = vpack.c.bf16 %v434, %v429
  %v480 = vpack.c.bf16 %v440, %v435
  %v481 = vpack.c.bf16 %v441, %v436
  %v482 = vpack.c.bf16 %v442, %v437
  %v483 = vpack.c.bf16 %v443, %v438
  %v484 = vpack.c.bf16 %v444, %v439
  %v485 = vld [vmem:[%s1] sm:$0xf]
  %v486 = vld [vmem:[%s1 + $0x4] sm:$0xf]
  %v487 = vld [vmem:[%s1 + $0x8] sm:$0xf]
  %v488 = vld [vmem:[%s1 + $0xc] sm:$0xf]
  %v489 = vld [vmem:[%s1 + $0x10] sm:$0xf]
  %v490 = vld [vmem:[%s1 + $0x14] sm:$0xf]
  %v491 = vld [vmem:[%s1 + $0x18] sm:$0xf]
  %v492 = vld [vmem:[%s1 + $0x1c] sm:$0xf]
  %v493 = vld [vmem:[%s1 + $0x20] sm:$0xf]
  %v494 = vld [vmem:[%s1 + $0x24] sm:$0xf]
  %v495 = vld [vmem:[%s1 + $0x28] sm:$0xf]
  %v496 = vld [vmem:[%s1 + $0x2c] sm:$0xf]
  %v497 = vld [vmem:[%s1 + $0x30] sm:$0xf]
  %v498 = vld [vmem:[%s1 + $0x34] sm:$0xf]
  %v499 = vld [vmem:[%s1 + $0x38] sm:$0xf]
  %v500 = vld [vmem:[%s1 + $0x3c] sm:$0xf]
  %v501 = vld [vmem:[%s1 + $0x40] sm:$0xf]
  %v502 = vld [vmem:[%s1 + $0x44] sm:$0xf]
  %v503 = vld [vmem:[%s1 + $0x48] sm:$0xf]
  %v504 = vld [vmem:[%s1 + $0x4c] sm:$0xf]
  %v505 = vld [vmem:[%s1 + $0x50] sm:$0xf]
  %v506 = vld [vmem:[%s1 + $0x54] sm:$0xf]
  %v507 = vld [vmem:[%s1 + $0x58] sm:$0xf]
  %v508 = vld [vmem:[%s1 + $0x5c] sm:$0xf]
  %v509 = vld [vmem:[%s1 + $0x60] sm:$0xf]
  %v510 = vld [vmem:[%s1 + $0x64] sm:$0xf]
  %v511 = vld [vmem:[%s1 + $0x68] sm:$0xf]
  %v512 = vld [vmem:[%s1 + $0x6c] sm:$0xf]
  %v513 = vld [vmem:[%s1 + $0x70] sm:$0xf]
  %v514 = vld [vmem:[%s1 + $0x74] sm:$0xf]
  %v515 = vld [vmem:[%s1 + $0x78] sm:$0xf]
  %v516 = vld [vmem:[%s1 + $0x7c] sm:$0xf]
  %v517 = vld [vmem:[%s1 + $0x80] sm:$0xf]
  %v518 = vld [vmem:[%s1 + $0x84] sm:$0xf]
  %v519 = vld [vmem:[%s1 + $0x88] sm:$0xf]
  %v520 = vld [vmem:[%s1 + $0x8c] sm:$0xf]
  %v521 = vld [vmem:[%s1 + $0x90] sm:$0xf]
  %v522 = vld [vmem:[%s1 + $0x94] sm:$0xf]
  %v523 = vld [vmem:[%s1 + $0x98] sm:$0xf]
  %v524 = vld [vmem:[%s1 + $0x9c] sm:$0xf]
  %v525 = vld [vmem:[%s1 + $0xa0] sm:$0xf]
  %v526 = vld [vmem:[%s1 + $0xa4] sm:$0xf]
  %v527 = vld [vmem:[%s1 + $0xa8] sm:$0xf]
  %v528 = vld [vmem:[%s1 + $0xac] sm:$0xf]
  %v529 = vld [vmem:[%s1 + $0xb0] sm:$0xf]
  %v530 = vld [vmem:[%s1 + $0xb4] sm:$0xf]
  %v531 = vld [vmem:[%s1 + $0xb8] sm:$0xf]
  %v532 = vld [vmem:[%s1 + $0xbc] sm:$0xf]
  %v533 = vld [vmem:[%s1 + $0xc0] sm:$0xf]
  %v534 = vld [vmem:[%s1 + $0xc4] sm:$0xf]
  %v535 = vld [vmem:[%s1 + $0xc8] sm:$0xf]
  %v536 = vld [vmem:[%s1 + $0xcc] sm:$0xf]
  %v537 = vld [vmem:[%s1 + $0xd0] sm:$0xf]
  %v538 = vld [vmem:[%s1 + $0xd4] sm:$0xf]
  %v539 = vld [vmem:[%s1 + $0xd8] sm:$0xf]
  %v540 = vld [vmem:[%s1 + $0xdc] sm:$0xf]
  %v541 = vld [vmem:[%s1 + $0xe0] sm:$0xf]
  %v542 = vld [vmem:[%s1 + $0xe4] sm:$0xf]
  %v543 = vld [vmem:[%s1 + $0xe8] sm:$0xf]
  %v544 = vld [vmem:[%s1 + $0xec] sm:$0xf]
  %v545 = vld [vmem:[%s1 + $0xf0] sm:$0xf]
  %v546 = vld [vmem:[%s1 + $0xf4] sm:$0xf]
  %v547 = vld [vmem:[%s1 + $0xf8] sm:$0xf]
  %v548 = vld [vmem:[%s1 + $0xfc] sm:$0xf]
  %v549 = vld [vmem:[%s1 + $0x100] sm:$0xf]
  %v550 = vld [vmem:[%s1 + $0x104] sm:$0xf]
  %v551 = vld [vmem:[%s1 + $0x108] sm:$0xf]
  %v552 = vld [vmem:[%s1 + $0x10c] sm:$0xf]
  %v553 = vld [vmem:[%s1 + $0x110] sm:$0xf]
  %v554 = vld [vmem:[%s1 + $0x114] sm:$0xf]
  %v555 = vld [vmem:[%s1 + $0x118] sm:$0xf]
  %v556 = vld [vmem:[%s1 + $0x11c] sm:$0xf]
  %v557 = vld [vmem:[%s2] sm:$0x1]
  %v559 = vlaneseq
  %v560 = vshrl.u32 %v559, 7
  %v561 = vsub.s32 0, %v560
  %v562 = vrot.slane %v557, %v561
  %v636 = vunpack.c.l.b16 %v485
  %v637 = vunpack.c.l.b16 %v486
  %v638 = vunpack.c.l.b16 %v487
  %v639 = vunpack.c.l.b16 %v488
  %v640 = vunpack.c.l.b16 %v489
  %v641 = vunpack.c.l.b16 %v490
  %v642 = vunpack.c.l.b16 %v491
  %v643 = vunpack.c.l.b16 %v492
  %v644 = vunpack.c.l.b16 %v493
  %v645 = vunpack.c.l.b16 %v494
  %v646 = vunpack.c.l.b16 %v495
  %v647 = vunpack.c.l.b16 %v496
  %v648 = vunpack.c.l.b16 %v497
  %v649 = vunpack.c.l.b16 %v498
  %v650 = vunpack.c.l.b16 %v499
  %v651 = vunpack.c.l.b16 %v500
  %v652 = vunpack.c.l.b16 %v501
  %v653 = vunpack.c.l.b16 %v502
  %v654 = vunpack.c.l.b16 %v503
  %v655 = vunpack.c.l.b16 %v504
  %v656 = vunpack.c.l.b16 %v505
  %v657 = vunpack.c.l.b16 %v506
  %v658 = vunpack.c.l.b16 %v507
  %v659 = vunpack.c.l.b16 %v508
  %v660 = vunpack.c.l.b16 %v509
  %v661 = vunpack.c.l.b16 %v510
  %v662 = vunpack.c.l.b16 %v511
  %v663 = vunpack.c.l.b16 %v512
  %v664 = vunpack.c.l.b16 %v513
  %v665 = vunpack.c.l.b16 %v514
  %v666 = vunpack.c.l.b16 %v515
  %v667 = vunpack.c.l.b16 %v516
  %v668 = vunpack.c.l.b16 %v517
  %v669 = vunpack.c.l.b16 %v518
  %v670 = vunpack.c.l.b16 %v519
  %v671 = vunpack.c.l.b16 %v520
  %v672 = vunpack.c.l.b16 %v521
  %v673 = vunpack.c.l.b16 %v522
  %v674 = vunpack.c.l.b16 %v523
  %v675 = vunpack.c.l.b16 %v524
  %v676 = vunpack.c.l.b16 %v525
  %v677 = vunpack.c.l.b16 %v526
  %v678 = vunpack.c.l.b16 %v527
  %v679 = vunpack.c.l.b16 %v528
  %v680 = vunpack.c.l.b16 %v529
  %v681 = vunpack.c.l.b16 %v530
  %v682 = vunpack.c.l.b16 %v531
  %v683 = vunpack.c.l.b16 %v532
  %v684 = vunpack.c.l.b16 %v533
  %v685 = vunpack.c.l.b16 %v534
  %v686 = vunpack.c.l.b16 %v535
  %v687 = vunpack.c.l.b16 %v536
  %v688 = vunpack.c.l.b16 %v537
  %v689 = vunpack.c.l.b16 %v538
  %v690 = vunpack.c.l.b16 %v539
  %v691 = vunpack.c.l.b16 %v540
  %v692 = vunpack.c.l.b16 %v541
  %v693 = vunpack.c.l.b16 %v542
  %v694 = vunpack.c.l.b16 %v543
  %v695 = vunpack.c.l.b16 %v544
  %v696 = vunpack.c.l.b16 %v545
  %v697 = vunpack.c.l.b16 %v546
  %v698 = vunpack.c.l.b16 %v547
  %v699 = vunpack.c.l.b16 %v548
  %v700 = vunpack.c.l.b16 %v549
  %v701 = vunpack.c.l.b16 %v550
  %v702 = vunpack.c.l.b16 %v551
  %v703 = vunpack.c.l.b16 %v552
  %v704 = vunpack.c.l.b16 %v553
  %v705 = vunpack.c.l.b16 %v554
  %v706 = vunpack.c.l.b16 %v555
  %v707 = vunpack.c.l.b16 %v556
  %v708 = vpack.c.b16 %v637, %v636
  %v709 = vpack.c.b16 %v639, %v638
  %v710 = vpack.c.b16 %v641, %v640
  %v711 = vpack.c.b16 %v643, %v642
  %v712 = vpack.c.b16 %v645, %v644
  %v713 = vpack.c.b16 %v647, %v646
  %v714 = vpack.c.b16 %v649, %v648
  %v715 = vpack.c.b16 %v651, %v650
  %v716 = vpack.c.b16 %v653, %v652
  %v717 = vpack.c.b16 %v655, %v654
  %v718 = vpack.c.b16 %v657, %v656
  %v719 = vpack.c.b16 %v659, %v658
  %v720 = vpack.c.b16 %v661, %v660
  %v721 = vpack.c.b16 %v663, %v662
  %v722 = vpack.c.b16 %v665, %v664
  %v723 = vpack.c.b16 %v667, %v666
  %v724 = vpack.c.b16 %v669, %v668
  %v725 = vpack.c.b16 %v671, %v670
  %v726 = vpack.c.b16 %v673, %v672
  %v727 = vpack.c.b16 %v675, %v674
  %v728 = vpack.c.b16 %v677, %v676
  %v729 = vpack.c.b16 %v679, %v678
  %v730 = vpack.c.b16 %v681, %v680
  %v731 = vpack.c.b16 %v683, %v682
  %v732 = vpack.c.b16 %v685, %v684
  %v733 = vpack.c.b16 %v687, %v686
  %v734 = vpack.c.b16 %v689, %v688
  %v735 = vpack.c.b16 %v691, %v690
  %v736 = vpack.c.b16 %v693, %v692
  %v737 = vpack.c.b16 %v695, %v694
  %v738 = vpack.c.b16 %v697, %v696
  %v739 = vpack.c.b16 %v699, %v698
  %v740 = vpack.c.b16 %v701, %v700
  %v741 = vpack.c.b16 %v703, %v702
  %v742 = vpack.c.b16 %v705, %v704
  %v743 = vpack.c.b16 %v707, %v706
  %vm780 = vcmask 523264
  %v782 = vsel %vm780, %v449, 0
  %v785 = vsel %vm780, %v454, 0
  %v788 = vsel %vm780, %v459, 0
  %v791 = vsel %vm780, %v464, 0
  %v794 = vsel %vm780, %v469, 0
  %v797 = vsel %vm780, %v474, 0
  %v800 = vsel %vm780, %v479, 0
  %v803 = vsel %vm780, %v484, 0
  %805 = vmatprep.subr.bf16.mxu0 0
  %806 = vmatpush1.bf16.msra.mxu0 %v708
  %807 = vmatprep.subr.bf16.mxu0 0
  %808 = vmatpush1.bf16.msra.mxu0 %v709
  %809 = vmatprep.subr.bf16.mxu0 0
  %810 = vmatpush1.bf16.msra.mxu0 %v710
  %811 = vmatprep.subr.bf16.mxu0 0
  %812 = vmatpush1.bf16.msra.mxu0 %v711
  %813 = vmatprep.subr.bf16.mxu0 0
  %814 = vmatpush1.bf16.msra.mxu0 %v712
  %815 = vmatprep.subr.bf16.mxu0 0
  %816 = vmatpush1.bf16.msra.mxu0 %v713
  %817 = vmatprep.subr.bf16.mxu0 0
  %818 = vmatpush1.bf16.msra.mxu0 %v714
  %819 = vmatprep.subr.bf16.mxu0 0
  %820 = vmatpush1.bf16.msra.mxu0 %v715
  %821 = vmatprep.subr.bf16.mxu0 0
  %822 = vmatpush1.bf16.msra.mxu0 %v716
  %823 = vmatprep.subr.bf16.mxu0 0
  %824 = vmatpush1.bf16.msra.mxu0 %v717
  %825 = vmatprep.subr.bf16.mxu0 0
  %826 = vmatpush1.bf16.msra.mxu0 %v718
  %827 = vmatprep.subr.bf16.mxu0 0
  %828 = vmatpush1.bf16.msra.mxu0 %v719
  %829 = vmatprep.subr.bf16.mxu0 0
  %830 = vmatpush1.bf16.msra.mxu0 %v720
  %831 = vmatprep.subr.bf16.mxu0 0
  %832 = vmatpush1.bf16.msra.mxu0 %v721
  %833 = vmatprep.subr.bf16.mxu0 0
  %834 = vmatpush1.bf16.msra.mxu0 %v722
  %835 = vmatprep.subr.bf16.mxu0 0
  %836 = vmatpush1.bf16.msra.mxu0 %v723
  %837 = vmatprep.mubr.bf16.mxu0 %v446
  %838 = vmatmul.mubr.bf16.gmra.mrb[0].mxu0 %v445
  %v839 = vpop.f32.mrb[0].mxu0
  %v840 = vadd.f32 %v562, %v839
  %v841 = vpop.f32.mrb[0].mxu0
  %v842 = vpop.f32.mrb[0].mxu0
  %v843 = vadd.f32 %v562, %v842
  %v844 = vpop.f32.mrb[0].mxu0
  %845 = vmatprep.mubr.bf16.mxu0 %v451
  %846 = vmatmul.mubr.bf16.gmra.mrb[0].mxu0 %v450
  %v847 = vpop.f32.mrb[0].mxu0
  %v848 = vadd.f32 %v562, %v847
  %v849 = vpop.f32.mrb[0].mxu0
  %v850 = vpop.f32.mrb[0].mxu0
  %v851 = vadd.f32 %v562, %v850
  %v852 = vpop.f32.mrb[0].mxu0
  %853 = vmatprep.mubr.bf16.mxu0 %v456
  %854 = vmatmul.mubr.bf16.gmra.mrb[0].mxu0 %v455
  %v855 = vpop.f32.mrb[0].mxu0
  %v856 = vadd.f32 %v562, %v855
  %v857 = vpop.f32.mrb[0].mxu0
  %v858 = vpop.f32.mrb[0].mxu0
  %v859 = vadd.f32 %v562, %v858
  %v860 = vpop.f32.mrb[0].mxu0
  %861 = vmatprep.mubr.bf16.mxu0 %v461
  %862 = vmatmul.mubr.bf16.gmra.mrb[0].mxu0 %v460
  %v863 = vpop.f32.mrb[0].mxu0
  %v864 = vadd.f32 %v562, %v863
  %v865 = vpop.f32.mrb[0].mxu0
  %v866 = vpop.f32.mrb[0].mxu0
  %v867 = vadd.f32 %v562, %v866
  %v868 = vpop.f32.mrb[0].mxu0
  %869 = vmatprep.mubr.bf16.mxu0 %v466
  %870 = vmatmul.mubr.bf16.gmra.mrb[0].mxu0 %v465
  %v871 = vpop.f32.mrb[0].mxu0
  %v872 = vadd.f32 %v562, %v871
  %v873 = vpop.f32.mrb[0].mxu0
  %v874 = vpop.f32.mrb[0].mxu0
  %v875 = vadd.f32 %v562, %v874
  %v876 = vpop.f32.mrb[0].mxu0
  %877 = vmatprep.mubr.bf16.mxu0 %v471
  %878 = vmatmul.mubr.bf16.gmra.mrb[0].mxu0 %v470
  %v879 = vpop.f32.mrb[0].mxu0
  %v880 = vadd.f32 %v562, %v879
  %v881 = vpop.f32.mrb[0].mxu0
  %v882 = vpop.f32.mrb[0].mxu0
  %v883 = vadd.f32 %v562, %v882
  %v884 = vpop.f32.mrb[0].mxu0
  %885 = vmatprep.mubr.bf16.mxu0 %v476
  %886 = vmatmul.mubr.bf16.gmra.mrb[0].mxu0 %v475
  %v887 = vpop.f32.mrb[0].mxu0
  %v888 = vadd.f32 %v562, %v887
  %v889 = vpop.f32.mrb[0].mxu0
  %v890 = vpop.f32.mrb[0].mxu0
  %v891 = vadd.f32 %v562, %v890
  %v892 = vpop.f32.mrb[0].mxu0
  %893 = vmatprep.mubr.bf16.mxu0 %v481
  %894 = vmatmul.mubr.bf16.gmra.mrb[0].mxu0 %v480
  %v895 = vpop.f32.mrb[0].mxu0
  %v896 = vadd.f32 %v562, %v895
  %v897 = vpop.f32.mrb[0].mxu0
  %v898 = vpop.f32.mrb[0].mxu0
  %v899 = vadd.f32 %v562, %v898
  %v900 = vpop.f32.mrb[0].mxu0
  %901 = vdwg.mxu0
  %902 = vmatprep.subr.bf16.mxu0 0
  %903 = vmatpush1.bf16.msra.mxu0 %v724
  %904 = vmatprep.subr.bf16.mxu0 0
  %905 = vmatpush1.bf16.msra.mxu0 %v725
  %906 = vmatprep.subr.bf16.mxu0 0
  %907 = vmatpush1.bf16.msra.mxu0 %v726
  %908 = vmatprep.subr.bf16.mxu0 0
  %909 = vmatpush1.bf16.msra.mxu0 %v727
  %910 = vmatprep.subr.bf16.mxu0 0
  %911 = vmatpush1.bf16.msra.mxu0 %v728
  %912 = vmatprep.subr.bf16.mxu0 0
  %913 = vmatpush1.bf16.msra.mxu0 %v729
  %914 = vmatprep.subr.bf16.mxu0 0
  %915 = vmatpush1.bf16.msra.mxu0 %v730
  %916 = vmatprep.subr.bf16.mxu0 0
  %917 = vmatpush1.bf16.msra.mxu0 %v731
  %918 = vmatprep.subr.bf16.mxu0 0
  %919 = vmatpush1.bf16.msra.mxu0 %v732
  %920 = vmatprep.subr.bf16.mxu0 0
  %921 = vmatpush1.bf16.msra.mxu0 %v733
  %922 = vmatprep.subr.bf16.mxu0 0
  %923 = vmatpush1.bf16.msra.mxu0 %v734
  %924 = vmatprep.subr.bf16.mxu0 0
  %925 = vmatpush1.bf16.msra.mxu0 %v735
  %926 = vmatprep.subr.bf16.mxu0 0
  %927 = vmatpush1.bf16.msra.mxu0 %v736
  %928 = vmatprep.subr.bf16.mxu0 0
  %929 = vmatpush1.bf16.msra.mxu0 %v737
  %930 = vmatprep.subr.bf16.mxu0 0
  %931 = vmatpush1.bf16.msra.mxu0 %v738
  %932 = vmatprep.subr.bf16.mxu0 0
  %933 = vmatpush1.bf16.msra.mxu0 %v739
  %934 = vmatprep.mubr.bf16.mxu0 %v448
  %935 = vmatmul.mubr.bf16.gmra.mrb[0].mxu0 %v447
  %v936 = vpop.f32.mrb[0].mxu0
  %v937 = vadd.f32 %v840, %v936
  %v938 = vpop.f32.mrb[0].mxu0
  %v939 = vpop.f32.mrb[0].mxu0
  %v940 = vadd.f32 %v843, %v939
  %v941 = vpop.f32.mrb[0].mxu0
  %942 = vmatprep.mubr.bf16.mxu0 %v453
  %943 = vmatmul.mubr.bf16.gmra.mrb[0].mxu0 %v452
  %v944 = vpop.f32.mrb[0].mxu0
  %v945 = vadd.f32 %v848, %v944
  %v946 = vpop.f32.mrb[0].mxu0
  %v947 = vpop.f32.mrb[0].mxu0
  %v948 = vadd.f32 %v851, %v947
  %v949 = vpop.f32.mrb[0].mxu0
  %950 = vmatprep.mubr.bf16.mxu0 %v458
  %951 = vmatmul.mubr.bf16.gmra.mrb[0].mxu0 %v457
  %v952 = vpop.f32.mrb[0].mxu0
  %v953 = vadd.f32 %v856, %v952
  %v954 = vpop.f32.mrb[0].mxu0
  %v955 = vpop.f32.mrb[0].mxu0
  %v956 = vadd.f32 %v859, %v955
  %v957 = vpop.f32.mrb[0].mxu0
  %958 = vmatprep.mubr.bf16.mxu0 %v463
  %959 = vmatmul.mubr.bf16.gmra.mrb[0].mxu0 %v462
  %v960 = vpop.f32.mrb[0].mxu0
  %v961 = vadd.f32 %v864, %v960
  %v962 = vpop.f32.mrb[0].mxu0
  %v963 = vpop.f32.mrb[0].mxu0
  %v964 = vadd.f32 %v867, %v963
  %v965 = vpop.f32.mrb[0].mxu0
  %966 = vmatprep.mubr.bf16.mxu0 %v468
  %967 = vmatmul.mubr.bf16.gmra.mrb[0].mxu0 %v467
  %v968 = vpop.f32.mrb[0].mxu0
  %v969 = vadd.f32 %v872, %v968
  %v970 = vpop.f32.mrb[0].mxu0
  %v971 = vpop.f32.mrb[0].mxu0
  %v972 = vadd.f32 %v875, %v971
  %v973 = vpop.f32.mrb[0].mxu0
  %974 = vmatprep.mubr.bf16.mxu0 %v473
  %975 = vmatmul.mubr.bf16.gmra.mrb[0].mxu0 %v472
  %v976 = vpop.f32.mrb[0].mxu0
  %v977 = vadd.f32 %v880, %v976
  %v978 = vpop.f32.mrb[0].mxu0
  %v979 = vpop.f32.mrb[0].mxu0
  %v980 = vadd.f32 %v883, %v979
  %v981 = vpop.f32.mrb[0].mxu0
  %982 = vmatprep.mubr.bf16.mxu0 %v478
  %983 = vmatmul.mubr.bf16.gmra.mrb[0].mxu0 %v477
  %v984 = vpop.f32.mrb[0].mxu0
  %v985 = vadd.f32 %v888, %v984
  %v986 = vpop.f32.mrb[0].mxu0
  %v987 = vpop.f32.mrb[0].mxu0
  %v988 = vadd.f32 %v891, %v987
  %v989 = vpop.f32.mrb[0].mxu0
  %990 = vmatprep.mubr.bf16.mxu0 %v483
  %991 = vmatmul.mubr.bf16.gmra.mrb[0].mxu0 %v482
  %v992 = vpop.f32.mrb[0].mxu0
  %v993 = vadd.f32 %v896, %v992
  %v994 = vpop.f32.mrb[0].mxu0
  %v995 = vpop.f32.mrb[0].mxu0
  %v996 = vadd.f32 %v899, %v995
  %v997 = vpop.f32.mrb[0].mxu0
  %998 = vdwg.mxu0
  %999 = vmatprep.subr.bf16.mxu0 0
  %1000 = vmatpush1.bf16.msra.mxu0 %v740
  %1001 = vmatprep.subr.bf16.mxu0 0
  %1002 = vmatpush1.bf16.msra.mxu0 %v741
  %1003 = vmatprep.subr.bf16.mxu0 0
  %1004 = vmatpush1.bf16.msra.mxu0 %v742
  %1005 = vmatprep.subr.bf16.mxu0 0
  %1006 = vmatpush1.bf16.msra.mxu0 %v743
  %1007 = vmatprep.subr.bf16.mxu0 0
  %1008 = vmatpush1.bf16.msra.mxu0 0
  %1009 = vmatprep.subr.bf16.mxu0 0
  %1010 = vmatpush1.bf16.msra.mxu0 0
  %1011 = vmatprep.subr.bf16.mxu0 0
  %1012 = vmatpush1.bf16.msra.mxu0 0
  %1013 = vmatprep.subr.bf16.mxu0 0
  %1014 = vmatpush1.bf16.msra.mxu0 0
  %1015 = vmatprep.subr.bf16.mxu0 0
  %1016 = vmatpush1.bf16.msra.mxu0 0
  %1017 = vmatprep.subr.bf16.mxu0 0
  %1018 = vmatpush1.bf16.msra.mxu0 0
  %1019 = vmatprep.subr.bf16.mxu0 0
  %1020 = vmatpush1.bf16.msra.mxu0 0
  %1021 = vmatprep.subr.bf16.mxu0 0
  %1022 = vmatpush1.bf16.msra.mxu0 0
  %1023 = vmatprep.subr.bf16.mxu0 0
  %1024 = vmatpush1.bf16.msra.mxu0 0
  %1025 = vmatprep.subr.bf16.mxu0 0
  %1026 = vmatpush1.bf16.msra.mxu0 0
  %1027 = vmatprep.subr.bf16.mxu0 0
  %1028 = vmatpush1.bf16.msra.mxu0 0
  %1029 = vmatprep.subr.bf16.mxu0 0
  %1030 = vmatpush1.bf16.msra.mxu0 0
  %1031 = vmatprep.mubr.bf16.mxu0 0
  %1032 = vmatmul.mubr.bf16.gmra.mrb[0].mxu0 %v782
  %v1033 = vpop.f32.mrb[0].mxu0
  %v1034 = vadd.f32 %v937, %v1033
  %v1035 = vpop.f32.mrb[0].mxu0
  %v1036 = vpop.f32.mrb[0].mxu0
  %v1037 = vadd.f32 %v940, %v1036
  %v1038 = vpop.f32.mrb[0].mxu0
  %1039 = vmatprep.mubr.bf16.mxu0 0
  %1040 = vmatmul.mubr.bf16.gmra.mrb[0].mxu0 %v785
  %v1041 = vpop.f32.mrb[0].mxu0
  %v1042 = vadd.f32 %v945, %v1041
  %v1043 = vpop.f32.mrb[0].mxu0
  %v1044 = vpop.f32.mrb[0].mxu0
  %v1045 = vadd.f32 %v948, %v1044
  %v1046 = vpop.f32.mrb[0].mxu0
  %1047 = vmatprep.mubr.bf16.mxu0 0
  %1048 = vmatmul.mubr.bf16.gmra.mrb[0].mxu0 %v788
  %v1049 = vpop.f32.mrb[0].mxu0
  %v1050 = vadd.f32 %v953, %v1049
  %v1051 = vpop.f32.mrb[0].mxu0
  %v1052 = vpop.f32.mrb[0].mxu0
  %v1053 = vadd.f32 %v956, %v1052
  %v1054 = vpop.f32.mrb[0].mxu0
  %1055 = vmatprep.mubr.bf16.mxu0 0
  %1056 = vmatmul.mubr.bf16.gmra.mrb[0].mxu0 %v791
  %v1057 = vpop.f32.mrb[0].mxu0
  %v1058 = vadd.f32 %v961, %v1057
  %v1059 = vpop.f32.mrb[0].mxu0
  %v1060 = vpop.f32.mrb[0].mxu0
  %v1061 = vadd.f32 %v964, %v1060
  %v1062 = vpop.f32.mrb[0].mxu0
  %1063 = vmatprep.mubr.bf16.mxu0 0
  %1064 = vmatmul.mubr.bf16.gmra.mrb[0].mxu0 %v794
  %v1065 = vpop.f32.mrb[0].mxu0
  %v1066 = vadd.f32 %v969, %v1065
  %v1067 = vpop.f32.mrb[0].mxu0
  %v1068 = vpop.f32.mrb[0].mxu0
  %v1069 = vadd.f32 %v972, %v1068
  %v1070 = vpop.f32.mrb[0].mxu0
  %1071 = vmatprep.mubr.bf16.mxu0 0
  %1072 = vmatmul.mubr.bf16.gmra.mrb[0].mxu0 %v797
  %v1073 = vpop.f32.mrb[0].mxu0
  %v1074 = vadd.f32 %v977, %v1073
  %v1075 = vpop.f32.mrb[0].mxu0
  %v1076 = vpop.f32.mrb[0].mxu0
  %v1077 = vadd.f32 %v980, %v1076
  %v1078 = vpop.f32.mrb[0].mxu0
  %1079 = vmatprep.mubr.bf16.mxu0 0
  %1080 = vmatmul.mubr.bf16.gmra.mrb[0].mxu0 %v800
  %v1081 = vpop.f32.mrb[0].mxu0
  %v1082 = vadd.f32 %v985, %v1081
  %v1083 = vpop.f32.mrb[0].mxu0
  %v1084 = vpop.f32.mrb[0].mxu0
  %v1085 = vadd.f32 %v988, %v1084
  %v1086 = vpop.f32.mrb[0].mxu0
  %1087 = vmatprep.mubr.bf16.mxu0 0
  %1088 = vmatmul.mubr.bf16.gmra.mrb[0].mxu0 %v803
  %v1089 = vpop.f32.mrb[0].mxu0
  %v1090 = vadd.f32 %v993, %v1089
  %v1091 = vpop.f32.mrb[0].mxu0
  %v1092 = vpop.f32.mrb[0].mxu0
  %v1093 = vadd.f32 %v996, %v1092
  %v1094 = vpop.f32.mrb[0].mxu0
  %1095 = vdwg.mxu0
  %v1096 = vpack.c.bf16 %v1037, %v1034
  %v1097 = vpack.c.bf16 %v1045, %v1042
  %v1098 = vpack.c.bf16 %v1053, %v1050
  %v1099 = vpack.c.bf16 %v1061, %v1058
  %v1100 = vpack.c.bf16 %v1069, %v1066
  %v1101 = vpack.c.bf16 %v1077, %v1074
  %v1102 = vpack.c.bf16 %v1085, %v1082
  %v1103 = vpack.c.bf16 %v1093, %v1090
  %v1112 = vunpack.c.l.b16 %v1096
  %v1113 = vunpack.c.h.b16 %v1096
  %v1114 = vunpack.c.l.b16 %v1097
  %v1115 = vunpack.c.h.b16 %v1097
  %v1116 = vunpack.c.l.b16 %v1098
  %v1117 = vunpack.c.h.b16 %v1098
  %v1118 = vunpack.c.l.b16 %v1099
  %v1119 = vunpack.c.h.b16 %v1099
  %v1120 = vunpack.c.l.b16 %v1100
  %v1121 = vunpack.c.h.b16 %v1100
  %v1122 = vunpack.c.l.b16 %v1101
  %v1123 = vunpack.c.h.b16 %v1101
  %v1124 = vunpack.c.l.b16 %v1102
  %v1125 = vunpack.c.h.b16 %v1102
  %v1126 = vunpack.c.l.b16 %v1103
  %v1127 = vunpack.c.h.b16 %v1103
  %v1128 = vpack.c.b16 %v1112, %v1112
  %v1129 = vpack.c.b16 %v1113, %v1113
  %v1130 = vpack.c.b16 %v1114, %v1114
  %v1131 = vpack.c.b16 %v1115, %v1115
  %v1132 = vpack.c.b16 %v1116, %v1116
  %v1133 = vpack.c.b16 %v1117, %v1117
  %v1134 = vpack.c.b16 %v1118, %v1118
  %v1135 = vpack.c.b16 %v1119, %v1119
  %v1136 = vpack.c.b16 %v1120, %v1120
  %v1137 = vpack.c.b16 %v1121, %v1121
  %v1138 = vpack.c.b16 %v1122, %v1122
  %v1139 = vpack.c.b16 %v1123, %v1123
  %v1140 = vpack.c.b16 %v1124, %v1124
  %v1141 = vpack.c.b16 %v1125, %v1125
  %v1142 = vpack.c.b16 %v1126, %v1126
  %v1143 = vpack.c.b16 %v1127, %v1127
  %1160 = vst [vmem:[%s5] sm:$0xf] %v1128
  %1161 = vst [vmem:[%s5 + $0x4] sm:$0xf] %v1129
  %1162 = vst [vmem:[%s5 + $0x8] sm:$0xf] %v1130
  %1163 = vst [vmem:[%s5 + $0xc] sm:$0xf] %v1131
  %1164 = vst [vmem:[%s5 + $0x10] sm:$0xf] %v1132
  %1165 = vst [vmem:[%s5 + $0x14] sm:$0xf] %v1133
  %1166 = vst [vmem:[%s5 + $0x18] sm:$0xf] %v1134
  %1167 = vst [vmem:[%s5 + $0x1c] sm:$0xf] %v1135
  %1168 = vst [vmem:[%s5 + $0x20] sm:$0xf] %v1136
  %1169 = vst [vmem:[%s5 + $0x24] sm:$0xf] %v1137
  %1170 = vst [vmem:[%s5 + $0x28] sm:$0xf] %v1138
  %1171 = vst [vmem:[%s5 + $0x2c] sm:$0xf] %v1139
  %1172 = vst [vmem:[%s5 + $0x30] sm:$0xf] %v1140
  %1173 = vst [vmem:[%s5 + $0x34] sm:$0xf] %v1141
  %1174 = vst [vmem:[%s5 + $0x38] sm:$0xf] %v1142
  %1175 = vst [vmem:[%s5 + $0x3c] sm:$0xf] %v1143
  %v1176 = vlaneseq
  %v1177 = vshrl.u32 %v1176, 7
  %v1178 = vadd.s32 %v1177, 8
  %v1179 = vadd.s32 %v1177, 16
  %v1180 = vadd.s32 %v1177, 24
  %v1181 = vadd.s32 %v1177, 32
  %v1182 = vadd.s32 %v1177, 40
  %v1183 = vadd.s32 %v1177, 48
  %v1184 = vadd.s32 %v1177, 56
  %v1185 = vadd.s32 %v1177, 64
  %v1186 = vadd.s32 %v1177, 72
  %v1187 = vadd.s32 %v1177, 80
  %v1188 = vadd.s32 %v1177, 88
  %v1189 = vadd.s32 %v1177, 96
  %v1190 = vadd.s32 %v1177, 104
  %v1191 = vadd.s32 %v1177, 112
  %v1192 = vadd.s32 %v1177, 120
  %s1193 = smul.u32 0, 128
  %s1194 = ssub.s32 32, %s1193
  %v1195 = vstv %s1194
  %vm1196 = vcmp.lt.s32.totalorder %v1177, %v1195
  %vm1197 = vcmp.lt.s32.totalorder %v1178, %v1195
  %vm1198 = vcmp.lt.s32.totalorder %v1179, %v1195
  %vm1199 = vcmp.lt.s32.totalorder %v1180, %v1195
  %vm1200 = vcmp.lt.s32.totalorder %v1181, %v1195
  %vm1201 = vcmp.lt.s32.totalorder %v1182, %v1195
  %vm1202 = vcmp.lt.s32.totalorder %v1183, %v1195
  %vm1203 = vcmp.lt.s32.totalorder %v1184, %v1195
  %vm1204 = vcmp.lt.s32.totalorder %v1185, %v1195
  %vm1205 = vcmp.lt.s32.totalorder %v1186, %v1195
  %vm1206 = vcmp.lt.s32.totalorder %v1187, %v1195
  %vm1207 = vcmp.lt.s32.totalorder %v1188, %v1195
  %vm1208 = vcmp.lt.s32.totalorder %v1189, %v1195
  %vm1209 = vcmp.lt.s32.totalorder %v1190, %v1195
  %vm1210 = vcmp.lt.s32.totalorder %v1191, %v1195
  %vm1211 = vcmp.lt.s32.totalorder %v1192, %v1195
  %v1212 = vsel %vm1196, 1, 0
  %v1213 = vsel %vm1197, 1, 0
  %v1214 = vsel %vm1198, 1, 0
  %v1215 = vsel %vm1199, 1, 0
  %v1216 = vsel %vm1200, 1, 0
  %v1217 = vsel %vm1201, 1, 0
  %v1218 = vsel %vm1202, 1, 0
  %v1219 = vsel %vm1203, 1, 0
  %v1220 = vsel %vm1204, 1, 0
  %v1221 = vsel %vm1205, 1, 0
  %v1222 = vsel %vm1206, 1, 0
  %v1223 = vsel %vm1207, 1, 0
  %v1224 = vsel %vm1208, 1, 0
  %v1225 = vsel %vm1209, 1, 0
  %v1226 = vsel %vm1210, 1, 0
  %v1227 = vsel %vm1211, 1, 0
  %vm1228 = vcmp.eq.s32.totalorder %v1212, 1
  %vm1229 = vcmp.eq.s32.totalorder %v1213, 1
  %vm1230 = vcmp.eq.s32.totalorder %v1214, 1
  %vm1231 = vcmp.eq.s32.totalorder %v1215, 1
  %vm1232 = vcmp.eq.s32.totalorder %v1216, 1
  %vm1233 = vcmp.eq.s32.totalorder %v1217, 1
  %vm1234 = vcmp.eq.s32.totalorder %v1218, 1
  %vm1235 = vcmp.eq.s32.totalorder %v1219, 1
  %vm1236 = vcmp.eq.s32.totalorder %v1220, 1
  %vm1237 = vcmp.eq.s32.totalorder %v1221, 1
  %vm1238 = vcmp.eq.s32.totalorder %v1222, 1
  %vm1239 = vcmp.eq.s32.totalorder %v1223, 1
  %vm1240 = vcmp.eq.s32.totalorder %v1224, 1
  %vm1241 = vcmp.eq.s32.totalorder %v1225, 1
  %vm1242 = vcmp.eq.s32.totalorder %v1226, 1
  %vm1243 = vcmp.eq.s32.totalorder %v1227, 1
  %v1244 = vsel %vm1228, %v1034, 0.0
  %v1245 = vsel %vm1229, %v1037, 0.0
  %v1246 = vsel %vm1230, %v1042, 0.0
  %v1247 = vsel %vm1231, %v1045, 0.0
  %v1248 = vsel %vm1232, %v1050, 0.0
  %v1249 = vsel %vm1233, %v1053, 0.0
  %v1250 = vsel %vm1234, %v1058, 0.0
  %v1251 = vsel %vm1235, %v1061, 0.0
  %v1252 = vsel %vm1236, %v1066, 0.0
  %v1253 = vsel %vm1237, %v1069, 0.0
  %v1254 = vsel %vm1238, %v1074, 0.0
  %v1255 = vsel %vm1239, %v1077, 0.0
  %v1256 = vsel %vm1240, %v1082, 0.0
  %v1257 = vsel %vm1241, %v1085, 0.0
  %v1258 = vsel %vm1242, %v1090, 0.0
  %v1259 = vsel %vm1243, %v1093, 0.0
  %v1260 = vadd.f32 %v1244, %v1245
  %v1261 = vadd.f32 %v1260, %v1246
  %v1262 = vadd.f32 %v1261, %v1247
  %v1263 = vadd.f32 %v1262, %v1248
  %v1264 = vadd.f32 %v1263, %v1249
  %v1265 = vadd.f32 %v1264, %v1250
  %v1266 = vadd.f32 %v1265, %v1251
  %v1267 = vadd.f32 %v1266, %v1252
  %v1268 = vadd.f32 %v1267, %v1253
  %v1269 = vadd.f32 %v1268, %v1254
  %v1270 = vadd.f32 %v1269, %v1255
  %v1271 = vadd.f32 %v1270, %v1256
  %v1272 = vadd.f32 %v1271, %v1257
  %v1273 = vadd.f32 %v1272, %v1258
  %v1274 = vadd.f32 %v1273, %v1259
  %v1275 = vrot.slane %v1274, 4
  %v1276 = vadd.f32 %v1274, %v1275
  %v1277 = vrot.slane %v1276, 2
  %v1278 = vadd.f32 %v1276, %v1277
  %v1279 = vrot.slane %v1278, 1
  %v1280 = vadd.f32 %v1278, %v1279
  %v1281 = vmul.f32 %v1244, %v1244
  %v1282 = vmul.f32 %v1245, %v1245
  %v1283 = vmul.f32 %v1246, %v1246
  %v1284 = vmul.f32 %v1247, %v1247
  %v1285 = vmul.f32 %v1248, %v1248
  %v1286 = vmul.f32 %v1249, %v1249
  %v1287 = vmul.f32 %v1250, %v1250
  %v1288 = vmul.f32 %v1251, %v1251
  %v1289 = vmul.f32 %v1252, %v1252
  %v1290 = vmul.f32 %v1253, %v1253
  %v1291 = vmul.f32 %v1254, %v1254
  %v1292 = vmul.f32 %v1255, %v1255
  %v1293 = vmul.f32 %v1256, %v1256
  %v1294 = vmul.f32 %v1257, %v1257
  %v1295 = vmul.f32 %v1258, %v1258
  %v1296 = vmul.f32 %v1259, %v1259
  %v1297 = vadd.f32 %v1281, %v1282
  %v1298 = vadd.f32 %v1297, %v1283
  %v1299 = vadd.f32 %v1298, %v1284
  %v1300 = vadd.f32 %v1299, %v1285
  %v1301 = vadd.f32 %v1300, %v1286
  %v1302 = vadd.f32 %v1301, %v1287
  %v1303 = vadd.f32 %v1302, %v1288
  %v1304 = vadd.f32 %v1303, %v1289
  %v1305 = vadd.f32 %v1304, %v1290
  %v1306 = vadd.f32 %v1305, %v1291
  %v1307 = vadd.f32 %v1306, %v1292
  %v1308 = vadd.f32 %v1307, %v1293
  %v1309 = vadd.f32 %v1308, %v1294
  %v1310 = vadd.f32 %v1309, %v1295
  %v1311 = vadd.f32 %v1310, %v1296
  %v1312 = vrot.slane %v1311, 4
  %v1313 = vadd.f32 %v1311, %v1312
  %v1314 = vrot.slane %v1313, 2
  %v1315 = vadd.f32 %v1313, %v1314
  %v1316 = vrot.slane %v1315, 1
  %v1317 = vadd.f32 %v1315, %v1316
  %vm1318 = vcmask 1040384
  %v1319 = vsel %vm1318, %v1280, %v1317
  %vm1320 = vcmask 1041408
  %v1321 = vsel %vm1320, %v1319, 0.0
  %1322 = vst [vmem:[%s6] sm:$0xff] %v1321
  // Predicated region
  $region22: #{unet_generator_forward.17} parent=0 // pred_check
    _
  $region23: #{unet_generator_forward.17} parent=0 // pred_check_branch
    %1324 = sbr.rel (0) target = $region25
  $region24: #{unet_generator_forward.17} parent=0 // pred_region
    _
  $region25: #{unet_generator_forward.17} parent=0 // pred_fallthru
    _
  // Predicated region
  $region26: #{unet_generator_forward.17} parent=0 // pred_check
    _
  $region27: #{unet_generator_forward.17} parent=0 // pred_check_branch
    %1326 = sbr.rel (0) target = $region29
  $region28: #{unet_generator_forward.17} parent=0 // pred_region
    _
  $region29: #{unet_generator_forward.17} parent=0 // pred_fallthru
    _
  // Predicated region
  $region30: #{unet_generator_forward.17} parent=0 // pred_check
    _
  $region31: #{unet_generator_forward.17} parent=0 // pred_check_branch
    %1328 = sbr.rel (0) target = $region33
  $region32: #{unet_generator_forward.17} parent=0 // pred_region
    _
  $region33: #{unet_generator_forward.17} parent=0 // pred_fallthru
    _
  // Predicated region
  $region34: #{unet_generator_forward.17} parent=0 // pred_check
    _
  $region35: #{unet_generator_forward.17} parent=0 // pred_check_branch
    %1330 = sbr.rel (0) target = $region37
  $region36: #{unet_generator_forward.17} parent=0 // pred_region
    _
  $region37: #{unet_generator_forward.17} parent=0 // pred_fallthru
    _

// kernel: tile.128
$region0: #{tile.128}
  #allocation0 [shape = 's32[1]{0}', space=sflag, size = 0x4, scoped, tag = 'scoped memory for tile.128']
  %s0 = inlined_call_operand.vmem [shape: f32[32], index: 0, kind: input, shape index: {}]
  %s1 = inlined_call_operand.vmem [shape: f32[9,32], index: 1, kind: output, shape index: {}]
  // Predicated region
  $region2: #{tile.128} parent=0 // pred_check
    _
  $region3: #{tile.128} parent=0 // pred_check_branch
    %3 = sbr.rel (0) target = $region5
  $region4: #{tile.128} parent=0 // pred_region
    _
  $region5: #{tile.128} parent=0 // pred_fallthru
    _
  %v4 = vld [vmem:[%s0] ss:$0 sm:$0xff]
  %5 = vst [vmem:[%s1] sm:$0xff] %v4
  %s6 = scalar_lea.vmem %s1, 8
  %7 = vst [vmem:[%s6] sm:$0xff] %v4

// kernel: unet_generator_forward.18
$region0: #{unet_generator_forward.18}
  #allocation0 [shape = 'u32[]', space=smem, size = 0x4, offset = 0x4, fixed_abs, tag = 'smem constant byte address 0x4 - core index']
  #allocation1 [shape = 'u32[144,128]{1,0:T(1,128)}', space=vmem, size = 0x12000, scoped, tag = 'internal scratch']
  %s0 = inlined_call_operand.vmem [shape: bf16[128,288], index: 0, kind: input, shape index: {}]
  %s1 = inlined_call_operand.vmem [shape: bf16[288,128], index: 1, kind: input, shape index: {}]
  %s2 = inlined_call_operand.vmem [shape: f32[1,128], index: 2, kind: input, shape index: {}]
  %s3 = inlined_call_operand.vmem [shape: f32[1,288], index: 3, kind: input, shape index: {}]
  %s4 = inlined_call_operand.vmem [shape: f32[1,288], index: 4, kind: input, shape index: {}]
  %s5 = inlined_call_operand.vmem [shape: bf16[128,128], index: 5, kind: output, shape index: {0}]
  %s6 = inlined_call_operand.vmem [shape: f32[1,8,128], index: 6, kind: output, shape index: {1}]
  %7 = xla_tuple %s5, %s6
  %s8 = sld [smem:[#allocation0]]
  $region38: #{unet_generator_forward.18} parent=0
    _
  %s10 = ssub.s32 1, %s8
  %s11 = scalar_select 0, %s10, %s8
  // Predicated region
  $region2: #{unet_generator_forward.18} parent=0 // pred_check
    _
  $region3: #{unet_generator_forward.18} parent=0 // pred_check_branch
    %13 = sbr.rel (0) target = $region5
  $region4: #{unet_generator_forward.18} parent=0 // pred_region
    _
  $region5: #{unet_generator_forward.18} parent=0 // pred_fallthru
    _
  // Predicated region
  $region6: #{unet_generator_forward.18} parent=0 // pred_check
    _
  $region7: #{unet_generator_forward.18} parent=0 // pred_check_branch
    %15 = sbr.rel (0) target = $region9
  $region8: #{unet_generator_forward.18} parent=0 // pred_region
    _
  $region9: #{unet_generator_forward.18} parent=0 // pred_fallthru
    _
  // Predicated region
  $region10: #{unet_generator_forward.18} parent=0 // pred_check
    _
  $region11: #{unet_generator_forward.18} parent=0 // pred_check_branch
    %17 = sbr.rel (0) target = $region13
  $region12: #{unet_generator_forward.18} parent=0 // pred_region
    _
  $region13: #{unet_generator_forward.18} parent=0 // pred_fallthru
    _
  // Predicated region
  $region14: #{unet_generator_forward.18} parent=0 // pred_check
    _
  $region15: #{unet_generator_forward.18} parent=0 // pred_check_branch
    %19 = sbr.rel (0) target = $region17
  $region16: #{unet_generator_forward.18} parent=0 // pred_region
    _
  $region17: #{unet_generator_forward.18} parent=0 // pred_fallthru
    _
  // Predicated region
  $region18: #{unet_generator_forward.18} parent=0 // pred_check
    _
  $region19: #{unet_generator_forward.18} parent=0 // pred_check_branch
    %21 = sbr.rel (0) target = $region21
  $region20: #{unet_generator_forward.18} parent=0 // pred_region
    _
  $region21: #{unet_generator_forward.18} parent=0 // pred_fallthru
    _
  %v23 = vld [vmem:[%s0] sm:$0xff]
  %v24 = vld [vmem:[%s0 + $0x8] sm:$0xf]
  %v25 = vld [vmem:[%s0 + $0xc] sm:$0xff]
  %v26 = vld [vmem:[%s0 + $0x14] sm:$0xf]
  %v27 = vld [vmem:[%s0 + $0x18] sm:$0xff]
  %v28 = vld [vmem:[%s0 + $0x20] sm:$0xf]
  %v29 = vld [vmem:[%s0 + $0x24] sm:$0xff]
  %v30 = vld [vmem:[%s0 + $0x2c] sm:$0xf]
  %v31 = vld [vmem:[%s0 + $0x30] sm:$0xff]
  %v32 = vld [vmem:[%s0 + $0x38] sm:$0xf]
  %v33 = vld [vmem:[%s0 + $0x3c] sm:$0xff]
  %v34 = vld [vmem:[%s0 + $0x44] sm:$0xf]
  %v35 = vld [vmem:[%s0 + $0x48] sm:$0xff]
  %v36 = vld [vmem:[%s0 + $0x50] sm:$0xf]
  %v37 = vld [vmem:[%s0 + $0x54] sm:$0xff]
  %v38 = vld [vmem:[%s0 + $0x5c] sm:$0xf]
  %v39 = vld [vmem:[%s0 + $0x60] sm:$0xff]
  %v40 = vld [vmem:[%s0 + $0x68] sm:$0xf]
  %v41 = vld [vmem:[%s0 + $0x6c] sm:$0xff]
  %v42 = vld [vmem:[%s0 + $0x74] sm:$0xf]
  %v43 = vld [vmem:[%s0 + $0x78] sm:$0xff]
  %v44 = vld [vmem:[%s0 + $0x80] sm:$0xf]
  %v45 = vld [vmem:[%s0 + $0x84] sm:$0xff]
  %v46 = vld [vmem:[%s0 + $0x8c] sm:$0xf]
  %v47 = vld [vmem:[%s0 + $0x90] sm:$0xff]
  %v48 = vld [vmem:[%s0 + $0x98] sm:$0xf]
  %v49 = vld [vmem:[%s0 + $0x9c] sm:$0xff]
  %v50 = vld [vmem:[%s0 + $0xa4] sm:$0xf]
  %v51 = vld [vmem:[%s0 + $0xa8] sm:$0xff]
  %v52 = vld [vmem:[%s0 + $0xb0] sm:$0xf]
  %v53 = vld [vmem:[%s0 + $0xb4] sm:$0xff]
  %v54 = vld [vmem:[%s0 + $0xbc] sm:$0xf]
  %v55 = vunpack.c.l.bf16 %v23
  %v56 = vunpack.c.h.bf16 %v23
  %v57 = vunpack.c.l.bf16 %v24
  %v58 = vunpack.c.l.bf16 %v25
  %v59 = vunpack.c.h.bf16 %v25
  %v60 = vunpack.c.l.bf16 %v26
  %v61 = vunpack.c.l.bf16 %v27
  %v62 = vunpack.c.h.bf16 %v27
  %v63 = vunpack.c.l.bf16 %v28
  %v64 = vunpack.c.l.bf16 %v29
  %v65 = vunpack.c.h.bf16 %v29
  %v66 = vunpack.c.l.bf16 %v30
  %v67 = vunpack.c.l.bf16 %v31
  %v68 = vunpack.c.h.bf16 %v31
  %v69 = vunpack.c.l.bf16 %v32
  %v70 = vunpack.c.l.bf16 %v33
  %v71 = vunpack.c.h.bf16 %v33
  %v72 = vunpack.c.l.bf16 %v34
  %v73 = vunpack.c.l.bf16 %v35
  %v74 = vunpack.c.h.bf16 %v35
  %v75 = vunpack.c.l.bf16 %v36
  %v76 = vunpack.c.l.bf16 %v37
  %v77 = vunpack.c.h.bf16 %v37
  %v78 = vunpack.c.l.bf16 %v38
  %v79 = vunpack.c.l.bf16 %v39
  %v80 = vunpack.c.h.bf16 %v39
  %v81 = vunpack.c.l.bf16 %v40
  %v82 = vunpack.c.l.bf16 %v41
  %v83 = vunpack.c.h.bf16 %v41
  %v84 = vunpack.c.l.bf16 %v42
  %v85 = vunpack.c.l.bf16 %v43
  %v86 = vunpack.c.h.bf16 %v43
  %v87 = vunpack.c.l.bf16 %v44
  %v88 = vunpack.c.l.bf16 %v45
  %v89 = vunpack.c.h.bf16 %v45
  %v90 = vunpack.c.l.bf16 %v46
  %v91 = vunpack.c.l.bf16 %v47
  %v92 = vunpack.c.h.bf16 %v47
  %v93 = vunpack.c.l.bf16 %v48
  %v94 = vunpack.c.l.bf16 %v49
  %v95 = vunpack.c.h.bf16 %v49
  %v96 = vunpack.c.l.bf16 %v50
  %v97 = vunpack.c.l.bf16 %v51
  %v98 = vunpack.c.h.bf16 %v51
  %v99 = vunpack.c.l.bf16 %v52
  %v100 = vunpack.c.l.bf16 %v53
  %v101 = vunpack.c.h.bf16 %v53
  %v102 = vunpack.c.l.bf16 %v54
  %v103 = vld [vmem:[%s3] sm:$0x7]
  %v105 = vlaneseq
  %v106 = vshrl.u32 %v105, 7
  %v107 = vsub.s32 0, %v106
  %v108 = vrot.slane %v103, %v107
  %v109 = vlaneseq
  %v110 = vshrl.u32 %v109, 7
  %v111 = vsub.s32 1, %v110
  %v112 = vrot.slane %v103, %v111
  %v113 = vlaneseq
  %v114 = vshrl.u32 %v113, 7
  %v115 = vsub.s32 2, %v114
  %v116 = vrot.slane %v103, %v115
  %v120 = vmul.f32 %v55, %v108
  %v121 = vmul.f32 %v56, %v112
  %v122 = vmul.f32 %v57, %v116
  %v123 = vmul.f32 %v58, %v108
  %v124 = vmul.f32 %v59, %v112
  %v125 = vmul.f32 %v60, %v116
  %v126 = vmul.f32 %v61, %v108
  %v127 = vmul.f32 %v62, %v112
  %v128 = vmul.f32 %v63, %v116
  %v129 = vmul.f32 %v64, %v108
  %v130 = vmul.f32 %v65, %v112
  %v131 = vmul.f32 %v66, %v116
  %v132 = vmul.f32 %v67, %v108
  %v133 = vmul.f32 %v68, %v112
  %v134 = vmul.f32 %v69, %v116
  %v135 = vmul.f32 %v70, %v108
  %v136 = vmul.f32 %v71, %v112
  %v137 = vmul.f32 %v72, %v116
  %v138 = vmul.f32 %v73, %v108
  %v139 = vmul.f32 %v74, %v112
  %v140 = vmul.f32 %v75, %v116
  %v141 = vmul.f32 %v76, %v108
  %v142 = vmul.f32 %v77, %v112
  %v143 = vmul.f32 %v78, %v116
  %v144 = vmul.f32 %v79, %v108
  %v145 = vmul.f32 %v80, %v112
  %v146 = vmul.f32 %v81, %v116
  %v147 = vmul.f32 %v82, %v108
  %v148 = vmul.f32 %v83, %v112
  %v149 = vmul.f32 %v84, %v116
  %v150 = vmul.f32 %v85, %v108
  %v151 = vmul.f32 %v86, %v112
  %v152 = vmul.f32 %v87, %v116
  %v153 = vmul.f32 %v88, %v108
  %v154 = vmul.f32 %v89, %v112
  %v155 = vmul.f32 %v90, %v116
  %v156 = vmul.f32 %v91, %v108
  %v157 = vmul.f32 %v92, %v112
  %v158 = vmul.f32 %v93, %v116
  %v159 = vmul.f32 %v94, %v108
  %v160 = vmul.f32 %v95, %v112
  %v161 = vmul.f32 %v96, %v116
  %v162 = vmul.f32 %v97, %v108
  %v163 = vmul.f32 %v98, %v112
  %v164 = vmul.f32 %v99, %v116
  %v165 = vmul.f32 %v100, %v108
  %v166 = vmul.f32 %v101, %v112
  %v167 = vmul.f32 %v102, %v116
  %v168 = vld [vmem:[%s4] sm:$0x7]
  %v170 = vlaneseq
  %v171 = vshrl.u32 %v170, 7
  %v172 = vsub.s32 0, %v171
  %v173 = vrot.slane %v168, %v172
  %v174 = vlaneseq
  %v175 = vshrl.u32 %v174, 7
  %v176 = vsub.s32 1, %v175
  %v177 = vrot.slane %v168, %v176
  %v178 = vlaneseq
  %v179 = vshrl.u32 %v178, 7
  %v180 = vsub.s32 2, %v179
  %v181 = vrot.slane %v168, %v180
  %v185 = vadd.f32 %v120, %v173
  %v186 = vadd.f32 %v121, %v177
  %v187 = vadd.f32 %v122, %v181
  %v188 = vadd.f32 %v123, %v173
  %v189 = vadd.f32 %v124, %v177
  %v190 = vadd.f32 %v125, %v181
  %v191 = vadd.f32 %v126, %v173
  %v192 = vadd.f32 %v127, %v177
  %v193 = vadd.f32 %v128, %v181
  %v194 = vadd.f32 %v129, %v173
  %v195 = vadd.f32 %v130, %v177
  %v196 = vadd.f32 %v131, %v181
  %v197 = vadd.f32 %v132, %v173
  %v198 = vadd.f32 %v133, %v177
  %v199 = vadd.f32 %v134, %v181
  %v200 = vadd.f32 %v135, %v173
  %v201 = vadd.f32 %v136, %v177
  %v202 = vadd.f32 %v137, %v181
  %v203 = vadd.f32 %v138, %v173
  %v204 = vadd.f32 %v139, %v177
  %v205 = vadd.f32 %v140, %v181
  %v206 = vadd.f32 %v141, %v173
  %v207 = vadd.f32 %v142, %v177
  %v208 = vadd.f32 %v143, %v181
  %v209 = vadd.f32 %v144, %v173
  %v210 = vadd.f32 %v145, %v177
  %v211 = vadd.f32 %v146, %v181
  %v212 = vadd.f32 %v147, %v173
  %v213 = vadd.f32 %v148, %v177
  %v214 = vadd.f32 %v149, %v181
  %v215 = vadd.f32 %v150, %v173
  %v216 = vadd.f32 %v151, %v177
  %v217 = vadd.f32 %v152, %v181
  %v218 = vadd.f32 %v153, %v173
  %v219 = vadd.f32 %v154, %v177
  %v220 = vadd.f32 %v155, %v181
  %v221 = vadd.f32 %v156, %v173
  %v222 = vadd.f32 %v157, %v177
  %v223 = vadd.f32 %v158, %v181
  %v224 = vadd.f32 %v159, %v173
  %v225 = vadd.f32 %v160, %v177
  %v226 = vadd.f32 %v161, %v181
  %v227 = vadd.f32 %v162, %v173
  %v228 = vadd.f32 %v163, %v177
  %v229 = vadd.f32 %v164, %v181
  %v230 = vadd.f32 %v165, %v173
  %v231 = vadd.f32 %v166, %v177
  %v232 = vadd.f32 %v167, %v181
  %v233 = vmax.f32 %v185, 0.0
  %v234 = vmax.f32 %v186, 0.0
  %v235 = vmax.f32 %v187, 0.0
  %v236 = vmax.f32 %v188, 0.0
  %v237 = vmax.f32 %v189, 0.0
  %v238 = vmax.f32 %v190, 0.0
  %v239 = vmax.f32 %v191, 0.0
  %v240 = vmax.f32 %v192, 0.0
  %v241 = vmax.f32 %v193, 0.0
  %v242 = vmax.f32 %v194, 0.0
  %v243 = vmax.f32 %v195, 0.0
  %v244 = vmax.f32 %v196, 0.0
  %v245 = vmax.f32 %v197, 0.0
  %v246 = vmax.f32 %v198, 0.0
  %v247 = vmax.f32 %v199, 0.0
  %v248 = vmax.f32 %v200, 0.0
  %v249 = vmax.f32 %v201, 0.0
  %v250 = vmax.f32 %v202, 0.0
  %v251 = vmax.f32 %v203, 0.0
  %v252 = vmax.f32 %v204, 0.0
  %v253 = vmax.f32 %v205, 0.0
  %v254 = vmax.f32 %v206, 0.0
  %v255 = vmax.f32 %v207, 0.0
  %v256 = vmax.f32 %v208, 0.0
  %v257 = vmax.f32 %v209, 0.0
  %v258 = vmax.f32 %v210, 0.0
  %v259 = vmax.f32 %v211, 0.0
  %v260 = vmax.f32 %v212, 0.0
  %v261 = vmax.f32 %v213, 0.0
  %v262 = vmax.f32 %v214, 0.0
  %v263 = vmax.f32 %v215, 0.0
  %v264 = vmax.f32 %v216, 0.0
  %v265 = vmax.f32 %v217, 0.0
  %v266 = vmax.f32 %v218, 0.0
  %v267 = vmax.f32 %v219, 0.0
  %v268 = vmax.f32 %v220, 0.0
  %v269 = vmax.f32 %v221, 0.0
  %v270 = vmax.f32 %v222, 0.0
  %v271 = vmax.f32 %v223, 0.0
  %v272 = vmax.f32 %v224, 0.0
  %v273 = vmax.f32 %v225, 0.0
  %v274 = vmax.f32 %v226, 0.0
  %v275 = vmax.f32 %v227, 0.0
  %v276 = vmax.f32 %v228, 0.0
  %v277 = vmax.f32 %v229, 0.0
  %v278 = vmax.f32 %v230, 0.0
  %v279 = vmax.f32 %v231, 0.0
  %v280 = vmax.f32 %v232, 0.0
  %v281 = vpack.c.bf16 %v236, %v233
  %v282 = vpack.c.bf16 %v237, %v234
  %v283 = vpack.c.bf16 %v238, %v235
  %v284 = vpack.c.bf16 %v242, %v239
  %v285 = vpack.c.bf16 %v243, %v240
  %v286 = vpack.c.bf16 %v244, %v241
  %v287 = vpack.c.bf16 %v248, %v245
  %v288 = vpack.c.bf16 %v249, %v246
  %v289 = vpack.c.bf16 %v250, %v247
  %v290 = vpack.c.bf16 %v254, %v251
  %v291 = vpack.c.bf16 %v255, %v252
  %v292 = vpack.c.bf16 %v256, %v253
  %v293 = vpack.c.bf16 %v260, %v257
  %v294 = vpack.c.bf16 %v261, %v258
  %v295 = vpack.c.bf16 %v262, %v259
  %v296 = vpack.c.bf16 %v266, %v263
  %v297 = vpack.c.bf16 %v267, %v264
  %v298 = vpack.c.bf16 %v268, %v265
  %v299 = vpack.c.bf16 %v272, %v269
  %v300 = vpack.c.bf16 %v273, %v270
  %v301 = vpack.c.bf16 %v274, %v271
  %v302 = vpack.c.bf16 %v278, %v275
  %v303 = vpack.c.bf16 %v279, %v276
  %v304 = vpack.c.bf16 %v280, %v277
  %v305 = vld [vmem:[%s1] sm:$0xf]
  %v306 = vld [vmem:[%s1 + $0x4] sm:$0xf]
  %v307 = vld [vmem:[%s1 + $0x8] sm:$0xf]
  %v308 = vld [vmem:[%s1 + $0xc] sm:$0xf]
  %v309 = vld [vmem:[%s1 + $0x10] sm:$0xf]
  %v310 = vld [vmem:[%s1 + $0x14] sm:$0xf]
  %v311 = vld [vmem:[%s1 + $0x18] sm:$0xf]
  %v312 = vld [vmem:[%s1 + $0x1c] sm:$0xf]
  %v313 = vld [vmem:[%s1 + $0x20] sm:$0xf]
  %v314 = vld [vmem:[%s1 + $0x24] sm:$0xf]
  %v315 = vld [vmem:[%s1 + $0x28] sm:$0xf]
  %v316 = vld [vmem:[%s1 + $0x2c] sm:$0xf]
  %v317 = vld [vmem:[%s1 + $0x30] sm:$0xf]
  %v318 = vld [vmem:[%s1 + $0x34] sm:$0xf]
  %v319 = vld [vmem:[%s1 + $0x38] sm:$0xf]
  %v320 = vld [vmem:[%s1 + $0x3c] sm:$0xf]
  %v321 = vld [vmem:[%s1 + $0x40] sm:$0xf]
  %v322 = vld [vmem:[%s1 + $0x44] sm:$0xf]
  %v323 = vld [vmem:[%s1 + $0x48] sm:$0xf]
  %v324 = vld [vmem:[%s1 + $0x4c] sm:$0xf]
  %v325 = vld [vmem:[%s1 + $0x50] sm:$0xf]
  %v326 = vld [vmem:[%s1 + $0x54] sm:$0xf]
  %v327 = vld [vmem:[%s1 + $0x58] sm:$0xf]
  %v328 = vld [vmem:[%s1 + $0x5c] sm:$0xf]
  %v329 = vld [vmem:[%s1 + $0x60] sm:$0xf]
  %v330 = vld [vmem:[%s1 + $0x64] sm:$0xf]
  %v331 = vld [vmem:[%s1 + $0x68] sm:$0xf]
  %v332 = vld [vmem:[%s1 + $0x6c] sm:$0xf]
  %v333 = vld [vmem:[%s1 + $0x70] sm:$0xf]
  %v334 = vld [vmem:[%s1 + $0x74] sm:$0xf]
  %v335 = vld [vmem:[%s1 + $0x78] sm:$0xf]
  %v336 = vld [vmem:[%s1 + $0x7c] sm:$0xf]
  %v337 = vld [vmem:[%s1 + $0x80] sm:$0xf]
  %v338 = vld [vmem:[%s1 + $0x84] sm:$0xf]
  %v339 = vld [vmem:[%s1 + $0x88] sm:$0xf]
  %v340 = vld [vmem:[%s1 + $0x8c] sm:$0xf]
  %v341 = vld [vmem:[%s2] sm:$0x1]
  %v343 = vlaneseq
  %v344 = vshrl.u32 %v343, 7
  %v345 = vsub.s32 0, %v344
  %v346 = vrot.slane %v341, %v345
  %v384 = vunpack.c.l.b16 %v305
  %v385 = vunpack.c.l.b16 %v306
  %v386 = vunpack.c.l.b16 %v307
  %v387 = vunpack.c.l.b16 %v308
  %v388 = vunpack.c.l.b16 %v309
  %v389 = vunpack.c.l.b16 %v310
  %v390 = vunpack.c.l.b16 %v311
  %v391 = vunpack.c.l.b16 %v312
  %v392 = vunpack.c.l.b16 %v313
  %v393 = vunpack.c.l.b16 %v314
  %v394 = vunpack.c.l.b16 %v315
  %v395 = vunpack.c.l.b16 %v316
  %v396 = vunpack.c.l.b16 %v317
  %v397 = vunpack.c.l.b16 %v318
  %v398 = vunpack.c.l.b16 %v319
  %v399 = vunpack.c.l.b16 %v320
  %v400 = vunpack.c.l.b16 %v321
  %v401 = vunpack.c.l.b16 %v322
  %v402 = vunpack.c.l.b16 %v323
  %v403 = vunpack.c.l.b16 %v324
  %v404 = vunpack.c.l.b16 %v325
  %v405 = vunpack.c.l.b16 %v326
  %v406 = vunpack.c.l.b16 %v327
  %v407 = vunpack.c.l.b16 %v328
  %v408 = vunpack.c.l.b16 %v329
  %v409 = vunpack.c.l.b16 %v330
  %v410 = vunpack.c.l.b16 %v331
  %v411 = vunpack.c.l.b16 %v332
  %v412 = vunpack.c.l.b16 %v333
  %v413 = vunpack.c.l.b16 %v334
  %v414 = vunpack.c.l.b16 %v335
  %v415 = vunpack.c.l.b16 %v336
  %v416 = vunpack.c.l.b16 %v337
  %v417 = vunpack.c.l.b16 %v338
  %v418 = vunpack.c.l.b16 %v339
  %v419 = vunpack.c.l.b16 %v340
  %v420 = vpack.c.b16 %v385, %v384
  %v421 = vpack.c.b16 %v387, %v386
  %v422 = vpack.c.b16 %v389, %v388
  %v423 = vpack.c.b16 %v391, %v390
  %v424 = vpack.c.b16 %v393, %v392
  %v425 = vpack.c.b16 %v395, %v394
  %v426 = vpack.c.b16 %v397, %v396
  %v427 = vpack.c.b16 %v399, %v398
  %v428 = vpack.c.b16 %v401, %v400
  %v429 = vpack.c.b16 %v403, %v402
  %v430 = vpack.c.b16 %v405, %v404
  %v431 = vpack.c.b16 %v407, %v406
  %v432 = vpack.c.b16 %v409, %v408
  %v433 = vpack.c.b16 %v411, %v410
  %v434 = vpack.c.b16 %v413, %v412
  %v435 = vpack.c.b16 %v415, %v414
  %v436 = vpack.c.b16 %v417, %v416
  %v437 = vpack.c.b16 %v419, %v418
  %vm456 = vcmask 261120
  %v458 = vsel %vm456, %v283, 0
  %v461 = vsel %vm456, %v286, 0
  %v464 = vsel %vm456, %v289, 0
  %v467 = vsel %vm456, %v292, 0
  %v470 = vsel %vm456, %v295, 0
  %v473 = vsel %vm456, %v298, 0
  %v476 = vsel %vm456, %v301, 0
  %v479 = vsel %vm456, %v304, 0
  %481 = vmatprep.subr.bf16.mxu0 0
  %482 = vmatpush1.bf16.msra.mxu0 %v420
  %483 = vmatprep.subr.bf16.mxu0 0
  %484 = vmatpush1.bf16.msra.mxu0 %v421
  %485 = vmatprep.subr.bf16.mxu0 0
  %486 = vmatpush1.bf16.msra.mxu0 %v422
  %487 = vmatprep.subr.bf16.mxu0 0
  %488 = vmatpush1.bf16.msra.mxu0 %v423
  %489 = vmatprep.subr.bf16.mxu0 0
  %490 = vmatpush1.bf16.msra.mxu0 %v424
  %491 = vmatprep.subr.bf16.mxu0 0
  %492 = vmatpush1.bf16.msra.mxu0 %v425
  %493 = vmatprep.subr.bf16.mxu0 0
  %494 = vmatpush1.bf16.msra.mxu0 %v426
  %495 = vmatprep.subr.bf16.mxu0 0
  %496 = vmatpush1.bf16.msra.mxu0 %v427
  %497 = vmatprep.subr.bf16.mxu0 0
  %498 = vmatpush1.bf16.msra.mxu0 %v428
  %499 = vmatprep.subr.bf16.mxu0 0
  %500 = vmatpush1.bf16.msra.mxu0 %v429
  %501 = vmatprep.subr.bf16.mxu0 0
  %502 = vmatpush1.bf16.msra.mxu0 %v430
  %503 = vmatprep.subr.bf16.mxu0 0
  %504 = vmatpush1.bf16.msra.mxu0 %v431
  %505 = vmatprep.subr.bf16.mxu0 0
  %506 = vmatpush1.bf16.msra.mxu0 %v432
  %507 = vmatprep.subr.bf16.mxu0 0
  %508 = vmatpush1.bf16.msra.mxu0 %v433
  %509 = vmatprep.subr.bf16.mxu0 0
  %510 = vmatpush1.bf16.msra.mxu0 %v434
  %511 = vmatprep.subr.bf16.mxu0 0
  %512 = vmatpush1.bf16.msra.mxu0 %v435
  %513 = vmatprep.mubr.bf16.mxu0 %v282
  %514 = vmatmul.mubr.bf16.gmra.mrb[0].mxu0 %v281
  %v515 = vpop.f32.mrb[0].mxu0
  %v516 = vadd.f32 %v346, %v515
  %v517 = vpop.f32.mrb[0].mxu0
  %v518 = vpop.f32.mrb[0].mxu0
  %v519 = vadd.f32 %v346, %v518
  %v520 = vpop.f32.mrb[0].mxu0
  %521 = vmatprep.mubr.bf16.mxu0 %v285
  %522 = vmatmul.mubr.bf16.gmra.mrb[0].mxu0 %v284
  %v523 = vpop.f32.mrb[0].mxu0
  %v524 = vadd.f32 %v346, %v523
  %v525 = vpop.f32.mrb[0].mxu0
  %v526 = vpop.f32.mrb[0].mxu0
  %v527 = vadd.f32 %v346, %v526
  %v528 = vpop.f32.mrb[0].mxu0
  %529 = vmatprep.mubr.bf16.mxu0 %v288
  %530 = vmatmul.mubr.bf16.gmra.mrb[0].mxu0 %v287
  %v531 = vpop.f32.mrb[0].mxu0
  %v532 = vadd.f32 %v346, %v531
  %v533 = vpop.f32.mrb[0].mxu0
  %v534 = vpop.f32.mrb[0].mxu0
  %v535 = vadd.f32 %v346, %v534
  %v536 = vpop.f32.mrb[0].mxu0
  %537 = vmatprep.mubr.bf16.mxu0 %v291
  %538 = vmatmul.mubr.bf16.gmra.mrb[0].mxu0 %v290
  %v539 = vpop.f32.mrb[0].mxu0
  %v540 = vadd.f32 %v346, %v539
  %v541 = vpop.f32.mrb[0].mxu0
  %v542 = vpop.f32.mrb[0].mxu0
  %v543 = vadd.f32 %v346, %v542
  %v544 = vpop.f32.mrb[0].mxu0
  %545 = vmatprep.mubr.bf16.mxu0 %v294
  %546 = vmatmul.mubr.bf16.gmra.mrb[0].mxu0 %v293
  %v547 = vpop.f32.mrb[0].mxu0
  %v548 = vadd.f32 %v346, %v547
  %v549 = vpop.f32.mrb[0].mxu0
  %v550 = vpop.f32.mrb[0].mxu0
  %v551 = vadd.f32 %v346, %v550
  %v552 = vpop.f32.mrb[0].mxu0
  %553 = vmatprep.mubr.bf16.mxu0 %v297
  %554 = vmatmul.mubr.bf16.gmra.mrb[0].mxu0 %v296
  %v555 = vpop.f32.mrb[0].mxu0
  %v556 = vadd.f32 %v346, %v555
  %v557 = vpop.f32.mrb[0].mxu0
  %v558 = vpop.f32.mrb[0].mxu0
  %v559 = vadd.f32 %v346, %v558
  %v560 = vpop.f32.mrb[0].mxu0
  %561 = vmatprep.mubr.bf16.mxu0 %v300
  %562 = vmatmul.mubr.bf16.gmra.mrb[0].mxu0 %v299
  %v563 = vpop.f32.mrb[0].mxu0
  %v564 = vadd.f32 %v346, %v563
  %v565 = vpop.f32.mrb[0].mxu0
  %v566 = vpop.f32.mrb[0].mxu0
  %v567 = vadd.f32 %v346, %v566
  %v568 = vpop.f32.mrb[0].mxu0
  %569 = vmatprep.mubr.bf16.mxu0 %v303
  %570 = vmatmul.mubr.bf16.gmra.mrb[0].mxu0 %v302
  %v571 = vpop.f32.mrb[0].mxu0
  %v572 = vadd.f32 %v346, %v571
  %v573 = vpop.f32.mrb[0].mxu0
  %v574 = vpop.f32.mrb[0].mxu0
  %v575 = vadd.f32 %v346, %v574
  %v576 = vpop.f32.mrb[0].mxu0
  %577 = vdwg.mxu0
  %578 = vmatprep.subr.bf16.mxu0 0
  %579 = vmatpush1.bf16.msra.mxu0 %v436
  %580 = vmatprep.subr.bf16.mxu0 0
  %581 = vmatpush1.bf16.msra.mxu0 %v437
  %582 = vmatprep.subr.bf16.mxu0 0
  %583 = vmatpush1.bf16.msra.mxu0 0
  %584 = vmatprep.subr.bf16.mxu0 0
  %585 = vmatpush1.bf16.msra.mxu0 0
  %586 = vmatprep.subr.bf16.mxu0 0
  %587 = vmatpush1.bf16.msra.mxu0 0
  %588 = vmatprep.subr.bf16.mxu0 0
  %589 = vmatpush1.bf16.msra.mxu0 0
  %590 = vmatprep.subr.bf16.mxu0 0
  %591 = vmatpush1.bf16.msra.mxu0 0
  %592 = vmatprep.subr.bf16.mxu0 0
  %593 = vmatpush1.bf16.msra.mxu0 0
  %594 = vmatprep.subr.bf16.mxu0 0
  %595 = vmatpush1.bf16.msra.mxu0 0
  %596 = vmatprep.subr.bf16.mxu0 0
  %597 = vmatpush1.bf16.msra.mxu0 0
  %598 = vmatprep.subr.bf16.mxu0 0
  %599 = vmatpush1.bf16.msra.mxu0 0
  %600 = vmatprep.subr.bf16.mxu0 0
  %601 = vmatpush1.bf16.msra.mxu0 0
  %602 = vmatprep.subr.bf16.mxu0 0
  %603 = vmatpush1.bf16.msra.mxu0 0
  %604 = vmatprep.subr.bf16.mxu0 0
  %605 = vmatpush1.bf16.msra.mxu0 0
  %606 = vmatprep.subr.bf16.mxu0 0
  %607 = vmatpush1.bf16.msra.mxu0 0
  %608 = vmatprep.subr.bf16.mxu0 0
  %609 = vmatpush1.bf16.msra.mxu0 0
  %610 = vmatprep.mubr.bf16.mxu0 0
  %611 = vmatmul.mubr.bf16.gmra.mrb[0].mxu0 %v458
  %v612 = vpop.f32.mrb[0].mxu0
  %v613 = vadd.f32 %v516, %v612
  %v614 = vpop.f32.mrb[0].mxu0
  %v615 = vpop.f32.mrb[0].mxu0
  %v616 = vadd.f32 %v519, %v615
  %v617 = vpop.f32.mrb[0].mxu0
  %618 = vmatprep.mubr.bf16.mxu0 0
  %619 = vmatmul.mubr.bf16.gmra.mrb[0].mxu0 %v461
  %v620 = vpop.f32.mrb[0].mxu0
  %v621 = vadd.f32 %v524, %v620
  %v622 = vpop.f32.mrb[0].mxu0
  %v623 = vpop.f32.mrb[0].mxu0
  %v624 = vadd.f32 %v527, %v623
  %v625 = vpop.f32.mrb[0].mxu0
  %626 = vmatprep.mubr.bf16.mxu0 0
  %627 = vmatmul.mubr.bf16.gmra.mrb[0].mxu0 %v464
  %v628 = vpop.f32.mrb[0].mxu0
  %v629 = vadd.f32 %v532, %v628
  %v630 = vpop.f32.mrb[0].mxu0
  %v631 = vpop.f32.mrb[0].mxu0
  %v632 = vadd.f32 %v535, %v631
  %v633 = vpop.f32.mrb[0].mxu0
  %634 = vmatprep.mubr.bf16.mxu0 0
  %635 = vmatmul.mubr.bf16.gmra.mrb[0].mxu0 %v467
  %v636 = vpop.f32.mrb[0].mxu0
  %v637 = vadd.f32 %v540, %v636
  %v638 = vpop.f32.mrb[0].mxu0
  %v639 = vpop.f32.mrb[0].mxu0
  %v640 = vadd.f32 %v543, %v639
  %v641 = vpop.f32.mrb[0].mxu0
  %642 = vmatprep.mubr.bf16.mxu0 0
  %643 = vmatmul.mubr.bf16.gmra.mrb[0].mxu0 %v470
  %v644 = vpop.f32.mrb[0].mxu0
  %v645 = vadd.f32 %v548, %v644
  %v646 = vpop.f32.mrb[0].mxu0
  %v647 = vpop.f32.mrb[0].mxu0
  %v648 = vadd.f32 %v551, %v647
  %v649 = vpop.f32.mrb[0].mxu0
  %650 = vmatprep.mubr.bf16.mxu0 0
  %651 = vmatmul.mubr.bf16.gmra.mrb[0].mxu0 %v473
  %v652 = vpop.f32.mrb[0].mxu0
  %v653 = vadd.f32 %v556, %v652
  %v654 = vpop.f32.mrb[0].mxu0
  %v655 = vpop.f32.mrb[0].mxu0
  %v656 = vadd.f32 %v559, %v655
  %v657 = vpop.f32.mrb[0].mxu0
  %658 = vmatprep.mubr.bf16.mxu0 0
  %659 = vmatmul.mubr.bf16.gmra.mrb[0].mxu0 %v476
  %v660 = vpop.f32.mrb[0].mxu0
  %v661 = vadd.f32 %v564, %v660
  %v662 = vpop.f32.mrb[0].mxu0
  %v663 = vpop.f32.mrb[0].mxu0
  %v664 = vadd.f32 %v567, %v663
  %v665 = vpop.f32.mrb[0].mxu0
  %666 = vmatprep.mubr.bf16.mxu0 0
  %667 = vmatmul.mubr.bf16.gmra.mrb[0].mxu0 %v479
  %v668 = vpop.f32.mrb[0].mxu0
  %v669 = vadd.f32 %v572, %v668
  %v670 = vpop.f32.mrb[0].mxu0
  %v671 = vpop.f32.mrb[0].mxu0
  %v672 = vadd.f32 %v575, %v671
  %v673 = vpop.f32.mrb[0].mxu0
  %674 = vdwg.mxu0
  %v675 = vpack.c.bf16 %v616, %v613
  %v676 = vpack.c.bf16 %v624, %v621
  %v677 = vpack.c.bf16 %v632, %v629
  %v678 = vpack.c.bf16 %v640, %v637
  %v679 = vpack.c.bf16 %v648, %v645
  %v680 = vpack.c.bf16 %v656, %v653
  %v681 = vpack.c.bf16 %v664, %v661
  %v682 = vpack.c.bf16 %v672, %v669
  %v691 = vunpack.c.l.b16 %v675
  %v692 = vunpack.c.h.b16 %v675
  %v693 = vunpack.c.l.b16 %v676
  %v694 = vunpack.c.h.b16 %v676
  %v695 = vunpack.c.l.b16 %v677
  %v696 = vunpack.c.h.b16 %v677
  %v697 = vunpack.c.l.b16 %v678
  %v698 = vunpack.c.h.b16 %v678
  %v699 = vunpack.c.l.b16 %v679
  %v700 = vunpack.c.h.b16 %v679
  %v701 = vunpack.c.l.b16 %v680
  %v702 = vunpack.c.h.b16 %v680
  %v703 = vunpack.c.l.b16 %v681
  %v704 = vunpack.c.h.b16 %v681
  %v705 = vunpack.c.l.b16 %v682
  %v706 = vunpack.c.h.b16 %v682
  %v707 = vpack.c.b16 %v691, %v691
  %v708 = vpack.c.b16 %v692, %v692
  %v709 = vpack.c.b16 %v693, %v693
  %v710 = vpack.c.b16 %v694, %v694
  %v711 = vpack.c.b16 %v695, %v695
  %v712 = vpack.c.b16 %v696, %v696
  %v713 = vpack.c.b16 %v697, %v697
  %v714 = vpack.c.b16 %v698, %v698
  %v715 = vpack.c.b16 %v699, %v699
  %v716 = vpack.c.b16 %v700, %v700
  %v717 = vpack.c.b16 %v701, %v701
  %v718 = vpack.c.b16 %v702, %v702
  %v719 = vpack.c.b16 %v703, %v703
  %v720 = vpack.c.b16 %v704, %v704
  %v721 = vpack.c.b16 %v705, %v705
  %v722 = vpack.c.b16 %v706, %v706
  %739 = vst [vmem:[%s5] sm:$0xf] %v707
  %740 = vst [vmem:[%s5 + $0x4] sm:$0xf] %v708
  %741 = vst [vmem:[%s5 + $0x8] sm:$0xf] %v709
  %742 = vst [vmem:[%s5 + $0xc] sm:$0xf] %v710
  %743 = vst [vmem:[%s5 + $0x10] sm:$0xf] %v711
  %744 = vst [vmem:[%s5 + $0x14] sm:$0xf] %v712
  %745 = vst [vmem:[%s5 + $0x18] sm:$0xf] %v713
  %746 = vst [vmem:[%s5 + $0x1c] sm:$0xf] %v714
  %747 = vst [vmem:[%s5 + $0x20] sm:$0xf] %v715
  %748 = vst [vmem:[%s5 + $0x24] sm:$0xf] %v716
  %749 = vst [vmem:[%s5 + $0x28] sm:$0xf] %v717
  %750 = vst [vmem:[%s5 + $0x2c] sm:$0xf] %v718
  %751 = vst [vmem:[%s5 + $0x30] sm:$0xf] %v719
  %752 = vst [vmem:[%s5 + $0x34] sm:$0xf] %v720
  %753 = vst [vmem:[%s5 + $0x38] sm:$0xf] %v721
  %754 = vst [vmem:[%s5 + $0x3c] sm:$0xf] %v722
  %v755 = vlaneseq
  %v756 = vshrl.u32 %v755, 7
  %v757 = vadd.s32 %v756, 8
  %v758 = vadd.s32 %v756, 16
  %v759 = vadd.s32 %v756, 24
  %v760 = vadd.s32 %v756, 32
  %v761 = vadd.s32 %v756, 40
  %v762 = vadd.s32 %v756, 48
  %v763 = vadd.s32 %v756, 56
  %v764 = vadd.s32 %v756, 64
  %v765 = vadd.s32 %v756, 72
  %v766 = vadd.s32 %v756, 80
  %v767 = vadd.s32 %v756, 88
  %v768 = vadd.s32 %v756, 96
  %v769 = vadd.s32 %v756, 104
  %v770 = vadd.s32 %v756, 112
  %v771 = vadd.s32 %v756, 120
  %s772 = smul.u32 0, 128
  %s773 = ssub.s32 128, %s772
  %v774 = vstv %s773
  %vm775 = vcmp.lt.s32.totalorder %v756, %v774
  %vm776 = vcmp.lt.s32.totalorder %v757, %v774
  %vm777 = vcmp.lt.s32.totalorder %v758, %v774
  %vm778 = vcmp.lt.s32.totalorder %v759, %v774
  %vm779 = vcmp.lt.s32.totalorder %v760, %v774
  %vm780 = vcmp.lt.s32.totalorder %v761, %v774
  %vm781 = vcmp.lt.s32.totalorder %v762, %v774
  %vm782 = vcmp.lt.s32.totalorder %v763, %v774
  %vm783 = vcmp.lt.s32.totalorder %v764, %v774
  %vm784 = vcmp.lt.s32.totalorder %v765, %v774
  %vm785 = vcmp.lt.s32.totalorder %v766, %v774
  %vm786 = vcmp.lt.s32.totalorder %v767, %v774
  %vm787 = vcmp.lt.s32.totalorder %v768, %v774
  %vm788 = vcmp.lt.s32.totalorder %v769, %v774
  %vm789 = vcmp.lt.s32.totalorder %v770, %v774
  %vm790 = vcmp.lt.s32.totalorder %v771, %v774
  %v791 = vsel %vm775, 1, 0
  %v792 = vsel %vm776, 1, 0
  %v793 = vsel %vm777, 1, 0
  %v794 = vsel %vm778, 1, 0
  %v795 = vsel %vm779, 1, 0
  %v796 = vsel %vm780, 1, 0
  %v797 = vsel %vm781, 1, 0
  %v798 = vsel %vm782, 1, 0
  %v799 = vsel %vm783, 1, 0
  %v800 = vsel %vm784, 1, 0
  %v801 = vsel %vm785, 1, 0
  %v802 = vsel %vm786, 1, 0
  %v803 = vsel %vm787, 1, 0
  %v804 = vsel %vm788, 1, 0
  %v805 = vsel %vm789, 1, 0
  %v806 = vsel %vm790, 1, 0
  %vm807 = vcmp.eq.s32.totalorder %v791, 1
  %vm808 = vcmp.eq.s32.totalorder %v792, 1
  %vm809 = vcmp.eq.s32.totalorder %v793, 1
  %vm810 = vcmp.eq.s32.totalorder %v794, 1
  %vm811 = vcmp.eq.s32.totalorder %v795, 1
  %vm812 = vcmp.eq.s32.totalorder %v796, 1
  %vm813 = vcmp.eq.s32.totalorder %v797, 1
  %vm814 = vcmp.eq.s32.totalorder %v798, 1
  %vm815 = vcmp.eq.s32.totalorder %v799, 1
  %vm816 = vcmp.eq.s32.totalorder %v800, 1
  %vm817 = vcmp.eq.s32.totalorder %v801, 1
  %vm818 = vcmp.eq.s32.totalorder %v802, 1
  %vm819 = vcmp.eq.s32.totalorder %v803, 1
  %vm820 = vcmp.eq.s32.totalorder %v804, 1
  %vm821 = vcmp.eq.s32.totalorder %v805, 1
  %vm822 = vcmp.eq.s32.totalorder %v806, 1
  %v823 = vsel %vm807, %v613, 0.0
  %v824 = vsel %vm808, %v616, 0.0
  %v825 = vsel %vm809, %v621, 0.0
  %v826 = vsel %vm810, %v624, 0.0
  %v827 = vsel %vm811, %v629, 0.0
  %v828 = vsel %vm812, %v632, 0.0
  %v829 = vsel %vm813, %v637, 0.0
  %v830 = vsel %vm814, %v640, 0.0
  %v831 = vsel %vm815, %v645, 0.0
  %v832 = vsel %vm816, %v648, 0.0
  %v833 = vsel %vm817, %v653, 0.0
  %v834 = vsel %vm818, %v656, 0.0
  %v835 = vsel %vm819, %v661, 0.0
  %v836 = vsel %vm820, %v664, 0.0
  %v837 = vsel %vm821, %v669, 0.0
  %v838 = vsel %vm822, %v672, 0.0
  %v839 = vadd.f32 %v823, %v824
  %v840 = vadd.f32 %v839, %v825
  %v841 = vadd.f32 %v840, %v826
  %v842 = vadd.f32 %v841, %v827
  %v843 = vadd.f32 %v842, %v828
  %v844 = vadd.f32 %v843, %v829
  %v845 = vadd.f32 %v844, %v830
  %v846 = vadd.f32 %v845, %v831
  %v847 = vadd.f32 %v846, %v832
  %v848 = vadd.f32 %v847, %v833
  %v849 = vadd.f32 %v848, %v834
  %v850 = vadd.f32 %v849, %v835
  %v851 = vadd.f32 %v850, %v836
  %v852 = vadd.f32 %v851, %v837
  %v853 = vadd.f32 %v852, %v838
  %v854 = vrot.slane %v853, 4
  %v855 = vadd.f32 %v853, %v854
  %v856 = vrot.slane %v855, 2
  %v857 = vadd.f32 %v855, %v856
  %v858 = vrot.slane %v857, 1
  %v859 = vadd.f32 %v857, %v858
  %v860 = vmul.f32 %v823, %v823
  %v861 = vmul.f32 %v824, %v824
  %v862 = vmul.f32 %v825, %v825
  %v863 = vmul.f32 %v826, %v826
  %v864 = vmul.f32 %v827, %v827
  %v865 = vmul.f32 %v828, %v828
  %v866 = vmul.f32 %v829, %v829
  %v867 = vmul.f32 %v830, %v830
  %v868 = vmul.f32 %v831, %v831
  %v869 = vmul.f32 %v832, %v832
  %v870 = vmul.f32 %v833, %v833
  %v871 = vmul.f32 %v834, %v834
  %v872 = vmul.f32 %v835, %v835
  %v873 = vmul.f32 %v836, %v836
  %v874 = vmul.f32 %v837, %v837
  %v875 = vmul.f32 %v838, %v838
  %v876 = vadd.f32 %v860, %v861
  %v877 = vadd.f32 %v876, %v862
  %v878 = vadd.f32 %v877, %v863
  %v879 = vadd.f32 %v878, %v864
  %v880 = vadd.f32 %v879, %v865
  %v881 = vadd.f32 %v880, %v866
  %v882 = vadd.f32 %v881, %v867
  %v883 = vadd.f32 %v882, %v868
  %v884 = vadd.f32 %v883, %v869
  %v885 = vadd.f32 %v884, %v870
  %v886 = vadd.f32 %v885, %v871
  %v887 = vadd.f32 %v886, %v872
  %v888 = vadd.f32 %v887, %v873
  %v889 = vadd.f32 %v888, %v874
  %v890 = vadd.f32 %v889, %v875
  %v891 = vrot.slane %v890, 4
  %v892 = vadd.f32 %v890, %v891
  %v893 = vrot.slane %v892, 2
  %v894 = vadd.f32 %v892, %v893
  %v895 = vrot.slane %v894, 1
  %v896 = vadd.f32 %v894, %v895
  %vm897 = vcmask 1040384
  %v898 = vsel %vm897, %v859, %v896
  %vm899 = vcmask 1041408
  %v900 = vsel %vm899, %v898, 0.0
  %901 = vst [vmem:[%s6] sm:$0xff] %v900
  // Predicated region
  $region22: #{unet_generator_forward.18} parent=0 // pred_check
    _
  $region23: #{unet_generator_forward.18} parent=0 // pred_check_branch
    %903 = sbr.rel (0) target = $region25
  $region24: #{unet_generator_forward.18} parent=0 // pred_region
    _
  $region25: #{unet_generator_forward.18} parent=0 // pred_fallthru
    _
  // Predicated region
  $region26: #{unet_generator_forward.18} parent=0 // pred_check
    _
  $region27: #{unet_generator_forward.18} parent=0 // pred_check_branch
    %905 = sbr.rel (0) target = $region29
  $region28: #{unet_generator_forward.18} parent=0 // pred_region
    _
  $region29: #{unet_generator_forward.18} parent=0 // pred_fallthru
    _
  // Predicated region
  $region30: #{unet_generator_forward.18} parent=0 // pred_check
    _
  $region31: #{unet_generator_forward.18} parent=0 // pred_check_branch
    %907 = sbr.rel (0) target = $region33
  $region32: #{unet_generator_forward.18} parent=0 // pred_region
    _
  $region33: #{unet_generator_forward.18} parent=0 // pred_fallthru
    _
  // Predicated region
  $region34: #{unet_generator_forward.18} parent=0 // pred_check
    _
  $region35: #{unet_generator_forward.18} parent=0 // pred_check_branch
    %909 = sbr.rel (0) target = $region37
  $region36: #{unet_generator_forward.18} parent=0 // pred_region
    _
  $region37: #{unet_generator_forward.18} parent=0 // pred_fallthru
    _

// kernel: tile.143
$region0: #{tile.143}
  #allocation0 [shape = 's32[1]{0}', space=sflag, size = 0x4, scoped, tag = 'scoped memory for tile.143']
  %s0 = inlined_call_operand.vmem [shape: f32[16], index: 0, kind: input, shape index: {}]
  %s1 = inlined_call_operand.vmem [shape: f32[9,16], index: 1, kind: output, shape index: {}]
  // Predicated region
  $region2: #{tile.143} parent=0 // pred_check
    _
  $region3: #{tile.143} parent=0 // pred_check_branch
    %3 = sbr.rel (0) target = $region5
  $region4: #{tile.143} parent=0 // pred_region
    _
  $region5: #{tile.143} parent=0 // pred_fallthru
    _
  %v4 = vld [vmem:[%s0] ss:$0 sm:$0xff]
  %5 = vst [vmem:[%s1] sm:$0xff] %v4
  %s6 = scalar_lea.vmem %s1, 8
  %7 = vst [vmem:[%s6] sm:$0xff] %v4

// kernel: tile.138
$region0: #{tile.138}
  #allocation0 [shape = 's32[1]{0}', space=sflag, size = 0x4, scoped, tag = 'scoped memory for tile.138']
  %s0 = inlined_call_operand.vmem [shape: f32[3], index: 0, kind: input, shape index: {}]
  %s1 = inlined_call_operand.vmem [shape: f32[4,3], index: 1, kind: output, shape index: {}]
  // Predicated region
  $region2: #{tile.138} parent=0 // pred_check
    _
  $region3: #{tile.138} parent=0 // pred_check_branch
    %3 = sbr.rel (0) target = $region5
  $region4: #{tile.138} parent=0 // pred_region
    _
  $region5: #{tile.138} parent=0 // pred_fallthru
    _
  %v4 = vld [vmem:[%s0] ss:$0 sm:$0xff]
  %5 = vst [vmem:[%s1] sm:$0xf] %v4

// kernel: tile.139
$region0: #{tile.139}
  %s0 = inlined_call_operand.vmem [shape: f32[4,3], index: 0, kind: input, shape index: {}]
  %s1 = inlined_call_operand.vmem [shape: f32[12], index: 1, kind: output, shape index: {}]
  $region1: #{tile.139} parent=0
    #allocation0 [shape = 'u8[4096]{0}', space=vmem, size = 0x1000, scoped, tag = 'scoped mem for output reshape']
    #allocation1 [shape = 'u8[4096]{0}', space=vmem, size = 0x1000, scoped, tag = 'scoped mem for input reshape']
    %s3 = sshllo.u32 0, 4
    %v4 = vld [vmem:[%s0] sm:%s3]
    %5 = vst [vmem:[#allocation1] sm:%s3] %v4
    %v6 = vld [vmem:[#allocation1] sm:$0x1]
    %vm7 = vcmask 23552
    %8 = vst.msk [vmem:[#allocation0] sm:$0x1] %vm7, %v6
    %s9 = scalar_lea.vmem [#allocation1], 3
    %v10 = vld [vmem:[%s9] sm:$0x1]
    %11 = vrot.lane.b32.xlu0 %v10, 9
    %v12 = vpop.permute.xlu0 %11
    %vm13 = vcmask 97352
    %14 = vst.msk [vmem:[#allocation0] sm:$0x1] %vm13, %v12
    %s15 = scalar_lea.vmem [#allocation1], 2
    %v16 = vld [vmem:[%s15] sm:$0x1]
    %17 = vrot.lane.b32.xlu0 %v16, 6
    %v18 = vpop.permute.xlu0 %17
    %vm19 = vcmask 72752
    %20 = vst.msk [vmem:[#allocation0] sm:$0x1] %vm19, %v18
    %s21 = scalar_lea.vmem [#allocation1], 1
    %v22 = vld [vmem:[%s21] sm:$0x1]
    %23 = vrot.lane.b32.xlu0 %v22, 3
    %v24 = vpop.permute.xlu0 %23
    %vm25 = vcmask 48152
    %26 = vst.msk [vmem:[#allocation0] sm:$0x1] %vm25, %v24
    %s28 = sshllo.u32 0, 1
    %v30 = vld [vmem:[#allocation0] sm:%s28]
    %s31 = sshllo.u32 0, 1
    %32 = vst [vmem:[%s1] sm:%s31] %v30

// kernel: unet_generator_forward.19
$region0: #{unet_generator_forward.19}
  #allocation0 [shape = 'u32[]', space=smem, size = 0x4, offset = 0x4, fixed_abs, tag = 'smem constant byte address 0x4 - core index']
  #allocation1 [shape = 'u32[144,128]{1,0:T(1,128)}', space=vmem, size = 0x12000, scoped, tag = 'internal scratch']
  %s0 = inlined_call_operand.vmem [shape: bf16[512,144], index: 0, kind: input, shape index: {}]
  %s1 = inlined_call_operand.vmem [shape: bf16[144,128], index: 1, kind: input, shape index: {}]
  %s2 = inlined_call_operand.vmem [shape: f32[1,128], index: 2, kind: input, shape index: {}]
  %s3 = inlined_call_operand.vmem [shape: f32[1,144], index: 3, kind: input, shape index: {}]
  %s4 = inlined_call_operand.vmem [shape: f32[1,144], index: 4, kind: input, shape index: {}]
  %s5 = inlined_call_operand.vmem [shape: f32[512,128], index: 5, kind: output, shape index: {}]
  %s6 = sld [smem:[#allocation0]]
  $region53: #{unet_generator_forward.19} parent=0
    _
  %s8 = ssub.s32 1, %s6
  %s9 = scalar_select 0, %s8, %s6
  loop: start=0, step=1, limit=4
  $region2: #{unet_generator_forward.19} parent=0 // loop_pre_header
    _
  $region3: #{unet_generator_forward.19} parent=0 // loop_header
    %s11 = sphi 0, %s15
    %p12 = scmp.ge.s32.totalorder %s11, 4
    %s21 = sphi 0, %s23
    %s24 = sphi 0, %s21
    %s25 = sphi 0, %s24
    %s41 = sphi 0, %s25
    %s45 = sphi 0, %s45
    %s47 = sphi 0, %s45
    %s48 = sphi 0, %s47
    %s62 = sphi 0, %s48
    %s66 = sphi 0, %s66
    %s68 = sphi 0, %s66
    %s69 = sphi 0, %s68
    %s83 = sphi 0, %s69
    %s87 = sphi 0, %s87
    %s89 = sphi 0, %s87
    %s90 = sphi 0, %s89
    %s104 = sphi 0, %s90
    %s108 = sphi 0, %s108
    %s110 = sphi 0, %s108
    %s111 = sphi 0, %s110
    %s125 = sphi 0, %s111
    %s131 = sphi 0, %s133
    %s134 = sphi 0, %s131
    %s135 = sphi 0, %s134
    %s151 = sphi 0, %s135
  $region4: #{unet_generator_forward.19} parent=0 // loop_header_branch
    %14 = sbr.rel (%p12) target = $region8
  $region5: #{unet_generator_forward.19} parent=0 // loop_body
    %s16 = ssub.s32 %s11, 1
    %s17 = ssub.s32 %s11, 2
    %s18 = sadd.s32 %s11, 1
    %s19 = ssub.s32 %s11, %s18
    %p20 = scmp.eq.s32.totalorder %s19, 0
    %s22 = sadd.s32 %s21, 1
    %s23 = scalar_select %p20, %s21, %s22
    %p26 = pneg %p20
    %p27 = scmp.eq.s32.totalorder %s11, 1
    %p28 = por %p26, %p27
    %p29 = scmp.ne.s32.totalorder %s21, %s24
    %p30 = scmp.eq.s32.totalorder %s11, 0
    %p31 = por %p29, %p30
    %p32 = scmp.ne.s32.totalorder %s21, %s24
    %p33 = scmp.eq.s32.totalorder %s16, 1
    %p34 = por %p32, %p33
    %p35 = scmp.ne.s32.totalorder %s24, %s25
    %p36 = scmp.eq.s32.totalorder %s16, 0
    %p37 = por %p35, %p36
    %p38 = scmp.ne.s32.totalorder %s24, %s25
    %p39 = scmp.eq.s32.totalorder %s17, 1
    %p40 = por %p38, %p39
    %p42 = scmp.ne.s32.totalorder %s25, %s41
    %p43 = scmp.eq.s32.totalorder %s17, 0
    %p44 = por %p42, %p43
    %s46 = sadd.s32 %s45, 1
    %p49 = scmp.eq.s32.totalorder %s11, 1
    %p50 = scmp.ne.s32.totalorder %s45, %s47
    %p51 = scmp.eq.s32.totalorder %s11, 0
    %p52 = por %p50, %p51
    %p53 = scmp.ne.s32.totalorder %s45, %s47
    %p54 = scmp.eq.s32.totalorder %s16, 1
    %p55 = por %p53, %p54
    %p56 = scmp.ne.s32.totalorder %s47, %s48
    %p57 = scmp.eq.s32.totalorder %s16, 0
    %p58 = por %p56, %p57
    %p59 = scmp.ne.s32.totalorder %s47, %s48
    %p60 = scmp.eq.s32.totalorder %s17, 1
    %p61 = por %p59, %p60
    %p63 = scmp.ne.s32.totalorder %s48, %s62
    %p64 = scmp.eq.s32.totalorder %s17, 0
    %p65 = por %p63, %p64
    %s67 = sadd.s32 %s66, 1
    %p70 = scmp.eq.s32.totalorder %s11, 1
    %p71 = scmp.ne.s32.totalorder %s66, %s68
    %p72 = scmp.eq.s32.totalorder %s11, 0
    %p73 = por %p71, %p72
    %p74 = scmp.ne.s32.totalorder %s66, %s68
    %p75 = scmp.eq.s32.totalorder %s16, 1
    %p76 = por %p74, %p75
    %p77 = scmp.ne.s32.totalorder %s68, %s69
    %p78 = scmp.eq.s32.totalorder %s16, 0
    %p79 = por %p77, %p78
    %p80 = scmp.ne.s32.totalorder %s68, %s69
    %p81 = scmp.eq.s32.totalorder %s17, 1
    %p82 = por %p80, %p81
    %p84 = scmp.ne.s32.totalorder %s69, %s83
    %p85 = scmp.eq.s32.totalorder %s17, 0
    %p86 = por %p84, %p85
    %s88 = sadd.s32 %s87, 1
    %p91 = scmp.eq.s32.totalorder %s11, 1
    %p92 = scmp.ne.s32.totalorder %s87, %s89
    %p93 = scmp.eq.s32.totalorder %s11, 0
    %p94 = por %p92, %p93
    %p95 = scmp.ne.s32.totalorder %s87, %s89
    %p96 = scmp.eq.s32.totalorder %s16, 1
    %p97 = por %p95, %p96
    %p98 = scmp.ne.s32.totalorder %s89, %s90
    %p99 = scmp.eq.s32.totalorder %s16, 0
    %p100 = por %p98, %p99
    %p101 = scmp.ne.s32.totalorder %s89, %s90
    %p102 = scmp.eq.s32.totalorder %s17, 1
    %p103 = por %p101, %p102
    %p105 = scmp.ne.s32.totalorder %s90, %s104
    %p106 = scmp.eq.s32.totalorder %s17, 0
    %p107 = por %p105, %p106
    %s109 = sadd.s32 %s108, 1
    %p112 = scmp.eq.s32.totalorder %s11, 1
    %p113 = scmp.ne.s32.totalorder %s108, %s110
    %p114 = scmp.eq.s32.totalorder %s11, 0
    %p115 = por %p113, %p114
    %p116 = scmp.ne.s32.totalorder %s108, %s110
    %p117 = scmp.eq.s32.totalorder %s16, 1
    %p118 = por %p116, %p117
    %p119 = scmp.ne.s32.totalorder %s110, %s111
    %p120 = scmp.eq.s32.totalorder %s16, 0
    %p121 = por %p119, %p120
    %p122 = scmp.ne.s32.totalorder %s110, %s111
    %p123 = scmp.eq.s32.totalorder %s17, 1
    %p124 = por %p122, %p123
    %p126 = scmp.ne.s32.totalorder %s111, %s125
    %p127 = scmp.eq.s32.totalorder %s17, 0
    %p128 = por %p126, %p127
    %s129 = ssub.s32 %s11, %s18
    %p130 = scmp.eq.s32.totalorder %s129, 0
    %s132 = sadd.s32 %s131, 1
    %s133 = scalar_select %p130, %s131, %s132
    %p136 = pneg %p130
    %p137 = scmp.eq.s32.totalorder %s11, 1
    %p138 = por %p136, %p137
    %p139 = scmp.ne.s32.totalorder %s131, %s134
    %p140 = scmp.eq.s32.totalorder %s11, 0
    %p141 = por %p139, %p140
    %p142 = scmp.ne.s32.totalorder %s131, %s134
    %p143 = scmp.eq.s32.totalorder %s16, 1
    %p144 = por %p142, %p143
    %p145 = scmp.ne.s32.totalorder %s134, %s135
    %p146 = scmp.eq.s32.totalorder %s16, 0
    %p147 = por %p145, %p146
    %p148 = scmp.ne.s32.totalorder %s134, %s135
    %p149 = scmp.eq.s32.totalorder %s17, 1
    %p150 = por %p148, %p149
    %p152 = scmp.ne.s32.totalorder %s135, %s151
    %p153 = scmp.eq.s32.totalorder %s17, 0
    %p154 = por %p152, %p153
    %p155 = scmp.le.s32.totalorder 1, %s11
    %p156 = scmp.lt.s32.totalorder %s11, 3
    %p157 = pnand %p155, %p156
    %p158 = pneg %p157
    // Predicated region
    $region9: #{unet_generator_forward.19} parent=5 // pred_check
      _
    $region10: #{unet_generator_forward.19} parent=5 // pred_check_branch
      %160 = sbr.rel (%p157) target = $region12
    $region11: #{unet_generator_forward.19} parent=5 // pred_region
      %s161 = ssub.s32 %s11, 1
      // Predicated region
      $region13: #{unet_generator_forward.19} parent=11 // pred_check
        %p162 = pneg %p58
      $region14: #{unet_generator_forward.19} parent=11 // pred_check_branch
        %164 = sbr.rel (%p162) target = $region16
      $region15: #{unet_generator_forward.19} parent=11 // pred_region
        _
      $region16: #{unet_generator_forward.19} parent=11 // pred_fallthru
        _
      // Predicated region
      $region17: #{unet_generator_forward.19} parent=11 // pred_check
        %p165 = pneg %p79
      $region18: #{unet_generator_forward.19} parent=11 // pred_check_branch
        %167 = sbr.rel (%p165) target = $region20
      $region19: #{unet_generator_forward.19} parent=11 // pred_region
        _
      $region20: #{unet_generator_forward.19} parent=11 // pred_fallthru
        _
      // Predicated region
      $region21: #{unet_generator_forward.19} parent=11 // pred_check
        %p168 = pneg %p100
      $region22: #{unet_generator_forward.19} parent=11 // pred_check_branch
        %170 = sbr.rel (%p168) target = $region24
      $region23: #{unet_generator_forward.19} parent=11 // pred_region
        _
      $region24: #{unet_generator_forward.19} parent=11 // pred_fallthru
        _
      // Predicated region
      $region25: #{unet_generator_forward.19} parent=11 // pred_check
        %p171 = pneg %p121
      $region26: #{unet_generator_forward.19} parent=11 // pred_check_branch
        %173 = sbr.rel (%p171) target = $region28
      $region27: #{unet_generator_forward.19} parent=11 // pred_region
        _
      $region28: #{unet_generator_forward.19} parent=11 // pred_fallthru
        _
    $region12: #{unet_generator_forward.19} parent=5 // pred_fallthru
      _
    %p174 = scmp.lt.s32.totalorder %s11, 2
    // Predicated region
    $region29: #{unet_generator_forward.19} parent=5 // pred_check
      %p175 = pneg %p174
    $region30: #{unet_generator_forward.19} parent=5 // pred_check_branch
      %177 = sbr.rel (%p175) target = $region32
    $region31: #{unet_generator_forward.19} parent=5 // pred_region
      // Predicated region
      $region33: #{unet_generator_forward.19} parent=31 // pred_check
        %p178 = pneg %p31
      $region34: #{unet_generator_forward.19} parent=31 // pred_check_branch
        %180 = sbr.rel (%p178) target = $region36
      $region35: #{unet_generator_forward.19} parent=31 // pred_region
        %s181 = smul.u32 32, %s11
        %p182 = scmp.lt.s32.totalorder %s181, 63
        %s183 = scalar_select %p182, %s181, 63
        %s184 = smul.addr %s183, 2
        %s185 = smul.addr %s184, 4
        %s186 = scalar_lea.vmem %s0, %s185
        %s187 = smul.u32 32, %s11
      $region36: #{unet_generator_forward.19} parent=31 // pred_fallthru
        _
    $region32: #{unet_generator_forward.19} parent=5 // pred_fallthru
      _
    %p188 = scmp.le.s32.totalorder 1, %s11
    %p189 = scmp.lt.s32.totalorder %s11, 3
    %p190 = pnand %p188, %p189
    %p191 = pneg %p190
    // Predicated region
    $region37: #{unet_generator_forward.19} parent=5 // pred_check
      _
    $region38: #{unet_generator_forward.19} parent=5 // pred_check_branch
      %193 = sbr.rel (%p190) target = $region40
    $region39: #{unet_generator_forward.19} parent=5 // pred_region
      %s194 = ssub.s32 %s11, 1
      %s195 = smul.u32 32, %s16
      %p196 = scmp.lt.s32.totalorder %s195, 63
      %s197 = scalar_select %p196, %s195, 63
      %s198 = smul.addr %s197, 2
      %s199 = smul.addr %s198, 4
      %s200 = scalar_lea.vmem %s0, %s199
      %p201 = pneg %p37
      %p202 = pneg %p34
      %p203 = pneg %p58
      %p204 = pneg %p55
      %p205 = pneg %p79
      %p206 = pneg %p76
      %p207 = pneg %p100
      %p208 = pneg %p97
      %p209 = pneg %p121
      %p210 = pneg %p118
      %p211 = pneg %p147
      %p212 = pneg %p144
      %s213 = smul.u32 32, %s16
      %p214 = scmp.lt.s32.totalorder %s213, 63
      %s215 = scalar_select %p214, %s213, 63
      %s216 = smul.addr %s215, 8
      %s217 = scalar_lea.vmem %s5, %s216
      %s218 = smul.u32 32, %s16
      %p219 = scmp.lt.s32.totalorder %s218, 63
      %s220 = scalar_select %p219, %s218, 63
      %s221 = smul.addr %s220, 2
      %s222 = smul.addr %s221, 4
      %s223 = scalar_lea.vmem %s0, %s222
      %s224 = smul.u32 32, %s16
      %s225 = smul.u32 32, %s16
      %p226 = scmp.lt.s32.totalorder %s225, 63
      %s227 = scalar_select %p226, %s225, 63
      %s228 = smul.addr %s227, 8
      %s229 = scalar_lea.vmem %s5, %s228
      %s230 = smul.u32 32, %s16
      %v232 = vld [vmem:[%s223] sm:$0xff]
      %v233 = vld [vmem:[%s223 + $0x8] sm:$0xff]
      %v234 = vld [vmem:[%s223 + $0x10] sm:$0xff]
      %v235 = vld [vmem:[%s223 + $0x18] sm:$0xff]
      %v236 = vld [vmem:[%s223 + $0x20] sm:$0xff]
      %v237 = vld [vmem:[%s223 + $0x28] sm:$0xff]
      %v238 = vld [vmem:[%s223 + $0x30] sm:$0xff]
      %v239 = vld [vmem:[%s223 + $0x38] sm:$0xff]
      %v240 = vld [vmem:[%s223 + $0x40] sm:$0xff]
      %v241 = vld [vmem:[%s223 + $0x48] sm:$0xff]
      %v242 = vld [vmem:[%s223 + $0x50] sm:$0xff]
      %v243 = vld [vmem:[%s223 + $0x58] sm:$0xff]
      %v244 = vld [vmem:[%s223 + $0x60] sm:$0xff]
      %v245 = vld [vmem:[%s223 + $0x68] sm:$0xff]
      %v246 = vld [vmem:[%s223 + $0x70] sm:$0xff]
      %v247 = vld [vmem:[%s223 + $0x78] sm:$0xff]
      %v248 = vld [vmem:[%s223 + $0x80] sm:$0xff]
      %v249 = vld [vmem:[%s223 + $0x88] sm:$0xff]
      %v250 = vld [vmem:[%s223 + $0x90] sm:$0xff]
      %v251 = vld [vmem:[%s223 + $0x98] sm:$0xff]
      %v252 = vld [vmem:[%s223 + $0xa0] sm:$0xff]
      %v253 = vld [vmem:[%s223 + $0xa8] sm:$0xff]
      %v254 = vld [vmem:[%s223 + $0xb0] sm:$0xff]
      %v255 = vld [vmem:[%s223 + $0xb8] sm:$0xff]
      %v256 = vld [vmem:[%s223 + $0xc0] sm:$0xff]
      %v257 = vld [vmem:[%s223 + $0xc8] sm:$0xff]
      %v258 = vld [vmem:[%s223 + $0xd0] sm:$0xff]
      %v259 = vld [vmem:[%s223 + $0xd8] sm:$0xff]
      %v260 = vld [vmem:[%s223 + $0xe0] sm:$0xff]
      %v261 = vld [vmem:[%s223 + $0xe8] sm:$0xff]
      %v262 = vld [vmem:[%s223 + $0xf0] sm:$0xff]
      %v263 = vld [vmem:[%s223 + $0xf8] sm:$0xff]
      %v264 = vunpack.c.l.bf16 %v232
      %v265 = vunpack.c.h.bf16 %v232
      %v266 = vunpack.c.l.bf16 %v233
      %v267 = vunpack.c.h.bf16 %v233
      %v268 = vunpack.c.l.bf16 %v234
      %v269 = vunpack.c.h.bf16 %v234
      %v270 = vunpack.c.l.bf16 %v235
      %v271 = vunpack.c.h.bf16 %v235
      %v272 = vunpack.c.l.bf16 %v236
      %v273 = vunpack.c.h.bf16 %v236
      %v274 = vunpack.c.l.bf16 %v237
      %v275 = vunpack.c.h.bf16 %v237
      %v276 = vunpack.c.l.bf16 %v238
      %v277 = vunpack.c.h.bf16 %v238
      %v278 = vunpack.c.l.bf16 %v239
      %v279 = vunpack.c.h.bf16 %v239
      %v280 = vunpack.c.l.bf16 %v240
      %v281 = vunpack.c.h.bf16 %v240
      %v282 = vunpack.c.l.bf16 %v241
      %v283 = vunpack.c.h.bf16 %v241
      %v284 = vunpack.c.l.bf16 %v242
      %v285 = vunpack.c.h.bf16 %v242
      %v286 = vunpack.c.l.bf16 %v243
      %v287 = vunpack.c.h.bf16 %v243
      %v288 = vunpack.c.l.bf16 %v244
      %v289 = vunpack.c.h.bf16 %v244
      %v290 = vunpack.c.l.bf16 %v245
      %v291 = vunpack.c.h.bf16 %v245
      %v292 = vunpack.c.l.bf16 %v246
      %v293 = vunpack.c.h.bf16 %v246
      %v294 = vunpack.c.l.bf16 %v247
      %v295 = vunpack.c.h.bf16 %v247
      %v296 = vunpack.c.l.bf16 %v248
      %v297 = vunpack.c.h.bf16 %v248
      %v298 = vunpack.c.l.bf16 %v249
      %v299 = vunpack.c.h.bf16 %v249
      %v300 = vunpack.c.l.bf16 %v250
      %v301 = vunpack.c.h.bf16 %v250
      %v302 = vunpack.c.l.bf16 %v251
      %v303 = vunpack.c.h.bf16 %v251
      %v304 = vunpack.c.l.bf16 %v252
      %v305 = vunpack.c.h.bf16 %v252
      %v306 = vunpack.c.l.bf16 %v253
      %v307 = vunpack.c.h.bf16 %v253
      %v308 = vunpack.c.l.bf16 %v254
      %v309 = vunpack.c.h.bf16 %v254
      %v310 = vunpack.c.l.bf16 %v255
      %v311 = vunpack.c.h.bf16 %v255
      %v312 = vunpack.c.l.bf16 %v256
      %v313 = vunpack.c.h.bf16 %v256
      %v314 = vunpack.c.l.bf16 %v257
      %v315 = vunpack.c.h.bf16 %v257
      %v316 = vunpack.c.l.bf16 %v258
      %v317 = vunpack.c.h.bf16 %v258
      %v318 = vunpack.c.l.bf16 %v259
      %v319 = vunpack.c.h.bf16 %v259
      %v320 = vunpack.c.l.bf16 %v260
      %v321 = vunpack.c.h.bf16 %v260
      %v322 = vunpack.c.l.bf16 %v261
      %v323 = vunpack.c.h.bf16 %v261
      %v324 = vunpack.c.l.bf16 %v262
      %v325 = vunpack.c.h.bf16 %v262
      %v326 = vunpack.c.l.bf16 %v263
      %v327 = vunpack.c.h.bf16 %v263
      %v328 = vld [vmem:[%s3] sm:$0x3]
      %v330 = vlaneseq
      %v331 = vshrl.u32 %v330, 7
      %v332 = vsub.s32 0, %v331
      %v333 = vrot.slane %v328, %v332
      %v334 = vlaneseq
      %v335 = vshrl.u32 %v334, 7
      %v336 = vsub.s32 1, %v335
      %v337 = vrot.slane %v328, %v336
      %v340 = vmul.f32 %v264, %v333
      %v341 = vmul.f32 %v265, %v337
      %v342 = vmul.f32 %v266, %v333
      %v343 = vmul.f32 %v267, %v337
      %v344 = vmul.f32 %v268, %v333
      %v345 = vmul.f32 %v269, %v337
      %v346 = vmul.f32 %v270, %v333
      %v347 = vmul.f32 %v271, %v337
      %v348 = vmul.f32 %v272, %v333
      %v349 = vmul.f32 %v273, %v337
      %v350 = vmul.f32 %v274, %v333
      %v351 = vmul.f32 %v275, %v337
      %v352 = vmul.f32 %v276, %v333
      %v353 = vmul.f32 %v277, %v337
      %v354 = vmul.f32 %v278, %v333
      %v355 = vmul.f32 %v279, %v337
      %v356 = vmul.f32 %v280, %v333
      %v357 = vmul.f32 %v281, %v337
      %v358 = vmul.f32 %v282, %v333
      %v359 = vmul.f32 %v283, %v337
      %v360 = vmul.f32 %v284, %v333
      %v361 = vmul.f32 %v285, %v337
      %v362 = vmul.f32 %v286, %v333
      %v363 = vmul.f32 %v287, %v337
      %v364 = vmul.f32 %v288, %v333
      %v365 = vmul.f32 %v289, %v337
      %v366 = vmul.f32 %v290, %v333
      %v367 = vmul.f32 %v291, %v337
      %v368 = vmul.f32 %v292, %v333
      %v369 = vmul.f32 %v293, %v337
      %v370 = vmul.f32 %v294, %v333
      %v371 = vmul.f32 %v295, %v337
      %v372 = vmul.f32 %v296, %v333
      %v373 = vmul.f32 %v297, %v337
      %v374 = vmul.f32 %v298, %v333
      %v375 = vmul.f32 %v299, %v337
      %v376 = vmul.f32 %v300, %v333
      %v377 = vmul.f32 %v301, %v337
      %v378 = vmul.f32 %v302, %v333
      %v379 = vmul.f32 %v303, %v337
      %v380 = vmul.f32 %v304, %v333
      %v381 = vmul.f32 %v305, %v337
      %v382 = vmul.f32 %v306, %v333
      %v383 = vmul.f32 %v307, %v337
      %v384 = vmul.f32 %v308, %v333
      %v385 = vmul.f32 %v309, %v337
      %v386 = vmul.f32 %v310, %v333
      %v387 = vmul.f32 %v311, %v337
      %v388 = vmul.f32 %v312, %v333
      %v389 = vmul.f32 %v313, %v337
      %v390 = vmul.f32 %v314, %v333
      %v391 = vmul.f32 %v315, %v337
      %v392 = vmul.f32 %v316, %v333
      %v393 = vmul.f32 %v317, %v337
      %v394 = vmul.f32 %v318, %v333
      %v395 = vmul.f32 %v319, %v337
      %v396 = vmul.f32 %v320, %v333
      %v397 = vmul.f32 %v321, %v337
      %v398 = vmul.f32 %v322, %v333
      %v399 = vmul.f32 %v323, %v337
      %v400 = vmul.f32 %v324, %v333
      %v401 = vmul.f32 %v325, %v337
      %v402 = vmul.f32 %v326, %v333
      %v403 = vmul.f32 %v327, %v337
      %v404 = vld [vmem:[%s4] sm:$0x3]
      %v406 = vlaneseq
      %v407 = vshrl.u32 %v406, 7
      %v408 = vsub.s32 0, %v407
      %v409 = vrot.slane %v404, %v408
      %v410 = vlaneseq
      %v411 = vshrl.u32 %v410, 7
      %v412 = vsub.s32 1, %v411
      %v413 = vrot.slane %v404, %v412
      %v416 = vadd.f32 %v340, %v409
      %v417 = vadd.f32 %v341, %v413
      %v418 = vadd.f32 %v342, %v409
      %v419 = vadd.f32 %v343, %v413
      %v420 = vadd.f32 %v344, %v409
      %v421 = vadd.f32 %v345, %v413
      %v422 = vadd.f32 %v346, %v409
      %v423 = vadd.f32 %v347, %v413
      %v424 = vadd.f32 %v348, %v409
      %v425 = vadd.f32 %v349, %v413
      %v426 = vadd.f32 %v350, %v409
      %v427 = vadd.f32 %v351, %v413
      %v428 = vadd.f32 %v352, %v409
      %v429 = vadd.f32 %v353, %v413
      %v430 = vadd.f32 %v354, %v409
      %v431 = vadd.f32 %v355, %v413
      %v432 = vadd.f32 %v356, %v409
      %v433 = vadd.f32 %v357, %v413
      %v434 = vadd.f32 %v358, %v409
      %v435 = vadd.f32 %v359, %v413
      %v436 = vadd.f32 %v360, %v409
      %v437 = vadd.f32 %v361, %v413
      %v438 = vadd.f32 %v362, %v409
      %v439 = vadd.f32 %v363, %v413
      %v440 = vadd.f32 %v364, %v409
      %v441 = vadd.f32 %v365, %v413
      %v442 = vadd.f32 %v366, %v409
      %v443 = vadd.f32 %v367, %v413
      %v444 = vadd.f32 %v368, %v409
      %v445 = vadd.f32 %v369, %v413
      %v446 = vadd.f32 %v370, %v409
      %v447 = vadd.f32 %v371, %v413
      %v448 = vadd.f32 %v372, %v409
      %v449 = vadd.f32 %v373, %v413
      %v450 = vadd.f32 %v374, %v409
      %v451 = vadd.f32 %v375, %v413
      %v452 = vadd.f32 %v376, %v409
      %v453 = vadd.f32 %v377, %v413
      %v454 = vadd.f32 %v378, %v409
      %v455 = vadd.f32 %v379, %v413
      %v456 = vadd.f32 %v380, %v409
      %v457 = vadd.f32 %v381, %v413
      %v458 = vadd.f32 %v382, %v409
      %v459 = vadd.f32 %v383, %v413
      %v460 = vadd.f32 %v384, %v409
      %v461 = vadd.f32 %v385, %v413
      %v462 = vadd.f32 %v386, %v409
      %v463 = vadd.f32 %v387, %v413
      %v464 = vadd.f32 %v388, %v409
      %v465 = vadd.f32 %v389, %v413
      %v466 = vadd.f32 %v390, %v409
      %v467 = vadd.f32 %v391, %v413
      %v468 = vadd.f32 %v392, %v409
      %v469 = vadd.f32 %v393, %v413
      %v470 = vadd.f32 %v394, %v409
      %v471 = vadd.f32 %v395, %v413
      %v472 = vadd.f32 %v396, %v409
      %v473 = vadd.f32 %v397, %v413
      %v474 = vadd.f32 %v398, %v409
      %v475 = vadd.f32 %v399, %v413
      %v476 = vadd.f32 %v400, %v409
      %v477 = vadd.f32 %v401, %v413
      %v478 = vadd.f32 %v402, %v409
      %v479 = vadd.f32 %v403, %v413
      %v480 = vmax.f32 %v416, 0.0
      %v481 = vmax.f32 %v417, 0.0
      %v482 = vmax.f32 %v418, 0.0
      %v483 = vmax.f32 %v419, 0.0
      %v484 = vmax.f32 %v420, 0.0
      %v485 = vmax.f32 %v421, 0.0
      %v486 = vmax.f32 %v422, 0.0
      %v487 = vmax.f32 %v423, 0.0
      %v488 = vmax.f32 %v424, 0.0
      %v489 = vmax.f32 %v425, 0.0
      %v490 = vmax.f32 %v426, 0.0
      %v491 = vmax.f32 %v427, 0.0
      %v492 = vmax.f32 %v428, 0.0
      %v493 = vmax.f32 %v429, 0.0
      %v494 = vmax.f32 %v430, 0.0
      %v495 = vmax.f32 %v431, 0.0
      %v496 = vmax.f32 %v432, 0.0
      %v497 = vmax.f32 %v433, 0.0
      %v498 = vmax.f32 %v434, 0.0
      %v499 = vmax.f32 %v435, 0.0
      %v500 = vmax.f32 %v436, 0.0
      %v501 = vmax.f32 %v437, 0.0
      %v502 = vmax.f32 %v438, 0.0
      %v503 = vmax.f32 %v439, 0.0
      %v504 = vmax.f32 %v440, 0.0
      %v505 = vmax.f32 %v441, 0.0
      %v506 = vmax.f32 %v442, 0.0
      %v507 = vmax.f32 %v443, 0.0
      %v508 = vmax.f32 %v444, 0.0
      %v509 = vmax.f32 %v445, 0.0
      %v510 = vmax.f32 %v446, 0.0
      %v511 = vmax.f32 %v447, 0.0
      %v512 = vmax.f32 %v448, 0.0
      %v513 = vmax.f32 %v449, 0.0
      %v514 = vmax.f32 %v450, 0.0
      %v515 = vmax.f32 %v451, 0.0
      %v516 = vmax.f32 %v452, 0.0
      %v517 = vmax.f32 %v453, 0.0
      %v518 = vmax.f32 %v454, 0.0
      %v519 = vmax.f32 %v455, 0.0
      %v520 = vmax.f32 %v456, 0.0
      %v521 = vmax.f32 %v457, 0.0
      %v522 = vmax.f32 %v458, 0.0
      %v523 = vmax.f32 %v459, 0.0
      %v524 = vmax.f32 %v460, 0.0
      %v525 = vmax.f32 %v461, 0.0
      %v526 = vmax.f32 %v462, 0.0
      %v527 = vmax.f32 %v463, 0.0
      %v528 = vmax.f32 %v464, 0.0
      %v529 = vmax.f32 %v465, 0.0
      %v530 = vmax.f32 %v466, 0.0
      %v531 = vmax.f32 %v467, 0.0
      %v532 = vmax.f32 %v468, 0.0
      %v533 = vmax.f32 %v469, 0.0
      %v534 = vmax.f32 %v470, 0.0
      %v535 = vmax.f32 %v471, 0.0
      %v536 = vmax.f32 %v472, 0.0
      %v537 = vmax.f32 %v473, 0.0
      %v538 = vmax.f32 %v474, 0.0
      %v539 = vmax.f32 %v475, 0.0
      %v540 = vmax.f32 %v476, 0.0
      %v541 = vmax.f32 %v477, 0.0
      %v542 = vmax.f32 %v478, 0.0
      %v543 = vmax.f32 %v479, 0.0
      %v544 = vpack.c.bf16 %v482, %v480
      %v545 = vpack.c.bf16 %v483, %v481
      %v546 = vpack.c.bf16 %v486, %v484
      %v547 = vpack.c.bf16 %v487, %v485
      %v548 = vpack.c.bf16 %v490, %v488
      %v549 = vpack.c.bf16 %v491, %v489
      %v550 = vpack.c.bf16 %v494, %v492
      %v551 = vpack.c.bf16 %v495, %v493
      %v552 = vpack.c.bf16 %v498, %v496
      %v553 = vpack.c.bf16 %v499, %v497
      %v554 = vpack.c.bf16 %v502, %v500
      %v555 = vpack.c.bf16 %v503, %v501
      %v556 = vpack.c.bf16 %v506, %v504
      %v557 = vpack.c.bf16 %v507, %v505
      %v558 = vpack.c.bf16 %v510, %v508
      %v559 = vpack.c.bf16 %v511, %v509
      %v560 = vpack.c.bf16 %v514, %v512
      %v561 = vpack.c.bf16 %v515, %v513
      %v562 = vpack.c.bf16 %v518, %v516
      %v563 = vpack.c.bf16 %v519, %v517
      %v564 = vpack.c.bf16 %v522, %v520
      %v565 = vpack.c.bf16 %v523, %v521
      %v566 = vpack.c.bf16 %v526, %v524
      %v567 = vpack.c.bf16 %v527, %v525
      %v568 = vpack.c.bf16 %v530, %v528
      %v569 = vpack.c.bf16 %v531, %v529
      %v570 = vpack.c.bf16 %v534, %v532
      %v571 = vpack.c.bf16 %v535, %v533
      %v572 = vpack.c.bf16 %v538, %v536
      %v573 = vpack.c.bf16 %v539, %v537
      %v574 = vpack.c.bf16 %v542, %v540
      %v575 = vpack.c.bf16 %v543, %v541
      %v576 = vld [vmem:[%s1] sm:$0xf]
      %v577 = vld [vmem:[%s1 + $0x4] sm:$0xf]
      %v578 = vld [vmem:[%s1 + $0x8] sm:$0xf]
      %v579 = vld [vmem:[%s1 + $0xc] sm:$0xf]
      %v580 = vld [vmem:[%s1 + $0x10] sm:$0xf]
      %v581 = vld [vmem:[%s1 + $0x14] sm:$0xf]
      %v582 = vld [vmem:[%s1 + $0x18] sm:$0xf]
      %v583 = vld [vmem:[%s1 + $0x1c] sm:$0xf]
      %v584 = vld [vmem:[%s1 + $0x20] sm:$0xf]
      %v585 = vld [vmem:[%s1 + $0x24] sm:$0xf]
      %v586 = vld [vmem:[%s1 + $0x28] sm:$0xf]
      %v587 = vld [vmem:[%s1 + $0x2c] sm:$0xf]
      %v588 = vld [vmem:[%s1 + $0x30] sm:$0xf]
      %v589 = vld [vmem:[%s1 + $0x34] sm:$0xf]
      %v590 = vld [vmem:[%s1 + $0x38] sm:$0xf]
      %v591 = vld [vmem:[%s1 + $0x3c] sm:$0xf]
      %v592 = vld [vmem:[%s1 + $0x40] sm:$0xf]
      %v593 = vld [vmem:[%s1 + $0x44] sm:$0xf]
      %v594 = vld [vmem:[%s2] sm:$0x1]
      %v596 = vlaneseq
      %v597 = vshrl.u32 %v596, 7
      %v598 = vsub.s32 0, %v597
      %v599 = vrot.slane %v594, %v598
      %v619 = vunpack.c.l.b16 %v576
      %v620 = vunpack.c.l.b16 %v577
      %v621 = vunpack.c.l.b16 %v578
      %v622 = vunpack.c.l.b16 %v579
      %v623 = vunpack.c.l.b16 %v580
      %v624 = vunpack.c.l.b16 %v581
      %v625 = vunpack.c.l.b16 %v582
      %v626 = vunpack.c.l.b16 %v583
      %v627 = vunpack.c.l.b16 %v584
      %v628 = vunpack.c.l.b16 %v585
      %v629 = vunpack.c.l.b16 %v586
      %v630 = vunpack.c.l.b16 %v587
      %v631 = vunpack.c.l.b16 %v588
      %v632 = vunpack.c.l.b16 %v589
      %v633 = vunpack.c.l.b16 %v590
      %v634 = vunpack.c.l.b16 %v591
      %v635 = vunpack.c.l.b16 %v592
      %v636 = vunpack.c.l.b16 %v593
      %v637 = vpack.c.b16 %v620, %v619
      %v638 = vpack.c.b16 %v622, %v621
      %v639 = vpack.c.b16 %v624, %v623
      %v640 = vpack.c.b16 %v626, %v625
      %v641 = vpack.c.b16 %v628, %v627
      %v642 = vpack.c.b16 %v630, %v629
      %v643 = vpack.c.b16 %v632, %v631
      %v644 = vpack.c.b16 %v634, %v633
      %v645 = vpack.c.b16 %v636, %v635
      %vm655 = vcmask 130048
      %v657 = vsel %vm655, %v545, 0
      %v660 = vsel %vm655, %v547, 0
      %v663 = vsel %vm655, %v549, 0
      %v666 = vsel %vm655, %v551, 0
      %v669 = vsel %vm655, %v553, 0
      %v672 = vsel %vm655, %v555, 0
      %v675 = vsel %vm655, %v557, 0
      %v678 = vsel %vm655, %v559, 0
      %v681 = vsel %vm655, %v561, 0
      %v684 = vsel %vm655, %v563, 0
      %v687 = vsel %vm655, %v565, 0
      %v690 = vsel %vm655, %v567, 0
      %v693 = vsel %vm655, %v569, 0
      %v696 = vsel %vm655, %v571, 0
      %v699 = vsel %vm655, %v573, 0
      %v702 = vsel %vm655, %v575, 0
      %704 = vmatprep.subr.bf16.mxu0 0
      %705 = vmatpush1.bf16.msra.mxu0 %v637
      %706 = vmatprep.subr.bf16.mxu0 0
      %707 = vmatpush1.bf16.msra.mxu0 %v638
      %708 = vmatprep.subr.bf16.mxu0 0
      %709 = vmatpush1.bf16.msra.mxu0 %v639
      %710 = vmatprep.subr.bf16.mxu0 0
      %711 = vmatpush1.bf16.msra.mxu0 %v640
      %712 = vmatprep.subr.bf16.mxu0 0
      %713 = vmatpush1.bf16.msra.mxu0 %v641
      %714 = vmatprep.subr.bf16.mxu0 0
      %715 = vmatpush1.bf16.msra.mxu0 %v642
      %716 = vmatprep.subr.bf16.mxu0 0
      %717 = vmatpush1.bf16.msra.mxu0 %v643
      %718 = vmatprep.subr.bf16.mxu0 0
      %719 = vmatpush1.bf16.msra.mxu0 %v644
      %720 = vmatprep.subr.bf16.mxu0 0
      %721 = vmatpush1.bf16.msra.mxu0 %v645
      %722 = vmatprep.subr.bf16.mxu0 0
      %723 = vmatpush1.bf16.msra.mxu0 0
      %724 = vmatprep.subr.bf16.mxu0 0
      %725 = vmatpush1.bf16.msra.mxu0 0
      %726 = vmatprep.subr.bf16.mxu0 0
      %727 = vmatpush1.bf16.msra.mxu0 0
      %728 = vmatprep.subr.bf16.mxu0 0
      %729 = vmatpush1.bf16.msra.mxu0 0
      %730 = vmatprep.subr.bf16.mxu0 0
      %731 = vmatpush1.bf16.msra.mxu0 0
      %732 = vmatprep.subr.bf16.mxu0 0
      %733 = vmatpush1.bf16.msra.mxu0 0
      %734 = vmatprep.subr.bf16.mxu0 0
      %735 = vmatpush1.bf16.msra.mxu0 0
      %736 = vmatprep.mubr.bf16.mxu0 %v657
      %737 = vmatmul.mubr.bf16.gmra.mrb[0].mxu0 %v544
      %v738 = vpop.f32.mrb[0].mxu0
      %v739 = vadd.f32 %v599, %v738
      %v740 = vpop.f32.mrb[0].mxu0
      %v741 = vpop.f32.mrb[0].mxu0
      %v742 = vadd.f32 %v599, %v741
      %v743 = vpop.f32.mrb[0].mxu0
      %744 = vmatprep.mubr.bf16.mxu0 %v660
      %745 = vmatmul.mubr.bf16.gmra.mrb[0].mxu0 %v546
      %v746 = vpop.f32.mrb[0].mxu0
      %v747 = vadd.f32 %v599, %v746
      %v748 = vpop.f32.mrb[0].mxu0
      %v749 = vpop.f32.mrb[0].mxu0
      %v750 = vadd.f32 %v599, %v749
      %v751 = vpop.f32.mrb[0].mxu0
      %752 = vmatprep.mubr.bf16.mxu0 %v663
      %753 = vmatmul.mubr.bf16.gmra.mrb[0].mxu0 %v548
      %v754 = vpop.f32.mrb[0].mxu0
      %v755 = vadd.f32 %v599, %v754
      %v756 = vpop.f32.mrb[0].mxu0
      %v757 = vpop.f32.mrb[0].mxu0
      %v758 = vadd.f32 %v599, %v757
      %v759 = vpop.f32.mrb[0].mxu0
      %760 = vmatprep.mubr.bf16.mxu0 %v666
      %761 = vmatmul.mubr.bf16.gmra.mrb[0].mxu0 %v550
      %v762 = vpop.f32.mrb[0].mxu0
      %v763 = vadd.f32 %v599, %v762
      %v764 = vpop.f32.mrb[0].mxu0
      %v765 = vpop.f32.mrb[0].mxu0
      %v766 = vadd.f32 %v599, %v765
      %v767 = vpop.f32.mrb[0].mxu0
      %768 = vmatprep.mubr.bf16.mxu0 %v669
      %769 = vmatmul.mubr.bf16.gmra.mrb[0].mxu0 %v552
      %v770 = vpop.f32.mrb[0].mxu0
      %v771 = vadd.f32 %v599, %v770
      %v772 = vpop.f32.mrb[0].mxu0
      %v773 = vpop.f32.mrb[0].mxu0
      %v774 = vadd.f32 %v599, %v773
      %v775 = vpop.f32.mrb[0].mxu0
      %776 = vmatprep.mubr.bf16.mxu0 %v672
      %777 = vmatmul.mubr.bf16.gmra.mrb[0].mxu0 %v554
      %v778 = vpop.f32.mrb[0].mxu0
      %v779 = vadd.f32 %v599, %v778
      %v780 = vpop.f32.mrb[0].mxu0
      %v781 = vpop.f32.mrb[0].mxu0
      %v782 = vadd.f32 %v599, %v781
      %v783 = vpop.f32.mrb[0].mxu0
      %784 = vmatprep.mubr.bf16.mxu0 %v675
      %785 = vmatmul.mubr.bf16.gmra.mrb[0].mxu0 %v556
      %v786 = vpop.f32.mrb[0].mxu0
      %v787 = vadd.f32 %v599, %v786
      %v788 = vpop.f32.mrb[0].mxu0
      %v789 = vpop.f32.mrb[0].mxu0
      %v790 = vadd.f32 %v599, %v789
      %v791 = vpop.f32.mrb[0].mxu0
      %792 = vmatprep.mubr.bf16.mxu0 %v678
      %793 = vmatmul.mubr.bf16.gmra.mrb[0].mxu0 %v558
      %v794 = vpop.f32.mrb[0].mxu0
      %v795 = vadd.f32 %v599, %v794
      %v796 = vpop.f32.mrb[0].mxu0
      %v797 = vpop.f32.mrb[0].mxu0
      %v798 = vadd.f32 %v599, %v797
      %v799 = vpop.f32.mrb[0].mxu0
      %800 = vmatprep.mubr.bf16.mxu0 %v681
      %801 = vmatmul.mubr.bf16.gmra.mrb[0].mxu0 %v560
      %v802 = vpop.f32.mrb[0].mxu0
      %v803 = vadd.f32 %v599, %v802
      %v804 = vpop.f32.mrb[0].mxu0
      %v805 = vpop.f32.mrb[0].mxu0
      %v806 = vadd.f32 %v599, %v805
      %v807 = vpop.f32.mrb[0].mxu0
      %808 = vmatprep.mubr.bf16.mxu0 %v684
      %809 = vmatmul.mubr.bf16.gmra.mrb[0].mxu0 %v562
      %v810 = vpop.f32.mrb[0].mxu0
      %v811 = vadd.f32 %v599, %v810
      %v812 = vpop.f32.mrb[0].mxu0
      %v813 = vpop.f32.mrb[0].mxu0
      %v814 = vadd.f32 %v599, %v813
      %v815 = vpop.f32.mrb[0].mxu0
      %816 = vmatprep.mubr.bf16.mxu0 %v687
      %817 = vmatmul.mubr.bf16.gmra.mrb[0].mxu0 %v564
      %v818 = vpop.f32.mrb[0].mxu0
      %v819 = vadd.f32 %v599, %v818
      %v820 = vpop.f32.mrb[0].mxu0
      %v821 = vpop.f32.mrb[0].mxu0
      %v822 = vadd.f32 %v599, %v821
      %v823 = vpop.f32.mrb[0].mxu0
      %824 = vmatprep.mubr.bf16.mxu0 %v690
      %825 = vmatmul.mubr.bf16.gmra.mrb[0].mxu0 %v566
      %v826 = vpop.f32.mrb[0].mxu0
      %v827 = vadd.f32 %v599, %v826
      %v828 = vpop.f32.mrb[0].mxu0
      %v829 = vpop.f32.mrb[0].mxu0
      %v830 = vadd.f32 %v599, %v829
      %v831 = vpop.f32.mrb[0].mxu0
      %832 = vmatprep.mubr.bf16.mxu0 %v693
      %833 = vmatmul.mubr.bf16.gmra.mrb[0].mxu0 %v568
      %v834 = vpop.f32.mrb[0].mxu0
      %v835 = vadd.f32 %v599, %v834
      %v836 = vpop.f32.mrb[0].mxu0
      %v837 = vpop.f32.mrb[0].mxu0
      %v838 = vadd.f32 %v599, %v837
      %v839 = vpop.f32.mrb[0].mxu0
      %840 = vmatprep.mubr.bf16.mxu0 %v696
      %841 = vmatmul.mubr.bf16.gmra.mrb[0].mxu0 %v570
      %v842 = vpop.f32.mrb[0].mxu0
      %v843 = vadd.f32 %v599, %v842
      %v844 = vpop.f32.mrb[0].mxu0
      %v845 = vpop.f32.mrb[0].mxu0
      %v846 = vadd.f32 %v599, %v845
      %v847 = vpop.f32.mrb[0].mxu0
      %848 = vmatprep.mubr.bf16.mxu0 %v699
      %849 = vmatmul.mubr.bf16.gmra.mrb[0].mxu0 %v572
      %v850 = vpop.f32.mrb[0].mxu0
      %v851 = vadd.f32 %v599, %v850
      %v852 = vpop.f32.mrb[0].mxu0
      %v853 = vpop.f32.mrb[0].mxu0
      %v854 = vadd.f32 %v599, %v853
      %v855 = vpop.f32.mrb[0].mxu0
      %856 = vmatprep.mubr.bf16.mxu0 %v702
      %857 = vmatmul.mubr.bf16.gmra.mrb[0].mxu0 %v574
      %v858 = vpop.f32.mrb[0].mxu0
      %v859 = vadd.f32 %v599, %v858
      %v860 = vpop.f32.mrb[0].mxu0
      %v861 = vpop.f32.mrb[0].mxu0
      %v862 = vadd.f32 %v599, %v861
      %v863 = vpop.f32.mrb[0].mxu0
      %864 = vdwg.mxu0
      %v865 = vtanh.pop %v739
      %v866 = vtanh.pop %v742
      %v867 = vtanh.pop %v747
      %v868 = vtanh.pop %v750
      %v869 = vtanh.pop %v755
      %v870 = vtanh.pop %v758
      %v871 = vtanh.pop %v763
      %v872 = vtanh.pop %v766
      %v873 = vtanh.pop %v771
      %v874 = vtanh.pop %v774
      %v875 = vtanh.pop %v779
      %v876 = vtanh.pop %v782
      %v877 = vtanh.pop %v787
      %v878 = vtanh.pop %v790
      %v879 = vtanh.pop %v795
      %v880 = vtanh.pop %v798
      %v881 = vtanh.pop %v803
      %v882 = vtanh.pop %v806
      %v883 = vtanh.pop %v811
      %v884 = vtanh.pop %v814
      %v885 = vtanh.pop %v819
      %v886 = vtanh.pop %v822
      %v887 = vtanh.pop %v827
      %v888 = vtanh.pop %v830
      %v889 = vtanh.pop %v835
      %v890 = vtanh.pop %v838
      %v891 = vtanh.pop %v843
      %v892 = vtanh.pop %v846
      %v893 = vtanh.pop %v851
      %v894 = vtanh.pop %v854
      %v895 = vtanh.pop %v859
      %v896 = vtanh.pop %v862
      %897 = vst [vmem:[%s229] sm:$0xff] %v865
      %898 = vst [vmem:[%s229 + $0x8] sm:$0xff] %v866
      %899 = vst [vmem:[%s229 + $0x10] sm:$0xff] %v867
      %900 = vst [vmem:[%s229 + $0x18] sm:$0xff] %v868
      %901 = vst [vmem:[%s229 + $0x20] sm:$0xff] %v869
      %902 = vst [vmem:[%s229 + $0x28] sm:$0xff] %v870
      %903 = vst [vmem:[%s229 + $0x30] sm:$0xff] %v871
      %904 = vst [vmem:[%s229 + $0x38] sm:$0xff] %v872
      %905 = vst [vmem:[%s229 + $0x40] sm:$0xff] %v873
      %906 = vst [vmem:[%s229 + $0x48] sm:$0xff] %v874
      %907 = vst [vmem:[%s229 + $0x50] sm:$0xff] %v875
      %908 = vst [vmem:[%s229 + $0x58] sm:$0xff] %v876
      %909 = vst [vmem:[%s229 + $0x60] sm:$0xff] %v877
      %910 = vst [vmem:[%s229 + $0x68] sm:$0xff] %v878
      %911 = vst [vmem:[%s229 + $0x70] sm:$0xff] %v879
      %912 = vst [vmem:[%s229 + $0x78] sm:$0xff] %v880
      %913 = vst [vmem:[%s229 + $0x80] sm:$0xff] %v881
      %914 = vst [vmem:[%s229 + $0x88] sm:$0xff] %v882
      %915 = vst [vmem:[%s229 + $0x90] sm:$0xff] %v883
      %916 = vst [vmem:[%s229 + $0x98] sm:$0xff] %v884
      %917 = vst [vmem:[%s229 + $0xa0] sm:$0xff] %v885
      %918 = vst [vmem:[%s229 + $0xa8] sm:$0xff] %v886
      %919 = vst [vmem:[%s229 + $0xb0] sm:$0xff] %v887
      %920 = vst [vmem:[%s229 + $0xb8] sm:$0xff] %v888
      %921 = vst [vmem:[%s229 + $0xc0] sm:$0xff] %v889
      %922 = vst [vmem:[%s229 + $0xc8] sm:$0xff] %v890
      %923 = vst [vmem:[%s229 + $0xd0] sm:$0xff] %v891
      %924 = vst [vmem:[%s229 + $0xd8] sm:$0xff] %v892
      %925 = vst [vmem:[%s229 + $0xe0] sm:$0xff] %v893
      %926 = vst [vmem:[%s229 + $0xe8] sm:$0xff] %v894
      %927 = vst [vmem:[%s229 + $0xf0] sm:$0xff] %v895
      %928 = vst [vmem:[%s229 + $0xf8] sm:$0xff] %v896
      %s929 = smul.u32 32, %s16
      %p930 = scmp.lt.s32.totalorder %s929, 63
      %s931 = scalar_select %p930, %s929, 63
      %s932 = smul.addr %s931, 8
      %s933 = scalar_lea.vmem %s5, %s932
      // Predicated region
      $region41: #{unet_generator_forward.19} parent=39 // pred_check
        %p934 = pneg %p144
      $region42: #{unet_generator_forward.19} parent=39 // pred_check_branch
        %936 = sbr.rel (%p934) target = $region44
      $region43: #{unet_generator_forward.19} parent=39 // pred_region
        %s937 = smul.u32 32, %s16
      $region44: #{unet_generator_forward.19} parent=39 // pred_fallthru
        _
    $region40: #{unet_generator_forward.19} parent=5 // pred_fallthru
      _
    %p938 = scmp.le.s32.totalorder 2, %s11
    // Predicated region
    $region45: #{unet_generator_forward.19} parent=5 // pred_check
      %p939 = pneg %p938
    $region46: #{unet_generator_forward.19} parent=5 // pred_check_branch
      %941 = sbr.rel (%p939) target = $region48
    $region47: #{unet_generator_forward.19} parent=5 // pred_region
      %s942 = ssub.s32 %s11, 2
      // Predicated region
      $region49: #{unet_generator_forward.19} parent=47 // pred_check
        %p943 = pneg %p150
      $region50: #{unet_generator_forward.19} parent=47 // pred_check_branch
        %945 = sbr.rel (%p943) target = $region52
      $region51: #{unet_generator_forward.19} parent=47 // pred_region
        %s946 = smul.u32 32, %s17
        %p947 = scmp.lt.s32.totalorder %s946, 63
        %s948 = scalar_select %p947, %s946, 63
        %s949 = smul.addr %s948, 8
        %s950 = scalar_lea.vmem %s5, %s949
      $region52: #{unet_generator_forward.19} parent=47 // pred_fallthru
        _
    $region48: #{unet_generator_forward.19} parent=5 // pred_fallthru
      _
  $region6: #{unet_generator_forward.19} parent=0 // loop_footer
    %s15 = sadd.s32 1, %s11
  $region7: #{unet_generator_forward.19} parent=0 // loop_footer_branch
    %10 = sbr.rel target = $region3
  $region8: #{unet_generator_forward.19} parent=0 // loop_exit
    _

</llo_original>
